<compile_context>
chip_gen: v5e
topology: v5e:2x2
jax: 0.10.0
libtpu: 0.0.40
codegen_flags: <defaults>
</compile_context>

<pallas_src>
import jax
import jax.numpy as jnp
from jax.experimental import pallas as pl
from jax.experimental.pallas import tpu as pltpu


def _round_up(x, m):
    return ((x + m - 1) // m) * m


# ----------------------------------------------------------------------------
# Conv(3x3) + bias + ReLU + folded-BN as ONE im2col matmul per layer (whole
# batch at once).  Output layout is (Cout, B*H*W): channel-major, lane-dense.
# ----------------------------------------------------------------------------
def _conv_kernel(p_ref, w_ref, b_ref, s_ref, t_ref, out_ref):
    # p_ref : (K9p, tn)    im2col patches (bf16, zero-padded K rows)
    # w_ref : (Cout, K9p)  conv weight, PyTorch (Cin,KH,KW) flat order (bf16)
    # b/s/t : (Cout, 1)    conv bias / folded-BN scale / folded-BN shift (f32)
    # out   : (Cout, tn)   bf16, lane-dense
    acc = jnp.dot(w_ref[...], p_ref[...], preferred_element_type=jnp.float32)
    y = jnp.maximum(acc + b_ref[...], 0.0)                    # conv bias + ReLU
    out_ref[...] = (y * s_ref[...] + t_ref[...]).astype(out_ref.dtype)  # folded BN


def _im2col_cbhw(x):
    """x: (Cin, B, H, W) bf16 -> ReflectionPad2d(1) + 3x3 im2col -> (Cin*9, B*H*W).

    All-bf16 glue (no f32 patch stack is materialized).
    TODO(synk): fuse tap construction into the kernel (DMA the padded plane and
    build the 9 taps in VMEM) to remove the 9x im2col HBM amplification.
    """
    Cin, B, H, W = x.shape
    xp = jnp.pad(x, ((0, 0), (0, 0), (1, 1), (1, 1)), mode="reflect")
    taps = [xp[:, :, dy:dy + H, dx:dx + W]
            for dy in range(3) for dx in range(3)]
    p = jnp.stack(taps, axis=1)                 # (Cin, 9, B, H, W); K = c*9 + dy*3+dx
    return p.reshape(Cin * 9, B * H * W)


def _pick_n_tile(n, max_tile=16384):
    """Largest multiple-of-128 divisor of n capped at max_tile; n itself if none."""
    if n <= max_tile:
        return n
    t = (max_tile // 128) * 128
    while t >= 128:
        if n % t == 0:
            return t
        t -= 128
    return n


def conv_relu_bn(x_cbhw, w, b, gamma, beta, mean, var, eps=1e-5):
    """x_cbhw: (Cin, B, H, W) bf16.  w: (Cout, Cin, 3, 3) PyTorch layout.
    Returns (Cout, B, H, W) bf16."""
    Cin, B, H, W = x_cbhw.shape
    Cout = w.shape[0]
    BHW = B * H * W
    K9 = Cin * 9
    K9p = _round_up(K9, 16)                     # clean bf16 sublane packing

    patches = _im2col_cbhw(x_cbhw)              # (K9, BHW) bf16
    w_mat = w.reshape(Cout, K9).astype(jnp.bfloat16)
    if K9p != K9:                               # zero rows/cols contribute 0
        patches = jnp.pad(patches, ((0, K9p - K9), (0, 0)))
        w_mat = jnp.pad(w_mat, ((0, 0), (0, K9p - K9)))

    inv = jax.lax.rsqrt(var.astype(jnp.float32) + eps)        # fold BN (eval)
    s = (gamma * inv).reshape(Cout, 1).astype(jnp.float32)
    t = (beta - mean * gamma * inv).reshape(Cout, 1).astype(jnp.float32)
    bb = b.reshape(Cout, 1).astype(jnp.float32)

    tn = _pick_n_tile(BHW)
    grid_n = BHW // tn

    out = pl.pallas_call(
        _conv_kernel,
        out_shape=jax.ShapeDtypeStruct((Cout, BHW), jnp.bfloat16),
        grid_spec=pltpu.PrefetchScalarGridSpec(
            num_scalar_prefetch=0,
            grid=(grid_n,),
            in_specs=[
                pl.BlockSpec((K9p, tn), lambda j: (0, j)),
                pl.BlockSpec((Cout, K9p), lambda j: (0, 0)),
                pl.BlockSpec((Cout, 1), lambda j: (0, 0)),
                pl.BlockSpec((Cout, 1), lambda j: (0, 0)),
                pl.BlockSpec((Cout, 1), lambda j: (0, 0)),
            ],
            out_specs=pl.BlockSpec((Cout, tn), lambda j: (0, j)),
        ),
        compiler_params=pltpu.CompilerParams(
            dimension_semantics=("parallel",),
            vmem_limit_bytes=32 << 20,
        ),
    )(patches, w_mat, bb, s, t)
    return out.reshape(Cout, B, H, W)


# ----------------------------------------------------------------------------
# Fused 3-layer MLP.  The fc1 reduction (K) axis is gridded ('arbitrary',
# reduction last) with a f32 VMEM accumulator; fc2/fc3 run in the finalize
# step.  Weights are bf16, accumulation is f32.  D is zero-padded up to a
# multiple of a large K tile so the dominant fc1 weight stream uses big DMAs.
# ----------------------------------------------------------------------------
def _mlp_kernel(x_ref, w1_ref, b1_ref, w2_ref, b2_ref, w3_ref, b3_ref,
                out_ref, acc_ref):
    k = pl.program_id(0)

    @pl.when(k == 0)
    def _():
        acc_ref[...] = jnp.zeros_like(acc_ref)

    acc_ref[...] += jnp.dot(x_ref[...], w1_ref[...],
                            preferred_element_type=jnp.float32)

    @pl.when(k == pl.num_programs(0) - 1)
    def _():
        h = jnp.maximum(acc_ref[...] + b1_ref[...], 0.0)
        h = jnp.dot(h.astype(w2_ref.dtype), w2_ref[...],
                    preferred_element_type=jnp.float32) + b2_ref[...]
        h = jnp.maximum(h, 0.0)
        out_ref[...] = (jnp.dot(h.astype(w3_ref.dtype), w3_ref[...],
                                preferred_element_type=jnp.float32)
                        + b3_ref[...])


def _mlp_config():
    """Per-generation fc1 K-tile cap and VMEM budget.
    v5e/v6e (128 MiB VMEM): 24K-row tiles + ~100 MiB budget -> near HBM roofline.
    v7x (64 MiB VMEM) / unknown: 8K-row tiles, stay <= 48 MiB (no spill risk)."""
    try:
        cap = pltpu.get_tpu_info().vmem_capacity_bytes
    except Exception:
        cap = 64 << 20
    if cap >= (100 << 20):
        return 24576, 100 << 20
    return 8192, 48 << 20


def mlp(x, w1, b1, w2, b2, w3, b3):
    B, D = x.shape
    H1, H2, O = w1.shape[1], w2.shape[1], w3.shape[1]

    max_tk, vmem_limit = _mlp_config()
    tk = min(max_tk, _round_up(D, 512))          # multiple of 512 (lane/sublane clean)
    D_pad = _round_up(D, tk)
    kt = D_pad // tk

    x = x.astype(jnp.bfloat16)
    w1 = w1.astype(jnp.bfloat16)
    w2 = w2.astype(jnp.bfloat16)
    w3 = w3.astype(jnp.bfloat16)
    if D_pad != D:
        # Zero rows/cols contribute 0 to the dot, so results are unchanged.
        # TODO(synk): hoist the w1 pad into one-time weight preprocessing so the
        # big weight is not re-written every call.
        x = jnp.pad(x, ((0, 0), (0, D_pad - D)))
        w1 = jnp.pad(w1, ((0, D_pad - D), (0, 0)))

    # TODO(synk): on v7x, split the K reduction across the 2 TensorCores
    # (leading 'parallel' axis + tiny combine kernel) to use both DMA paths.
    # TODO(synk): if the trace shows gaps between w1 tile DMAs, add
    # pipeline_mode=pl.Buffered(3) on the w1 spec where VMEM headroom allows.
    return pl.pallas_call(
        _mlp_kernel,
        out_shape=jax.ShapeDtypeStruct((B, O), jnp.float32),
        grid_spec=pltpu.PrefetchScalarGridSpec(
            num_scalar_prefetch=0,
            grid=(kt,),
            in_specs=[
                pl.BlockSpec((B, tk), lambda k: (0, k)),
                pl.BlockSpec((tk, H1), lambda k: (k, 0)),
                pl.BlockSpec((1, H1), lambda k: (0, 0)),
                pl.BlockSpec((H1, H2), lambda k: (0, 0)),
                pl.BlockSpec((1, H2), lambda k: (0, 0)),
                pl.BlockSpec((H2, O), lambda k: (0, 0)),
                pl.BlockSpec((1, O), lambda k: (0, 0)),
            ],
            out_specs=pl.BlockSpec((B, O), lambda k: (0, 0)),
            scratch_shapes=[pltpu.VMEM((B, H1), jnp.float32)],
        ),
        compiler_params=pltpu.CompilerParams(
            dimension_semantics=("arbitrary",),
            vmem_limit_bytes=vmem_limit,
        ),
    )(x, w1, b1.reshape(1, -1).astype(jnp.float32),
      w2, b2.reshape(1, -1).astype(jnp.float32),
      w3, b3.reshape(1, -1).astype(jnp.float32))


# ----------------------------------------------------------------------------
# Parameter construction (deterministic, synthetic) and full forward.
# ----------------------------------------------------------------------------
def init_params(key, flat_dim):
    ks = jax.random.split(key, 12)

    def conv_block(kw, kb, cin, cout):
        w = jax.random.normal(kw, (cout, cin, 3, 3), jnp.float32) * 0.1
        b = jax.random.normal(kb, (cout,), jnp.float32) * 0.1
        # BatchNorm2d defaults: gamma=1, beta=0, running_mean=0, running_var=1
        return dict(w=w, b=b,
                    gamma=jnp.ones((cout,), jnp.float32),
                    beta=jnp.zeros((cout,), jnp.float32),
                    mean=jnp.zeros((cout,), jnp.float32),
                    var=jnp.ones((cout,), jnp.float32))

    return dict(
        conv1=conv_block(ks[0], ks[1], 3, 6),
        conv2=conv_block(ks[2], ks[3], 6, 12),
        conv3=conv_block(ks[4], ks[5], 12, 24),
        # Linear weights stored as (in, out) = PyTorch W.T
        fc1_w=jax.random.normal(ks[6], (flat_dim, 500), jnp.float32) * 0.01,
        fc1_b=jax.random.normal(ks[7], (500,), jnp.float32) * 0.01,
        fc2_w=jax.random.normal(ks[8], (500, 500), jnp.float32) * 0.01,
        fc2_b=jax.random.normal(ks[9], (500,), jnp.float32) * 0.01,
        fc3_w=jax.random.normal(ks[10], (500, 5), jnp.float32) * 0.01,
        fc3_b=jax.random.normal(ks[11], (500, 5)[1:], jnp.float32) * 0.01
        if False else jax.random.normal(ks[11], (5,), jnp.float32) * 0.01,
    )


def forward_once(params, x_nchw):
    # Channel-major batched layout (C, B, H, W): the im2col glue needs no
    # transposes between conv layers and the conv matmul output stays
    # lane-dense across the whole batch.
    x = jnp.transpose(x_nchw, (1, 0, 2, 3)).astype(jnp.bfloat16)
    for name in ("conv1", "conv2", "conv3"):
        p = params[name]
        x = conv_relu_bn(x, p["w"], p["b"], p["gamma"], p["beta"],
                         p["mean"], p["var"])
    # (Cout, B, H, W) -> NCHW flatten, matching PyTorch .view(batch, -1).
    # This one small bf16 transpose is the only layout shuffle in the stack.
    B = x.shape[1]
    x = jnp.transpose(x, (1, 0, 2, 3)).reshape(B, -1)
    return mlp(x, params["fc1_w"], params["fc1_b"],
               params["fc2_w"], params["fc2_b"],
               params["fc3_w"], params["fc3_b"])


@jax.jit
def net_forward(params, input1, input2):
    n = input1.shape[0]
    # Run both siamese branches as one batch so FC weights stream from HBM once.
    x = jnp.concatenate([input1, input2], axis=0)
    out = forward_once(params, x)
    return out[:n], out[n:]


if __name__ == "__main__":
    # Small shapes consistent with the module: 3 input channels, square images.
    # (Original net uses 100x100 -> 24*100*100 = 240000; here 16x16 -> 6144.)
    N, C, H, W = 2, 3, 16, 16
    flat_dim = 24 * H * W

    key = jax.random.PRNGKey(0)
    kp, k1, k2 = jax.random.split(key, 3)
    params = init_params(kp, flat_dim)
    input1 = jax.random.normal(k1, (N, C, H, W), jnp.float32)
    input2 = jax.random.normal(k2, (N, C, H, W), jnp.float32)

    out1, out2 = net_forward(params, input1, input2)
    out1 = jax.block_until_ready(out1)
    out2 = jax.block_until_ready(out2)

    assert out1.shape == (N, 5) and out2.shape == (N, 5)
    assert jnp.all(jnp.isfinite(out1)) and jnp.all(jnp.isfinite(out2))
    print("KERNEL_OK")
</pallas_src>

<mosaic_0001>
module attributes {stable_mosaic.version = 11 : i64} {
  func.func @_conv_kernel(%arg0: i32, %arg1: memref<32x1024xbf16, #tpu.memory_space<vmem>>, %arg2: memref<6x32xbf16, #tpu.memory_space<vmem>>, %arg3: memref<6x1xf32, #tpu.memory_space<vmem>>, %arg4: memref<6x1xf32, #tpu.memory_space<vmem>>, %arg5: memref<6x1xf32, #tpu.memory_space<vmem>>, %arg6: memref<6x1024xbf16, #tpu.memory_space<vmem>>) attributes {dimension_semantics = [#tpu.dimension_semantics<parallel>], iteration_bounds = array<i64: 1>, scalar_prefetch = 0 : i64, scratch_operands = 0 : i64, tpu.core_type = #tpu.core_type<tc>, window_params = [{transform_indices = @transform_0, window_bounds = array<i64: 32, 1024>}, {pipeline_mode = #tpu.pipeline_mode<synchronous>, transform_indices = @transform_1, window_bounds = array<i64: 6, 32>}, {pipeline_mode = #tpu.pipeline_mode<synchronous>, transform_indices = @transform_2, window_bounds = array<i64: 6, 1>}, {pipeline_mode = #tpu.pipeline_mode<synchronous>, transform_indices = @transform_3, window_bounds = array<i64: 6, 1>}, {pipeline_mode = #tpu.pipeline_mode<synchronous>, transform_indices = @transform_4, window_bounds = array<i64: 6, 1>}, {transform_indices = @transform_5, window_bounds = array<i64: 6, 1024>}]} {
    %c0 = arith.constant 0 : index
    %c0_0 = arith.constant 0 : index
    %0 = vector.load %arg2[%c0, %c0_0] : memref<6x32xbf16, #tpu.memory_space<vmem>>, vector<6x32xbf16>
    %c0_1 = arith.constant 0 : index
    %c0_2 = arith.constant 0 : index
    %1 = vector.load %arg1[%c0_1, %c0_2] : memref<32x1024xbf16, #tpu.memory_space<vmem>>, vector<32x1024xbf16>
    %cst = arith.constant dense<0.000000e+00> : vector<6x1024xf32>
    %2 = tpu.matmul %0, %1, %cst {dimension_numbers = #tpu.dot_dimension_numbers<[1], [0], [0], [1], [0, 0, 1, 1], [], []>} : vector<6x32xbf16>, vector<32x1024xbf16>, vector<6x1024xf32> -> vector<6x1024xf32>
    %c0_3 = arith.constant 0 : index
    %c0_4 = arith.constant 0 : index
    %3 = vector.load %arg3[%c0_3, %c0_4] : memref<6x1xf32, #tpu.memory_space<vmem>>, vector<6x1xf32>
    %4 = vector.broadcast %3 : vector<6x1xf32> to vector<6x1024xf32>
    %5 = arith.addf %2, %4 : vector<6x1024xf32>
    %cst_5 = arith.constant 0.000000e+00 : f32
    %6 = vector.broadcast %cst_5 : f32 to vector<6x1024xf32>
    %7 = arith.maximumf %5, %6 : vector<6x1024xf32>
    %c0_6 = arith.constant 0 : index
    %c0_7 = arith.constant 0 : index
    %8 = vector.load %arg4[%c0_6, %c0_7] : memref<6x1xf32, #tpu.memory_space<vmem>>, vector<6x1xf32>
    %9 = vector.broadcast %8 : vector<6x1xf32> to vector<6x1024xf32>
    %10 = arith.mulf %7, %9 : vector<6x1024xf32>
    %c0_8 = arith.constant 0 : index
    %c0_9 = arith.constant 0 : index
    %11 = vector.load %arg5[%c0_8, %c0_9] : memref<6x1xf32, #tpu.memory_space<vmem>>, vector<6x1xf32>
    %12 = vector.broadcast %11 : vector<6x1xf32> to vector<6x1024xf32>
    %13 = arith.addf %10, %12 : vector<6x1024xf32>
    %14 = arith.truncf %13 : vector<6x1024xf32> to vector<6x1024xbf16>
    %c0_10 = arith.constant 0 : index
    %c0_11 = arith.constant 0 : index
    %15 = vector.load %arg6[%c0_10, %c0_11] : memref<6x1024xbf16, #tpu.memory_space<vmem>>, vector<6x1024xbf16>
    tpu.vector_store %arg6[%c0_10, %c0_11], %14 {strides = array<i32>} : memref<6x1024xbf16, #tpu.memory_space<vmem>>, vector<6x1024xbf16>,
    return
  }
  func.func @transform_0(%arg0: i32) -> (i32, i32) {
    %c0_i32 = arith.constant 0 : i32
    %c0_i32_0 = arith.constant 0 : i32
    return %c0_i32, %arg0 : i32, i32
  }
  func.func @transform_1(%arg0: i32) -> (i32, i32) {
    %c0_i32 = arith.constant 0 : i32
    %c0_i32_0 = arith.constant 0 : i32
    %c0_i32_1 = arith.constant 0 : i32
    return %c0_i32, %c0_i32_0 : i32, i32
  }
  func.func @transform_2(%arg0: i32) -> (i32, i32) {
    %c0_i32 = arith.constant 0 : i32
    %c0_i32_0 = arith.constant 0 : i32
    %c0_i32_1 = arith.constant 0 : i32
    return %c0_i32, %c0_i32_0 : i32, i32
  }
  func.func @transform_3(%arg0: i32) -> (i32, i32) {
    %c0_i32 = arith.constant 0 : i32
    %c0_i32_0 = arith.constant 0 : i32
    %c0_i32_1 = arith.constant 0 : i32
    return %c0_i32, %c0_i32_0 : i32, i32
  }
  func.func @transform_4(%arg0: i32) -> (i32, i32) {
    %c0_i32 = arith.constant 0 : i32
    %c0_i32_0 = arith.constant 0 : i32
    %c0_i32_1 = arith.constant 0 : i32
    return %c0_i32, %c0_i32_0 : i32, i32
  }
  func.func @transform_5(%arg0: i32) -> (i32, i32) {
    %c0_i32 = arith.constant 0 : i32
    %c0_i32_0 = arith.constant 0 : i32
    return %c0_i32, %arg0 : i32, i32
  }
}

module attributes {stable_mosaic.version = 11 : i64} {
  func.func @_conv_kernel(%arg0: i32, %arg1: memref<64x1024xbf16, #tpu.memory_space<vmem>>, %arg2: memref<12x64xbf16, #tpu.memory_space<vmem>>, %arg3: memref<12x1xf32, #tpu.memory_space<vmem>>, %arg4: memref<12x1xf32, #tpu.memory_space<vmem>>, %arg5: memref<12x1xf32, #tpu.memory_space<vmem>>, %arg6: memref<12x1024xbf16, #tpu.memory_space<vmem>>) attributes {dimension_semantics = [#tpu.dimension_semantics<parallel>], iteration_bounds = array<i64: 1>, scalar_prefetch = 0 : i64, scratch_operands = 0 : i64, tpu.core_type = #tpu.core_type<tc>, window_params = [{transform_indices = @transform_0, window_bounds = array<i64: 64, 1024>}, {pipeline_mode = #tpu.pipeline_mode<synchronous>, transform_indices = @transform_1, window_bounds = array<i64: 12, 64>}, {pipeline_mode = #tpu.pipeline_mode<synchronous>, transform_indices = @transform_2, window_bounds = array<i64: 12, 1>}, {pipeline_mode = #tpu.pipeline_mode<synchronous>, transform_indices = @transform_3, window_bounds = array<i64: 12, 1>}, {pipeline_mode = #tpu.pipeline_mode<synchronous>, transform_indices = @transform_4, window_bounds = array<i64: 12, 1>}, {transform_indices = @transform_5, window_bounds = array<i64: 12, 1024>}]} {
    %c0 = arith.constant 0 : index
    %c0_0 = arith.constant 0 : index
    %0 = vector.load %arg2[%c0, %c0_0] : memref<12x64xbf16, #tpu.memory_space<vmem>>, vector<12x64xbf16>
    %c0_1 = arith.constant 0 : index
    %c0_2 = arith.constant 0 : index
    %1 = vector.load %arg1[%c0_1, %c0_2] : memref<64x1024xbf16, #tpu.memory_space<vmem>>, vector<64x1024xbf16>
    %cst = arith.constant dense<0.000000e+00> : vector<12x1024xf32>
    %2 = tpu.matmul %0, %1, %cst {dimension_numbers = #tpu.dot_dimension_numbers<[1], [0], [0], [1], [0, 0, 1, 1], [], []>} : vector<12x64xbf16>, vector<64x1024xbf16>, vector<12x1024xf32> -> vector<12x1024xf32>
    %c0_3 = arith.constant 0 : index
    %c0_4 = arith.constant 0 : index
    %3 = vector.load %arg3[%c0_3, %c0_4] : memref<12x1xf32, #tpu.memory_space<vmem>>, vector<12x1xf32>
    %4 = vector.broadcast %3 : vector<12x1xf32> to vector<12x1024xf32>
    %5 = arith.addf %2, %4 : vector<12x1024xf32>
    %cst_5 = arith.constant 0.000000e+00 : f32
    %6 = vector.broadcast %cst_5 : f32 to vector<12x1024xf32>
    %7 = arith.maximumf %5, %6 : vector<12x1024xf32>
    %c0_6 = arith.constant 0 : index
    %c0_7 = arith.constant 0 : index
    %8 = vector.load %arg4[%c0_6, %c0_7] : memref<12x1xf32, #tpu.memory_space<vmem>>, vector<12x1xf32>
    %9 = vector.broadcast %8 : vector<12x1xf32> to vector<12x1024xf32>
    %10 = arith.mulf %7, %9 : vector<12x1024xf32>
    %c0_8 = arith.constant 0 : index
    %c0_9 = arith.constant 0 : index
    %11 = vector.load %arg5[%c0_8, %c0_9] : memref<12x1xf32, #tpu.memory_space<vmem>>, vector<12x1xf32>
    %12 = vector.broadcast %11 : vector<12x1xf32> to vector<12x1024xf32>
    %13 = arith.addf %10, %12 : vector<12x1024xf32>
    %14 = arith.truncf %13 : vector<12x1024xf32> to vector<12x1024xbf16>
    %c0_10 = arith.constant 0 : index
    %c0_11 = arith.constant 0 : index
    %15 = vector.load %arg6[%c0_10, %c0_11] : memref<12x1024xbf16, #tpu.memory_space<vmem>>, vector<12x1024xbf16>
    tpu.vector_store %arg6[%c0_10, %c0_11], %14 {strides = array<i32>} : memref<12x1024xbf16, #tpu.memory_space<vmem>>, vector<12x1024xbf16>,
    return
  }
  func.func @transform_0(%arg0: i32) -> (i32, i32) {
    %c0_i32 = arith.constant 0 : i32
    %c0_i32_0 = arith.constant 0 : i32
    return %c0_i32, %arg0 : i32, i32
  }
  func.func @transform_1(%arg0: i32) -> (i32, i32) {
    %c0_i32 = arith.constant 0 : i32
    %c0_i32_0 = arith.constant 0 : i32
    %c0_i32_1 = arith.constant 0 : i32
    return %c0_i32, %c0_i32_0 : i32, i32
  }
  func.func @transform_2(%arg0: i32) -> (i32, i32) {
    %c0_i32 = arith.constant 0 : i32
    %c0_i32_0 = arith.constant 0 : i32
    %c0_i32_1 = arith.constant 0 : i32
    return %c0_i32, %c0_i32_0 : i32, i32
  }
  func.func @transform_3(%arg0: i32) -> (i32, i32) {
    %c0_i32 = arith.constant 0 : i32
    %c0_i32_0 = arith.constant 0 : i32
    %c0_i32_1 = arith.constant 0 : i32
    return %c0_i32, %c0_i32_0 : i32, i32
  }
  func.func @transform_4(%arg0: i32) -> (i32, i32) {
    %c0_i32 = arith.constant 0 : i32
    %c0_i32_0 = arith.constant 0 : i32
    %c0_i32_1 = arith.constant 0 : i32
    return %c0_i32, %c0_i32_0 : i32, i32
  }
  func.func @transform_5(%arg0: i32) -> (i32, i32) {
    %c0_i32 = arith.constant 0 : i32
    %c0_i32_0 = arith.constant 0 : i32
    return %c0_i32, %arg0 : i32, i32
  }
}

module attributes {stable_mosaic.version = 11 : i64} {
  func.func @_conv_kernel(%arg0: i32, %arg1: memref<112x1024xbf16, #tpu.memory_space<vmem>>, %arg2: memref<24x112xbf16, #tpu.memory_space<vmem>>, %arg3: memref<24x1xf32, #tpu.memory_space<vmem>>, %arg4: memref<24x1xf32, #tpu.memory_space<vmem>>, %arg5: memref<24x1xf32, #tpu.memory_space<vmem>>, %arg6: memref<24x1024xbf16, #tpu.memory_space<vmem>>) attributes {dimension_semantics = [#tpu.dimension_semantics<parallel>], iteration_bounds = array<i64: 1>, scalar_prefetch = 0 : i64, scratch_operands = 0 : i64, tpu.core_type = #tpu.core_type<tc>, window_params = [{transform_indices = @transform_0, window_bounds = array<i64: 112, 1024>}, {pipeline_mode = #tpu.pipeline_mode<synchronous>, transform_indices = @transform_1, window_bounds = array<i64: 24, 112>}, {pipeline_mode = #tpu.pipeline_mode<synchronous>, transform_indices = @transform_2, window_bounds = array<i64: 24, 1>}, {pipeline_mode = #tpu.pipeline_mode<synchronous>, transform_indices = @transform_3, window_bounds = array<i64: 24, 1>}, {pipeline_mode = #tpu.pipeline_mode<synchronous>, transform_indices = @transform_4, window_bounds = array<i64: 24, 1>}, {transform_indices = @transform_5, window_bounds = array<i64: 24, 1024>}]} {
    %c0 = arith.constant 0 : index
    %c0_0 = arith.constant 0 : index
    %0 = vector.load %arg2[%c0, %c0_0] : memref<24x112xbf16, #tpu.memory_space<vmem>>, vector<24x112xbf16>
    %c0_1 = arith.constant 0 : index
    %c0_2 = arith.constant 0 : index
    %1 = vector.load %arg1[%c0_1, %c0_2] : memref<112x1024xbf16, #tpu.memory_space<vmem>>, vector<112x1024xbf16>
    %cst = arith.constant dense<0.000000e+00> : vector<24x1024xf32>
    %2 = tpu.matmul %0, %1, %cst {dimension_numbers = #tpu.dot_dimension_numbers<[1], [0], [0], [1], [0, 0, 1, 1], [], []>} : vector<24x112xbf16>, vector<112x1024xbf16>, vector<24x1024xf32> -> vector<24x1024xf32>
    %c0_3 = arith.constant 0 : index
    %c0_4 = arith.constant 0 : index
    %3 = vector.load %arg3[%c0_3, %c0_4] : memref<24x1xf32, #tpu.memory_space<vmem>>, vector<24x1xf32>
    %4 = vector.broadcast %3 : vector<24x1xf32> to vector<24x1024xf32>
    %5 = arith.addf %2, %4 : vector<24x1024xf32>
    %cst_5 = arith.constant 0.000000e+00 : f32
    %6 = vector.broadcast %cst_5 : f32 to vector<24x1024xf32>
    %7 = arith.maximumf %5, %6 : vector<24x1024xf32>
    %c0_6 = arith.constant 0 : index
    %c0_7 = arith.constant 0 : index
    %8 = vector.load %arg4[%c0_6, %c0_7] : memref<24x1xf32, #tpu.memory_space<vmem>>, vector<24x1xf32>
    %9 = vector.broadcast %8 : vector<24x1xf32> to vector<24x1024xf32>
    %10 = arith.mulf %7, %9 : vector<24x1024xf32>
    %c0_8 = arith.constant 0 : index
    %c0_9 = arith.constant 0 : index
    %11 = vector.load %arg5[%c0_8, %c0_9] : memref<24x1xf32, #tpu.memory_space<vmem>>, vector<24x1xf32>
    %12 = vector.broadcast %11 : vector<24x1xf32> to vector<24x1024xf32>
    %13 = arith.addf %10, %12 : vector<24x1024xf32>
    %14 = arith.truncf %13 : vector<24x1024xf32> to vector<24x1024xbf16>
    %c0_10 = arith.constant 0 : index
    %c0_11 = arith.constant 0 : index
    %15 = vector.load %arg6[%c0_10, %c0_11] : memref<24x1024xbf16, #tpu.memory_space<vmem>>, vector<24x1024xbf16>
    tpu.vector_store %arg6[%c0_10, %c0_11], %14 {strides = array<i32>} : memref<24x1024xbf16, #tpu.memory_space<vmem>>, vector<24x1024xbf16>,
    return
  }
  func.func @transform_0(%arg0: i32) -> (i32, i32) {
    %c0_i32 = arith.constant 0 : i32
    %c0_i32_0 = arith.constant 0 : i32
    return %c0_i32, %arg0 : i32, i32
  }
  func.func @transform_1(%arg0: i32) -> (i32, i32) {
    %c0_i32 = arith.constant 0 : i32
    %c0_i32_0 = arith.constant 0 : i32
    %c0_i32_1 = arith.constant 0 : i32
    return %c0_i32, %c0_i32_0 : i32, i32
  }
  func.func @transform_2(%arg0: i32) -> (i32, i32) {
    %c0_i32 = arith.constant 0 : i32
    %c0_i32_0 = arith.constant 0 : i32
    %c0_i32_1 = arith.constant 0 : i32
    return %c0_i32, %c0_i32_0 : i32, i32
  }
  func.func @transform_3(%arg0: i32) -> (i32, i32) {
    %c0_i32 = arith.constant 0 : i32
    %c0_i32_0 = arith.constant 0 : i32
    %c0_i32_1 = arith.constant 0 : i32
    return %c0_i32, %c0_i32_0 : i32, i32
  }
  func.func @transform_4(%arg0: i32) -> (i32, i32) {
    %c0_i32 = arith.constant 0 : i32
    %c0_i32_0 = arith.constant 0 : i32
    %c0_i32_1 = arith.constant 0 : i32
    return %c0_i32, %c0_i32_0 : i32, i32
  }
  func.func @transform_5(%arg0: i32) -> (i32, i32) {
    %c0_i32 = arith.constant 0 : i32
    %c0_i32_0 = arith.constant 0 : i32
    return %c0_i32, %arg0 : i32, i32
  }
}

module attributes {stable_mosaic.version = 11 : i64} {
  func.func @_mlp_kernel(%arg0: i32, %arg1: memref<4x6144xbf16, #tpu.memory_space<vmem>>, %arg2: memref<6144x500xbf16, #tpu.memory_space<vmem>>, %arg3: memref<1x500xf32, #tpu.memory_space<vmem>>, %arg4: memref<500x500xbf16, #tpu.memory_space<vmem>>, %arg5: memref<1x500xf32, #tpu.memory_space<vmem>>, %arg6: memref<500x5xbf16, #tpu.memory_space<vmem>>, %arg7: memref<1x5xf32, #tpu.memory_space<vmem>>, %arg8: memref<4x5xf32, #tpu.memory_space<vmem>>, %arg9: memref<4x500xf32, #tpu.memory_space<vmem>>) attributes {dimension_semantics = [#tpu.dimension_semantics<arbitrary>], iteration_bounds = array<i64: 1>, scalar_prefetch = 0 : i64, scratch_operands = 1 : i64, tpu.core_type = #tpu.core_type<tc>, window_params = [{transform_indices = @transform_0, window_bounds = array<i64: 4, 6144>}, {transform_indices = @transform_1, window_bounds = array<i64: 6144, 500>}, {pipeline_mode = #tpu.pipeline_mode<synchronous>, transform_indices = @transform_2, window_bounds = array<i64: 1, 500>}, {pipeline_mode = #tpu.pipeline_mode<synchronous>, transform_indices = @transform_3, window_bounds = array<i64: 500, 500>}, {pipeline_mode = #tpu.pipeline_mode<synchronous>, transform_indices = @transform_4, window_bounds = array<i64: 1, 500>}, {pipeline_mode = #tpu.pipeline_mode<synchronous>, transform_indices = @transform_5, window_bounds = array<i64: 500, 5>}, {pipeline_mode = #tpu.pipeline_mode<synchronous>, transform_indices = @transform_6, window_bounds = array<i64: 1, 5>}, {pipeline_mode = #tpu.pipeline_mode<synchronous>, transform_indices = @transform_7, window_bounds = array<i64: 4, 5>}]} {
    %c0_i32 = arith.constant 0 : i32
    %0 = arith.cmpi eq, %arg0, %c0_i32 : i32
    %1 = arith.extui %0 : i1 to i32
    %c0_i32_0 = arith.constant 0 : i32
    %2 = arith.cmpi ne, %1, %c0_i32_0 : i32
    scf.if %2 {
      %cst_10 = arith.constant 0.000000e+00 : f32
      %12 = vector.broadcast %cst_10 : f32 to vector<4x500xf32>
      %c0_11 = arith.constant 0 : index
      %c0_12 = arith.constant 0 : index
      %13 = vector.load %arg9[%c0_11, %c0_12] : memref<4x500xf32, #tpu.memory_space<vmem>>, vector<4x500xf32>
      tpu.vector_store %arg9[%c0_11, %c0_12], %12 {strides = array<i32>} : memref<4x500xf32, #tpu.memory_space<vmem>>, vector<4x500xf32>,
    } else {
    }
    %c0 = arith.constant 0 : index
    %c0_1 = arith.constant 0 : index
    %3 = vector.load %arg9[%c0, %c0_1] : memref<4x500xf32, #tpu.memory_space<vmem>>, vector<4x500xf32>
    %c0_2 = arith.constant 0 : index
    %c0_3 = arith.constant 0 : index
    %4 = vector.load %arg1[%c0_2, %c0_3] : memref<4x6144xbf16, #tpu.memory_space<vmem>>, vector<4x6144xbf16>
    %c0_4 = arith.constant 0 : index
    %c0_5 = arith.constant 0 : index
    %5 = vector.load %arg2[%c0_4, %c0_5] : memref<6144x500xbf16, #tpu.memory_space<vmem>>, vector<6144x500xbf16>
    %cst = arith.constant dense<0.000000e+00> : vector<4x500xf32>
    %6 = tpu.matmul %4, %5, %cst {dimension_numbers = #tpu.dot_dimension_numbers<[1], [0], [0], [1], [0, 0, 1, 1], [], []>} : vector<4x6144xbf16>, vector<6144x500xbf16>, vector<4x500xf32> -> vector<4x500xf32>
    %7 = arith.addf %3, %6 : vector<4x500xf32>
    %c0_6 = arith.constant 0 : index
    %c0_7 = arith.constant 0 : index
    %8 = vector.load %arg9[%c0_6, %c0_7] : memref<4x500xf32, #tpu.memory_space<vmem>>, vector<4x500xf32>
    tpu.vector_store %arg9[%c0_6, %c0_7], %7 {strides = array<i32>} : memref<4x500xf32, #tpu.memory_space<vmem>>, vector<4x500xf32>,
    %c0_i32_8 = arith.constant 0 : i32
    %9 = arith.cmpi eq, %arg0, %c0_i32_8 : i32
    %10 = arith.extui %9 : i1 to i32
    %c0_i32_9 = arith.constant 0 : i32
    %11 = arith.cmpi ne, %10, %c0_i32_9 : i32
    scf.if %11 {
      %c0_10 = arith.constant 0 : index
      %c0_11 = arith.constant 0 : index
      %12 = vector.load %arg9[%c0_10, %c0_11] : memref<4x500xf32, #tpu.memory_space<vmem>>, vector<4x500xf32>
      %c0_12 = arith.constant 0 : index
      %c0_13 = arith.constant 0 : index
      %13 = vector.load %arg3[%c0_12, %c0_13] : memref<1x500xf32, #tpu.memory_space<vmem>>, vector<1x500xf32>
      %14 = vector.broadcast %13 : vector<1x500xf32> to vector<4x500xf32>
      %15 = arith.addf %12, %14 : vector<4x500xf32>
      %cst_14 = arith.constant 0.000000e+00 : f32
      %16 = vector.broadcast %cst_14 : f32 to vector<4x500xf32>
      %17 = arith.maximumf %15, %16 : vector<4x500xf32>
      %18 = arith.truncf %17 : vector<4x500xf32> to vector<4x500xbf16>
      %c0_15 = arith.constant 0 : index
      %c0_16 = arith.constant 0 : index
      %19 = vector.load %arg4[%c0_15, %c0_16] : memref<500x500xbf16, #tpu.memory_space<vmem>>, vector<500x500xbf16>
      %cst_17 = arith.constant dense<0.000000e+00> : vector<4x500xf32>
      %20 = tpu.matmul %18, %19, %cst_17 {dimension_numbers = #tpu.dot_dimension_numbers<[1], [0], [0], [1], [0, 0, 1, 1], [], []>} : vector<4x500xbf16>, vector<500x500xbf16>, vector<4x500xf32> -> vector<4x500xf32>
      %c0_18 = arith.constant 0 : index
      %c0_19 = arith.constant 0 : index
      %21 = vector.load %arg5[%c0_18, %c0_19] : memref<1x500xf32, #tpu.memory_space<vmem>>, vector<1x500xf32>
      %22 = vector.broadcast %21 : vector<1x500xf32> to vector<4x500xf32>
      %23 = arith.addf %20, %22 : vector<4x500xf32>
      %cst_20 = arith.constant 0.000000e+00 : f32
      %24 = vector.broadcast %cst_20 : f32 to vector<4x500xf32>
      %25 = arith.maximumf %23, %24 : vector<4x500xf32>
      %26 = arith.truncf %25 : vector<4x500xf32> to vector<4x500xbf16>
      %c0_21 = arith.constant 0 : index
      %c0_22 = arith.constant 0 : index
      %27 = vector.load %arg6[%c0_21, %c0_22] : memref<500x5xbf16, #tpu.memory_space<vmem>>, vector<500x5xbf16>
      %cst_23 = arith.constant dense<0.000000e+00> : vector<4x5xf32>
      %28 = tpu.matmul %26, %27, %cst_23 {dimension_numbers = #tpu.dot_dimension_numbers<[1], [0], [0], [1], [0, 0, 1, 1], [], []>} : vector<4x500xbf16>, vector<500x5xbf16>, vector<4x5xf32> -> vector<4x5xf32>
      %c0_24 = arith.constant 0 : index
      %c0_25 = arith.constant 0 : index
      %29 = vector.load %arg7[%c0_24, %c0_25] : memref<1x5xf32, #tpu.memory_space<vmem>>, vector<1x5xf32>
      %30 = vector.broadcast %29 : vector<1x5xf32> to vector<4x5xf32>
      %31 = arith.addf %28, %30 : vector<4x5xf32>
      %c0_26 = arith.constant 0 : index
      %c0_27 = arith.constant 0 : index
      %32 = vector.load %arg8[%c0_26, %c0_27] : memref<4x5xf32, #tpu.memory_space<vmem>>, vector<4x5xf32>
      tpu.vector_store %arg8[%c0_26, %c0_27], %31 {strides = array<i32>} : memref<4x5xf32, #tpu.memory_space<vmem>>, vector<4x5xf32>,
    } else {
    }
    return
  }
  func.func @transform_0(%arg0: i32) -> (i32, i32) {
    %c0_i32 = arith.constant 0 : i32
    %c0_i32_0 = arith.constant 0 : i32
    return %c0_i32, %arg0 : i32, i32
  }
  func.func @transform_1(%arg0: i32) -> (i32, i32) {
    %c0_i32 = arith.constant 0 : i32
    %c0_i32_0 = arith.constant 0 : i32
    return %arg0, %c0_i32 : i32, i32
  }
  func.func @transform_2(%arg0: i32) -> (i32, i32) {
    %c0_i32 = arith.constant 0 : i32
    %c0_i32_0 = arith.constant 0 : i32
    %c0_i32_1 = arith.constant 0 : i32
    return %c0_i32, %c0_i32_0 : i32, i32
  }
  func.func @transform_3(%arg0: i32) -> (i32, i32) {
    %c0_i32 = arith.constant 0 : i32
    %c0_i32_0 = arith.constant 0 : i32
    %c0_i32_1 = arith.constant 0 : i32
    return %c0_i32, %c0_i32_0 : i32, i32
  }
  func.func @transform_4(%arg0: i32) -> (i32, i32) {
    %c0_i32 = arith.constant 0 : i32
    %c0_i32_0 = arith.constant 0 : i32
    %c0_i32_1 = arith.constant 0 : i32
    return %c0_i32, %c0_i32_0 : i32, i32
  }
  func.func @transform_5(%arg0: i32) -> (i32, i32) {
    %c0_i32 = arith.constant 0 : i32
    %c0_i32_0 = arith.constant 0 : i32
    %c0_i32_1 = arith.constant 0 : i32
    return %c0_i32, %c0_i32_0 : i32, i32
  }
  func.func @transform_6(%arg0: i32) -> (i32, i32) {
    %c0_i32 = arith.constant 0 : i32
    %c0_i32_0 = arith.constant 0 : i32
    %c0_i32_1 = arith.constant 0 : i32
    return %c0_i32, %c0_i32_0 : i32, i32
  }
  func.func @transform_7(%arg0: i32) -> (i32, i32) {
    %c0_i32 = arith.constant 0 : i32
    %c0_i32_0 = arith.constant 0 : i32
    %c0_i32_1 = arith.constant 0 : i32
    return %c0_i32, %c0_i32_0 : i32, i32
  }
}

</mosaic_0001>

<llo_original>
// kernel: net_forward.4
$region0: #{net_forward.4}
  #allocation0 [shape = 'u32[]', space=smem, size = 0x4, offset = 0x4, fixed_abs, tag = 'smem constant byte address 0x4 - core index']
  #allocation1 [shape = 'u32[72,128]{1,0:T(1,128)}', space=vmem, size = 0x9000, scoped, tag = 'internal scratch']
  %s0 = inlined_call_operand.vmem [shape: bf16[32,1024], index: 0, kind: input, shape index: {}]
  %s1 = inlined_call_operand.vmem [shape: bf16[6,32], index: 1, kind: input, shape index: {}]
  %s2 = inlined_call_operand.vmem [shape: f32[6,1], index: 2, kind: input, shape index: {}]
  %s3 = inlined_call_operand.vmem [shape: f32[6,1], index: 3, kind: input, shape index: {}]
  %s4 = inlined_call_operand.vmem [shape: f32[6,1], index: 4, kind: input, shape index: {}]
  %s5 = inlined_call_operand.vmem [shape: bf16[6,1024], index: 5, kind: output, shape index: {}]
  %s6 = sld [smem:[#allocation0]]
  $region30: #{net_forward.4} parent=0
    _
  %s8 = ssub.s32 1, %s6
  %s9 = scalar_select 0, %s8, %s6
  // Predicated region
  $region2: #{net_forward.4} parent=0 // pred_check
    _
  $region3: #{net_forward.4} parent=0 // pred_check_branch
    %11 = sbr.rel (0) target = $region5
  $region4: #{net_forward.4} parent=0 // pred_region
    _
  $region5: #{net_forward.4} parent=0 // pred_fallthru
    _
  // Predicated region
  $region6: #{net_forward.4} parent=0 // pred_check
    _
  $region7: #{net_forward.4} parent=0 // pred_check_branch
    %13 = sbr.rel (0) target = $region9
  $region8: #{net_forward.4} parent=0 // pred_region
    _
  $region9: #{net_forward.4} parent=0 // pred_fallthru
    _
  // Predicated region
  $region10: #{net_forward.4} parent=0 // pred_check
    _
  $region11: #{net_forward.4} parent=0 // pred_check_branch
    %15 = sbr.rel (0) target = $region13
  $region12: #{net_forward.4} parent=0 // pred_region
    _
  $region13: #{net_forward.4} parent=0 // pred_fallthru
    _
  // Predicated region
  $region14: #{net_forward.4} parent=0 // pred_check
    _
  $region15: #{net_forward.4} parent=0 // pred_check_branch
    %17 = sbr.rel (0) target = $region17
  $region16: #{net_forward.4} parent=0 // pred_region
    _
  $region17: #{net_forward.4} parent=0 // pred_fallthru
    _
  // Predicated region
  $region18: #{net_forward.4} parent=0 // pred_check
    _
  $region19: #{net_forward.4} parent=0 // pred_check_branch
    %19 = sbr.rel (0) target = $region21
  $region20: #{net_forward.4} parent=0 // pred_region
    _
  $region21: #{net_forward.4} parent=0 // pred_fallthru
    _
  %v21 = vld [vmem:[%s1] sm:$0x7]
  %v22 = vld [vmem:[%s0] sm:$0xff]
  %v23 = vld [vmem:[%s0 + $0x8] sm:$0xff]
  %v24 = vld [vmem:[%s0 + $0x10] sm:$0xff]
  %v25 = vld [vmem:[%s0 + $0x18] sm:$0xff]
  %v26 = vld [vmem:[%s0 + $0x20] sm:$0xff]
  %v27 = vld [vmem:[%s0 + $0x28] sm:$0xff]
  %v28 = vld [vmem:[%s0 + $0x30] sm:$0xff]
  %v29 = vld [vmem:[%s0 + $0x38] sm:$0xff]
  %v30 = vld [vmem:[%s0 + $0x40] sm:$0xff]
  %v31 = vld [vmem:[%s0 + $0x48] sm:$0xff]
  %v32 = vld [vmem:[%s0 + $0x50] sm:$0xff]
  %v33 = vld [vmem:[%s0 + $0x58] sm:$0xff]
  %v34 = vld [vmem:[%s0 + $0x60] sm:$0xff]
  %v35 = vld [vmem:[%s0 + $0x68] sm:$0xff]
  %v36 = vld [vmem:[%s0 + $0x70] sm:$0xff]
  %v37 = vld [vmem:[%s0 + $0x78] sm:$0xff]
  %v38 = vld [vmem:[%s2] sm:$0x3f]
  %40 = vset.pattern.permute.xlu0 0
  %41 = vperm.xlu0 %40, %v38
  %v42 = vpop.permute.xlu0 %41
  %v60 = vunpack.c.l.b16 %v22
  %v61 = vunpack.c.h.b16 %v22
  %v62 = vunpack.c.l.b16 %v23
  %v63 = vunpack.c.h.b16 %v23
  %v64 = vunpack.c.l.b16 %v24
  %v65 = vunpack.c.h.b16 %v24
  %v66 = vunpack.c.l.b16 %v25
  %v67 = vunpack.c.h.b16 %v25
  %v68 = vunpack.c.l.b16 %v26
  %v69 = vunpack.c.h.b16 %v26
  %v70 = vunpack.c.l.b16 %v27
  %v71 = vunpack.c.h.b16 %v27
  %v72 = vunpack.c.l.b16 %v28
  %v73 = vunpack.c.h.b16 %v28
  %v74 = vunpack.c.l.b16 %v29
  %v75 = vunpack.c.h.b16 %v29
  %v76 = vunpack.c.l.b16 %v30
  %v77 = vunpack.c.h.b16 %v30
  %v78 = vunpack.c.l.b16 %v31
  %v79 = vunpack.c.h.b16 %v31
  %v80 = vunpack.c.l.b16 %v32
  %v81 = vunpack.c.h.b16 %v32
  %v82 = vunpack.c.l.b16 %v33
  %v83 = vunpack.c.h.b16 %v33
  %v84 = vunpack.c.l.b16 %v34
  %v85 = vunpack.c.h.b16 %v34
  %v86 = vunpack.c.l.b16 %v35
  %v87 = vunpack.c.h.b16 %v35
  %v88 = vunpack.c.l.b16 %v36
  %v89 = vunpack.c.h.b16 %v36
  %v90 = vunpack.c.l.b16 %v37
  %v91 = vunpack.c.h.b16 %v37
  %v92 = vpack.c.b16 %v68, %v60
  %v93 = vpack.c.b16 %v69, %v61
  %v94 = vpack.c.b16 %v70, %v62
  %v95 = vpack.c.b16 %v71, %v63
  %v96 = vpack.c.b16 %v72, %v64
  %v97 = vpack.c.b16 %v73, %v65
  %v98 = vpack.c.b16 %v74, %v66
  %v99 = vpack.c.b16 %v75, %v67
  %v100 = vpack.c.b16 %v84, %v76
  %v101 = vpack.c.b16 %v85, %v77
  %v102 = vpack.c.b16 %v86, %v78
  %v103 = vpack.c.b16 %v87, %v79
  %v104 = vpack.c.b16 %v88, %v80
  %v105 = vpack.c.b16 %v89, %v81
  %v106 = vpack.c.b16 %v90, %v82
  %v107 = vpack.c.b16 %v91, %v83
  %vm124 = vcmask 261120
  %v126 = vsel %vm124, %v21, 0
  %128 = vmatpush.bf16.msra.mxu0 0
  %129 = vmatpush.bf16.msra.mxu0 0
  %130 = vmatpush.bf16.msra.mxu0 0
  %131 = vmatpush.bf16.msra.mxu0 0
  %132 = vmatpush.bf16.msra.mxu0 0
  %133 = vmatpush.bf16.msra.mxu0 0
  %134 = vmatpush.bf16.msra.mxu0 %v100
  %135 = vmatpush.bf16.msra.mxu0 %v92
  %136 = vmatmul.bf16.gmra.mxu0 %v126
  %v137 = vpop.f32.mrf.mxu0
  %v138 = vadd.f32 %v42, %v137
  %v139 = vpop.f32.mrf.mxu0
  %140 = vdwg.mxu0
  %141 = vmatpush.bf16.msra.mxu0 0
  %142 = vmatpush.bf16.msra.mxu0 0
  %143 = vmatpush.bf16.msra.mxu0 0
  %144 = vmatpush.bf16.msra.mxu0 0
  %145 = vmatpush.bf16.msra.mxu0 0
  %146 = vmatpush.bf16.msra.mxu0 0
  %147 = vmatpush.bf16.msra.mxu0 %v101
  %148 = vmatpush.bf16.msra.mxu0 %v93
  %149 = vmatmul.bf16.gmra.mxu0 %v126
  %v150 = vpop.f32.mrf.mxu0
  %v151 = vadd.f32 %v42, %v150
  %v152 = vpop.f32.mrf.mxu0
  %153 = vdwg.mxu0
  %154 = vmatpush.bf16.msra.mxu0 0
  %155 = vmatpush.bf16.msra.mxu0 0
  %156 = vmatpush.bf16.msra.mxu0 0
  %157 = vmatpush.bf16.msra.mxu0 0
  %158 = vmatpush.bf16.msra.mxu0 0
  %159 = vmatpush.bf16.msra.mxu0 0
  %160 = vmatpush.bf16.msra.mxu0 %v102
  %161 = vmatpush.bf16.msra.mxu0 %v94
  %162 = vmatmul.bf16.gmra.mxu0 %v126
  %v163 = vpop.f32.mrf.mxu0
  %v164 = vadd.f32 %v42, %v163
  %v165 = vpop.f32.mrf.mxu0
  %166 = vdwg.mxu0
  %167 = vmatpush.bf16.msra.mxu0 0
  %168 = vmatpush.bf16.msra.mxu0 0
  %169 = vmatpush.bf16.msra.mxu0 0
  %170 = vmatpush.bf16.msra.mxu0 0
  %171 = vmatpush.bf16.msra.mxu0 0
  %172 = vmatpush.bf16.msra.mxu0 0
  %173 = vmatpush.bf16.msra.mxu0 %v103
  %174 = vmatpush.bf16.msra.mxu0 %v95
  %175 = vmatmul.bf16.gmra.mxu0 %v126
  %v176 = vpop.f32.mrf.mxu0
  %v177 = vadd.f32 %v42, %v176
  %v178 = vpop.f32.mrf.mxu0
  %179 = vdwg.mxu0
  %180 = vmatpush.bf16.msra.mxu0 0
  %181 = vmatpush.bf16.msra.mxu0 0
  %182 = vmatpush.bf16.msra.mxu0 0
  %183 = vmatpush.bf16.msra.mxu0 0
  %184 = vmatpush.bf16.msra.mxu0 0
  %185 = vmatpush.bf16.msra.mxu0 0
  %186 = vmatpush.bf16.msra.mxu0 %v104
  %187 = vmatpush.bf16.msra.mxu0 %v96
  %188 = vmatmul.bf16.gmra.mxu0 %v126
  %v189 = vpop.f32.mrf.mxu0
  %v190 = vadd.f32 %v42, %v189
  %v191 = vpop.f32.mrf.mxu0
  %192 = vdwg.mxu0
  %193 = vmatpush.bf16.msra.mxu0 0
  %194 = vmatpush.bf16.msra.mxu0 0
  %195 = vmatpush.bf16.msra.mxu0 0
  %196 = vmatpush.bf16.msra.mxu0 0
  %197 = vmatpush.bf16.msra.mxu0 0
  %198 = vmatpush.bf16.msra.mxu0 0
  %199 = vmatpush.bf16.msra.mxu0 %v105
  %200 = vmatpush.bf16.msra.mxu0 %v97
  %201 = vmatmul.bf16.gmra.mxu0 %v126
  %v202 = vpop.f32.mrf.mxu0
  %v203 = vadd.f32 %v42, %v202
  %v204 = vpop.f32.mrf.mxu0
  %205 = vdwg.mxu0
  %206 = vmatpush.bf16.msra.mxu0 0
  %207 = vmatpush.bf16.msra.mxu0 0
  %208 = vmatpush.bf16.msra.mxu0 0
  %209 = vmatpush.bf16.msra.mxu0 0
  %210 = vmatpush.bf16.msra.mxu0 0
  %211 = vmatpush.bf16.msra.mxu0 0
  %212 = vmatpush.bf16.msra.mxu0 %v106
  %213 = vmatpush.bf16.msra.mxu0 %v98
  %214 = vmatmul.bf16.gmra.mxu0 %v126
  %v215 = vpop.f32.mrf.mxu0
  %v216 = vadd.f32 %v42, %v215
  %v217 = vpop.f32.mrf.mxu0
  %218 = vdwg.mxu0
  %219 = vmatpush.bf16.msra.mxu0 0
  %220 = vmatpush.bf16.msra.mxu0 0
  %221 = vmatpush.bf16.msra.mxu0 0
  %222 = vmatpush.bf16.msra.mxu0 0
  %223 = vmatpush.bf16.msra.mxu0 0
  %224 = vmatpush.bf16.msra.mxu0 0
  %225 = vmatpush.bf16.msra.mxu0 %v107
  %226 = vmatpush.bf16.msra.mxu0 %v99
  %227 = vmatmul.bf16.gmra.mxu0 %v126
  %v228 = vpop.f32.mrf.mxu0
  %v229 = vadd.f32 %v42, %v228
  %v230 = vpop.f32.mrf.mxu0
  %231 = vdwg.mxu0
  %v232 = vmax.f32 %v138, 0.0
  %v233 = vmax.f32 %v151, 0.0
  %v234 = vmax.f32 %v164, 0.0
  %v235 = vmax.f32 %v177, 0.0
  %v236 = vmax.f32 %v190, 0.0
  %v237 = vmax.f32 %v203, 0.0
  %v238 = vmax.f32 %v216, 0.0
  %v239 = vmax.f32 %v229, 0.0
  %v240 = vld [vmem:[%s3] sm:$0x3f]
  %242 = vset.pattern.permute.xlu0 0
  %243 = vperm.xlu0 %242, %v240
  %v244 = vpop.permute.xlu0 %243
  %v246 = vmul.f32 %v232, %v244
  %v247 = vmul.f32 %v233, %v244
  %v248 = vmul.f32 %v234, %v244
  %v249 = vmul.f32 %v235, %v244
  %v250 = vmul.f32 %v236, %v244
  %v251 = vmul.f32 %v237, %v244
  %v252 = vmul.f32 %v238, %v244
  %v253 = vmul.f32 %v239, %v244
  %v254 = vld [vmem:[%s4] sm:$0x3f]
  %256 = vset.pattern.permute.xlu0 0
  %257 = vperm.xlu0 %256, %v254
  %v258 = vpop.permute.xlu0 %257
  %v260 = vadd.f32 %v246, %v258
  %v261 = vadd.f32 %v247, %v258
  %v262 = vadd.f32 %v248, %v258
  %v263 = vadd.f32 %v249, %v258
  %v264 = vadd.f32 %v250, %v258
  %v265 = vadd.f32 %v251, %v258
  %v266 = vadd.f32 %v252, %v258
  %v267 = vadd.f32 %v253, %v258
  %v268 = vpack.c.bf16 %v261, %v260
  %v269 = vpack.c.bf16 %v263, %v262
  %v270 = vpack.c.bf16 %v265, %v264
  %v271 = vpack.c.bf16 %v267, %v266
  %272 = vst [vmem:[%s5] sm:$0x77] %v268
  %273 = vst [vmem:[%s5 + $0x8] sm:$0x77] %v269
  %274 = vst [vmem:[%s5 + $0x10] sm:$0x77] %v270
  %275 = vst [vmem:[%s5 + $0x18] sm:$0x77] %v271
  // Predicated region
  $region22: #{net_forward.4} parent=0 // pred_check
    _
  $region23: #{net_forward.4} parent=0 // pred_check_branch
    %277 = sbr.rel (0) target = $region25
  $region24: #{net_forward.4} parent=0 // pred_region
    _
  $region25: #{net_forward.4} parent=0 // pred_fallthru
    _
  // Predicated region
  $region26: #{net_forward.4} parent=0 // pred_check
    _
  $region27: #{net_forward.4} parent=0 // pred_check_branch
    %279 = sbr.rel (0) target = $region29
  $region28: #{net_forward.4} parent=0 // pred_region
    _
  $region29: #{net_forward.4} parent=0 // pred_fallthru
    _

// kernel: net_forward.5
$region0: #{net_forward.5}
  #allocation0 [shape = 'u32[]', space=smem, size = 0x4, offset = 0x4, fixed_abs, tag = 'smem constant byte address 0x4 - core index']
  #allocation1 [shape = 'u32[72,128]{1,0:T(1,128)}', space=vmem, size = 0x9000, scoped, tag = 'internal scratch']
  %s0 = inlined_call_operand.vmem [shape: bf16[64,1024], index: 0, kind: input, shape index: {}]
  %s1 = inlined_call_operand.vmem [shape: bf16[12,64], index: 1, kind: input, shape index: {}]
  %s2 = inlined_call_operand.vmem [shape: f32[12,1], index: 2, kind: input, shape index: {}]
  %s3 = inlined_call_operand.vmem [shape: f32[12,1], index: 3, kind: input, shape index: {}]
  %s4 = inlined_call_operand.vmem [shape: f32[12,1], index: 4, kind: input, shape index: {}]
  %s5 = inlined_call_operand.vmem [shape: bf16[12,1024], index: 5, kind: output, shape index: {}]
  %s6 = sld [smem:[#allocation0]]
  $region30: #{net_forward.5} parent=0
    _
  %s8 = ssub.s32 1, %s6
  %s9 = scalar_select 0, %s8, %s6
  // Predicated region
  $region2: #{net_forward.5} parent=0 // pred_check
    _
  $region3: #{net_forward.5} parent=0 // pred_check_branch
    %11 = sbr.rel (0) target = $region5
  $region4: #{net_forward.5} parent=0 // pred_region
    _
  $region5: #{net_forward.5} parent=0 // pred_fallthru
    _
  // Predicated region
  $region6: #{net_forward.5} parent=0 // pred_check
    _
  $region7: #{net_forward.5} parent=0 // pred_check_branch
    %13 = sbr.rel (0) target = $region9
  $region8: #{net_forward.5} parent=0 // pred_region
    _
  $region9: #{net_forward.5} parent=0 // pred_fallthru
    _
  // Predicated region
  $region10: #{net_forward.5} parent=0 // pred_check
    _
  $region11: #{net_forward.5} parent=0 // pred_check_branch
    %15 = sbr.rel (0) target = $region13
  $region12: #{net_forward.5} parent=0 // pred_region
    _
  $region13: #{net_forward.5} parent=0 // pred_fallthru
    _
  // Predicated region
  $region14: #{net_forward.5} parent=0 // pred_check
    _
  $region15: #{net_forward.5} parent=0 // pred_check_branch
    %17 = sbr.rel (0) target = $region17
  $region16: #{net_forward.5} parent=0 // pred_region
    _
  $region17: #{net_forward.5} parent=0 // pred_fallthru
    _
  // Predicated region
  $region18: #{net_forward.5} parent=0 // pred_check
    _
  $region19: #{net_forward.5} parent=0 // pred_check_branch
    %19 = sbr.rel (0) target = $region21
  $region20: #{net_forward.5} parent=0 // pred_region
    _
  $region21: #{net_forward.5} parent=0 // pred_fallthru
    _
  %v21 = vld [vmem:[%s1] sm:$0xf]
  %v22 = vld [vmem:[%s1 + $0x4] sm:$0x3]
  %v23 = vld [vmem:[%s0] sm:$0xff]
  %v24 = vld [vmem:[%s0 + $0x8] sm:$0xff]
  %v25 = vld [vmem:[%s0 + $0x10] sm:$0xff]
  %v26 = vld [vmem:[%s0 + $0x18] sm:$0xff]
  %v27 = vld [vmem:[%s0 + $0x20] sm:$0xff]
  %v28 = vld [vmem:[%s0 + $0x28] sm:$0xff]
  %v29 = vld [vmem:[%s0 + $0x30] sm:$0xff]
  %v30 = vld [vmem:[%s0 + $0x38] sm:$0xff]
  %v31 = vld [vmem:[%s0 + $0x40] sm:$0xff]
  %v32 = vld [vmem:[%s0 + $0x48] sm:$0xff]
  %v33 = vld [vmem:[%s0 + $0x50] sm:$0xff]
  %v34 = vld [vmem:[%s0 + $0x58] sm:$0xff]
  %v35 = vld [vmem:[%s0 + $0x60] sm:$0xff]
  %v36 = vld [vmem:[%s0 + $0x68] sm:$0xff]
  %v37 = vld [vmem:[%s0 + $0x70] sm:$0xff]
  %v38 = vld [vmem:[%s0 + $0x78] sm:$0xff]
  %v39 = vld [vmem:[%s0 + $0x80] sm:$0xff]
  %v40 = vld [vmem:[%s0 + $0x88] sm:$0xff]
  %v41 = vld [vmem:[%s0 + $0x90] sm:$0xff]
  %v42 = vld [vmem:[%s0 + $0x98] sm:$0xff]
  %v43 = vld [vmem:[%s0 + $0xa0] sm:$0xff]
  %v44 = vld [vmem:[%s0 + $0xa8] sm:$0xff]
  %v45 = vld [vmem:[%s0 + $0xb0] sm:$0xff]
  %v46 = vld [vmem:[%s0 + $0xb8] sm:$0xff]
  %v47 = vld [vmem:[%s0 + $0xc0] sm:$0xff]
  %v48 = vld [vmem:[%s0 + $0xc8] sm:$0xff]
  %v49 = vld [vmem:[%s0 + $0xd0] sm:$0xff]
  %v50 = vld [vmem:[%s0 + $0xd8] sm:$0xff]
  %v51 = vld [vmem:[%s0 + $0xe0] sm:$0xff]
  %v52 = vld [vmem:[%s0 + $0xe8] sm:$0xff]
  %v53 = vld [vmem:[%s0 + $0xf0] sm:$0xff]
  %v54 = vld [vmem:[%s0 + $0xf8] sm:$0xff]
  %v55 = vld [vmem:[%s2] sm:$0xff]
  %v56 = vld [vmem:[%s2 + $0x8] sm:$0xf]
  %58 = vset.pattern.permute.xlu0 0
  %59 = vperm.xlu0 %58, %v55
  %v60 = vpop.permute.xlu0 %59
  %63 = vset.pattern.permute.xlu0 0
  %64 = vperm.xlu0 %63, %v56
  %v65 = vpop.permute.xlu0 %64
  %v69 = vunpack.c.l.b16 %v21
  %v70 = vunpack.c.l.b16 %v22
  %v71 = vpack.c.b16 %v70, %v69
  %v104 = vunpack.c.l.b16 %v23
  %v105 = vunpack.c.h.b16 %v23
  %v106 = vunpack.c.l.b16 %v24
  %v107 = vunpack.c.h.b16 %v24
  %v108 = vunpack.c.l.b16 %v25
  %v109 = vunpack.c.h.b16 %v25
  %v110 = vunpack.c.l.b16 %v26
  %v111 = vunpack.c.h.b16 %v26
  %v112 = vunpack.c.l.b16 %v27
  %v113 = vunpack.c.h.b16 %v27
  %v114 = vunpack.c.l.b16 %v28
  %v115 = vunpack.c.h.b16 %v28
  %v116 = vunpack.c.l.b16 %v29
  %v117 = vunpack.c.h.b16 %v29
  %v118 = vunpack.c.l.b16 %v30
  %v119 = vunpack.c.h.b16 %v30
  %v120 = vunpack.c.l.b16 %v31
  %v121 = vunpack.c.h.b16 %v31
  %v122 = vunpack.c.l.b16 %v32
  %v123 = vunpack.c.h.b16 %v32
  %v124 = vunpack.c.l.b16 %v33
  %v125 = vunpack.c.h.b16 %v33
  %v126 = vunpack.c.l.b16 %v34
  %v127 = vunpack.c.h.b16 %v34
  %v128 = vunpack.c.l.b16 %v35
  %v129 = vunpack.c.h.b16 %v35
  %v130 = vunpack.c.l.b16 %v36
  %v131 = vunpack.c.h.b16 %v36
  %v132 = vunpack.c.l.b16 %v37
  %v133 = vunpack.c.h.b16 %v37
  %v134 = vunpack.c.l.b16 %v38
  %v135 = vunpack.c.h.b16 %v38
  %v136 = vunpack.c.l.b16 %v39
  %v137 = vunpack.c.h.b16 %v39
  %v138 = vunpack.c.l.b16 %v40
  %v139 = vunpack.c.h.b16 %v40
  %v140 = vunpack.c.l.b16 %v41
  %v141 = vunpack.c.h.b16 %v41
  %v142 = vunpack.c.l.b16 %v42
  %v143 = vunpack.c.h.b16 %v42
  %v144 = vunpack.c.l.b16 %v43
  %v145 = vunpack.c.h.b16 %v43
  %v146 = vunpack.c.l.b16 %v44
  %v147 = vunpack.c.h.b16 %v44
  %v148 = vunpack.c.l.b16 %v45
  %v149 = vunpack.c.h.b16 %v45
  %v150 = vunpack.c.l.b16 %v46
  %v151 = vunpack.c.h.b16 %v46
  %v152 = vunpack.c.l.b16 %v47
  %v153 = vunpack.c.h.b16 %v47
  %v154 = vunpack.c.l.b16 %v48
  %v155 = vunpack.c.h.b16 %v48
  %v156 = vunpack.c.l.b16 %v49
  %v157 = vunpack.c.h.b16 %v49
  %v158 = vunpack.c.l.b16 %v50
  %v159 = vunpack.c.h.b16 %v50
  %v160 = vunpack.c.l.b16 %v51
  %v161 = vunpack.c.h.b16 %v51
  %v162 = vunpack.c.l.b16 %v52
  %v163 = vunpack.c.h.b16 %v52
  %v164 = vunpack.c.l.b16 %v53
  %v165 = vunpack.c.h.b16 %v53
  %v166 = vunpack.c.l.b16 %v54
  %v167 = vunpack.c.h.b16 %v54
  %v168 = vpack.c.b16 %v112, %v104
  %v169 = vpack.c.b16 %v113, %v105
  %v170 = vpack.c.b16 %v114, %v106
  %v171 = vpack.c.b16 %v115, %v107
  %v172 = vpack.c.b16 %v116, %v108
  %v173 = vpack.c.b16 %v117, %v109
  %v174 = vpack.c.b16 %v118, %v110
  %v175 = vpack.c.b16 %v119, %v111
  %v176 = vpack.c.b16 %v128, %v120
  %v177 = vpack.c.b16 %v129, %v121
  %v178 = vpack.c.b16 %v130, %v122
  %v179 = vpack.c.b16 %v131, %v123
  %v180 = vpack.c.b16 %v132, %v124
  %v181 = vpack.c.b16 %v133, %v125
  %v182 = vpack.c.b16 %v134, %v126
  %v183 = vpack.c.b16 %v135, %v127
  %v184 = vpack.c.b16 %v144, %v136
  %v185 = vpack.c.b16 %v145, %v137
  %v186 = vpack.c.b16 %v146, %v138
  %v187 = vpack.c.b16 %v147, %v139
  %v188 = vpack.c.b16 %v148, %v140
  %v189 = vpack.c.b16 %v149, %v141
  %v190 = vpack.c.b16 %v150, %v142
  %v191 = vpack.c.b16 %v151, %v143
  %v192 = vpack.c.b16 %v160, %v152
  %v193 = vpack.c.b16 %v161, %v153
  %v194 = vpack.c.b16 %v162, %v154
  %v195 = vpack.c.b16 %v163, %v155
  %v196 = vpack.c.b16 %v164, %v156
  %v197 = vpack.c.b16 %v165, %v157
  %v198 = vpack.c.b16 %v166, %v158
  %v199 = vpack.c.b16 %v167, %v159
  %vm232 = vcmask 523264
  %v234 = vsel %vm232, %v71, 0
  %236 = vmatpush.bf16.msra.mxu0 0
  %237 = vmatpush.bf16.msra.mxu0 0
  %238 = vmatpush.bf16.msra.mxu0 0
  %239 = vmatpush.bf16.msra.mxu0 0
  %240 = vmatpush.bf16.msra.mxu0 %v192
  %241 = vmatpush.bf16.msra.mxu0 %v184
  %242 = vmatpush.bf16.msra.mxu0 %v176
  %243 = vmatpush.bf16.msra.mxu0 %v168
  %244 = vmatmul.bf16.gmra.mxu0 %v234
  %v245 = vpop.f32.mrf.mxu0
  %v246 = vadd.f32 %v60, %v245
  %v247 = vpop.f32.mrf.mxu0
  %v248 = vadd.f32 %v65, %v247
  %249 = vdwg.mxu0
  %250 = vmatpush.bf16.msra.mxu0 0
  %251 = vmatpush.bf16.msra.mxu0 0
  %252 = vmatpush.bf16.msra.mxu0 0
  %253 = vmatpush.bf16.msra.mxu0 0
  %254 = vmatpush.bf16.msra.mxu0 %v193
  %255 = vmatpush.bf16.msra.mxu0 %v185
  %256 = vmatpush.bf16.msra.mxu0 %v177
  %257 = vmatpush.bf16.msra.mxu0 %v169
  %258 = vmatmul.bf16.gmra.mxu0 %v234
  %v259 = vpop.f32.mrf.mxu0
  %v260 = vadd.f32 %v60, %v259
  %v261 = vpop.f32.mrf.mxu0
  %v262 = vadd.f32 %v65, %v261
  %263 = vdwg.mxu0
  %264 = vmatpush.bf16.msra.mxu0 0
  %265 = vmatpush.bf16.msra.mxu0 0
  %266 = vmatpush.bf16.msra.mxu0 0
  %267 = vmatpush.bf16.msra.mxu0 0
  %268 = vmatpush.bf16.msra.mxu0 %v194
  %269 = vmatpush.bf16.msra.mxu0 %v186
  %270 = vmatpush.bf16.msra.mxu0 %v178
  %271 = vmatpush.bf16.msra.mxu0 %v170
  %272 = vmatmul.bf16.gmra.mxu0 %v234
  %v273 = vpop.f32.mrf.mxu0
  %v274 = vadd.f32 %v60, %v273
  %v275 = vpop.f32.mrf.mxu0
  %v276 = vadd.f32 %v65, %v275
  %277 = vdwg.mxu0
  %278 = vmatpush.bf16.msra.mxu0 0
  %279 = vmatpush.bf16.msra.mxu0 0
  %280 = vmatpush.bf16.msra.mxu0 0
  %281 = vmatpush.bf16.msra.mxu0 0
  %282 = vmatpush.bf16.msra.mxu0 %v195
  %283 = vmatpush.bf16.msra.mxu0 %v187
  %284 = vmatpush.bf16.msra.mxu0 %v179
  %285 = vmatpush.bf16.msra.mxu0 %v171
  %286 = vmatmul.bf16.gmra.mxu0 %v234
  %v287 = vpop.f32.mrf.mxu0
  %v288 = vadd.f32 %v60, %v287
  %v289 = vpop.f32.mrf.mxu0
  %v290 = vadd.f32 %v65, %v289
  %291 = vdwg.mxu0
  %292 = vmatpush.bf16.msra.mxu0 0
  %293 = vmatpush.bf16.msra.mxu0 0
  %294 = vmatpush.bf16.msra.mxu0 0
  %295 = vmatpush.bf16.msra.mxu0 0
  %296 = vmatpush.bf16.msra.mxu0 %v196
  %297 = vmatpush.bf16.msra.mxu0 %v188
  %298 = vmatpush.bf16.msra.mxu0 %v180
  %299 = vmatpush.bf16.msra.mxu0 %v172
  %300 = vmatmul.bf16.gmra.mxu0 %v234
  %v301 = vpop.f32.mrf.mxu0
  %v302 = vadd.f32 %v60, %v301
  %v303 = vpop.f32.mrf.mxu0
  %v304 = vadd.f32 %v65, %v303
  %305 = vdwg.mxu0
  %306 = vmatpush.bf16.msra.mxu0 0
  %307 = vmatpush.bf16.msra.mxu0 0
  %308 = vmatpush.bf16.msra.mxu0 0
  %309 = vmatpush.bf16.msra.mxu0 0
  %310 = vmatpush.bf16.msra.mxu0 %v197
  %311 = vmatpush.bf16.msra.mxu0 %v189
  %312 = vmatpush.bf16.msra.mxu0 %v181
  %313 = vmatpush.bf16.msra.mxu0 %v173
  %314 = vmatmul.bf16.gmra.mxu0 %v234
  %v315 = vpop.f32.mrf.mxu0
  %v316 = vadd.f32 %v60, %v315
  %v317 = vpop.f32.mrf.mxu0
  %v318 = vadd.f32 %v65, %v317
  %319 = vdwg.mxu0
  %320 = vmatpush.bf16.msra.mxu0 0
  %321 = vmatpush.bf16.msra.mxu0 0
  %322 = vmatpush.bf16.msra.mxu0 0
  %323 = vmatpush.bf16.msra.mxu0 0
  %324 = vmatpush.bf16.msra.mxu0 %v198
  %325 = vmatpush.bf16.msra.mxu0 %v190
  %326 = vmatpush.bf16.msra.mxu0 %v182
  %327 = vmatpush.bf16.msra.mxu0 %v174
  %328 = vmatmul.bf16.gmra.mxu0 %v234
  %v329 = vpop.f32.mrf.mxu0
  %v330 = vadd.f32 %v60, %v329
  %v331 = vpop.f32.mrf.mxu0
  %v332 = vadd.f32 %v65, %v331
  %333 = vdwg.mxu0
  %334 = vmatpush.bf16.msra.mxu0 0
  %335 = vmatpush.bf16.msra.mxu0 0
  %336 = vmatpush.bf16.msra.mxu0 0
  %337 = vmatpush.bf16.msra.mxu0 0
  %338 = vmatpush.bf16.msra.mxu0 %v199
  %339 = vmatpush.bf16.msra.mxu0 %v191
  %340 = vmatpush.bf16.msra.mxu0 %v183
  %341 = vmatpush.bf16.msra.mxu0 %v175
  %342 = vmatmul.bf16.gmra.mxu0 %v234
  %v343 = vpop.f32.mrf.mxu0
  %v344 = vadd.f32 %v60, %v343
  %v345 = vpop.f32.mrf.mxu0
  %v346 = vadd.f32 %v65, %v345
  %347 = vdwg.mxu0
  %v348 = vmax.f32 %v246, 0.0
  %v349 = vmax.f32 %v260, 0.0
  %v350 = vmax.f32 %v274, 0.0
  %v351 = vmax.f32 %v288, 0.0
  %v352 = vmax.f32 %v302, 0.0
  %v353 = vmax.f32 %v316, 0.0
  %v354 = vmax.f32 %v330, 0.0
  %v355 = vmax.f32 %v344, 0.0
  %v356 = vmax.f32 %v248, 0.0
  %v357 = vmax.f32 %v262, 0.0
  %v358 = vmax.f32 %v276, 0.0
  %v359 = vmax.f32 %v290, 0.0
  %v360 = vmax.f32 %v304, 0.0
  %v361 = vmax.f32 %v318, 0.0
  %v362 = vmax.f32 %v332, 0.0
  %v363 = vmax.f32 %v346, 0.0
  %v364 = vld [vmem:[%s3] sm:$0xff]
  %v365 = vld [vmem:[%s3 + $0x8] sm:$0xf]
  %367 = vset.pattern.permute.xlu0 0
  %368 = vperm.xlu0 %367, %v364
  %v369 = vpop.permute.xlu0 %368
  %372 = vset.pattern.permute.xlu0 0
  %373 = vperm.xlu0 %372, %v365
  %v374 = vpop.permute.xlu0 %373
  %v376 = vmul.f32 %v348, %v369
  %v377 = vmul.f32 %v349, %v369
  %v378 = vmul.f32 %v350, %v369
  %v379 = vmul.f32 %v351, %v369
  %v380 = vmul.f32 %v352, %v369
  %v381 = vmul.f32 %v353, %v369
  %v382 = vmul.f32 %v354, %v369
  %v383 = vmul.f32 %v355, %v369
  %v384 = vmul.f32 %v356, %v374
  %v385 = vmul.f32 %v357, %v374
  %v386 = vmul.f32 %v358, %v374
  %v387 = vmul.f32 %v359, %v374
  %v388 = vmul.f32 %v360, %v374
  %v389 = vmul.f32 %v361, %v374
  %v390 = vmul.f32 %v362, %v374
  %v391 = vmul.f32 %v363, %v374
  %v392 = vld [vmem:[%s4] sm:$0xff]
  %v393 = vld [vmem:[%s4 + $0x8] sm:$0xf]
  %395 = vset.pattern.permute.xlu0 0
  %396 = vperm.xlu0 %395, %v392
  %v397 = vpop.permute.xlu0 %396
  %400 = vset.pattern.permute.xlu0 0
  %401 = vperm.xlu0 %400, %v393
  %v402 = vpop.permute.xlu0 %401
  %v404 = vadd.f32 %v376, %v397
  %v405 = vadd.f32 %v377, %v397
  %v406 = vadd.f32 %v378, %v397
  %v407 = vadd.f32 %v379, %v397
  %v408 = vadd.f32 %v380, %v397
  %v409 = vadd.f32 %v381, %v397
  %v410 = vadd.f32 %v382, %v397
  %v411 = vadd.f32 %v383, %v397
  %v412 = vadd.f32 %v384, %v402
  %v413 = vadd.f32 %v385, %v402
  %v414 = vadd.f32 %v386, %v402
  %v415 = vadd.f32 %v387, %v402
  %v416 = vadd.f32 %v388, %v402
  %v417 = vadd.f32 %v389, %v402
  %v418 = vadd.f32 %v390, %v402
  %v419 = vadd.f32 %v391, %v402
  %v420 = vpack.c.bf16 %v405, %v404
  %v421 = vpack.c.bf16 %v407, %v406
  %v422 = vpack.c.bf16 %v409, %v408
  %v423 = vpack.c.bf16 %v411, %v410
  %v424 = vpack.c.bf16 %v413, %v412
  %v425 = vpack.c.bf16 %v415, %v414
  %v426 = vpack.c.bf16 %v417, %v416
  %v427 = vpack.c.bf16 %v419, %v418
  %428 = vst [vmem:[%s5] sm:$0xff] %v420
  %429 = vst [vmem:[%s5 + $0x8] sm:$0xff] %v421
  %430 = vst [vmem:[%s5 + $0x10] sm:$0xff] %v422
  %431 = vst [vmem:[%s5 + $0x18] sm:$0xff] %v423
  %432 = vst [vmem:[%s5 + $0x20] sm:$0x33] %v424
  %433 = vst [vmem:[%s5 + $0x28] sm:$0x33] %v425
  %434 = vst [vmem:[%s5 + $0x30] sm:$0x33] %v426
  %435 = vst [vmem:[%s5 + $0x38] sm:$0x33] %v427
  // Predicated region
  $region22: #{net_forward.5} parent=0 // pred_check
    _
  $region23: #{net_forward.5} parent=0 // pred_check_branch
    %437 = sbr.rel (0) target = $region25
  $region24: #{net_forward.5} parent=0 // pred_region
    _
  $region25: #{net_forward.5} parent=0 // pred_fallthru
    _
  // Predicated region
  $region26: #{net_forward.5} parent=0 // pred_check
    _
  $region27: #{net_forward.5} parent=0 // pred_check_branch
    %439 = sbr.rel (0) target = $region29
  $region28: #{net_forward.5} parent=0 // pred_region
    _
  $region29: #{net_forward.5} parent=0 // pred_fallthru
    _

// kernel: net_forward.6
$region0: #{net_forward.6}
  #allocation0 [shape = 'u32[]', space=smem, size = 0x4, offset = 0x4, fixed_abs, tag = 'smem constant byte address 0x4 - core index']
  #allocation1 [shape = 'u32[72,128]{1,0:T(1,128)}', space=vmem, size = 0x9000, scoped, tag = 'internal scratch']
  %s0 = inlined_call_operand.vmem [shape: bf16[112,1024], index: 0, kind: input, shape index: {}]
  %s1 = inlined_call_operand.vmem [shape: bf16[24,112], index: 1, kind: input, shape index: {}]
  %s2 = inlined_call_operand.vmem [shape: f32[24,1], index: 2, kind: input, shape index: {}]
  %s3 = inlined_call_operand.vmem [shape: f32[24,1], index: 3, kind: input, shape index: {}]
  %s4 = inlined_call_operand.vmem [shape: f32[24,1], index: 4, kind: input, shape index: {}]
  %s5 = inlined_call_operand.vmem [shape: bf16[24,1024], index: 5, kind: output, shape index: {}]
  %s6 = sld [smem:[#allocation0]]
  $region30: #{net_forward.6} parent=0
    _
  %s8 = ssub.s32 1, %s6
  %s9 = scalar_select 0, %s8, %s6
  // Predicated region
  $region2: #{net_forward.6} parent=0 // pred_check
    _
  $region3: #{net_forward.6} parent=0 // pred_check_branch
    %11 = sbr.rel (0) target = $region5
  $region4: #{net_forward.6} parent=0 // pred_region
    _
  $region5: #{net_forward.6} parent=0 // pred_fallthru
    _
  // Predicated region
  $region6: #{net_forward.6} parent=0 // pred_check
    _
  $region7: #{net_forward.6} parent=0 // pred_check_branch
    %13 = sbr.rel (0) target = $region9
  $region8: #{net_forward.6} parent=0 // pred_region
    _
  $region9: #{net_forward.6} parent=0 // pred_fallthru
    _
  // Predicated region
  $region10: #{net_forward.6} parent=0 // pred_check
    _
  $region11: #{net_forward.6} parent=0 // pred_check_branch
    %15 = sbr.rel (0) target = $region13
  $region12: #{net_forward.6} parent=0 // pred_region
    _
  $region13: #{net_forward.6} parent=0 // pred_fallthru
    _
  // Predicated region
  $region14: #{net_forward.6} parent=0 // pred_check
    _
  $region15: #{net_forward.6} parent=0 // pred_check_branch
    %17 = sbr.rel (0) target = $region17
  $region16: #{net_forward.6} parent=0 // pred_region
    _
  $region17: #{net_forward.6} parent=0 // pred_fallthru
    _
  // Predicated region
  $region18: #{net_forward.6} parent=0 // pred_check
    _
  $region19: #{net_forward.6} parent=0 // pred_check_branch
    %19 = sbr.rel (0) target = $region21
  $region20: #{net_forward.6} parent=0 // pred_region
    _
  $region21: #{net_forward.6} parent=0 // pred_fallthru
    _
  %v21 = vld [vmem:[%s1] sm:$0xf]
  %v22 = vld [vmem:[%s1 + $0x4] sm:$0xf]
  %v23 = vld [vmem:[%s1 + $0x8] sm:$0xf]
  %v24 = vld [vmem:[%s0] sm:$0xff]
  %v25 = vld [vmem:[%s0 + $0x8] sm:$0xff]
  %v26 = vld [vmem:[%s0 + $0x10] sm:$0xff]
  %v27 = vld [vmem:[%s0 + $0x18] sm:$0xff]
  %v28 = vld [vmem:[%s0 + $0x20] sm:$0xff]
  %v29 = vld [vmem:[%s0 + $0x28] sm:$0xff]
  %v30 = vld [vmem:[%s0 + $0x30] sm:$0xff]
  %v31 = vld [vmem:[%s0 + $0x38] sm:$0xff]
  %v32 = vld [vmem:[%s0 + $0x40] sm:$0xff]
  %v33 = vld [vmem:[%s0 + $0x48] sm:$0xff]
  %v34 = vld [vmem:[%s0 + $0x50] sm:$0xff]
  %v35 = vld [vmem:[%s0 + $0x58] sm:$0xff]
  %v36 = vld [vmem:[%s0 + $0x60] sm:$0xff]
  %v37 = vld [vmem:[%s0 + $0x68] sm:$0xff]
  %v38 = vld [vmem:[%s0 + $0x70] sm:$0xff]
  %v39 = vld [vmem:[%s0 + $0x78] sm:$0xff]
  %v40 = vld [vmem:[%s0 + $0x80] sm:$0xff]
  %v41 = vld [vmem:[%s0 + $0x88] sm:$0xff]
  %v42 = vld [vmem:[%s0 + $0x90] sm:$0xff]
  %v43 = vld [vmem:[%s0 + $0x98] sm:$0xff]
  %v44 = vld [vmem:[%s0 + $0xa0] sm:$0xff]
  %v45 = vld [vmem:[%s0 + $0xa8] sm:$0xff]
  %v46 = vld [vmem:[%s0 + $0xb0] sm:$0xff]
  %v47 = vld [vmem:[%s0 + $0xb8] sm:$0xff]
  %v48 = vld [vmem:[%s0 + $0xc0] sm:$0xff]
  %v49 = vld [vmem:[%s0 + $0xc8] sm:$0xff]
  %v50 = vld [vmem:[%s0 + $0xd0] sm:$0xff]
  %v51 = vld [vmem:[%s0 + $0xd8] sm:$0xff]
  %v52 = vld [vmem:[%s0 + $0xe0] sm:$0xff]
  %v53 = vld [vmem:[%s0 + $0xe8] sm:$0xff]
  %v54 = vld [vmem:[%s0 + $0xf0] sm:$0xff]
  %v55 = vld [vmem:[%s0 + $0xf8] sm:$0xff]
  %v56 = vld [vmem:[%s0 + $0x100] sm:$0xff]
  %v57 = vld [vmem:[%s0 + $0x108] sm:$0xff]
  %v58 = vld [vmem:[%s0 + $0x110] sm:$0xff]
  %v59 = vld [vmem:[%s0 + $0x118] sm:$0xff]
  %v60 = vld [vmem:[%s0 + $0x120] sm:$0xff]
  %v61 = vld [vmem:[%s0 + $0x128] sm:$0xff]
  %v62 = vld [vmem:[%s0 + $0x130] sm:$0xff]
  %v63 = vld [vmem:[%s0 + $0x138] sm:$0xff]
  %v64 = vld [vmem:[%s0 + $0x140] sm:$0xff]
  %v65 = vld [vmem:[%s0 + $0x148] sm:$0xff]
  %v66 = vld [vmem:[%s0 + $0x150] sm:$0xff]
  %v67 = vld [vmem:[%s0 + $0x158] sm:$0xff]
  %v68 = vld [vmem:[%s0 + $0x160] sm:$0xff]
  %v69 = vld [vmem:[%s0 + $0x168] sm:$0xff]
  %v70 = vld [vmem:[%s0 + $0x170] sm:$0xff]
  %v71 = vld [vmem:[%s0 + $0x178] sm:$0xff]
  %v72 = vld [vmem:[%s0 + $0x180] sm:$0xff]
  %v73 = vld [vmem:[%s0 + $0x188] sm:$0xff]
  %v74 = vld [vmem:[%s0 + $0x190] sm:$0xff]
  %v75 = vld [vmem:[%s0 + $0x198] sm:$0xff]
  %v76 = vld [vmem:[%s0 + $0x1a0] sm:$0xff]
  %v77 = vld [vmem:[%s0 + $0x1a8] sm:$0xff]
  %v78 = vld [vmem:[%s0 + $0x1b0] sm:$0xff]
  %v79 = vld [vmem:[%s0 + $0x1b8] sm:$0xff]
  %v80 = vld [vmem:[%s2] sm:$0xff]
  %v81 = vld [vmem:[%s2 + $0x8] sm:$0xff]
  %v82 = vld [vmem:[%s2 + $0x10] sm:$0xff]
  %84 = vset.pattern.permute.xlu0 0
  %85 = vperm.xlu0 %84, %v80
  %v86 = vpop.permute.xlu0 %85
  %89 = vset.pattern.permute.xlu0 0
  %90 = vperm.xlu0 %89, %v81
  %v91 = vpop.permute.xlu0 %90
  %94 = vset.pattern.permute.xlu0 0
  %95 = vperm.xlu0 %94, %v82
  %v96 = vpop.permute.xlu0 %95
  %v101 = vunpack.c.l.b16 %v21
  %v102 = vunpack.c.l.b16 %v22
  %v103 = vunpack.c.l.b16 %v23
  %v104 = vpack.c.b16 %v102, %v101
  %v105 = vpack.c.b16 %v103, %v103
  %v162 = vunpack.c.l.b16 %v24
  %v163 = vunpack.c.h.b16 %v24
  %v164 = vunpack.c.l.b16 %v25
  %v165 = vunpack.c.h.b16 %v25
  %v166 = vunpack.c.l.b16 %v26
  %v167 = vunpack.c.h.b16 %v26
  %v168 = vunpack.c.l.b16 %v27
  %v169 = vunpack.c.h.b16 %v27
  %v170 = vunpack.c.l.b16 %v28
  %v171 = vunpack.c.h.b16 %v28
  %v172 = vunpack.c.l.b16 %v29
  %v173 = vunpack.c.h.b16 %v29
  %v174 = vunpack.c.l.b16 %v30
  %v175 = vunpack.c.h.b16 %v30
  %v176 = vunpack.c.l.b16 %v31
  %v177 = vunpack.c.h.b16 %v31
  %v178 = vunpack.c.l.b16 %v32
  %v179 = vunpack.c.h.b16 %v32
  %v180 = vunpack.c.l.b16 %v33
  %v181 = vunpack.c.h.b16 %v33
  %v182 = vunpack.c.l.b16 %v34
  %v183 = vunpack.c.h.b16 %v34
  %v184 = vunpack.c.l.b16 %v35
  %v185 = vunpack.c.h.b16 %v35
  %v186 = vunpack.c.l.b16 %v36
  %v187 = vunpack.c.h.b16 %v36
  %v188 = vunpack.c.l.b16 %v37
  %v189 = vunpack.c.h.b16 %v37
  %v190 = vunpack.c.l.b16 %v38
  %v191 = vunpack.c.h.b16 %v38
  %v192 = vunpack.c.l.b16 %v39
  %v193 = vunpack.c.h.b16 %v39
  %v194 = vunpack.c.l.b16 %v40
  %v195 = vunpack.c.h.b16 %v40
  %v196 = vunpack.c.l.b16 %v41
  %v197 = vunpack.c.h.b16 %v41
  %v198 = vunpack.c.l.b16 %v42
  %v199 = vunpack.c.h.b16 %v42
  %v200 = vunpack.c.l.b16 %v43
  %v201 = vunpack.c.h.b16 %v43
  %v202 = vunpack.c.l.b16 %v44
  %v203 = vunpack.c.h.b16 %v44
  %v204 = vunpack.c.l.b16 %v45
  %v205 = vunpack.c.h.b16 %v45
  %v206 = vunpack.c.l.b16 %v46
  %v207 = vunpack.c.h.b16 %v46
  %v208 = vunpack.c.l.b16 %v47
  %v209 = vunpack.c.h.b16 %v47
  %v210 = vunpack.c.l.b16 %v48
  %v211 = vunpack.c.h.b16 %v48
  %v212 = vunpack.c.l.b16 %v49
  %v213 = vunpack.c.h.b16 %v49
  %v214 = vunpack.c.l.b16 %v50
  %v215 = vunpack.c.h.b16 %v50
  %v216 = vunpack.c.l.b16 %v51
  %v217 = vunpack.c.h.b16 %v51
  %v218 = vunpack.c.l.b16 %v52
  %v219 = vunpack.c.h.b16 %v52
  %v220 = vunpack.c.l.b16 %v53
  %v221 = vunpack.c.h.b16 %v53
  %v222 = vunpack.c.l.b16 %v54
  %v223 = vunpack.c.h.b16 %v54
  %v224 = vunpack.c.l.b16 %v55
  %v225 = vunpack.c.h.b16 %v55
  %v226 = vunpack.c.l.b16 %v56
  %v227 = vunpack.c.h.b16 %v56
  %v228 = vunpack.c.l.b16 %v57
  %v229 = vunpack.c.h.b16 %v57
  %v230 = vunpack.c.l.b16 %v58
  %v231 = vunpack.c.h.b16 %v58
  %v232 = vunpack.c.l.b16 %v59
  %v233 = vunpack.c.h.b16 %v59
  %v234 = vunpack.c.l.b16 %v60
  %v235 = vunpack.c.h.b16 %v60
  %v236 = vunpack.c.l.b16 %v61
  %v237 = vunpack.c.h.b16 %v61
  %v238 = vunpack.c.l.b16 %v62
  %v239 = vunpack.c.h.b16 %v62
  %v240 = vunpack.c.l.b16 %v63
  %v241 = vunpack.c.h.b16 %v63
  %v242 = vunpack.c.l.b16 %v64
  %v243 = vunpack.c.h.b16 %v64
  %v244 = vunpack.c.l.b16 %v65
  %v245 = vunpack.c.h.b16 %v65
  %v246 = vunpack.c.l.b16 %v66
  %v247 = vunpack.c.h.b16 %v66
  %v248 = vunpack.c.l.b16 %v67
  %v249 = vunpack.c.h.b16 %v67
  %v250 = vunpack.c.l.b16 %v68
  %v251 = vunpack.c.h.b16 %v68
  %v252 = vunpack.c.l.b16 %v69
  %v253 = vunpack.c.h.b16 %v69
  %v254 = vunpack.c.l.b16 %v70
  %v255 = vunpack.c.h.b16 %v70
  %v256 = vunpack.c.l.b16 %v71
  %v257 = vunpack.c.h.b16 %v71
  %v258 = vunpack.c.l.b16 %v72
  %v259 = vunpack.c.h.b16 %v72
  %v260 = vunpack.c.l.b16 %v73
  %v261 = vunpack.c.h.b16 %v73
  %v262 = vunpack.c.l.b16 %v74
  %v263 = vunpack.c.h.b16 %v74
  %v264 = vunpack.c.l.b16 %v75
  %v265 = vunpack.c.h.b16 %v75
  %v266 = vunpack.c.l.b16 %v76
  %v267 = vunpack.c.h.b16 %v76
  %v268 = vunpack.c.l.b16 %v77
  %v269 = vunpack.c.h.b16 %v77
  %v270 = vunpack.c.l.b16 %v78
  %v271 = vunpack.c.h.b16 %v78
  %v272 = vunpack.c.l.b16 %v79
  %v273 = vunpack.c.h.b16 %v79
  %v274 = vpack.c.b16 %v170, %v162
  %v275 = vpack.c.b16 %v171, %v163
  %v276 = vpack.c.b16 %v172, %v164
  %v277 = vpack.c.b16 %v173, %v165
  %v278 = vpack.c.b16 %v174, %v166
  %v279 = vpack.c.b16 %v175, %v167
  %v280 = vpack.c.b16 %v176, %v168
  %v281 = vpack.c.b16 %v177, %v169
  %v282 = vpack.c.b16 %v186, %v178
  %v283 = vpack.c.b16 %v187, %v179
  %v284 = vpack.c.b16 %v188, %v180
  %v285 = vpack.c.b16 %v189, %v181
  %v286 = vpack.c.b16 %v190, %v182
  %v287 = vpack.c.b16 %v191, %v183
  %v288 = vpack.c.b16 %v192, %v184
  %v289 = vpack.c.b16 %v193, %v185
  %v290 = vpack.c.b16 %v202, %v194
  %v291 = vpack.c.b16 %v203, %v195
  %v292 = vpack.c.b16 %v204, %v196
  %v293 = vpack.c.b16 %v205, %v197
  %v294 = vpack.c.b16 %v206, %v198
  %v295 = vpack.c.b16 %v207, %v199
  %v296 = vpack.c.b16 %v208, %v200
  %v297 = vpack.c.b16 %v209, %v201
  %v298 = vpack.c.b16 %v218, %v210
  %v299 = vpack.c.b16 %v219, %v211
  %v300 = vpack.c.b16 %v220, %v212
  %v301 = vpack.c.b16 %v221, %v213
  %v302 = vpack.c.b16 %v222, %v214
  %v303 = vpack.c.b16 %v223, %v215
  %v304 = vpack.c.b16 %v224, %v216
  %v305 = vpack.c.b16 %v225, %v217
  %v306 = vpack.c.b16 %v234, %v226
  %v307 = vpack.c.b16 %v235, %v227
  %v308 = vpack.c.b16 %v236, %v228
  %v309 = vpack.c.b16 %v237, %v229
  %v310 = vpack.c.b16 %v238, %v230
  %v311 = vpack.c.b16 %v239, %v231
  %v312 = vpack.c.b16 %v240, %v232
  %v313 = vpack.c.b16 %v241, %v233
  %v314 = vpack.c.b16 %v250, %v242
  %v315 = vpack.c.b16 %v251, %v243
  %v316 = vpack.c.b16 %v252, %v244
  %v317 = vpack.c.b16 %v253, %v245
  %v318 = vpack.c.b16 %v254, %v246
  %v319 = vpack.c.b16 %v255, %v247
  %v320 = vpack.c.b16 %v256, %v248
  %v321 = vpack.c.b16 %v257, %v249
  %v322 = vpack.c.b16 %v266, %v258
  %v323 = vpack.c.b16 %v267, %v259
  %v324 = vpack.c.b16 %v268, %v260
  %v325 = vpack.c.b16 %v269, %v261
  %v326 = vpack.c.b16 %v270, %v262
  %v327 = vpack.c.b16 %v271, %v263
  %v328 = vpack.c.b16 %v272, %v264
  %v329 = vpack.c.b16 %v273, %v265
  %vm386 = vcmask 916480
  %v388 = vsel %vm386, %v104, 0
  %v391 = vsel %vm386, %v105, 0
  %393 = vmatpush.bf16.msra.mxu0 0
  %394 = vmatpush.bf16.msra.mxu0 %v322
  %395 = vmatpush.bf16.msra.mxu0 %v314
  %396 = vmatpush.bf16.msra.mxu0 %v306
  %397 = vmatpush.bf16.msra.mxu0 %v298
  %398 = vmatpush.bf16.msra.mxu0 %v290
  %399 = vmatpush.bf16.msra.mxu0 %v282
  %400 = vmatpush.bf16.msra.mxu0 %v274
  %401 = vmatmul.bf16.gmra.mxu0 %v388
  %v402 = vpop.f32.mrf.mxu0
  %v403 = vadd.f32 %v86, %v402
  %v404 = vpop.f32.mrf.mxu0
  %v405 = vadd.f32 %v91, %v404
  %406 = vmatmul.bf16.gmra.mxu0 %v391
  %v407 = vpop.f32.mrf.mxu0
  %v408 = vadd.f32 %v96, %v407
  %v409 = vpop.f32.mrf.mxu0
  %410 = vdwg.mxu0
  %411 = vmatpush.bf16.msra.mxu0 0
  %412 = vmatpush.bf16.msra.mxu0 %v323
  %413 = vmatpush.bf16.msra.mxu0 %v315
  %414 = vmatpush.bf16.msra.mxu0 %v307
  %415 = vmatpush.bf16.msra.mxu0 %v299
  %416 = vmatpush.bf16.msra.mxu0 %v291
  %417 = vmatpush.bf16.msra.mxu0 %v283
  %418 = vmatpush.bf16.msra.mxu0 %v275
  %419 = vmatmul.bf16.gmra.mxu0 %v388
  %v420 = vpop.f32.mrf.mxu0
  %v421 = vadd.f32 %v86, %v420
  %v422 = vpop.f32.mrf.mxu0
  %v423 = vadd.f32 %v91, %v422
  %424 = vmatmul.bf16.gmra.mxu0 %v391
  %v425 = vpop.f32.mrf.mxu0
  %v426 = vadd.f32 %v96, %v425
  %v427 = vpop.f32.mrf.mxu0
  %428 = vdwg.mxu0
  %429 = vmatpush.bf16.msra.mxu0 0
  %430 = vmatpush.bf16.msra.mxu0 %v324
  %431 = vmatpush.bf16.msra.mxu0 %v316
  %432 = vmatpush.bf16.msra.mxu0 %v308
  %433 = vmatpush.bf16.msra.mxu0 %v300
  %434 = vmatpush.bf16.msra.mxu0 %v292
  %435 = vmatpush.bf16.msra.mxu0 %v284
  %436 = vmatpush.bf16.msra.mxu0 %v276
  %437 = vmatmul.bf16.gmra.mxu0 %v388
  %v438 = vpop.f32.mrf.mxu0
  %v439 = vadd.f32 %v86, %v438
  %v440 = vpop.f32.mrf.mxu0
  %v441 = vadd.f32 %v91, %v440
  %442 = vmatmul.bf16.gmra.mxu0 %v391
  %v443 = vpop.f32.mrf.mxu0
  %v444 = vadd.f32 %v96, %v443
  %v445 = vpop.f32.mrf.mxu0
  %446 = vdwg.mxu0
  %447 = vmatpush.bf16.msra.mxu0 0
  %448 = vmatpush.bf16.msra.mxu0 %v325
  %449 = vmatpush.bf16.msra.mxu0 %v317
  %450 = vmatpush.bf16.msra.mxu0 %v309
  %451 = vmatpush.bf16.msra.mxu0 %v301
  %452 = vmatpush.bf16.msra.mxu0 %v293
  %453 = vmatpush.bf16.msra.mxu0 %v285
  %454 = vmatpush.bf16.msra.mxu0 %v277
  %455 = vmatmul.bf16.gmra.mxu0 %v388
  %v456 = vpop.f32.mrf.mxu0
  %v457 = vadd.f32 %v86, %v456
  %v458 = vpop.f32.mrf.mxu0
  %v459 = vadd.f32 %v91, %v458
  %460 = vmatmul.bf16.gmra.mxu0 %v391
  %v461 = vpop.f32.mrf.mxu0
  %v462 = vadd.f32 %v96, %v461
  %v463 = vpop.f32.mrf.mxu0
  %464 = vdwg.mxu0
  %465 = vmatpush.bf16.msra.mxu0 0
  %466 = vmatpush.bf16.msra.mxu0 %v326
  %467 = vmatpush.bf16.msra.mxu0 %v318
  %468 = vmatpush.bf16.msra.mxu0 %v310
  %469 = vmatpush.bf16.msra.mxu0 %v302
  %470 = vmatpush.bf16.msra.mxu0 %v294
  %471 = vmatpush.bf16.msra.mxu0 %v286
  %472 = vmatpush.bf16.msra.mxu0 %v278
  %473 = vmatmul.bf16.gmra.mxu0 %v388
  %v474 = vpop.f32.mrf.mxu0
  %v475 = vadd.f32 %v86, %v474
  %v476 = vpop.f32.mrf.mxu0
  %v477 = vadd.f32 %v91, %v476
  %478 = vmatmul.bf16.gmra.mxu0 %v391
  %v479 = vpop.f32.mrf.mxu0
  %v480 = vadd.f32 %v96, %v479
  %v481 = vpop.f32.mrf.mxu0
  %482 = vdwg.mxu0
  %483 = vmatpush.bf16.msra.mxu0 0
  %484 = vmatpush.bf16.msra.mxu0 %v327
  %485 = vmatpush.bf16.msra.mxu0 %v319
  %486 = vmatpush.bf16.msra.mxu0 %v311
  %487 = vmatpush.bf16.msra.mxu0 %v303
  %488 = vmatpush.bf16.msra.mxu0 %v295
  %489 = vmatpush.bf16.msra.mxu0 %v287
  %490 = vmatpush.bf16.msra.mxu0 %v279
  %491 = vmatmul.bf16.gmra.mxu0 %v388
  %v492 = vpop.f32.mrf.mxu0
  %v493 = vadd.f32 %v86, %v492
  %v494 = vpop.f32.mrf.mxu0
  %v495 = vadd.f32 %v91, %v494
  %496 = vmatmul.bf16.gmra.mxu0 %v391
  %v497 = vpop.f32.mrf.mxu0
  %v498 = vadd.f32 %v96, %v497
  %v499 = vpop.f32.mrf.mxu0
  %500 = vdwg.mxu0
  %501 = vmatpush.bf16.msra.mxu0 0
  %502 = vmatpush.bf16.msra.mxu0 %v328
  %503 = vmatpush.bf16.msra.mxu0 %v320
  %504 = vmatpush.bf16.msra.mxu0 %v312
  %505 = vmatpush.bf16.msra.mxu0 %v304
  %506 = vmatpush.bf16.msra.mxu0 %v296
  %507 = vmatpush.bf16.msra.mxu0 %v288
  %508 = vmatpush.bf16.msra.mxu0 %v280
  %509 = vmatmul.bf16.gmra.mxu0 %v388
  %v510 = vpop.f32.mrf.mxu0
  %v511 = vadd.f32 %v86, %v510
  %v512 = vpop.f32.mrf.mxu0
  %v513 = vadd.f32 %v91, %v512
  %514 = vmatmul.bf16.gmra.mxu0 %v391
  %v515 = vpop.f32.mrf.mxu0
  %v516 = vadd.f32 %v96, %v515
  %v517 = vpop.f32.mrf.mxu0
  %518 = vdwg.mxu0
  %519 = vmatpush.bf16.msra.mxu0 0
  %520 = vmatpush.bf16.msra.mxu0 %v329
  %521 = vmatpush.bf16.msra.mxu0 %v321
  %522 = vmatpush.bf16.msra.mxu0 %v313
  %523 = vmatpush.bf16.msra.mxu0 %v305
  %524 = vmatpush.bf16.msra.mxu0 %v297
  %525 = vmatpush.bf16.msra.mxu0 %v289
  %526 = vmatpush.bf16.msra.mxu0 %v281
  %527 = vmatmul.bf16.gmra.mxu0 %v388
  %v528 = vpop.f32.mrf.mxu0
  %v529 = vadd.f32 %v86, %v528
  %v530 = vpop.f32.mrf.mxu0
  %v531 = vadd.f32 %v91, %v530
  %532 = vmatmul.bf16.gmra.mxu0 %v391
  %v533 = vpop.f32.mrf.mxu0
  %v534 = vadd.f32 %v96, %v533
  %v535 = vpop.f32.mrf.mxu0
  %536 = vdwg.mxu0
  %v537 = vmax.f32 %v403, 0.0
  %v538 = vmax.f32 %v421, 0.0
  %v539 = vmax.f32 %v439, 0.0
  %v540 = vmax.f32 %v457, 0.0
  %v541 = vmax.f32 %v475, 0.0
  %v542 = vmax.f32 %v493, 0.0
  %v543 = vmax.f32 %v511, 0.0
  %v544 = vmax.f32 %v529, 0.0
  %v545 = vmax.f32 %v405, 0.0
  %v546 = vmax.f32 %v423, 0.0
  %v547 = vmax.f32 %v441, 0.0
  %v548 = vmax.f32 %v459, 0.0
  %v549 = vmax.f32 %v477, 0.0
  %v550 = vmax.f32 %v495, 0.0
  %v551 = vmax.f32 %v513, 0.0
  %v552 = vmax.f32 %v531, 0.0
  %v553 = vmax.f32 %v408, 0.0
  %v554 = vmax.f32 %v426, 0.0
  %v555 = vmax.f32 %v444, 0.0
  %v556 = vmax.f32 %v462, 0.0
  %v557 = vmax.f32 %v480, 0.0
  %v558 = vmax.f32 %v498, 0.0
  %v559 = vmax.f32 %v516, 0.0
  %v560 = vmax.f32 %v534, 0.0
  %v561 = vld [vmem:[%s3] sm:$0xff]
  %v562 = vld [vmem:[%s3 + $0x8] sm:$0xff]
  %v563 = vld [vmem:[%s3 + $0x10] sm:$0xff]
  %565 = vset.pattern.permute.xlu0 0
  %566 = vperm.xlu0 %565, %v561
  %v567 = vpop.permute.xlu0 %566
  %570 = vset.pattern.permute.xlu0 0
  %571 = vperm.xlu0 %570, %v562
  %v572 = vpop.permute.xlu0 %571
  %575 = vset.pattern.permute.xlu0 0
  %576 = vperm.xlu0 %575, %v563
  %v577 = vpop.permute.xlu0 %576
  %v579 = vmul.f32 %v537, %v567
  %v580 = vmul.f32 %v538, %v567
  %v581 = vmul.f32 %v539, %v567
  %v582 = vmul.f32 %v540, %v567
  %v583 = vmul.f32 %v541, %v567
  %v584 = vmul.f32 %v542, %v567
  %v585 = vmul.f32 %v543, %v567
  %v586 = vmul.f32 %v544, %v567
  %v587 = vmul.f32 %v545, %v572
  %v588 = vmul.f32 %v546, %v572
  %v589 = vmul.f32 %v547, %v572
  %v590 = vmul.f32 %v548, %v572
  %v591 = vmul.f32 %v549, %v572
  %v592 = vmul.f32 %v550, %v572
  %v593 = vmul.f32 %v551, %v572
  %v594 = vmul.f32 %v552, %v572
  %v595 = vmul.f32 %v553, %v577
  %v596 = vmul.f32 %v554, %v577
  %v597 = vmul.f32 %v555, %v577
  %v598 = vmul.f32 %v556, %v577
  %v599 = vmul.f32 %v557, %v577
  %v600 = vmul.f32 %v558, %v577
  %v601 = vmul.f32 %v559, %v577
  %v602 = vmul.f32 %v560, %v577
  %v603 = vld [vmem:[%s4] sm:$0xff]
  %v604 = vld [vmem:[%s4 + $0x8] sm:$0xff]
  %v605 = vld [vmem:[%s4 + $0x10] sm:$0xff]
  %607 = vset.pattern.permute.xlu0 0
  %608 = vperm.xlu0 %607, %v603
  %v609 = vpop.permute.xlu0 %608
  %612 = vset.pattern.permute.xlu0 0
  %613 = vperm.xlu0 %612, %v604
  %v614 = vpop.permute.xlu0 %613
  %617 = vset.pattern.permute.xlu0 0
  %618 = vperm.xlu0 %617, %v605
  %v619 = vpop.permute.xlu0 %618
  %v621 = vadd.f32 %v579, %v609
  %v622 = vadd.f32 %v580, %v609
  %v623 = vadd.f32 %v581, %v609
  %v624 = vadd.f32 %v582, %v609
  %v625 = vadd.f32 %v583, %v609
  %v626 = vadd.f32 %v584, %v609
  %v627 = vadd.f32 %v585, %v609
  %v628 = vadd.f32 %v586, %v609
  %v629 = vadd.f32 %v587, %v614
  %v630 = vadd.f32 %v588, %v614
  %v631 = vadd.f32 %v589, %v614
  %v632 = vadd.f32 %v590, %v614
  %v633 = vadd.f32 %v591, %v614
  %v634 = vadd.f32 %v592, %v614
  %v635 = vadd.f32 %v593, %v614
  %v636 = vadd.f32 %v594, %v614
  %v637 = vadd.f32 %v595, %v619
  %v638 = vadd.f32 %v596, %v619
  %v639 = vadd.f32 %v597, %v619
  %v640 = vadd.f32 %v598, %v619
  %v641 = vadd.f32 %v599, %v619
  %v642 = vadd.f32 %v600, %v619
  %v643 = vadd.f32 %v601, %v619
  %v644 = vadd.f32 %v602, %v619
  %v645 = vpack.c.bf16 %v622, %v621
  %v646 = vpack.c.bf16 %v624, %v623
  %v647 = vpack.c.bf16 %v626, %v625
  %v648 = vpack.c.bf16 %v628, %v627
  %v649 = vpack.c.bf16 %v630, %v629
  %v650 = vpack.c.bf16 %v632, %v631
  %v651 = vpack.c.bf16 %v634, %v633
  %v652 = vpack.c.bf16 %v636, %v635
  %v653 = vpack.c.bf16 %v638, %v637
  %v654 = vpack.c.bf16 %v640, %v639
  %v655 = vpack.c.bf16 %v642, %v641
  %v656 = vpack.c.bf16 %v644, %v643
  %657 = vst [vmem:[%s5] sm:$0xff] %v645
  %658 = vst [vmem:[%s5 + $0x8] sm:$0xff] %v646
  %659 = vst [vmem:[%s5 + $0x10] sm:$0xff] %v647
  %660 = vst [vmem:[%s5 + $0x18] sm:$0xff] %v648
  %661 = vst [vmem:[%s5 + $0x20] sm:$0xff] %v649
  %662 = vst [vmem:[%s5 + $0x28] sm:$0xff] %v650
  %663 = vst [vmem:[%s5 + $0x30] sm:$0xff] %v651
  %664 = vst [vmem:[%s5 + $0x38] sm:$0xff] %v652
  %665 = vst [vmem:[%s5 + $0x40] sm:$0xff] %v653
  %666 = vst [vmem:[%s5 + $0x48] sm:$0xff] %v654
  %667 = vst [vmem:[%s5 + $0x50] sm:$0xff] %v655
  %668 = vst [vmem:[%s5 + $0x58] sm:$0xff] %v656
  // Predicated region
  $region22: #{net_forward.6} parent=0 // pred_check
    _
  $region23: #{net_forward.6} parent=0 // pred_check_branch
    %670 = sbr.rel (0) target = $region25
  $region24: #{net_forward.6} parent=0 // pred_region
    _
  $region25: #{net_forward.6} parent=0 // pred_fallthru
    _
  // Predicated region
  $region26: #{net_forward.6} parent=0 // pred_check
    _
  $region27: #{net_forward.6} parent=0 // pred_check_branch
    %672 = sbr.rel (0) target = $region29
  $region28: #{net_forward.6} parent=0 // pred_region
    _
  $region29: #{net_forward.6} parent=0 // pred_fallthru
    _

// kernel: net_forward.7
$region0: #{net_forward.7}
  #allocation0 [shape = 'u32[]', space=smem, size = 0x4, offset = 0x4, fixed_abs, tag = 'smem constant byte address 0x4 - core index']
  #allocation1 [shape = 'u32[72,128]{1,0:T(1,128)}', space=vmem, size = 0x9000, scoped, tag = 'internal scratch']
  #allocation2 [shape = 'f32[4,500]{1,0:T(4,128)}', space=vmem, size = 0x2000, scoped, tag = 'scratch operand']
  %s0 = inlined_call_operand.vmem [shape: bf16[4,6144], index: 0, kind: input, shape index: {}]
  %s1 = inlined_call_operand.vmem [shape: bf16[6144,500], index: 1, kind: input, shape index: {}]
  %s2 = inlined_call_operand.vmem [shape: f32[1,500], index: 2, kind: input, shape index: {}]
  %s3 = inlined_call_operand.vmem [shape: bf16[500,500], index: 3, kind: input, shape index: {}]
  %s4 = inlined_call_operand.vmem [shape: f32[1,500], index: 4, kind: input, shape index: {}]
  %s5 = inlined_call_operand.vmem [shape: bf16[500,5], index: 5, kind: input, shape index: {}]
  %s6 = inlined_call_operand.vmem [shape: f32[1,5], index: 6, kind: input, shape index: {}]
  %s7 = inlined_call_operand.vmem [shape: f32[4,5], index: 7, kind: output, shape index: {}]
  %s8 = sld [smem:[#allocation0]]
  $region46: #{net_forward.7} parent=0
    _
  %s10 = ssub.s32 1, %s8
  %s11 = scalar_select 0, %s10, %s8
  // Predicated region
  $region2: #{net_forward.7} parent=0 // pred_check
    _
  $region3: #{net_forward.7} parent=0 // pred_check_branch
    %13 = sbr.rel (0) target = $region5
  $region4: #{net_forward.7} parent=0 // pred_region
    _
  $region5: #{net_forward.7} parent=0 // pred_fallthru
    _
  // Predicated region
  $region6: #{net_forward.7} parent=0 // pred_check
    _
  $region7: #{net_forward.7} parent=0 // pred_check_branch
    %15 = sbr.rel (0) target = $region9
  $region8: #{net_forward.7} parent=0 // pred_region
    _
  $region9: #{net_forward.7} parent=0 // pred_fallthru
    _
  // Predicated region
  $region10: #{net_forward.7} parent=0 // pred_check
    _
  $region11: #{net_forward.7} parent=0 // pred_check_branch
    %17 = sbr.rel (0) target = $region13
  $region12: #{net_forward.7} parent=0 // pred_region
    _
  $region13: #{net_forward.7} parent=0 // pred_fallthru
    _
  // Predicated region
  $region14: #{net_forward.7} parent=0 // pred_check
    _
  $region15: #{net_forward.7} parent=0 // pred_check_branch
    %19 = sbr.rel (0) target = $region17
  $region16: #{net_forward.7} parent=0 // pred_region
    _
  $region17: #{net_forward.7} parent=0 // pred_fallthru
    _
  // Predicated region
  $region18: #{net_forward.7} parent=0 // pred_check
    _
  $region19: #{net_forward.7} parent=0 // pred_check_branch
    %21 = sbr.rel (0) target = $region21
  $region20: #{net_forward.7} parent=0 // pred_region
    _
  $region21: #{net_forward.7} parent=0 // pred_fallthru
    _
  // Predicated region
  $region22: #{net_forward.7} parent=0 // pred_check
    _
  $region23: #{net_forward.7} parent=0 // pred_check_branch
    %23 = sbr.rel (0) target = $region25
  $region24: #{net_forward.7} parent=0 // pred_region
    _
  $region25: #{net_forward.7} parent=0 // pred_fallthru
    _
  // Predicated region
  $region26: #{net_forward.7} parent=0 // pred_check
    _
  $region27: #{net_forward.7} parent=0 // pred_check_branch
    %25 = sbr.rel (0) target = $region29
  $region28: #{net_forward.7} parent=0 // pred_region
    _
  $region29: #{net_forward.7} parent=0 // pred_fallthru
    _
  %p26 = scmp.eq.s32.totalorder 0, 0
  // Predicated region
  $region30: #{net_forward.7} parent=0 // pred_check
    %p27 = pneg %p26
  $region31: #{net_forward.7} parent=0 // pred_check_branch
    %29 = sbr.rel (%p27) target = $region33
  $region32: #{net_forward.7} parent=0 // pred_region
    %30 = vst [vmem:[#allocation2] sm:$0xff] 0.0
    %vm31 = vcmask 1043456
    %vm32 = vcmask 949252
    %vm33 = vmor %vm32, %vm31
    %34 = vst.msk [vmem:[#allocation2 + $0x8] sm:$0xff] %vm33, 0.0
  $region33: #{net_forward.7} parent=0 // pred_fallthru
    _
  %v35 = vld [vmem:[#allocation2] sm:$0xff]
  %v36 = vld [vmem:[#allocation2 + $0x8] sm:$0xff]
  %v37 = vld [vmem:[%s0] sm:$0xff]
  %v38 = vld [vmem:[%s0 + $0x8] sm:$0xff]
  %v39 = vld [vmem:[%s0 + $0x10] sm:$0xff]
  %v40 = vld [vmem:[%s0 + $0x18] sm:$0xff]
  %v41 = vld [vmem:[%s0 + $0x20] sm:$0xff]
  %v42 = vld [vmem:[%s0 + $0x28] sm:$0xff]
  %v43 = vld [vmem:[%s0 + $0x30] sm:$0xff]
  %v44 = vld [vmem:[%s0 + $0x38] sm:$0xff]
  %v45 = vld [vmem:[%s0 + $0x40] sm:$0xff]
  %v46 = vld [vmem:[%s0 + $0x48] sm:$0xff]
  %v47 = vld [vmem:[%s0 + $0x50] sm:$0xff]
  %v48 = vld [vmem:[%s0 + $0x58] sm:$0xff]
  %v49 = vld [vmem:[%s1] sm:$0xff]
  %v50 = vld [vmem:[%s1 + $0x8] sm:$0xff]
  %v51 = vld [vmem:[%s1 + $0x10] sm:$0xff]
  %v52 = vld [vmem:[%s1 + $0x18] sm:$0xff]
  %v53 = vld [vmem:[%s1 + $0x20] sm:$0xff]
  %v54 = vld [vmem:[%s1 + $0x28] sm:$0xff]
  %v55 = vld [vmem:[%s1 + $0x30] sm:$0xff]
  %v56 = vld [vmem:[%s1 + $0x38] sm:$0xff]
  %v57 = vld [vmem:[%s1 + $0x40] sm:$0xff]
  %v58 = vld [vmem:[%s1 + $0x48] sm:$0xff]
  %v59 = vld [vmem:[%s1 + $0x50] sm:$0xff]
  %v60 = vld [vmem:[%s1 + $0x58] sm:$0xff]
  %v61 = vld [vmem:[%s1 + $0x60] sm:$0xff]
  %v62 = vld [vmem:[%s1 + $0x68] sm:$0xff]
  %v63 = vld [vmem:[%s1 + $0x70] sm:$0xff]
  %v64 = vld [vmem:[%s1 + $0x78] sm:$0xff]
  %v65 = vld [vmem:[%s1 + $0x80] sm:$0xff]
  %v66 = vld [vmem:[%s1 + $0x88] sm:$0xff]
  %v67 = vld [vmem:[%s1 + $0x90] sm:$0xff]
  %v68 = vld [vmem:[%s1 + $0x98] sm:$0xff]
  %v69 = vld [vmem:[%s1 + $0xa0] sm:$0xff]
  %v70 = vld [vmem:[%s1 + $0xa8] sm:$0xff]
  %v71 = vld [vmem:[%s1 + $0xb0] sm:$0xff]
  %v72 = vld [vmem:[%s1 + $0xb8] sm:$0xff]
  %v73 = vld [vmem:[%s1 + $0xc0] sm:$0xff]
  %v74 = vld [vmem:[%s1 + $0xc8] sm:$0xff]
  %v75 = vld [vmem:[%s1 + $0xd0] sm:$0xff]
  %v76 = vld [vmem:[%s1 + $0xd8] sm:$0xff]
  %v77 = vld [vmem:[%s1 + $0xe0] sm:$0xff]
  %v78 = vld [vmem:[%s1 + $0xe8] sm:$0xff]
  %v79 = vld [vmem:[%s1 + $0xf0] sm:$0xff]
  %v80 = vld [vmem:[%s1 + $0xf8] sm:$0xff]
  %v81 = vld [vmem:[%s1 + $0x100] sm:$0xff]
  %v82 = vld [vmem:[%s1 + $0x108] sm:$0xff]
  %v83 = vld [vmem:[%s1 + $0x110] sm:$0xff]
  %v84 = vld [vmem:[%s1 + $0x118] sm:$0xff]
  %v85 = vld [vmem:[%s1 + $0x120] sm:$0xff]
  %v86 = vld [vmem:[%s1 + $0x128] sm:$0xff]
  %v87 = vld [vmem:[%s1 + $0x130] sm:$0xff]
  %v88 = vld [vmem:[%s1 + $0x138] sm:$0xff]
  %v89 = vld [vmem:[%s1 + $0x140] sm:$0xff]
  %v90 = vld [vmem:[%s1 + $0x148] sm:$0xff]
  %v91 = vld [vmem:[%s1 + $0x150] sm:$0xff]
  %v92 = vld [vmem:[%s1 + $0x158] sm:$0xff]
  %v93 = vld [vmem:[%s1 + $0x160] sm:$0xff]
  %v94 = vld [vmem:[%s1 + $0x168] sm:$0xff]
  %v95 = vld [vmem:[%s1 + $0x170] sm:$0xff]
  %v96 = vld [vmem:[%s1 + $0x178] sm:$0xff]
  %v97 = vld [vmem:[%s1 + $0x180] sm:$0xff]
  %v98 = vld [vmem:[%s1 + $0x188] sm:$0xff]
  %v99 = vld [vmem:[%s1 + $0x190] sm:$0xff]
  %v100 = vld [vmem:[%s1 + $0x198] sm:$0xff]
  %v101 = vld [vmem:[%s1 + $0x1a0] sm:$0xff]
  %v102 = vld [vmem:[%s1 + $0x1a8] sm:$0xff]
  %v103 = vld [vmem:[%s1 + $0x1b0] sm:$0xff]
  %v104 = vld [vmem:[%s1 + $0x1b8] sm:$0xff]
  %v105 = vld [vmem:[%s1 + $0x1c0] sm:$0xff]
  %v106 = vld [vmem:[%s1 + $0x1c8] sm:$0xff]
  %v107 = vld [vmem:[%s1 + $0x1d0] sm:$0xff]
  %v108 = vld [vmem:[%s1 + $0x1d8] sm:$0xff]
  %v109 = vld [vmem:[%s1 + $0x1e0] sm:$0xff]
  %v110 = vld [vmem:[%s1 + $0x1e8] sm:$0xff]
  %v111 = vld [vmem:[%s1 + $0x1f0] sm:$0xff]
  %v112 = vld [vmem:[%s1 + $0x1f8] sm:$0xff]
  %v113 = vld [vmem:[%s1 + $0x200] sm:$0xff]
  %v114 = vld [vmem:[%s1 + $0x208] sm:$0xff]
  %v115 = vld [vmem:[%s1 + $0x210] sm:$0xff]
  %v116 = vld [vmem:[%s1 + $0x218] sm:$0xff]
  %v117 = vld [vmem:[%s1 + $0x220] sm:$0xff]
  %v118 = vld [vmem:[%s1 + $0x228] sm:$0xff]
  %v119 = vld [vmem:[%s1 + $0x230] sm:$0xff]
  %v120 = vld [vmem:[%s1 + $0x238] sm:$0xff]
  %v121 = vld [vmem:[%s1 + $0x240] sm:$0xff]
  %v122 = vld [vmem:[%s1 + $0x248] sm:$0xff]
  %v123 = vld [vmem:[%s1 + $0x250] sm:$0xff]
  %v124 = vld [vmem:[%s1 + $0x258] sm:$0xff]
  %v125 = vld [vmem:[%s1 + $0x260] sm:$0xff]
  %v126 = vld [vmem:[%s1 + $0x268] sm:$0xff]
  %v127 = vld [vmem:[%s1 + $0x270] sm:$0xff]
  %v128 = vld [vmem:[%s1 + $0x278] sm:$0xff]
  %v129 = vld [vmem:[%s1 + $0x280] sm:$0xff]
  %v130 = vld [vmem:[%s1 + $0x288] sm:$0xff]
  %v131 = vld [vmem:[%s1 + $0x290] sm:$0xff]
  %v132 = vld [vmem:[%s1 + $0x298] sm:$0xff]
  %v133 = vld [vmem:[%s1 + $0x2a0] sm:$0xff]
  %v134 = vld [vmem:[%s1 + $0x2a8] sm:$0xff]
  %v135 = vld [vmem:[%s1 + $0x2b0] sm:$0xff]
  %v136 = vld [vmem:[%s1 + $0x2b8] sm:$0xff]
  %v137 = vld [vmem:[%s1 + $0x2c0] sm:$0xff]
  %v138 = vld [vmem:[%s1 + $0x2c8] sm:$0xff]
  %v139 = vld [vmem:[%s1 + $0x2d0] sm:$0xff]
  %v140 = vld [vmem:[%s1 + $0x2d8] sm:$0xff]
  %v141 = vld [vmem:[%s1 + $0x2e0] sm:$0xff]
  %v142 = vld [vmem:[%s1 + $0x2e8] sm:$0xff]
  %v143 = vld [vmem:[%s1 + $0x2f0] sm:$0xff]
  %v144 = vld [vmem:[%s1 + $0x2f8] sm:$0xff]
  %v145 = vld [vmem:[%s1 + $0x300] sm:$0xff]
  %v146 = vld [vmem:[%s1 + $0x308] sm:$0xff]
  %v147 = vld [vmem:[%s1 + $0x310] sm:$0xff]
  %v148 = vld [vmem:[%s1 + $0x318] sm:$0xff]
  %v149 = vld [vmem:[%s1 + $0x320] sm:$0xff]
  %v150 = vld [vmem:[%s1 + $0x328] sm:$0xff]
  %v151 = vld [vmem:[%s1 + $0x330] sm:$0xff]
  %v152 = vld [vmem:[%s1 + $0x338] sm:$0xff]
  %v153 = vld [vmem:[%s1 + $0x340] sm:$0xff]
  %v154 = vld [vmem:[%s1 + $0x348] sm:$0xff]
  %v155 = vld [vmem:[%s1 + $0x350] sm:$0xff]
  %v156 = vld [vmem:[%s1 + $0x358] sm:$0xff]
  %v157 = vld [vmem:[%s1 + $0x360] sm:$0xff]
  %v158 = vld [vmem:[%s1 + $0x368] sm:$0xff]
  %v159 = vld [vmem:[%s1 + $0x370] sm:$0xff]
  %v160 = vld [vmem:[%s1 + $0x378] sm:$0xff]
  %v161 = vld [vmem:[%s1 + $0x380] sm:$0xff]
  %v162 = vld [vmem:[%s1 + $0x388] sm:$0xff]
  %v163 = vld [vmem:[%s1 + $0x390] sm:$0xff]
  %v164 = vld [vmem:[%s1 + $0x398] sm:$0xff]
  %v165 = vld [vmem:[%s1 + $0x3a0] sm:$0xff]
  %v166 = vld [vmem:[%s1 + $0x3a8] sm:$0xff]
  %v167 = vld [vmem:[%s1 + $0x3b0] sm:$0xff]
  %v168 = vld [vmem:[%s1 + $0x3b8] sm:$0xff]
  %v169 = vld [vmem:[%s1 + $0x3c0] sm:$0xff]
  %v170 = vld [vmem:[%s1 + $0x3c8] sm:$0xff]
  %v171 = vld [vmem:[%s1 + $0x3d0] sm:$0xff]
  %v172 = vld [vmem:[%s1 + $0x3d8] sm:$0xff]
  %v173 = vld [vmem:[%s1 + $0x3e0] sm:$0xff]
  %v174 = vld [vmem:[%s1 + $0x3e8] sm:$0xff]
  %v175 = vld [vmem:[%s1 + $0x3f0] sm:$0xff]
  %v176 = vld [vmem:[%s1 + $0x3f8] sm:$0xff]
  %v177 = vld [vmem:[%s1 + $0x400] sm:$0xff]
  %v178 = vld [vmem:[%s1 + $0x408] sm:$0xff]
  %v179 = vld [vmem:[%s1 + $0x410] sm:$0xff]
  %v180 = vld [vmem:[%s1 + $0x418] sm:$0xff]
  %v181 = vld [vmem:[%s1 + $0x420] sm:$0xff]
  %v182 = vld [vmem:[%s1 + $0x428] sm:$0xff]
  %v183 = vld [vmem:[%s1 + $0x430] sm:$0xff]
  %v184 = vld [vmem:[%s1 + $0x438] sm:$0xff]
  %v185 = vld [vmem:[%s1 + $0x440] sm:$0xff]
  %v186 = vld [vmem:[%s1 + $0x448] sm:$0xff]
  %v187 = vld [vmem:[%s1 + $0x450] sm:$0xff]
  %v188 = vld [vmem:[%s1 + $0x458] sm:$0xff]
  %v189 = vld [vmem:[%s1 + $0x460] sm:$0xff]
  %v190 = vld [vmem:[%s1 + $0x468] sm:$0xff]
  %v191 = vld [vmem:[%s1 + $0x470] sm:$0xff]
  %v192 = vld [vmem:[%s1 + $0x478] sm:$0xff]
  %v193 = vld [vmem:[%s1 + $0x480] sm:$0xff]
  %v194 = vld [vmem:[%s1 + $0x488] sm:$0xff]
  %v195 = vld [vmem:[%s1 + $0x490] sm:$0xff]
  %v196 = vld [vmem:[%s1 + $0x498] sm:$0xff]
  %v197 = vld [vmem:[%s1 + $0x4a0] sm:$0xff]
  %v198 = vld [vmem:[%s1 + $0x4a8] sm:$0xff]
  %v199 = vld [vmem:[%s1 + $0x4b0] sm:$0xff]
  %v200 = vld [vmem:[%s1 + $0x4b8] sm:$0xff]
  %v201 = vld [vmem:[%s1 + $0x4c0] sm:$0xff]
  %v202 = vld [vmem:[%s1 + $0x4c8] sm:$0xff]
  %v203 = vld [vmem:[%s1 + $0x4d0] sm:$0xff]
  %v204 = vld [vmem:[%s1 + $0x4d8] sm:$0xff]
  %v205 = vld [vmem:[%s1 + $0x4e0] sm:$0xff]
  %v206 = vld [vmem:[%s1 + $0x4e8] sm:$0xff]
  %v207 = vld [vmem:[%s1 + $0x4f0] sm:$0xff]
  %v208 = vld [vmem:[%s1 + $0x4f8] sm:$0xff]
  %v209 = vld [vmem:[%s1 + $0x500] sm:$0xff]
  %v210 = vld [vmem:[%s1 + $0x508] sm:$0xff]
  %v211 = vld [vmem:[%s1 + $0x510] sm:$0xff]
  %v212 = vld [vmem:[%s1 + $0x518] sm:$0xff]
  %v213 = vld [vmem:[%s1 + $0x520] sm:$0xff]
  %v214 = vld [vmem:[%s1 + $0x528] sm:$0xff]
  %v215 = vld [vmem:[%s1 + $0x530] sm:$0xff]
  %v216 = vld [vmem:[%s1 + $0x538] sm:$0xff]
  %v217 = vld [vmem:[%s1 + $0x540] sm:$0xff]
  %v218 = vld [vmem:[%s1 + $0x548] sm:$0xff]
  %v219 = vld [vmem:[%s1 + $0x550] sm:$0xff]
  %v220 = vld [vmem:[%s1 + $0x558] sm:$0xff]
  %v221 = vld [vmem:[%s1 + $0x560] sm:$0xff]
  %v222 = vld [vmem:[%s1 + $0x568] sm:$0xff]
  %v223 = vld [vmem:[%s1 + $0x570] sm:$0xff]
  %v224 = vld [vmem:[%s1 + $0x578] sm:$0xff]
  %v225 = vld [vmem:[%s1 + $0x580] sm:$0xff]
  %v226 = vld [vmem:[%s1 + $0x588] sm:$0xff]
  %v227 = vld [vmem:[%s1 + $0x590] sm:$0xff]
  %v228 = vld [vmem:[%s1 + $0x598] sm:$0xff]
  %v229 = vld [vmem:[%s1 + $0x5a0] sm:$0xff]
  %v230 = vld [vmem:[%s1 + $0x5a8] sm:$0xff]
  %v231 = vld [vmem:[%s1 + $0x5b0] sm:$0xff]
  %v232 = vld [vmem:[%s1 + $0x5b8] sm:$0xff]
  %v233 = vld [vmem:[%s1 + $0x5c0] sm:$0xff]
  %v234 = vld [vmem:[%s1 + $0x5c8] sm:$0xff]
  %v235 = vld [vmem:[%s1 + $0x5d0] sm:$0xff]
  %v236 = vld [vmem:[%s1 + $0x5d8] sm:$0xff]
  %v237 = vld [vmem:[%s1 + $0x5e0] sm:$0xff]
  %v238 = vld [vmem:[%s1 + $0x5e8] sm:$0xff]
  %v239 = vld [vmem:[%s1 + $0x5f0] sm:$0xff]
  %v240 = vld [vmem:[%s1 + $0x5f8] sm:$0xff]
  %v241 = vld [vmem:[%s1 + $0x600] sm:$0xff]
  %v242 = vld [vmem:[%s1 + $0x608] sm:$0xff]
  %v243 = vld [vmem:[%s1 + $0x610] sm:$0xff]
  %v244 = vld [vmem:[%s1 + $0x618] sm:$0xff]
  %v245 = vld [vmem:[%s1 + $0x620] sm:$0xff]
  %v246 = vld [vmem:[%s1 + $0x628] sm:$0xff]
  %v247 = vld [vmem:[%s1 + $0x630] sm:$0xff]
  %v248 = vld [vmem:[%s1 + $0x638] sm:$0xff]
  %v249 = vld [vmem:[%s1 + $0x640] sm:$0xff]
  %v250 = vld [vmem:[%s1 + $0x648] sm:$0xff]
  %v251 = vld [vmem:[%s1 + $0x650] sm:$0xff]
  %v252 = vld [vmem:[%s1 + $0x658] sm:$0xff]
  %v253 = vld [vmem:[%s1 + $0x660] sm:$0xff]
  %v254 = vld [vmem:[%s1 + $0x668] sm:$0xff]
  %v255 = vld [vmem:[%s1 + $0x670] sm:$0xff]
  %v256 = vld [vmem:[%s1 + $0x678] sm:$0xff]
  %v257 = vld [vmem:[%s1 + $0x680] sm:$0xff]
  %v258 = vld [vmem:[%s1 + $0x688] sm:$0xff]
  %v259 = vld [vmem:[%s1 + $0x690] sm:$0xff]
  %v260 = vld [vmem:[%s1 + $0x698] sm:$0xff]
  %v261 = vld [vmem:[%s1 + $0x6a0] sm:$0xff]
  %v262 = vld [vmem:[%s1 + $0x6a8] sm:$0xff]
  %v263 = vld [vmem:[%s1 + $0x6b0] sm:$0xff]
  %v264 = vld [vmem:[%s1 + $0x6b8] sm:$0xff]
  %v265 = vld [vmem:[%s1 + $0x6c0] sm:$0xff]
  %v266 = vld [vmem:[%s1 + $0x6c8] sm:$0xff]
  %v267 = vld [vmem:[%s1 + $0x6d0] sm:$0xff]
  %v268 = vld [vmem:[%s1 + $0x6d8] sm:$0xff]
  %v269 = vld [vmem:[%s1 + $0x6e0] sm:$0xff]
  %v270 = vld [vmem:[%s1 + $0x6e8] sm:$0xff]
  %v271 = vld [vmem:[%s1 + $0x6f0] sm:$0xff]
  %v272 = vld [vmem:[%s1 + $0x6f8] sm:$0xff]
  %v273 = vld [vmem:[%s1 + $0x700] sm:$0xff]
  %v274 = vld [vmem:[%s1 + $0x708] sm:$0xff]
  %v275 = vld [vmem:[%s1 + $0x710] sm:$0xff]
  %v276 = vld [vmem:[%s1 + $0x718] sm:$0xff]
  %v277 = vld [vmem:[%s1 + $0x720] sm:$0xff]
  %v278 = vld [vmem:[%s1 + $0x728] sm:$0xff]
  %v279 = vld [vmem:[%s1 + $0x730] sm:$0xff]
  %v280 = vld [vmem:[%s1 + $0x738] sm:$0xff]
  %v281 = vld [vmem:[%s1 + $0x740] sm:$0xff]
  %v282 = vld [vmem:[%s1 + $0x748] sm:$0xff]
  %v283 = vld [vmem:[%s1 + $0x750] sm:$0xff]
  %v284 = vld [vmem:[%s1 + $0x758] sm:$0xff]
  %v285 = vld [vmem:[%s1 + $0x760] sm:$0xff]
  %v286 = vld [vmem:[%s1 + $0x768] sm:$0xff]
  %v287 = vld [vmem:[%s1 + $0x770] sm:$0xff]
  %v288 = vld [vmem:[%s1 + $0x778] sm:$0xff]
  %v289 = vld [vmem:[%s1 + $0x780] sm:$0xff]
  %v290 = vld [vmem:[%s1 + $0x788] sm:$0xff]
  %v291 = vld [vmem:[%s1 + $0x790] sm:$0xff]
  %v292 = vld [vmem:[%s1 + $0x798] sm:$0xff]
  %v293 = vld [vmem:[%s1 + $0x7a0] sm:$0xff]
  %v294 = vld [vmem:[%s1 + $0x7a8] sm:$0xff]
  %v295 = vld [vmem:[%s1 + $0x7b0] sm:$0xff]
  %v296 = vld [vmem:[%s1 + $0x7b8] sm:$0xff]
  %v297 = vld [vmem:[%s1 + $0x7c0] sm:$0xff]
  %v298 = vld [vmem:[%s1 + $0x7c8] sm:$0xff]
  %v299 = vld [vmem:[%s1 + $0x7d0] sm:$0xff]
  %v300 = vld [vmem:[%s1 + $0x7d8] sm:$0xff]
  %v301 = vld [vmem:[%s1 + $0x7e0] sm:$0xff]
  %v302 = vld [vmem:[%s1 + $0x7e8] sm:$0xff]
  %v303 = vld [vmem:[%s1 + $0x7f0] sm:$0xff]
  %v304 = vld [vmem:[%s1 + $0x7f8] sm:$0xff]
  %v305 = vld [vmem:[%s1 + $0x800] sm:$0xff]
  %v306 = vld [vmem:[%s1 + $0x808] sm:$0xff]
  %v307 = vld [vmem:[%s1 + $0x810] sm:$0xff]
  %v308 = vld [vmem:[%s1 + $0x818] sm:$0xff]
  %v309 = vld [vmem:[%s1 + $0x820] sm:$0xff]
  %v310 = vld [vmem:[%s1 + $0x828] sm:$0xff]
  %v311 = vld [vmem:[%s1 + $0x830] sm:$0xff]
  %v312 = vld [vmem:[%s1 + $0x838] sm:$0xff]
  %v313 = vld [vmem:[%s1 + $0x840] sm:$0xff]
  %v314 = vld [vmem:[%s1 + $0x848] sm:$0xff]
  %v315 = vld [vmem:[%s1 + $0x850] sm:$0xff]
  %v316 = vld [vmem:[%s1 + $0x858] sm:$0xff]
  %v317 = vld [vmem:[%s1 + $0x860] sm:$0xff]
  %v318 = vld [vmem:[%s1 + $0x868] sm:$0xff]
  %v319 = vld [vmem:[%s1 + $0x870] sm:$0xff]
  %v320 = vld [vmem:[%s1 + $0x878] sm:$0xff]
  %v321 = vld [vmem:[%s1 + $0x880] sm:$0xff]
  %v322 = vld [vmem:[%s1 + $0x888] sm:$0xff]
  %v323 = vld [vmem:[%s1 + $0x890] sm:$0xff]
  %v324 = vld [vmem:[%s1 + $0x898] sm:$0xff]
  %v325 = vld [vmem:[%s1 + $0x8a0] sm:$0xff]
  %v326 = vld [vmem:[%s1 + $0x8a8] sm:$0xff]
  %v327 = vld [vmem:[%s1 + $0x8b0] sm:$0xff]
  %v328 = vld [vmem:[%s1 + $0x8b8] sm:$0xff]
  %v329 = vld [vmem:[%s1 + $0x8c0] sm:$0xff]
  %v330 = vld [vmem:[%s1 + $0x8c8] sm:$0xff]
  %v331 = vld [vmem:[%s1 + $0x8d0] sm:$0xff]
  %v332 = vld [vmem:[%s1 + $0x8d8] sm:$0xff]
  %v333 = vld [vmem:[%s1 + $0x8e0] sm:$0xff]
  %v334 = vld [vmem:[%s1 + $0x8e8] sm:$0xff]
  %v335 = vld [vmem:[%s1 + $0x8f0] sm:$0xff]
  %v336 = vld [vmem:[%s1 + $0x8f8] sm:$0xff]
  %v337 = vld [vmem:[%s1 + $0x900] sm:$0xff]
  %v338 = vld [vmem:[%s1 + $0x908] sm:$0xff]
  %v339 = vld [vmem:[%s1 + $0x910] sm:$0xff]
  %v340 = vld [vmem:[%s1 + $0x918] sm:$0xff]
  %v341 = vld [vmem:[%s1 + $0x920] sm:$0xff]
  %v342 = vld [vmem:[%s1 + $0x928] sm:$0xff]
  %v343 = vld [vmem:[%s1 + $0x930] sm:$0xff]
  %v344 = vld [vmem:[%s1 + $0x938] sm:$0xff]
  %v345 = vld [vmem:[%s1 + $0x940] sm:$0xff]
  %v346 = vld [vmem:[%s1 + $0x948] sm:$0xff]
  %v347 = vld [vmem:[%s1 + $0x950] sm:$0xff]
  %v348 = vld [vmem:[%s1 + $0x958] sm:$0xff]
  %v349 = vld [vmem:[%s1 + $0x960] sm:$0xff]
  %v350 = vld [vmem:[%s1 + $0x968] sm:$0xff]
  %v351 = vld [vmem:[%s1 + $0x970] sm:$0xff]
  %v352 = vld [vmem:[%s1 + $0x978] sm:$0xff]
  %v353 = vld [vmem:[%s1 + $0x980] sm:$0xff]
  %v354 = vld [vmem:[%s1 + $0x988] sm:$0xff]
  %v355 = vld [vmem:[%s1 + $0x990] sm:$0xff]
  %v356 = vld [vmem:[%s1 + $0x998] sm:$0xff]
  %v357 = vld [vmem:[%s1 + $0x9a0] sm:$0xff]
  %v358 = vld [vmem:[%s1 + $0x9a8] sm:$0xff]
  %v359 = vld [vmem:[%s1 + $0x9b0] sm:$0xff]
  %v360 = vld [vmem:[%s1 + $0x9b8] sm:$0xff]
  %v361 = vld [vmem:[%s1 + $0x9c0] sm:$0xff]
  %v362 = vld [vmem:[%s1 + $0x9c8] sm:$0xff]
  %v363 = vld [vmem:[%s1 + $0x9d0] sm:$0xff]
  %v364 = vld [vmem:[%s1 + $0x9d8] sm:$0xff]
  %v365 = vld [vmem:[%s1 + $0x9e0] sm:$0xff]
  %v366 = vld [vmem:[%s1 + $0x9e8] sm:$0xff]
  %v367 = vld [vmem:[%s1 + $0x9f0] sm:$0xff]
  %v368 = vld [vmem:[%s1 + $0x9f8] sm:$0xff]
  %v369 = vld [vmem:[%s1 + $0xa00] sm:$0xff]
  %v370 = vld [vmem:[%s1 + $0xa08] sm:$0xff]
  %v371 = vld [vmem:[%s1 + $0xa10] sm:$0xff]
  %v372 = vld [vmem:[%s1 + $0xa18] sm:$0xff]
  %v373 = vld [vmem:[%s1 + $0xa20] sm:$0xff]
  %v374 = vld [vmem:[%s1 + $0xa28] sm:$0xff]
  %v375 = vld [vmem:[%s1 + $0xa30] sm:$0xff]
  %v376 = vld [vmem:[%s1 + $0xa38] sm:$0xff]
  %v377 = vld [vmem:[%s1 + $0xa40] sm:$0xff]
  %v378 = vld [vmem:[%s1 + $0xa48] sm:$0xff]
  %v379 = vld [vmem:[%s1 + $0xa50] sm:$0xff]
  %v380 = vld [vmem:[%s1 + $0xa58] sm:$0xff]
  %v381 = vld [vmem:[%s1 + $0xa60] sm:$0xff]
  %v382 = vld [vmem:[%s1 + $0xa68] sm:$0xff]
  %v383 = vld [vmem:[%s1 + $0xa70] sm:$0xff]
  %v384 = vld [vmem:[%s1 + $0xa78] sm:$0xff]
  %v385 = vld [vmem:[%s1 + $0xa80] sm:$0xff]
  %v386 = vld [vmem:[%s1 + $0xa88] sm:$0xff]
  %v387 = vld [vmem:[%s1 + $0xa90] sm:$0xff]
  %v388 = vld [vmem:[%s1 + $0xa98] sm:$0xff]
  %v389 = vld [vmem:[%s1 + $0xaa0] sm:$0xff]
  %v390 = vld [vmem:[%s1 + $0xaa8] sm:$0xff]
  %v391 = vld [vmem:[%s1 + $0xab0] sm:$0xff]
  %v392 = vld [vmem:[%s1 + $0xab8] sm:$0xff]
  %v393 = vld [vmem:[%s1 + $0xac0] sm:$0xff]
  %v394 = vld [vmem:[%s1 + $0xac8] sm:$0xff]
  %v395 = vld [vmem:[%s1 + $0xad0] sm:$0xff]
  %v396 = vld [vmem:[%s1 + $0xad8] sm:$0xff]
  %v397 = vld [vmem:[%s1 + $0xae0] sm:$0xff]
  %v398 = vld [vmem:[%s1 + $0xae8] sm:$0xff]
  %v399 = vld [vmem:[%s1 + $0xaf0] sm:$0xff]
  %v400 = vld [vmem:[%s1 + $0xaf8] sm:$0xff]
  %v401 = vld [vmem:[%s1 + $0xb00] sm:$0xff]
  %v402 = vld [vmem:[%s1 + $0xb08] sm:$0xff]
  %v403 = vld [vmem:[%s1 + $0xb10] sm:$0xff]
  %v404 = vld [vmem:[%s1 + $0xb18] sm:$0xff]
  %v405 = vld [vmem:[%s1 + $0xb20] sm:$0xff]
  %v406 = vld [vmem:[%s1 + $0xb28] sm:$0xff]
  %v407 = vld [vmem:[%s1 + $0xb30] sm:$0xff]
  %v408 = vld [vmem:[%s1 + $0xb38] sm:$0xff]
  %v409 = vld [vmem:[%s1 + $0xb40] sm:$0xff]
  %v410 = vld [vmem:[%s1 + $0xb48] sm:$0xff]
  %v411 = vld [vmem:[%s1 + $0xb50] sm:$0xff]
  %v412 = vld [vmem:[%s1 + $0xb58] sm:$0xff]
  %v413 = vld [vmem:[%s1 + $0xb60] sm:$0xff]
  %v414 = vld [vmem:[%s1 + $0xb68] sm:$0xff]
  %v415 = vld [vmem:[%s1 + $0xb70] sm:$0xff]
  %v416 = vld [vmem:[%s1 + $0xb78] sm:$0xff]
  %v417 = vld [vmem:[%s1 + $0xb80] sm:$0xff]
  %v418 = vld [vmem:[%s1 + $0xb88] sm:$0xff]
  %v419 = vld [vmem:[%s1 + $0xb90] sm:$0xff]
  %v420 = vld [vmem:[%s1 + $0xb98] sm:$0xff]
  %v421 = vld [vmem:[%s1 + $0xba0] sm:$0xff]
  %v422 = vld [vmem:[%s1 + $0xba8] sm:$0xff]
  %v423 = vld [vmem:[%s1 + $0xbb0] sm:$0xff]
  %v424 = vld [vmem:[%s1 + $0xbb8] sm:$0xff]
  %v425 = vld [vmem:[%s1 + $0xbc0] sm:$0xff]
  %v426 = vld [vmem:[%s1 + $0xbc8] sm:$0xff]
  %v427 = vld [vmem:[%s1 + $0xbd0] sm:$0xff]
  %v428 = vld [vmem:[%s1 + $0xbd8] sm:$0xff]
  %v429 = vld [vmem:[%s1 + $0xbe0] sm:$0xff]
  %v430 = vld [vmem:[%s1 + $0xbe8] sm:$0xff]
  %v431 = vld [vmem:[%s1 + $0xbf0] sm:$0xff]
  %v432 = vld [vmem:[%s1 + $0xbf8] sm:$0xff]
  %v433 = vld [vmem:[%s1 + $0xc00] sm:$0xff]
  %v434 = vld [vmem:[%s1 + $0xc08] sm:$0xff]
  %v435 = vld [vmem:[%s1 + $0xc10] sm:$0xff]
  %v436 = vld [vmem:[%s1 + $0xc18] sm:$0xff]
  %v437 = vld [vmem:[%s1 + $0xc20] sm:$0xff]
  %v438 = vld [vmem:[%s1 + $0xc28] sm:$0xff]
  %v439 = vld [vmem:[%s1 + $0xc30] sm:$0xff]
  %v440 = vld [vmem:[%s1 + $0xc38] sm:$0xff]
  %v441 = vld [vmem:[%s1 + $0xc40] sm:$0xff]
  %v442 = vld [vmem:[%s1 + $0xc48] sm:$0xff]
  %v443 = vld [vmem:[%s1 + $0xc50] sm:$0xff]
  %v444 = vld [vmem:[%s1 + $0xc58] sm:$0xff]
  %v445 = vld [vmem:[%s1 + $0xc60] sm:$0xff]
  %v446 = vld [vmem:[%s1 + $0xc68] sm:$0xff]
  %v447 = vld [vmem:[%s1 + $0xc70] sm:$0xff]
  %v448 = vld [vmem:[%s1 + $0xc78] sm:$0xff]
  %v449 = vld [vmem:[%s1 + $0xc80] sm:$0xff]
  %v450 = vld [vmem:[%s1 + $0xc88] sm:$0xff]
  %v451 = vld [vmem:[%s1 + $0xc90] sm:$0xff]
  %v452 = vld [vmem:[%s1 + $0xc98] sm:$0xff]
  %v453 = vld [vmem:[%s1 + $0xca0] sm:$0xff]
  %v454 = vld [vmem:[%s1 + $0xca8] sm:$0xff]
  %v455 = vld [vmem:[%s1 + $0xcb0] sm:$0xff]
  %v456 = vld [vmem:[%s1 + $0xcb8] sm:$0xff]
  %v457 = vld [vmem:[%s1 + $0xcc0] sm:$0xff]
  %v458 = vld [vmem:[%s1 + $0xcc8] sm:$0xff]
  %v459 = vld [vmem:[%s1 + $0xcd0] sm:$0xff]
  %v460 = vld [vmem:[%s1 + $0xcd8] sm:$0xff]
  %v461 = vld [vmem:[%s1 + $0xce0] sm:$0xff]
  %v462 = vld [vmem:[%s1 + $0xce8] sm:$0xff]
  %v463 = vld [vmem:[%s1 + $0xcf0] sm:$0xff]
  %v464 = vld [vmem:[%s1 + $0xcf8] sm:$0xff]
  %v465 = vld [vmem:[%s1 + $0xd00] sm:$0xff]
  %v466 = vld [vmem:[%s1 + $0xd08] sm:$0xff]
  %v467 = vld [vmem:[%s1 + $0xd10] sm:$0xff]
  %v468 = vld [vmem:[%s1 + $0xd18] sm:$0xff]
  %v469 = vld [vmem:[%s1 + $0xd20] sm:$0xff]
  %v470 = vld [vmem:[%s1 + $0xd28] sm:$0xff]
  %v471 = vld [vmem:[%s1 + $0xd30] sm:$0xff]
  %v472 = vld [vmem:[%s1 + $0xd38] sm:$0xff]
  %v473 = vld [vmem:[%s1 + $0xd40] sm:$0xff]
  %v474 = vld [vmem:[%s1 + $0xd48] sm:$0xff]
  %v475 = vld [vmem:[%s1 + $0xd50] sm:$0xff]
  %v476 = vld [vmem:[%s1 + $0xd58] sm:$0xff]
  %v477 = vld [vmem:[%s1 + $0xd60] sm:$0xff]
  %v478 = vld [vmem:[%s1 + $0xd68] sm:$0xff]
  %v479 = vld [vmem:[%s1 + $0xd70] sm:$0xff]
  %v480 = vld [vmem:[%s1 + $0xd78] sm:$0xff]
  %v481 = vld [vmem:[%s1 + $0xd80] sm:$0xff]
  %v482 = vld [vmem:[%s1 + $0xd88] sm:$0xff]
  %v483 = vld [vmem:[%s1 + $0xd90] sm:$0xff]
  %v484 = vld [vmem:[%s1 + $0xd98] sm:$0xff]
  %v485 = vld [vmem:[%s1 + $0xda0] sm:$0xff]
  %v486 = vld [vmem:[%s1 + $0xda8] sm:$0xff]
  %v487 = vld [vmem:[%s1 + $0xdb0] sm:$0xff]
  %v488 = vld [vmem:[%s1 + $0xdb8] sm:$0xff]
  %v489 = vld [vmem:[%s1 + $0xdc0] sm:$0xff]
  %v490 = vld [vmem:[%s1 + $0xdc8] sm:$0xff]
  %v491 = vld [vmem:[%s1 + $0xdd0] sm:$0xff]
  %v492 = vld [vmem:[%s1 + $0xdd8] sm:$0xff]
  %v493 = vld [vmem:[%s1 + $0xde0] sm:$0xff]
  %v494 = vld [vmem:[%s1 + $0xde8] sm:$0xff]
  %v495 = vld [vmem:[%s1 + $0xdf0] sm:$0xff]
  %v496 = vld [vmem:[%s1 + $0xdf8] sm:$0xff]
  %v497 = vld [vmem:[%s1 + $0xe00] sm:$0xff]
  %v498 = vld [vmem:[%s1 + $0xe08] sm:$0xff]
  %v499 = vld [vmem:[%s1 + $0xe10] sm:$0xff]
  %v500 = vld [vmem:[%s1 + $0xe18] sm:$0xff]
  %v501 = vld [vmem:[%s1 + $0xe20] sm:$0xff]
  %v502 = vld [vmem:[%s1 + $0xe28] sm:$0xff]
  %v503 = vld [vmem:[%s1 + $0xe30] sm:$0xff]
  %v504 = vld [vmem:[%s1 + $0xe38] sm:$0xff]
  %v505 = vld [vmem:[%s1 + $0xe40] sm:$0xff]
  %v506 = vld [vmem:[%s1 + $0xe48] sm:$0xff]
  %v507 = vld [vmem:[%s1 + $0xe50] sm:$0xff]
  %v508 = vld [vmem:[%s1 + $0xe58] sm:$0xff]
  %v509 = vld [vmem:[%s1 + $0xe60] sm:$0xff]
  %v510 = vld [vmem:[%s1 + $0xe68] sm:$0xff]
  %v511 = vld [vmem:[%s1 + $0xe70] sm:$0xff]
  %v512 = vld [vmem:[%s1 + $0xe78] sm:$0xff]
  %v513 = vld [vmem:[%s1 + $0xe80] sm:$0xff]
  %v514 = vld [vmem:[%s1 + $0xe88] sm:$0xff]
  %v515 = vld [vmem:[%s1 + $0xe90] sm:$0xff]
  %v516 = vld [vmem:[%s1 + $0xe98] sm:$0xff]
  %v517 = vld [vmem:[%s1 + $0xea0] sm:$0xff]
  %v518 = vld [vmem:[%s1 + $0xea8] sm:$0xff]
  %v519 = vld [vmem:[%s1 + $0xeb0] sm:$0xff]
  %v520 = vld [vmem:[%s1 + $0xeb8] sm:$0xff]
  %v521 = vld [vmem:[%s1 + $0xec0] sm:$0xff]
  %v522 = vld [vmem:[%s1 + $0xec8] sm:$0xff]
  %v523 = vld [vmem:[%s1 + $0xed0] sm:$0xff]
  %v524 = vld [vmem:[%s1 + $0xed8] sm:$0xff]
  %v525 = vld [vmem:[%s1 + $0xee0] sm:$0xff]
  %v526 = vld [vmem:[%s1 + $0xee8] sm:$0xff]
  %v527 = vld [vmem:[%s1 + $0xef0] sm:$0xff]
  %v528 = vld [vmem:[%s1 + $0xef8] sm:$0xff]
  %v529 = vld [vmem:[%s1 + $0xf00] sm:$0xff]
  %v530 = vld [vmem:[%s1 + $0xf08] sm:$0xff]
  %v531 = vld [vmem:[%s1 + $0xf10] sm:$0xff]
  %v532 = vld [vmem:[%s1 + $0xf18] sm:$0xff]
  %v533 = vld [vmem:[%s1 + $0xf20] sm:$0xff]
  %v534 = vld [vmem:[%s1 + $0xf28] sm:$0xff]
  %v535 = vld [vmem:[%s1 + $0xf30] sm:$0xff]
  %v536 = vld [vmem:[%s1 + $0xf38] sm:$0xff]
  %v537 = vld [vmem:[%s1 + $0xf40] sm:$0xff]
  %v538 = vld [vmem:[%s1 + $0xf48] sm:$0xff]
  %v539 = vld [vmem:[%s1 + $0xf50] sm:$0xff]
  %v540 = vld [vmem:[%s1 + $0xf58] sm:$0xff]
  %v541 = vld [vmem:[%s1 + $0xf60] sm:$0xff]
  %v542 = vld [vmem:[%s1 + $0xf68] sm:$0xff]
  %v543 = vld [vmem:[%s1 + $0xf70] sm:$0xff]
  %v544 = vld [vmem:[%s1 + $0xf78] sm:$0xff]
  %v545 = vld [vmem:[%s1 + $0xf80] sm:$0xff]
  %v546 = vld [vmem:[%s1 + $0xf88] sm:$0xff]
  %v547 = vld [vmem:[%s1 + $0xf90] sm:$0xff]
  %v548 = vld [vmem:[%s1 + $0xf98] sm:$0xff]
  %v549 = vld [vmem:[%s1 + $0xfa0] sm:$0xff]
  %v550 = vld [vmem:[%s1 + $0xfa8] sm:$0xff]
  %v551 = vld [vmem:[%s1 + $0xfb0] sm:$0xff]
  %v552 = vld [vmem:[%s1 + $0xfb8] sm:$0xff]
  %v553 = vld [vmem:[%s1 + $0xfc0] sm:$0xff]
  %v554 = vld [vmem:[%s1 + $0xfc8] sm:$0xff]
  %v555 = vld [vmem:[%s1 + $0xfd0] sm:$0xff]
  %v556 = vld [vmem:[%s1 + $0xfd8] sm:$0xff]
  %v557 = vld [vmem:[%s1 + $0xfe0] sm:$0xff]
  %v558 = vld [vmem:[%s1 + $0xfe8] sm:$0xff]
  %v559 = vld [vmem:[%s1 + $0xff0] sm:$0xff]
  %v560 = vld [vmem:[%s1 + $0xff8] sm:$0xff]
  %v561 = vld [vmem:[%s1 + $0x1000] sm:$0xff]
  %v562 = vld [vmem:[%s1 + $0x1008] sm:$0xff]
  %v563 = vld [vmem:[%s1 + $0x1010] sm:$0xff]
  %v564 = vld [vmem:[%s1 + $0x1018] sm:$0xff]
  %v565 = vld [vmem:[%s1 + $0x1020] sm:$0xff]
  %v566 = vld [vmem:[%s1 + $0x1028] sm:$0xff]
  %v567 = vld [vmem:[%s1 + $0x1030] sm:$0xff]
  %v568 = vld [vmem:[%s1 + $0x1038] sm:$0xff]
  %v569 = vld [vmem:[%s1 + $0x1040] sm:$0xff]
  %v570 = vld [vmem:[%s1 + $0x1048] sm:$0xff]
  %v571 = vld [vmem:[%s1 + $0x1050] sm:$0xff]
  %v572 = vld [vmem:[%s1 + $0x1058] sm:$0xff]
  %v573 = vld [vmem:[%s1 + $0x1060] sm:$0xff]
  %v574 = vld [vmem:[%s1 + $0x1068] sm:$0xff]
  %v575 = vld [vmem:[%s1 + $0x1070] sm:$0xff]
  %v576 = vld [vmem:[%s1 + $0x1078] sm:$0xff]
  %v577 = vld [vmem:[%s1 + $0x1080] sm:$0xff]
  %v578 = vld [vmem:[%s1 + $0x1088] sm:$0xff]
  %v579 = vld [vmem:[%s1 + $0x1090] sm:$0xff]
  %v580 = vld [vmem:[%s1 + $0x1098] sm:$0xff]
  %v581 = vld [vmem:[%s1 + $0x10a0] sm:$0xff]
  %v582 = vld [vmem:[%s1 + $0x10a8] sm:$0xff]
  %v583 = vld [vmem:[%s1 + $0x10b0] sm:$0xff]
  %v584 = vld [vmem:[%s1 + $0x10b8] sm:$0xff]
  %v585 = vld [vmem:[%s1 + $0x10c0] sm:$0xff]
  %v586 = vld [vmem:[%s1 + $0x10c8] sm:$0xff]
  %v587 = vld [vmem:[%s1 + $0x10d0] sm:$0xff]
  %v588 = vld [vmem:[%s1 + $0x10d8] sm:$0xff]
  %v589 = vld [vmem:[%s1 + $0x10e0] sm:$0xff]
  %v590 = vld [vmem:[%s1 + $0x10e8] sm:$0xff]
  %v591 = vld [vmem:[%s1 + $0x10f0] sm:$0xff]
  %v592 = vld [vmem:[%s1 + $0x10f8] sm:$0xff]
  %v593 = vld [vmem:[%s1 + $0x1100] sm:$0xff]
  %v594 = vld [vmem:[%s1 + $0x1108] sm:$0xff]
  %v595 = vld [vmem:[%s1 + $0x1110] sm:$0xff]
  %v596 = vld [vmem:[%s1 + $0x1118] sm:$0xff]
  %v597 = vld [vmem:[%s1 + $0x1120] sm:$0xff]
  %v598 = vld [vmem:[%s1 + $0x1128] sm:$0xff]
  %v599 = vld [vmem:[%s1 + $0x1130] sm:$0xff]
  %v600 = vld [vmem:[%s1 + $0x1138] sm:$0xff]
  %v601 = vld [vmem:[%s1 + $0x1140] sm:$0xff]
  %v602 = vld [vmem:[%s1 + $0x1148] sm:$0xff]
  %v603 = vld [vmem:[%s1 + $0x1150] sm:$0xff]
  %v604 = vld [vmem:[%s1 + $0x1158] sm:$0xff]
  %v605 = vld [vmem:[%s1 + $0x1160] sm:$0xff]
  %v606 = vld [vmem:[%s1 + $0x1168] sm:$0xff]
  %v607 = vld [vmem:[%s1 + $0x1170] sm:$0xff]
  %v608 = vld [vmem:[%s1 + $0x1178] sm:$0xff]
  %v609 = vld [vmem:[%s1 + $0x1180] sm:$0xff]
  %v610 = vld [vmem:[%s1 + $0x1188] sm:$0xff]
  %v611 = vld [vmem:[%s1 + $0x1190] sm:$0xff]
  %v612 = vld [vmem:[%s1 + $0x1198] sm:$0xff]
  %v613 = vld [vmem:[%s1 + $0x11a0] sm:$0xff]
  %v614 = vld [vmem:[%s1 + $0x11a8] sm:$0xff]
  %v615 = vld [vmem:[%s1 + $0x11b0] sm:$0xff]
  %v616 = vld [vmem:[%s1 + $0x11b8] sm:$0xff]
  %v617 = vld [vmem:[%s1 + $0x11c0] sm:$0xff]
  %v618 = vld [vmem:[%s1 + $0x11c8] sm:$0xff]
  %v619 = vld [vmem:[%s1 + $0x11d0] sm:$0xff]
  %v620 = vld [vmem:[%s1 + $0x11d8] sm:$0xff]
  %v621 = vld [vmem:[%s1 + $0x11e0] sm:$0xff]
  %v622 = vld [vmem:[%s1 + $0x11e8] sm:$0xff]
  %v623 = vld [vmem:[%s1 + $0x11f0] sm:$0xff]
  %v624 = vld [vmem:[%s1 + $0x11f8] sm:$0xff]
  %v625 = vld [vmem:[%s1 + $0x1200] sm:$0xff]
  %v626 = vld [vmem:[%s1 + $0x1208] sm:$0xff]
  %v627 = vld [vmem:[%s1 + $0x1210] sm:$0xff]
  %v628 = vld [vmem:[%s1 + $0x1218] sm:$0xff]
  %v629 = vld [vmem:[%s1 + $0x1220] sm:$0xff]
  %v630 = vld [vmem:[%s1 + $0x1228] sm:$0xff]
  %v631 = vld [vmem:[%s1 + $0x1230] sm:$0xff]
  %v632 = vld [vmem:[%s1 + $0x1238] sm:$0xff]
  %v633 = vld [vmem:[%s1 + $0x1240] sm:$0xff]
  %v634 = vld [vmem:[%s1 + $0x1248] sm:$0xff]
  %v635 = vld [vmem:[%s1 + $0x1250] sm:$0xff]
  %v636 = vld [vmem:[%s1 + $0x1258] sm:$0xff]
  %v637 = vld [vmem:[%s1 + $0x1260] sm:$0xff]
  %v638 = vld [vmem:[%s1 + $0x1268] sm:$0xff]
  %v639 = vld [vmem:[%s1 + $0x1270] sm:$0xff]
  %v640 = vld [vmem:[%s1 + $0x1278] sm:$0xff]
  %v641 = vld [vmem:[%s1 + $0x1280] sm:$0xff]
  %v642 = vld [vmem:[%s1 + $0x1288] sm:$0xff]
  %v643 = vld [vmem:[%s1 + $0x1290] sm:$0xff]
  %v644 = vld [vmem:[%s1 + $0x1298] sm:$0xff]
  %v645 = vld [vmem:[%s1 + $0x12a0] sm:$0xff]
  %v646 = vld [vmem:[%s1 + $0x12a8] sm:$0xff]
  %v647 = vld [vmem:[%s1 + $0x12b0] sm:$0xff]
  %v648 = vld [vmem:[%s1 + $0x12b8] sm:$0xff]
  %v649 = vld [vmem:[%s1 + $0x12c0] sm:$0xff]
  %v650 = vld [vmem:[%s1 + $0x12c8] sm:$0xff]
  %v651 = vld [vmem:[%s1 + $0x12d0] sm:$0xff]
  %v652 = vld [vmem:[%s1 + $0x12d8] sm:$0xff]
  %v653 = vld [vmem:[%s1 + $0x12e0] sm:$0xff]
  %v654 = vld [vmem:[%s1 + $0x12e8] sm:$0xff]
  %v655 = vld [vmem:[%s1 + $0x12f0] sm:$0xff]
  %v656 = vld [vmem:[%s1 + $0x12f8] sm:$0xff]
  %v657 = vld [vmem:[%s1 + $0x1300] sm:$0xff]
  %v658 = vld [vmem:[%s1 + $0x1308] sm:$0xff]
  %v659 = vld [vmem:[%s1 + $0x1310] sm:$0xff]
  %v660 = vld [vmem:[%s1 + $0x1318] sm:$0xff]
  %v661 = vld [vmem:[%s1 + $0x1320] sm:$0xff]
  %v662 = vld [vmem:[%s1 + $0x1328] sm:$0xff]
  %v663 = vld [vmem:[%s1 + $0x1330] sm:$0xff]
  %v664 = vld [vmem:[%s1 + $0x1338] sm:$0xff]
  %v665 = vld [vmem:[%s1 + $0x1340] sm:$0xff]
  %v666 = vld [vmem:[%s1 + $0x1348] sm:$0xff]
  %v667 = vld [vmem:[%s1 + $0x1350] sm:$0xff]
  %v668 = vld [vmem:[%s1 + $0x1358] sm:$0xff]
  %v669 = vld [vmem:[%s1 + $0x1360] sm:$0xff]
  %v670 = vld [vmem:[%s1 + $0x1368] sm:$0xff]
  %v671 = vld [vmem:[%s1 + $0x1370] sm:$0xff]
  %v672 = vld [vmem:[%s1 + $0x1378] sm:$0xff]
  %v673 = vld [vmem:[%s1 + $0x1380] sm:$0xff]
  %v674 = vld [vmem:[%s1 + $0x1388] sm:$0xff]
  %v675 = vld [vmem:[%s1 + $0x1390] sm:$0xff]
  %v676 = vld [vmem:[%s1 + $0x1398] sm:$0xff]
  %v677 = vld [vmem:[%s1 + $0x13a0] sm:$0xff]
  %v678 = vld [vmem:[%s1 + $0x13a8] sm:$0xff]
  %v679 = vld [vmem:[%s1 + $0x13b0] sm:$0xff]
  %v680 = vld [vmem:[%s1 + $0x13b8] sm:$0xff]
  %v681 = vld [vmem:[%s1 + $0x13c0] sm:$0xff]
  %v682 = vld [vmem:[%s1 + $0x13c8] sm:$0xff]
  %v683 = vld [vmem:[%s1 + $0x13d0] sm:$0xff]
  %v684 = vld [vmem:[%s1 + $0x13d8] sm:$0xff]
  %v685 = vld [vmem:[%s1 + $0x13e0] sm:$0xff]
  %v686 = vld [vmem:[%s1 + $0x13e8] sm:$0xff]
  %v687 = vld [vmem:[%s1 + $0x13f0] sm:$0xff]
  %v688 = vld [vmem:[%s1 + $0x13f8] sm:$0xff]
  %v689 = vld [vmem:[%s1 + $0x1400] sm:$0xff]
  %v690 = vld [vmem:[%s1 + $0x1408] sm:$0xff]
  %v691 = vld [vmem:[%s1 + $0x1410] sm:$0xff]
  %v692 = vld [vmem:[%s1 + $0x1418] sm:$0xff]
  %v693 = vld [vmem:[%s1 + $0x1420] sm:$0xff]
  %v694 = vld [vmem:[%s1 + $0x1428] sm:$0xff]
  %v695 = vld [vmem:[%s1 + $0x1430] sm:$0xff]
  %v696 = vld [vmem:[%s1 + $0x1438] sm:$0xff]
  %v697 = vld [vmem:[%s1 + $0x1440] sm:$0xff]
  %v698 = vld [vmem:[%s1 + $0x1448] sm:$0xff]
  %v699 = vld [vmem:[%s1 + $0x1450] sm:$0xff]
  %v700 = vld [vmem:[%s1 + $0x1458] sm:$0xff]
  %v701 = vld [vmem:[%s1 + $0x1460] sm:$0xff]
  %v702 = vld [vmem:[%s1 + $0x1468] sm:$0xff]
  %v703 = vld [vmem:[%s1 + $0x1470] sm:$0xff]
  %v704 = vld [vmem:[%s1 + $0x1478] sm:$0xff]
  %v705 = vld [vmem:[%s1 + $0x1480] sm:$0xff]
  %v706 = vld [vmem:[%s1 + $0x1488] sm:$0xff]
  %v707 = vld [vmem:[%s1 + $0x1490] sm:$0xff]
  %v708 = vld [vmem:[%s1 + $0x1498] sm:$0xff]
  %v709 = vld [vmem:[%s1 + $0x14a0] sm:$0xff]
  %v710 = vld [vmem:[%s1 + $0x14a8] sm:$0xff]
  %v711 = vld [vmem:[%s1 + $0x14b0] sm:$0xff]
  %v712 = vld [vmem:[%s1 + $0x14b8] sm:$0xff]
  %v713 = vld [vmem:[%s1 + $0x14c0] sm:$0xff]
  %v714 = vld [vmem:[%s1 + $0x14c8] sm:$0xff]
  %v715 = vld [vmem:[%s1 + $0x14d0] sm:$0xff]
  %v716 = vld [vmem:[%s1 + $0x14d8] sm:$0xff]
  %v717 = vld [vmem:[%s1 + $0x14e0] sm:$0xff]
  %v718 = vld [vmem:[%s1 + $0x14e8] sm:$0xff]
  %v719 = vld [vmem:[%s1 + $0x14f0] sm:$0xff]
  %v720 = vld [vmem:[%s1 + $0x14f8] sm:$0xff]
  %v721 = vld [vmem:[%s1 + $0x1500] sm:$0xff]
  %v722 = vld [vmem:[%s1 + $0x1508] sm:$0xff]
  %v723 = vld [vmem:[%s1 + $0x1510] sm:$0xff]
  %v724 = vld [vmem:[%s1 + $0x1518] sm:$0xff]
  %v725 = vld [vmem:[%s1 + $0x1520] sm:$0xff]
  %v726 = vld [vmem:[%s1 + $0x1528] sm:$0xff]
  %v727 = vld [vmem:[%s1 + $0x1530] sm:$0xff]
  %v728 = vld [vmem:[%s1 + $0x1538] sm:$0xff]
  %v729 = vld [vmem:[%s1 + $0x1540] sm:$0xff]
  %v730 = vld [vmem:[%s1 + $0x1548] sm:$0xff]
  %v731 = vld [vmem:[%s1 + $0x1550] sm:$0xff]
  %v732 = vld [vmem:[%s1 + $0x1558] sm:$0xff]
  %v733 = vld [vmem:[%s1 + $0x1560] sm:$0xff]
  %v734 = vld [vmem:[%s1 + $0x1568] sm:$0xff]
  %v735 = vld [vmem:[%s1 + $0x1570] sm:$0xff]
  %v736 = vld [vmem:[%s1 + $0x1578] sm:$0xff]
  %v737 = vld [vmem:[%s1 + $0x1580] sm:$0xff]
  %v738 = vld [vmem:[%s1 + $0x1588] sm:$0xff]
  %v739 = vld [vmem:[%s1 + $0x1590] sm:$0xff]
  %v740 = vld [vmem:[%s1 + $0x1598] sm:$0xff]
  %v741 = vld [vmem:[%s1 + $0x15a0] sm:$0xff]
  %v742 = vld [vmem:[%s1 + $0x15a8] sm:$0xff]
  %v743 = vld [vmem:[%s1 + $0x15b0] sm:$0xff]
  %v744 = vld [vmem:[%s1 + $0x15b8] sm:$0xff]
  %v745 = vld [vmem:[%s1 + $0x15c0] sm:$0xff]
  %v746 = vld [vmem:[%s1 + $0x15c8] sm:$0xff]
  %v747 = vld [vmem:[%s1 + $0x15d0] sm:$0xff]
  %v748 = vld [vmem:[%s1 + $0x15d8] sm:$0xff]
  %v749 = vld [vmem:[%s1 + $0x15e0] sm:$0xff]
  %v750 = vld [vmem:[%s1 + $0x15e8] sm:$0xff]
  %v751 = vld [vmem:[%s1 + $0x15f0] sm:$0xff]
  %v752 = vld [vmem:[%s1 + $0x15f8] sm:$0xff]
  %v753 = vld [vmem:[%s1 + $0x1600] sm:$0xff]
  %v754 = vld [vmem:[%s1 + $0x1608] sm:$0xff]
  %v755 = vld [vmem:[%s1 + $0x1610] sm:$0xff]
  %v756 = vld [vmem:[%s1 + $0x1618] sm:$0xff]
  %v757 = vld [vmem:[%s1 + $0x1620] sm:$0xff]
  %v758 = vld [vmem:[%s1 + $0x1628] sm:$0xff]
  %v759 = vld [vmem:[%s1 + $0x1630] sm:$0xff]
  %v760 = vld [vmem:[%s1 + $0x1638] sm:$0xff]
  %v761 = vld [vmem:[%s1 + $0x1640] sm:$0xff]
  %v762 = vld [vmem:[%s1 + $0x1648] sm:$0xff]
  %v763 = vld [vmem:[%s1 + $0x1650] sm:$0xff]
  %v764 = vld [vmem:[%s1 + $0x1658] sm:$0xff]
  %v765 = vld [vmem:[%s1 + $0x1660] sm:$0xff]
  %v766 = vld [vmem:[%s1 + $0x1668] sm:$0xff]
  %v767 = vld [vmem:[%s1 + $0x1670] sm:$0xff]
  %v768 = vld [vmem:[%s1 + $0x1678] sm:$0xff]
  %v769 = vld [vmem:[%s1 + $0x1680] sm:$0xff]
  %v770 = vld [vmem:[%s1 + $0x1688] sm:$0xff]
  %v771 = vld [vmem:[%s1 + $0x1690] sm:$0xff]
  %v772 = vld [vmem:[%s1 + $0x1698] sm:$0xff]
  %v773 = vld [vmem:[%s1 + $0x16a0] sm:$0xff]
  %v774 = vld [vmem:[%s1 + $0x16a8] sm:$0xff]
  %v775 = vld [vmem:[%s1 + $0x16b0] sm:$0xff]
  %v776 = vld [vmem:[%s1 + $0x16b8] sm:$0xff]
  %v777 = vld [vmem:[%s1 + $0x16c0] sm:$0xff]
  %v778 = vld [vmem:[%s1 + $0x16c8] sm:$0xff]
  %v779 = vld [vmem:[%s1 + $0x16d0] sm:$0xff]
  %v780 = vld [vmem:[%s1 + $0x16d8] sm:$0xff]
  %v781 = vld [vmem:[%s1 + $0x16e0] sm:$0xff]
  %v782 = vld [vmem:[%s1 + $0x16e8] sm:$0xff]
  %v783 = vld [vmem:[%s1 + $0x16f0] sm:$0xff]
  %v784 = vld [vmem:[%s1 + $0x16f8] sm:$0xff]
  %v785 = vld [vmem:[%s1 + $0x1700] sm:$0xff]
  %v786 = vld [vmem:[%s1 + $0x1708] sm:$0xff]
  %v787 = vld [vmem:[%s1 + $0x1710] sm:$0xff]
  %v788 = vld [vmem:[%s1 + $0x1718] sm:$0xff]
  %v789 = vld [vmem:[%s1 + $0x1720] sm:$0xff]
  %v790 = vld [vmem:[%s1 + $0x1728] sm:$0xff]
  %v791 = vld [vmem:[%s1 + $0x1730] sm:$0xff]
  %v792 = vld [vmem:[%s1 + $0x1738] sm:$0xff]
  %v793 = vld [vmem:[%s1 + $0x1740] sm:$0xff]
  %v794 = vld [vmem:[%s1 + $0x1748] sm:$0xff]
  %v795 = vld [vmem:[%s1 + $0x1750] sm:$0xff]
  %v796 = vld [vmem:[%s1 + $0x1758] sm:$0xff]
  %v797 = vld [vmem:[%s1 + $0x1760] sm:$0xff]
  %v798 = vld [vmem:[%s1 + $0x1768] sm:$0xff]
  %v799 = vld [vmem:[%s1 + $0x1770] sm:$0xff]
  %v800 = vld [vmem:[%s1 + $0x1778] sm:$0xff]
  %v801 = vld [vmem:[%s1 + $0x1780] sm:$0xff]
  %v802 = vld [vmem:[%s1 + $0x1788] sm:$0xff]
  %v803 = vld [vmem:[%s1 + $0x1790] sm:$0xff]
  %v804 = vld [vmem:[%s1 + $0x1798] sm:$0xff]
  %v805 = vld [vmem:[%s1 + $0x17a0] sm:$0xff]
  %v806 = vld [vmem:[%s1 + $0x17a8] sm:$0xff]
  %v807 = vld [vmem:[%s1 + $0x17b0] sm:$0xff]
  %v808 = vld [vmem:[%s1 + $0x17b8] sm:$0xff]
  %v809 = vld [vmem:[%s1 + $0x17c0] sm:$0xff]
  %v810 = vld [vmem:[%s1 + $0x17c8] sm:$0xff]
  %v811 = vld [vmem:[%s1 + $0x17d0] sm:$0xff]
  %v812 = vld [vmem:[%s1 + $0x17d8] sm:$0xff]
  %v813 = vld [vmem:[%s1 + $0x17e0] sm:$0xff]
  %v814 = vld [vmem:[%s1 + $0x17e8] sm:$0xff]
  %v815 = vld [vmem:[%s1 + $0x17f0] sm:$0xff]
  %v816 = vld [vmem:[%s1 + $0x17f8] sm:$0xff]
  %v817 = vld [vmem:[%s1 + $0x1800] sm:$0xff]
  %v818 = vld [vmem:[%s1 + $0x1808] sm:$0xff]
  %v819 = vld [vmem:[%s1 + $0x1810] sm:$0xff]
  %v820 = vld [vmem:[%s1 + $0x1818] sm:$0xff]
  %v821 = vld [vmem:[%s1 + $0x1820] sm:$0xff]
  %v822 = vld [vmem:[%s1 + $0x1828] sm:$0xff]
  %v823 = vld [vmem:[%s1 + $0x1830] sm:$0xff]
  %v824 = vld [vmem:[%s1 + $0x1838] sm:$0xff]
  %v825 = vld [vmem:[%s1 + $0x1840] sm:$0xff]
  %v826 = vld [vmem:[%s1 + $0x1848] sm:$0xff]
  %v827 = vld [vmem:[%s1 + $0x1850] sm:$0xff]
  %v828 = vld [vmem:[%s1 + $0x1858] sm:$0xff]
  %v829 = vld [vmem:[%s1 + $0x1860] sm:$0xff]
  %v830 = vld [vmem:[%s1 + $0x1868] sm:$0xff]
  %v831 = vld [vmem:[%s1 + $0x1870] sm:$0xff]
  %v832 = vld [vmem:[%s1 + $0x1878] sm:$0xff]
  %v833 = vld [vmem:[%s1 + $0x1880] sm:$0xff]
  %v834 = vld [vmem:[%s1 + $0x1888] sm:$0xff]
  %v835 = vld [vmem:[%s1 + $0x1890] sm:$0xff]
  %v836 = vld [vmem:[%s1 + $0x1898] sm:$0xff]
  %v837 = vld [vmem:[%s1 + $0x18a0] sm:$0xff]
  %v838 = vld [vmem:[%s1 + $0x18a8] sm:$0xff]
  %v839 = vld [vmem:[%s1 + $0x18b0] sm:$0xff]
  %v840 = vld [vmem:[%s1 + $0x18b8] sm:$0xff]
  %v841 = vld [vmem:[%s1 + $0x18c0] sm:$0xff]
  %v842 = vld [vmem:[%s1 + $0x18c8] sm:$0xff]
  %v843 = vld [vmem:[%s1 + $0x18d0] sm:$0xff]
  %v844 = vld [vmem:[%s1 + $0x18d8] sm:$0xff]
  %v845 = vld [vmem:[%s1 + $0x18e0] sm:$0xff]
  %v846 = vld [vmem:[%s1 + $0x18e8] sm:$0xff]
  %v847 = vld [vmem:[%s1 + $0x18f0] sm:$0xff]
  %v848 = vld [vmem:[%s1 + $0x18f8] sm:$0xff]
  %v849 = vld [vmem:[%s1 + $0x1900] sm:$0xff]
  %v850 = vld [vmem:[%s1 + $0x1908] sm:$0xff]
  %v851 = vld [vmem:[%s1 + $0x1910] sm:$0xff]
  %v852 = vld [vmem:[%s1 + $0x1918] sm:$0xff]
  %v853 = vld [vmem:[%s1 + $0x1920] sm:$0xff]
  %v854 = vld [vmem:[%s1 + $0x1928] sm:$0xff]
  %v855 = vld [vmem:[%s1 + $0x1930] sm:$0xff]
  %v856 = vld [vmem:[%s1 + $0x1938] sm:$0xff]
  %v857 = vld [vmem:[%s1 + $0x1940] sm:$0xff]
  %v858 = vld [vmem:[%s1 + $0x1948] sm:$0xff]
  %v859 = vld [vmem:[%s1 + $0x1950] sm:$0xff]
  %v860 = vld [vmem:[%s1 + $0x1958] sm:$0xff]
  %v861 = vld [vmem:[%s1 + $0x1960] sm:$0xff]
  %v862 = vld [vmem:[%s1 + $0x1968] sm:$0xff]
  %v863 = vld [vmem:[%s1 + $0x1970] sm:$0xff]
  %v864 = vld [vmem:[%s1 + $0x1978] sm:$0xff]
  %v865 = vld [vmem:[%s1 + $0x1980] sm:$0xff]
  %v866 = vld [vmem:[%s1 + $0x1988] sm:$0xff]
  %v867 = vld [vmem:[%s1 + $0x1990] sm:$0xff]
  %v868 = vld [vmem:[%s1 + $0x1998] sm:$0xff]
  %v869 = vld [vmem:[%s1 + $0x19a0] sm:$0xff]
  %v870 = vld [vmem:[%s1 + $0x19a8] sm:$0xff]
  %v871 = vld [vmem:[%s1 + $0x19b0] sm:$0xff]
  %v872 = vld [vmem:[%s1 + $0x19b8] sm:$0xff]
  %v873 = vld [vmem:[%s1 + $0x19c0] sm:$0xff]
  %v874 = vld [vmem:[%s1 + $0x19c8] sm:$0xff]
  %v875 = vld [vmem:[%s1 + $0x19d0] sm:$0xff]
  %v876 = vld [vmem:[%s1 + $0x19d8] sm:$0xff]
  %v877 = vld [vmem:[%s1 + $0x19e0] sm:$0xff]
  %v878 = vld [vmem:[%s1 + $0x19e8] sm:$0xff]
  %v879 = vld [vmem:[%s1 + $0x19f0] sm:$0xff]
  %v880 = vld [vmem:[%s1 + $0x19f8] sm:$0xff]
  %v881 = vld [vmem:[%s1 + $0x1a00] sm:$0xff]
  %v882 = vld [vmem:[%s1 + $0x1a08] sm:$0xff]
  %v883 = vld [vmem:[%s1 + $0x1a10] sm:$0xff]
  %v884 = vld [vmem:[%s1 + $0x1a18] sm:$0xff]
  %v885 = vld [vmem:[%s1 + $0x1a20] sm:$0xff]
  %v886 = vld [vmem:[%s1 + $0x1a28] sm:$0xff]
  %v887 = vld [vmem:[%s1 + $0x1a30] sm:$0xff]
  %v888 = vld [vmem:[%s1 + $0x1a38] sm:$0xff]
  %v889 = vld [vmem:[%s1 + $0x1a40] sm:$0xff]
  %v890 = vld [vmem:[%s1 + $0x1a48] sm:$0xff]
  %v891 = vld [vmem:[%s1 + $0x1a50] sm:$0xff]
  %v892 = vld [vmem:[%s1 + $0x1a58] sm:$0xff]
  %v893 = vld [vmem:[%s1 + $0x1a60] sm:$0xff]
  %v894 = vld [vmem:[%s1 + $0x1a68] sm:$0xff]
  %v895 = vld [vmem:[%s1 + $0x1a70] sm:$0xff]
  %v896 = vld [vmem:[%s1 + $0x1a78] sm:$0xff]
  %v897 = vld [vmem:[%s1 + $0x1a80] sm:$0xff]
  %v898 = vld [vmem:[%s1 + $0x1a88] sm:$0xff]
  %v899 = vld [vmem:[%s1 + $0x1a90] sm:$0xff]
  %v900 = vld [vmem:[%s1 + $0x1a98] sm:$0xff]
  %v901 = vld [vmem:[%s1 + $0x1aa0] sm:$0xff]
  %v902 = vld [vmem:[%s1 + $0x1aa8] sm:$0xff]
  %v903 = vld [vmem:[%s1 + $0x1ab0] sm:$0xff]
  %v904 = vld [vmem:[%s1 + $0x1ab8] sm:$0xff]
  %v905 = vld [vmem:[%s1 + $0x1ac0] sm:$0xff]
  %v906 = vld [vmem:[%s1 + $0x1ac8] sm:$0xff]
  %v907 = vld [vmem:[%s1 + $0x1ad0] sm:$0xff]
  %v908 = vld [vmem:[%s1 + $0x1ad8] sm:$0xff]
  %v909 = vld [vmem:[%s1 + $0x1ae0] sm:$0xff]
  %v910 = vld [vmem:[%s1 + $0x1ae8] sm:$0xff]
  %v911 = vld [vmem:[%s1 + $0x1af0] sm:$0xff]
  %v912 = vld [vmem:[%s1 + $0x1af8] sm:$0xff]
  %v913 = vld [vmem:[%s1 + $0x1b00] sm:$0xff]
  %v914 = vld [vmem:[%s1 + $0x1b08] sm:$0xff]
  %v915 = vld [vmem:[%s1 + $0x1b10] sm:$0xff]
  %v916 = vld [vmem:[%s1 + $0x1b18] sm:$0xff]
  %v917 = vld [vmem:[%s1 + $0x1b20] sm:$0xff]
  %v918 = vld [vmem:[%s1 + $0x1b28] sm:$0xff]
  %v919 = vld [vmem:[%s1 + $0x1b30] sm:$0xff]
  %v920 = vld [vmem:[%s1 + $0x1b38] sm:$0xff]
  %v921 = vld [vmem:[%s1 + $0x1b40] sm:$0xff]
  %v922 = vld [vmem:[%s1 + $0x1b48] sm:$0xff]
  %v923 = vld [vmem:[%s1 + $0x1b50] sm:$0xff]
  %v924 = vld [vmem:[%s1 + $0x1b58] sm:$0xff]
  %v925 = vld [vmem:[%s1 + $0x1b60] sm:$0xff]
  %v926 = vld [vmem:[%s1 + $0x1b68] sm:$0xff]
  %v927 = vld [vmem:[%s1 + $0x1b70] sm:$0xff]
  %v928 = vld [vmem:[%s1 + $0x1b78] sm:$0xff]
  %v929 = vld [vmem:[%s1 + $0x1b80] sm:$0xff]
  %v930 = vld [vmem:[%s1 + $0x1b88] sm:$0xff]
  %v931 = vld [vmem:[%s1 + $0x1b90] sm:$0xff]
  %v932 = vld [vmem:[%s1 + $0x1b98] sm:$0xff]
  %v933 = vld [vmem:[%s1 + $0x1ba0] sm:$0xff]
  %v934 = vld [vmem:[%s1 + $0x1ba8] sm:$0xff]
  %v935 = vld [vmem:[%s1 + $0x1bb0] sm:$0xff]
  %v936 = vld [vmem:[%s1 + $0x1bb8] sm:$0xff]
  %v937 = vld [vmem:[%s1 + $0x1bc0] sm:$0xff]
  %v938 = vld [vmem:[%s1 + $0x1bc8] sm:$0xff]
  %v939 = vld [vmem:[%s1 + $0x1bd0] sm:$0xff]
  %v940 = vld [vmem:[%s1 + $0x1bd8] sm:$0xff]
  %v941 = vld [vmem:[%s1 + $0x1be0] sm:$0xff]
  %v942 = vld [vmem:[%s1 + $0x1be8] sm:$0xff]
  %v943 = vld [vmem:[%s1 + $0x1bf0] sm:$0xff]
  %v944 = vld [vmem:[%s1 + $0x1bf8] sm:$0xff]
  %v945 = vld [vmem:[%s1 + $0x1c00] sm:$0xff]
  %v946 = vld [vmem:[%s1 + $0x1c08] sm:$0xff]
  %v947 = vld [vmem:[%s1 + $0x1c10] sm:$0xff]
  %v948 = vld [vmem:[%s1 + $0x1c18] sm:$0xff]
  %v949 = vld [vmem:[%s1 + $0x1c20] sm:$0xff]
  %v950 = vld [vmem:[%s1 + $0x1c28] sm:$0xff]
  %v951 = vld [vmem:[%s1 + $0x1c30] sm:$0xff]
  %v952 = vld [vmem:[%s1 + $0x1c38] sm:$0xff]
  %v953 = vld [vmem:[%s1 + $0x1c40] sm:$0xff]
  %v954 = vld [vmem:[%s1 + $0x1c48] sm:$0xff]
  %v955 = vld [vmem:[%s1 + $0x1c50] sm:$0xff]
  %v956 = vld [vmem:[%s1 + $0x1c58] sm:$0xff]
  %v957 = vld [vmem:[%s1 + $0x1c60] sm:$0xff]
  %v958 = vld [vmem:[%s1 + $0x1c68] sm:$0xff]
  %v959 = vld [vmem:[%s1 + $0x1c70] sm:$0xff]
  %v960 = vld [vmem:[%s1 + $0x1c78] sm:$0xff]
  %v961 = vld [vmem:[%s1 + $0x1c80] sm:$0xff]
  %v962 = vld [vmem:[%s1 + $0x1c88] sm:$0xff]
  %v963 = vld [vmem:[%s1 + $0x1c90] sm:$0xff]
  %v964 = vld [vmem:[%s1 + $0x1c98] sm:$0xff]
  %v965 = vld [vmem:[%s1 + $0x1ca0] sm:$0xff]
  %v966 = vld [vmem:[%s1 + $0x1ca8] sm:$0xff]
  %v967 = vld [vmem:[%s1 + $0x1cb0] sm:$0xff]
  %v968 = vld [vmem:[%s1 + $0x1cb8] sm:$0xff]
  %v969 = vld [vmem:[%s1 + $0x1cc0] sm:$0xff]
  %v970 = vld [vmem:[%s1 + $0x1cc8] sm:$0xff]
  %v971 = vld [vmem:[%s1 + $0x1cd0] sm:$0xff]
  %v972 = vld [vmem:[%s1 + $0x1cd8] sm:$0xff]
  %v973 = vld [vmem:[%s1 + $0x1ce0] sm:$0xff]
  %v974 = vld [vmem:[%s1 + $0x1ce8] sm:$0xff]
  %v975 = vld [vmem:[%s1 + $0x1cf0] sm:$0xff]
  %v976 = vld [vmem:[%s1 + $0x1cf8] sm:$0xff]
  %v977 = vld [vmem:[%s1 + $0x1d00] sm:$0xff]
  %v978 = vld [vmem:[%s1 + $0x1d08] sm:$0xff]
  %v979 = vld [vmem:[%s1 + $0x1d10] sm:$0xff]
  %v980 = vld [vmem:[%s1 + $0x1d18] sm:$0xff]
  %v981 = vld [vmem:[%s1 + $0x1d20] sm:$0xff]
  %v982 = vld [vmem:[%s1 + $0x1d28] sm:$0xff]
  %v983 = vld [vmem:[%s1 + $0x1d30] sm:$0xff]
  %v984 = vld [vmem:[%s1 + $0x1d38] sm:$0xff]
  %v985 = vld [vmem:[%s1 + $0x1d40] sm:$0xff]
  %v986 = vld [vmem:[%s1 + $0x1d48] sm:$0xff]
  %v987 = vld [vmem:[%s1 + $0x1d50] sm:$0xff]
  %v988 = vld [vmem:[%s1 + $0x1d58] sm:$0xff]
  %v989 = vld [vmem:[%s1 + $0x1d60] sm:$0xff]
  %v990 = vld [vmem:[%s1 + $0x1d68] sm:$0xff]
  %v991 = vld [vmem:[%s1 + $0x1d70] sm:$0xff]
  %v992 = vld [vmem:[%s1 + $0x1d78] sm:$0xff]
  %v993 = vld [vmem:[%s1 + $0x1d80] sm:$0xff]
  %v994 = vld [vmem:[%s1 + $0x1d88] sm:$0xff]
  %v995 = vld [vmem:[%s1 + $0x1d90] sm:$0xff]
  %v996 = vld [vmem:[%s1 + $0x1d98] sm:$0xff]
  %v997 = vld [vmem:[%s1 + $0x1da0] sm:$0xff]
  %v998 = vld [vmem:[%s1 + $0x1da8] sm:$0xff]
  %v999 = vld [vmem:[%s1 + $0x1db0] sm:$0xff]
  %v1000 = vld [vmem:[%s1 + $0x1db8] sm:$0xff]
  %v1001 = vld [vmem:[%s1 + $0x1dc0] sm:$0xff]
  %v1002 = vld [vmem:[%s1 + $0x1dc8] sm:$0xff]
  %v1003 = vld [vmem:[%s1 + $0x1dd0] sm:$0xff]
  %v1004 = vld [vmem:[%s1 + $0x1dd8] sm:$0xff]
  %v1005 = vld [vmem:[%s1 + $0x1de0] sm:$0xff]
  %v1006 = vld [vmem:[%s1 + $0x1de8] sm:$0xff]
  %v1007 = vld [vmem:[%s1 + $0x1df0] sm:$0xff]
  %v1008 = vld [vmem:[%s1 + $0x1df8] sm:$0xff]
  %v1009 = vld [vmem:[%s1 + $0x1e00] sm:$0xff]
  %v1010 = vld [vmem:[%s1 + $0x1e08] sm:$0xff]
  %v1011 = vld [vmem:[%s1 + $0x1e10] sm:$0xff]
  %v1012 = vld [vmem:[%s1 + $0x1e18] sm:$0xff]
  %v1013 = vld [vmem:[%s1 + $0x1e20] sm:$0xff]
  %v1014 = vld [vmem:[%s1 + $0x1e28] sm:$0xff]
  %v1015 = vld [vmem:[%s1 + $0x1e30] sm:$0xff]
  %v1016 = vld [vmem:[%s1 + $0x1e38] sm:$0xff]
  %v1017 = vld [vmem:[%s1 + $0x1e40] sm:$0xff]
  %v1018 = vld [vmem:[%s1 + $0x1e48] sm:$0xff]
  %v1019 = vld [vmem:[%s1 + $0x1e50] sm:$0xff]
  %v1020 = vld [vmem:[%s1 + $0x1e58] sm:$0xff]
  %v1021 = vld [vmem:[%s1 + $0x1e60] sm:$0xff]
  %v1022 = vld [vmem:[%s1 + $0x1e68] sm:$0xff]
  %v1023 = vld [vmem:[%s1 + $0x1e70] sm:$0xff]
  %v1024 = vld [vmem:[%s1 + $0x1e78] sm:$0xff]
  %v1025 = vld [vmem:[%s1 + $0x1e80] sm:$0xff]
  %v1026 = vld [vmem:[%s1 + $0x1e88] sm:$0xff]
  %v1027 = vld [vmem:[%s1 + $0x1e90] sm:$0xff]
  %v1028 = vld [vmem:[%s1 + $0x1e98] sm:$0xff]
  %v1029 = vld [vmem:[%s1 + $0x1ea0] sm:$0xff]
  %v1030 = vld [vmem:[%s1 + $0x1ea8] sm:$0xff]
  %v1031 = vld [vmem:[%s1 + $0x1eb0] sm:$0xff]
  %v1032 = vld [vmem:[%s1 + $0x1eb8] sm:$0xff]
  %v1033 = vld [vmem:[%s1 + $0x1ec0] sm:$0xff]
  %v1034 = vld [vmem:[%s1 + $0x1ec8] sm:$0xff]
  %v1035 = vld [vmem:[%s1 + $0x1ed0] sm:$0xff]
  %v1036 = vld [vmem:[%s1 + $0x1ed8] sm:$0xff]
  %v1037 = vld [vmem:[%s1 + $0x1ee0] sm:$0xff]
  %v1038 = vld [vmem:[%s1 + $0x1ee8] sm:$0xff]
  %v1039 = vld [vmem:[%s1 + $0x1ef0] sm:$0xff]
  %v1040 = vld [vmem:[%s1 + $0x1ef8] sm:$0xff]
  %v1041 = vld [vmem:[%s1 + $0x1f00] sm:$0xff]
  %v1042 = vld [vmem:[%s1 + $0x1f08] sm:$0xff]
  %v1043 = vld [vmem:[%s1 + $0x1f10] sm:$0xff]
  %v1044 = vld [vmem:[%s1 + $0x1f18] sm:$0xff]
  %v1045 = vld [vmem:[%s1 + $0x1f20] sm:$0xff]
  %v1046 = vld [vmem:[%s1 + $0x1f28] sm:$0xff]
  %v1047 = vld [vmem:[%s1 + $0x1f30] sm:$0xff]
  %v1048 = vld [vmem:[%s1 + $0x1f38] sm:$0xff]
  %v1049 = vld [vmem:[%s1 + $0x1f40] sm:$0xff]
  %v1050 = vld [vmem:[%s1 + $0x1f48] sm:$0xff]
  %v1051 = vld [vmem:[%s1 + $0x1f50] sm:$0xff]
  %v1052 = vld [vmem:[%s1 + $0x1f58] sm:$0xff]
  %v1053 = vld [vmem:[%s1 + $0x1f60] sm:$0xff]
  %v1054 = vld [vmem:[%s1 + $0x1f68] sm:$0xff]
  %v1055 = vld [vmem:[%s1 + $0x1f70] sm:$0xff]
  %v1056 = vld [vmem:[%s1 + $0x1f78] sm:$0xff]
  %v1057 = vld [vmem:[%s1 + $0x1f80] sm:$0xff]
  %v1058 = vld [vmem:[%s1 + $0x1f88] sm:$0xff]
  %v1059 = vld [vmem:[%s1 + $0x1f90] sm:$0xff]
  %v1060 = vld [vmem:[%s1 + $0x1f98] sm:$0xff]
  %v1061 = vld [vmem:[%s1 + $0x1fa0] sm:$0xff]
  %v1062 = vld [vmem:[%s1 + $0x1fa8] sm:$0xff]
  %v1063 = vld [vmem:[%s1 + $0x1fb0] sm:$0xff]
  %v1064 = vld [vmem:[%s1 + $0x1fb8] sm:$0xff]
  %v1065 = vld [vmem:[%s1 + $0x1fc0] sm:$0xff]
  %v1066 = vld [vmem:[%s1 + $0x1fc8] sm:$0xff]
  %v1067 = vld [vmem:[%s1 + $0x1fd0] sm:$0xff]
  %v1068 = vld [vmem:[%s1 + $0x1fd8] sm:$0xff]
  %v1069 = vld [vmem:[%s1 + $0x1fe0] sm:$0xff]
  %v1070 = vld [vmem:[%s1 + $0x1fe8] sm:$0xff]
  %v1071 = vld [vmem:[%s1 + $0x1ff0] sm:$0xff]
  %v1072 = vld [vmem:[%s1 + $0x1ff8] sm:$0xff]
  %v1073 = vld [vmem:[%s1 + $0x2000] sm:$0xff]
  %v1074 = vld [vmem:[%s1 + $0x2008] sm:$0xff]
  %v1075 = vld [vmem:[%s1 + $0x2010] sm:$0xff]
  %v1076 = vld [vmem:[%s1 + $0x2018] sm:$0xff]
  %v1077 = vld [vmem:[%s1 + $0x2020] sm:$0xff]
  %v1078 = vld [vmem:[%s1 + $0x2028] sm:$0xff]
  %v1079 = vld [vmem:[%s1 + $0x2030] sm:$0xff]
  %v1080 = vld [vmem:[%s1 + $0x2038] sm:$0xff]
  %v1081 = vld [vmem:[%s1 + $0x2040] sm:$0xff]
  %v1082 = vld [vmem:[%s1 + $0x2048] sm:$0xff]
  %v1083 = vld [vmem:[%s1 + $0x2050] sm:$0xff]
  %v1084 = vld [vmem:[%s1 + $0x2058] sm:$0xff]
  %v1085 = vld [vmem:[%s1 + $0x2060] sm:$0xff]
  %v1086 = vld [vmem:[%s1 + $0x2068] sm:$0xff]
  %v1087 = vld [vmem:[%s1 + $0x2070] sm:$0xff]
  %v1088 = vld [vmem:[%s1 + $0x2078] sm:$0xff]
  %v1089 = vld [vmem:[%s1 + $0x2080] sm:$0xff]
  %v1090 = vld [vmem:[%s1 + $0x2088] sm:$0xff]
  %v1091 = vld [vmem:[%s1 + $0x2090] sm:$0xff]
  %v1092 = vld [vmem:[%s1 + $0x2098] sm:$0xff]
  %v1093 = vld [vmem:[%s1 + $0x20a0] sm:$0xff]
  %v1094 = vld [vmem:[%s1 + $0x20a8] sm:$0xff]
  %v1095 = vld [vmem:[%s1 + $0x20b0] sm:$0xff]
  %v1096 = vld [vmem:[%s1 + $0x20b8] sm:$0xff]
  %v1097 = vld [vmem:[%s1 + $0x20c0] sm:$0xff]
  %v1098 = vld [vmem:[%s1 + $0x20c8] sm:$0xff]
  %v1099 = vld [vmem:[%s1 + $0x20d0] sm:$0xff]
  %v1100 = vld [vmem:[%s1 + $0x20d8] sm:$0xff]
  %v1101 = vld [vmem:[%s1 + $0x20e0] sm:$0xff]
  %v1102 = vld [vmem:[%s1 + $0x20e8] sm:$0xff]
  %v1103 = vld [vmem:[%s1 + $0x20f0] sm:$0xff]
  %v1104 = vld [vmem:[%s1 + $0x20f8] sm:$0xff]
  %v1105 = vld [vmem:[%s1 + $0x2100] sm:$0xff]
  %v1106 = vld [vmem:[%s1 + $0x2108] sm:$0xff]
  %v1107 = vld [vmem:[%s1 + $0x2110] sm:$0xff]
  %v1108 = vld [vmem:[%s1 + $0x2118] sm:$0xff]
  %v1109 = vld [vmem:[%s1 + $0x2120] sm:$0xff]
  %v1110 = vld [vmem:[%s1 + $0x2128] sm:$0xff]
  %v1111 = vld [vmem:[%s1 + $0x2130] sm:$0xff]
  %v1112 = vld [vmem:[%s1 + $0x2138] sm:$0xff]
  %v1113 = vld [vmem:[%s1 + $0x2140] sm:$0xff]
  %v1114 = vld [vmem:[%s1 + $0x2148] sm:$0xff]
  %v1115 = vld [vmem:[%s1 + $0x2150] sm:$0xff]
  %v1116 = vld [vmem:[%s1 + $0x2158] sm:$0xff]
  %v1117 = vld [vmem:[%s1 + $0x2160] sm:$0xff]
  %v1118 = vld [vmem:[%s1 + $0x2168] sm:$0xff]
  %v1119 = vld [vmem:[%s1 + $0x2170] sm:$0xff]
  %v1120 = vld [vmem:[%s1 + $0x2178] sm:$0xff]
  %v1121 = vld [vmem:[%s1 + $0x2180] sm:$0xff]
  %v1122 = vld [vmem:[%s1 + $0x2188] sm:$0xff]
  %v1123 = vld [vmem:[%s1 + $0x2190] sm:$0xff]
  %v1124 = vld [vmem:[%s1 + $0x2198] sm:$0xff]
  %v1125 = vld [vmem:[%s1 + $0x21a0] sm:$0xff]
  %v1126 = vld [vmem:[%s1 + $0x21a8] sm:$0xff]
  %v1127 = vld [vmem:[%s1 + $0x21b0] sm:$0xff]
  %v1128 = vld [vmem:[%s1 + $0x21b8] sm:$0xff]
  %v1129 = vld [vmem:[%s1 + $0x21c0] sm:$0xff]
  %v1130 = vld [vmem:[%s1 + $0x21c8] sm:$0xff]
  %v1131 = vld [vmem:[%s1 + $0x21d0] sm:$0xff]
  %v1132 = vld [vmem:[%s1 + $0x21d8] sm:$0xff]
  %v1133 = vld [vmem:[%s1 + $0x21e0] sm:$0xff]
  %v1134 = vld [vmem:[%s1 + $0x21e8] sm:$0xff]
  %v1135 = vld [vmem:[%s1 + $0x21f0] sm:$0xff]
  %v1136 = vld [vmem:[%s1 + $0x21f8] sm:$0xff]
  %v1137 = vld [vmem:[%s1 + $0x2200] sm:$0xff]
  %v1138 = vld [vmem:[%s1 + $0x2208] sm:$0xff]
  %v1139 = vld [vmem:[%s1 + $0x2210] sm:$0xff]
  %v1140 = vld [vmem:[%s1 + $0x2218] sm:$0xff]
  %v1141 = vld [vmem:[%s1 + $0x2220] sm:$0xff]
  %v1142 = vld [vmem:[%s1 + $0x2228] sm:$0xff]
  %v1143 = vld [vmem:[%s1 + $0x2230] sm:$0xff]
  %v1144 = vld [vmem:[%s1 + $0x2238] sm:$0xff]
  %v1145 = vld [vmem:[%s1 + $0x2240] sm:$0xff]
  %v1146 = vld [vmem:[%s1 + $0x2248] sm:$0xff]
  %v1147 = vld [vmem:[%s1 + $0x2250] sm:$0xff]
  %v1148 = vld [vmem:[%s1 + $0x2258] sm:$0xff]
  %v1149 = vld [vmem:[%s1 + $0x2260] sm:$0xff]
  %v1150 = vld [vmem:[%s1 + $0x2268] sm:$0xff]
  %v1151 = vld [vmem:[%s1 + $0x2270] sm:$0xff]
  %v1152 = vld [vmem:[%s1 + $0x2278] sm:$0xff]
  %v1153 = vld [vmem:[%s1 + $0x2280] sm:$0xff]
  %v1154 = vld [vmem:[%s1 + $0x2288] sm:$0xff]
  %v1155 = vld [vmem:[%s1 + $0x2290] sm:$0xff]
  %v1156 = vld [vmem:[%s1 + $0x2298] sm:$0xff]
  %v1157 = vld [vmem:[%s1 + $0x22a0] sm:$0xff]
  %v1158 = vld [vmem:[%s1 + $0x22a8] sm:$0xff]
  %v1159 = vld [vmem:[%s1 + $0x22b0] sm:$0xff]
  %v1160 = vld [vmem:[%s1 + $0x22b8] sm:$0xff]
  %v1161 = vld [vmem:[%s1 + $0x22c0] sm:$0xff]
  %v1162 = vld [vmem:[%s1 + $0x22c8] sm:$0xff]
  %v1163 = vld [vmem:[%s1 + $0x22d0] sm:$0xff]
  %v1164 = vld [vmem:[%s1 + $0x22d8] sm:$0xff]
  %v1165 = vld [vmem:[%s1 + $0x22e0] sm:$0xff]
  %v1166 = vld [vmem:[%s1 + $0x22e8] sm:$0xff]
  %v1167 = vld [vmem:[%s1 + $0x22f0] sm:$0xff]
  %v1168 = vld [vmem:[%s1 + $0x22f8] sm:$0xff]
  %v1169 = vld [vmem:[%s1 + $0x2300] sm:$0xff]
  %v1170 = vld [vmem:[%s1 + $0x2308] sm:$0xff]
  %v1171 = vld [vmem:[%s1 + $0x2310] sm:$0xff]
  %v1172 = vld [vmem:[%s1 + $0x2318] sm:$0xff]
  %v1173 = vld [vmem:[%s1 + $0x2320] sm:$0xff]
  %v1174 = vld [vmem:[%s1 + $0x2328] sm:$0xff]
  %v1175 = vld [vmem:[%s1 + $0x2330] sm:$0xff]
  %v1176 = vld [vmem:[%s1 + $0x2338] sm:$0xff]
  %v1177 = vld [vmem:[%s1 + $0x2340] sm:$0xff]
  %v1178 = vld [vmem:[%s1 + $0x2348] sm:$0xff]
  %v1179 = vld [vmem:[%s1 + $0x2350] sm:$0xff]
  %v1180 = vld [vmem:[%s1 + $0x2358] sm:$0xff]
  %v1181 = vld [vmem:[%s1 + $0x2360] sm:$0xff]
  %v1182 = vld [vmem:[%s1 + $0x2368] sm:$0xff]
  %v1183 = vld [vmem:[%s1 + $0x2370] sm:$0xff]
  %v1184 = vld [vmem:[%s1 + $0x2378] sm:$0xff]
  %v1185 = vld [vmem:[%s1 + $0x2380] sm:$0xff]
  %v1186 = vld [vmem:[%s1 + $0x2388] sm:$0xff]
  %v1187 = vld [vmem:[%s1 + $0x2390] sm:$0xff]
  %v1188 = vld [vmem:[%s1 + $0x2398] sm:$0xff]
  %v1189 = vld [vmem:[%s1 + $0x23a0] sm:$0xff]
  %v1190 = vld [vmem:[%s1 + $0x23a8] sm:$0xff]
  %v1191 = vld [vmem:[%s1 + $0x23b0] sm:$0xff]
  %v1192 = vld [vmem:[%s1 + $0x23b8] sm:$0xff]
  %v1193 = vld [vmem:[%s1 + $0x23c0] sm:$0xff]
  %v1194 = vld [vmem:[%s1 + $0x23c8] sm:$0xff]
  %v1195 = vld [vmem:[%s1 + $0x23d0] sm:$0xff]
  %v1196 = vld [vmem:[%s1 + $0x23d8] sm:$0xff]
  %v1197 = vld [vmem:[%s1 + $0x23e0] sm:$0xff]
  %v1198 = vld [vmem:[%s1 + $0x23e8] sm:$0xff]
  %v1199 = vld [vmem:[%s1 + $0x23f0] sm:$0xff]
  %v1200 = vld [vmem:[%s1 + $0x23f8] sm:$0xff]
  %v1201 = vld [vmem:[%s1 + $0x2400] sm:$0xff]
  %v1202 = vld [vmem:[%s1 + $0x2408] sm:$0xff]
  %v1203 = vld [vmem:[%s1 + $0x2410] sm:$0xff]
  %v1204 = vld [vmem:[%s1 + $0x2418] sm:$0xff]
  %v1205 = vld [vmem:[%s1 + $0x2420] sm:$0xff]
  %v1206 = vld [vmem:[%s1 + $0x2428] sm:$0xff]
  %v1207 = vld [vmem:[%s1 + $0x2430] sm:$0xff]
  %v1208 = vld [vmem:[%s1 + $0x2438] sm:$0xff]
  %v1209 = vld [vmem:[%s1 + $0x2440] sm:$0xff]
  %v1210 = vld [vmem:[%s1 + $0x2448] sm:$0xff]
  %v1211 = vld [vmem:[%s1 + $0x2450] sm:$0xff]
  %v1212 = vld [vmem:[%s1 + $0x2458] sm:$0xff]
  %v1213 = vld [vmem:[%s1 + $0x2460] sm:$0xff]
  %v1214 = vld [vmem:[%s1 + $0x2468] sm:$0xff]
  %v1215 = vld [vmem:[%s1 + $0x2470] sm:$0xff]
  %v1216 = vld [vmem:[%s1 + $0x2478] sm:$0xff]
  %v1217 = vld [vmem:[%s1 + $0x2480] sm:$0xff]
  %v1218 = vld [vmem:[%s1 + $0x2488] sm:$0xff]
  %v1219 = vld [vmem:[%s1 + $0x2490] sm:$0xff]
  %v1220 = vld [vmem:[%s1 + $0x2498] sm:$0xff]
  %v1221 = vld [vmem:[%s1 + $0x24a0] sm:$0xff]
  %v1222 = vld [vmem:[%s1 + $0x24a8] sm:$0xff]
  %v1223 = vld [vmem:[%s1 + $0x24b0] sm:$0xff]
  %v1224 = vld [vmem:[%s1 + $0x24b8] sm:$0xff]
  %v1225 = vld [vmem:[%s1 + $0x24c0] sm:$0xff]
  %v1226 = vld [vmem:[%s1 + $0x24c8] sm:$0xff]
  %v1227 = vld [vmem:[%s1 + $0x24d0] sm:$0xff]
  %v1228 = vld [vmem:[%s1 + $0x24d8] sm:$0xff]
  %v1229 = vld [vmem:[%s1 + $0x24e0] sm:$0xff]
  %v1230 = vld [vmem:[%s1 + $0x24e8] sm:$0xff]
  %v1231 = vld [vmem:[%s1 + $0x24f0] sm:$0xff]
  %v1232 = vld [vmem:[%s1 + $0x24f8] sm:$0xff]
  %v1233 = vld [vmem:[%s1 + $0x2500] sm:$0xff]
  %v1234 = vld [vmem:[%s1 + $0x2508] sm:$0xff]
  %v1235 = vld [vmem:[%s1 + $0x2510] sm:$0xff]
  %v1236 = vld [vmem:[%s1 + $0x2518] sm:$0xff]
  %v1237 = vld [vmem:[%s1 + $0x2520] sm:$0xff]
  %v1238 = vld [vmem:[%s1 + $0x2528] sm:$0xff]
  %v1239 = vld [vmem:[%s1 + $0x2530] sm:$0xff]
  %v1240 = vld [vmem:[%s1 + $0x2538] sm:$0xff]
  %v1241 = vld [vmem:[%s1 + $0x2540] sm:$0xff]
  %v1242 = vld [vmem:[%s1 + $0x2548] sm:$0xff]
  %v1243 = vld [vmem:[%s1 + $0x2550] sm:$0xff]
  %v1244 = vld [vmem:[%s1 + $0x2558] sm:$0xff]
  %v1245 = vld [vmem:[%s1 + $0x2560] sm:$0xff]
  %v1246 = vld [vmem:[%s1 + $0x2568] sm:$0xff]
  %v1247 = vld [vmem:[%s1 + $0x2570] sm:$0xff]
  %v1248 = vld [vmem:[%s1 + $0x2578] sm:$0xff]
  %v1249 = vld [vmem:[%s1 + $0x2580] sm:$0xff]
  %v1250 = vld [vmem:[%s1 + $0x2588] sm:$0xff]
  %v1251 = vld [vmem:[%s1 + $0x2590] sm:$0xff]
  %v1252 = vld [vmem:[%s1 + $0x2598] sm:$0xff]
  %v1253 = vld [vmem:[%s1 + $0x25a0] sm:$0xff]
  %v1254 = vld [vmem:[%s1 + $0x25a8] sm:$0xff]
  %v1255 = vld [vmem:[%s1 + $0x25b0] sm:$0xff]
  %v1256 = vld [vmem:[%s1 + $0x25b8] sm:$0xff]
  %v1257 = vld [vmem:[%s1 + $0x25c0] sm:$0xff]
  %v1258 = vld [vmem:[%s1 + $0x25c8] sm:$0xff]
  %v1259 = vld [vmem:[%s1 + $0x25d0] sm:$0xff]
  %v1260 = vld [vmem:[%s1 + $0x25d8] sm:$0xff]
  %v1261 = vld [vmem:[%s1 + $0x25e0] sm:$0xff]
  %v1262 = vld [vmem:[%s1 + $0x25e8] sm:$0xff]
  %v1263 = vld [vmem:[%s1 + $0x25f0] sm:$0xff]
  %v1264 = vld [vmem:[%s1 + $0x25f8] sm:$0xff]
  %v1265 = vld [vmem:[%s1 + $0x2600] sm:$0xff]
  %v1266 = vld [vmem:[%s1 + $0x2608] sm:$0xff]
  %v1267 = vld [vmem:[%s1 + $0x2610] sm:$0xff]
  %v1268 = vld [vmem:[%s1 + $0x2618] sm:$0xff]
  %v1269 = vld [vmem:[%s1 + $0x2620] sm:$0xff]
  %v1270 = vld [vmem:[%s1 + $0x2628] sm:$0xff]
  %v1271 = vld [vmem:[%s1 + $0x2630] sm:$0xff]
  %v1272 = vld [vmem:[%s1 + $0x2638] sm:$0xff]
  %v1273 = vld [vmem:[%s1 + $0x2640] sm:$0xff]
  %v1274 = vld [vmem:[%s1 + $0x2648] sm:$0xff]
  %v1275 = vld [vmem:[%s1 + $0x2650] sm:$0xff]
  %v1276 = vld [vmem:[%s1 + $0x2658] sm:$0xff]
  %v1277 = vld [vmem:[%s1 + $0x2660] sm:$0xff]
  %v1278 = vld [vmem:[%s1 + $0x2668] sm:$0xff]
  %v1279 = vld [vmem:[%s1 + $0x2670] sm:$0xff]
  %v1280 = vld [vmem:[%s1 + $0x2678] sm:$0xff]
  %v1281 = vld [vmem:[%s1 + $0x2680] sm:$0xff]
  %v1282 = vld [vmem:[%s1 + $0x2688] sm:$0xff]
  %v1283 = vld [vmem:[%s1 + $0x2690] sm:$0xff]
  %v1284 = vld [vmem:[%s1 + $0x2698] sm:$0xff]
  %v1285 = vld [vmem:[%s1 + $0x26a0] sm:$0xff]
  %v1286 = vld [vmem:[%s1 + $0x26a8] sm:$0xff]
  %v1287 = vld [vmem:[%s1 + $0x26b0] sm:$0xff]
  %v1288 = vld [vmem:[%s1 + $0x26b8] sm:$0xff]
  %v1289 = vld [vmem:[%s1 + $0x26c0] sm:$0xff]
  %v1290 = vld [vmem:[%s1 + $0x26c8] sm:$0xff]
  %v1291 = vld [vmem:[%s1 + $0x26d0] sm:$0xff]
  %v1292 = vld [vmem:[%s1 + $0x26d8] sm:$0xff]
  %v1293 = vld [vmem:[%s1 + $0x26e0] sm:$0xff]
  %v1294 = vld [vmem:[%s1 + $0x26e8] sm:$0xff]
  %v1295 = vld [vmem:[%s1 + $0x26f0] sm:$0xff]
  %v1296 = vld [vmem:[%s1 + $0x26f8] sm:$0xff]
  %v1297 = vld [vmem:[%s1 + $0x2700] sm:$0xff]
  %v1298 = vld [vmem:[%s1 + $0x2708] sm:$0xff]
  %v1299 = vld [vmem:[%s1 + $0x2710] sm:$0xff]
  %v1300 = vld [vmem:[%s1 + $0x2718] sm:$0xff]
  %v1301 = vld [vmem:[%s1 + $0x2720] sm:$0xff]
  %v1302 = vld [vmem:[%s1 + $0x2728] sm:$0xff]
  %v1303 = vld [vmem:[%s1 + $0x2730] sm:$0xff]
  %v1304 = vld [vmem:[%s1 + $0x2738] sm:$0xff]
  %v1305 = vld [vmem:[%s1 + $0x2740] sm:$0xff]
  %v1306 = vld [vmem:[%s1 + $0x2748] sm:$0xff]
  %v1307 = vld [vmem:[%s1 + $0x2750] sm:$0xff]
  %v1308 = vld [vmem:[%s1 + $0x2758] sm:$0xff]
  %v1309 = vld [vmem:[%s1 + $0x2760] sm:$0xff]
  %v1310 = vld [vmem:[%s1 + $0x2768] sm:$0xff]
  %v1311 = vld [vmem:[%s1 + $0x2770] sm:$0xff]
  %v1312 = vld [vmem:[%s1 + $0x2778] sm:$0xff]
  %v1313 = vld [vmem:[%s1 + $0x2780] sm:$0xff]
  %v1314 = vld [vmem:[%s1 + $0x2788] sm:$0xff]
  %v1315 = vld [vmem:[%s1 + $0x2790] sm:$0xff]
  %v1316 = vld [vmem:[%s1 + $0x2798] sm:$0xff]
  %v1317 = vld [vmem:[%s1 + $0x27a0] sm:$0xff]
  %v1318 = vld [vmem:[%s1 + $0x27a8] sm:$0xff]
  %v1319 = vld [vmem:[%s1 + $0x27b0] sm:$0xff]
  %v1320 = vld [vmem:[%s1 + $0x27b8] sm:$0xff]
  %v1321 = vld [vmem:[%s1 + $0x27c0] sm:$0xff]
  %v1322 = vld [vmem:[%s1 + $0x27c8] sm:$0xff]
  %v1323 = vld [vmem:[%s1 + $0x27d0] sm:$0xff]
  %v1324 = vld [vmem:[%s1 + $0x27d8] sm:$0xff]
  %v1325 = vld [vmem:[%s1 + $0x27e0] sm:$0xff]
  %v1326 = vld [vmem:[%s1 + $0x27e8] sm:$0xff]
  %v1327 = vld [vmem:[%s1 + $0x27f0] sm:$0xff]
  %v1328 = vld [vmem:[%s1 + $0x27f8] sm:$0xff]
  %v1329 = vld [vmem:[%s1 + $0x2800] sm:$0xff]
  %v1330 = vld [vmem:[%s1 + $0x2808] sm:$0xff]
  %v1331 = vld [vmem:[%s1 + $0x2810] sm:$0xff]
  %v1332 = vld [vmem:[%s1 + $0x2818] sm:$0xff]
  %v1333 = vld [vmem:[%s1 + $0x2820] sm:$0xff]
  %v1334 = vld [vmem:[%s1 + $0x2828] sm:$0xff]
  %v1335 = vld [vmem:[%s1 + $0x2830] sm:$0xff]
  %v1336 = vld [vmem:[%s1 + $0x2838] sm:$0xff]
  %v1337 = vld [vmem:[%s1 + $0x2840] sm:$0xff]
  %v1338 = vld [vmem:[%s1 + $0x2848] sm:$0xff]
  %v1339 = vld [vmem:[%s1 + $0x2850] sm:$0xff]
  %v1340 = vld [vmem:[%s1 + $0x2858] sm:$0xff]
  %v1341 = vld [vmem:[%s1 + $0x2860] sm:$0xff]
  %v1342 = vld [vmem:[%s1 + $0x2868] sm:$0xff]
  %v1343 = vld [vmem:[%s1 + $0x2870] sm:$0xff]
  %v1344 = vld [vmem:[%s1 + $0x2878] sm:$0xff]
  %v1345 = vld [vmem:[%s1 + $0x2880] sm:$0xff]
  %v1346 = vld [vmem:[%s1 + $0x2888] sm:$0xff]
  %v1347 = vld [vmem:[%s1 + $0x2890] sm:$0xff]
  %v1348 = vld [vmem:[%s1 + $0x2898] sm:$0xff]
  %v1349 = vld [vmem:[%s1 + $0x28a0] sm:$0xff]
  %v1350 = vld [vmem:[%s1 + $0x28a8] sm:$0xff]
  %v1351 = vld [vmem:[%s1 + $0x28b0] sm:$0xff]
  %v1352 = vld [vmem:[%s1 + $0x28b8] sm:$0xff]
  %v1353 = vld [vmem:[%s1 + $0x28c0] sm:$0xff]
  %v1354 = vld [vmem:[%s1 + $0x28c8] sm:$0xff]
  %v1355 = vld [vmem:[%s1 + $0x28d0] sm:$0xff]
  %v1356 = vld [vmem:[%s1 + $0x28d8] sm:$0xff]
  %v1357 = vld [vmem:[%s1 + $0x28e0] sm:$0xff]
  %v1358 = vld [vmem:[%s1 + $0x28e8] sm:$0xff]
  %v1359 = vld [vmem:[%s1 + $0x28f0] sm:$0xff]
  %v1360 = vld [vmem:[%s1 + $0x28f8] sm:$0xff]
  %v1361 = vld [vmem:[%s1 + $0x2900] sm:$0xff]
  %v1362 = vld [vmem:[%s1 + $0x2908] sm:$0xff]
  %v1363 = vld [vmem:[%s1 + $0x2910] sm:$0xff]
  %v1364 = vld [vmem:[%s1 + $0x2918] sm:$0xff]
  %v1365 = vld [vmem:[%s1 + $0x2920] sm:$0xff]
  %v1366 = vld [vmem:[%s1 + $0x2928] sm:$0xff]
  %v1367 = vld [vmem:[%s1 + $0x2930] sm:$0xff]
  %v1368 = vld [vmem:[%s1 + $0x2938] sm:$0xff]
  %v1369 = vld [vmem:[%s1 + $0x2940] sm:$0xff]
  %v1370 = vld [vmem:[%s1 + $0x2948] sm:$0xff]
  %v1371 = vld [vmem:[%s1 + $0x2950] sm:$0xff]
  %v1372 = vld [vmem:[%s1 + $0x2958] sm:$0xff]
  %v1373 = vld [vmem:[%s1 + $0x2960] sm:$0xff]
  %v1374 = vld [vmem:[%s1 + $0x2968] sm:$0xff]
  %v1375 = vld [vmem:[%s1 + $0x2970] sm:$0xff]
  %v1376 = vld [vmem:[%s1 + $0x2978] sm:$0xff]
  %v1377 = vld [vmem:[%s1 + $0x2980] sm:$0xff]
  %v1378 = vld [vmem:[%s1 + $0x2988] sm:$0xff]
  %v1379 = vld [vmem:[%s1 + $0x2990] sm:$0xff]
  %v1380 = vld [vmem:[%s1 + $0x2998] sm:$0xff]
  %v1381 = vld [vmem:[%s1 + $0x29a0] sm:$0xff]
  %v1382 = vld [vmem:[%s1 + $0x29a8] sm:$0xff]
  %v1383 = vld [vmem:[%s1 + $0x29b0] sm:$0xff]
  %v1384 = vld [vmem:[%s1 + $0x29b8] sm:$0xff]
  %v1385 = vld [vmem:[%s1 + $0x29c0] sm:$0xff]
  %v1386 = vld [vmem:[%s1 + $0x29c8] sm:$0xff]
  %v1387 = vld [vmem:[%s1 + $0x29d0] sm:$0xff]
  %v1388 = vld [vmem:[%s1 + $0x29d8] sm:$0xff]
  %v1389 = vld [vmem:[%s1 + $0x29e0] sm:$0xff]
  %v1390 = vld [vmem:[%s1 + $0x29e8] sm:$0xff]
  %v1391 = vld [vmem:[%s1 + $0x29f0] sm:$0xff]
  %v1392 = vld [vmem:[%s1 + $0x29f8] sm:$0xff]
  %v1393 = vld [vmem:[%s1 + $0x2a00] sm:$0xff]
  %v1394 = vld [vmem:[%s1 + $0x2a08] sm:$0xff]
  %v1395 = vld [vmem:[%s1 + $0x2a10] sm:$0xff]
  %v1396 = vld [vmem:[%s1 + $0x2a18] sm:$0xff]
  %v1397 = vld [vmem:[%s1 + $0x2a20] sm:$0xff]
  %v1398 = vld [vmem:[%s1 + $0x2a28] sm:$0xff]
  %v1399 = vld [vmem:[%s1 + $0x2a30] sm:$0xff]
  %v1400 = vld [vmem:[%s1 + $0x2a38] sm:$0xff]
  %v1401 = vld [vmem:[%s1 + $0x2a40] sm:$0xff]
  %v1402 = vld [vmem:[%s1 + $0x2a48] sm:$0xff]
  %v1403 = vld [vmem:[%s1 + $0x2a50] sm:$0xff]
  %v1404 = vld [vmem:[%s1 + $0x2a58] sm:$0xff]
  %v1405 = vld [vmem:[%s1 + $0x2a60] sm:$0xff]
  %v1406 = vld [vmem:[%s1 + $0x2a68] sm:$0xff]
  %v1407 = vld [vmem:[%s1 + $0x2a70] sm:$0xff]
  %v1408 = vld [vmem:[%s1 + $0x2a78] sm:$0xff]
  %v1409 = vld [vmem:[%s1 + $0x2a80] sm:$0xff]
  %v1410 = vld [vmem:[%s1 + $0x2a88] sm:$0xff]
  %v1411 = vld [vmem:[%s1 + $0x2a90] sm:$0xff]
  %v1412 = vld [vmem:[%s1 + $0x2a98] sm:$0xff]
  %v1413 = vld [vmem:[%s1 + $0x2aa0] sm:$0xff]
  %v1414 = vld [vmem:[%s1 + $0x2aa8] sm:$0xff]
  %v1415 = vld [vmem:[%s1 + $0x2ab0] sm:$0xff]
  %v1416 = vld [vmem:[%s1 + $0x2ab8] sm:$0xff]
  %v1417 = vld [vmem:[%s1 + $0x2ac0] sm:$0xff]
  %v1418 = vld [vmem:[%s1 + $0x2ac8] sm:$0xff]
  %v1419 = vld [vmem:[%s1 + $0x2ad0] sm:$0xff]
  %v1420 = vld [vmem:[%s1 + $0x2ad8] sm:$0xff]
  %v1421 = vld [vmem:[%s1 + $0x2ae0] sm:$0xff]
  %v1422 = vld [vmem:[%s1 + $0x2ae8] sm:$0xff]
  %v1423 = vld [vmem:[%s1 + $0x2af0] sm:$0xff]
  %v1424 = vld [vmem:[%s1 + $0x2af8] sm:$0xff]
  %v1425 = vld [vmem:[%s1 + $0x2b00] sm:$0xff]
  %v1426 = vld [vmem:[%s1 + $0x2b08] sm:$0xff]
  %v1427 = vld [vmem:[%s1 + $0x2b10] sm:$0xff]
  %v1428 = vld [vmem:[%s1 + $0x2b18] sm:$0xff]
  %v1429 = vld [vmem:[%s1 + $0x2b20] sm:$0xff]
  %v1430 = vld [vmem:[%s1 + $0x2b28] sm:$0xff]
  %v1431 = vld [vmem:[%s1 + $0x2b30] sm:$0xff]
  %v1432 = vld [vmem:[%s1 + $0x2b38] sm:$0xff]
  %v1433 = vld [vmem:[%s1 + $0x2b40] sm:$0xff]
  %v1434 = vld [vmem:[%s1 + $0x2b48] sm:$0xff]
  %v1435 = vld [vmem:[%s1 + $0x2b50] sm:$0xff]
  %v1436 = vld [vmem:[%s1 + $0x2b58] sm:$0xff]
  %v1437 = vld [vmem:[%s1 + $0x2b60] sm:$0xff]
  %v1438 = vld [vmem:[%s1 + $0x2b68] sm:$0xff]
  %v1439 = vld [vmem:[%s1 + $0x2b70] sm:$0xff]
  %v1440 = vld [vmem:[%s1 + $0x2b78] sm:$0xff]
  %v1441 = vld [vmem:[%s1 + $0x2b80] sm:$0xff]
  %v1442 = vld [vmem:[%s1 + $0x2b88] sm:$0xff]
  %v1443 = vld [vmem:[%s1 + $0x2b90] sm:$0xff]
  %v1444 = vld [vmem:[%s1 + $0x2b98] sm:$0xff]
  %v1445 = vld [vmem:[%s1 + $0x2ba0] sm:$0xff]
  %v1446 = vld [vmem:[%s1 + $0x2ba8] sm:$0xff]
  %v1447 = vld [vmem:[%s1 + $0x2bb0] sm:$0xff]
  %v1448 = vld [vmem:[%s1 + $0x2bb8] sm:$0xff]
  %v1449 = vld [vmem:[%s1 + $0x2bc0] sm:$0xff]
  %v1450 = vld [vmem:[%s1 + $0x2bc8] sm:$0xff]
  %v1451 = vld [vmem:[%s1 + $0x2bd0] sm:$0xff]
  %v1452 = vld [vmem:[%s1 + $0x2bd8] sm:$0xff]
  %v1453 = vld [vmem:[%s1 + $0x2be0] sm:$0xff]
  %v1454 = vld [vmem:[%s1 + $0x2be8] sm:$0xff]
  %v1455 = vld [vmem:[%s1 + $0x2bf0] sm:$0xff]
  %v1456 = vld [vmem:[%s1 + $0x2bf8] sm:$0xff]
  %v1457 = vld [vmem:[%s1 + $0x2c00] sm:$0xff]
  %v1458 = vld [vmem:[%s1 + $0x2c08] sm:$0xff]
  %v1459 = vld [vmem:[%s1 + $0x2c10] sm:$0xff]
  %v1460 = vld [vmem:[%s1 + $0x2c18] sm:$0xff]
  %v1461 = vld [vmem:[%s1 + $0x2c20] sm:$0xff]
  %v1462 = vld [vmem:[%s1 + $0x2c28] sm:$0xff]
  %v1463 = vld [vmem:[%s1 + $0x2c30] sm:$0xff]
  %v1464 = vld [vmem:[%s1 + $0x2c38] sm:$0xff]
  %v1465 = vld [vmem:[%s1 + $0x2c40] sm:$0xff]
  %v1466 = vld [vmem:[%s1 + $0x2c48] sm:$0xff]
  %v1467 = vld [vmem:[%s1 + $0x2c50] sm:$0xff]
  %v1468 = vld [vmem:[%s1 + $0x2c58] sm:$0xff]
  %v1469 = vld [vmem:[%s1 + $0x2c60] sm:$0xff]
  %v1470 = vld [vmem:[%s1 + $0x2c68] sm:$0xff]
  %v1471 = vld [vmem:[%s1 + $0x2c70] sm:$0xff]
  %v1472 = vld [vmem:[%s1 + $0x2c78] sm:$0xff]
  %v1473 = vld [vmem:[%s1 + $0x2c80] sm:$0xff]
  %v1474 = vld [vmem:[%s1 + $0x2c88] sm:$0xff]
  %v1475 = vld [vmem:[%s1 + $0x2c90] sm:$0xff]
  %v1476 = vld [vmem:[%s1 + $0x2c98] sm:$0xff]
  %v1477 = vld [vmem:[%s1 + $0x2ca0] sm:$0xff]
  %v1478 = vld [vmem:[%s1 + $0x2ca8] sm:$0xff]
  %v1479 = vld [vmem:[%s1 + $0x2cb0] sm:$0xff]
  %v1480 = vld [vmem:[%s1 + $0x2cb8] sm:$0xff]
  %v1481 = vld [vmem:[%s1 + $0x2cc0] sm:$0xff]
  %v1482 = vld [vmem:[%s1 + $0x2cc8] sm:$0xff]
  %v1483 = vld [vmem:[%s1 + $0x2cd0] sm:$0xff]
  %v1484 = vld [vmem:[%s1 + $0x2cd8] sm:$0xff]
  %v1485 = vld [vmem:[%s1 + $0x2ce0] sm:$0xff]
  %v1486 = vld [vmem:[%s1 + $0x2ce8] sm:$0xff]
  %v1487 = vld [vmem:[%s1 + $0x2cf0] sm:$0xff]
  %v1488 = vld [vmem:[%s1 + $0x2cf8] sm:$0xff]
  %v1489 = vld [vmem:[%s1 + $0x2d00] sm:$0xff]
  %v1490 = vld [vmem:[%s1 + $0x2d08] sm:$0xff]
  %v1491 = vld [vmem:[%s1 + $0x2d10] sm:$0xff]
  %v1492 = vld [vmem:[%s1 + $0x2d18] sm:$0xff]
  %v1493 = vld [vmem:[%s1 + $0x2d20] sm:$0xff]
  %v1494 = vld [vmem:[%s1 + $0x2d28] sm:$0xff]
  %v1495 = vld [vmem:[%s1 + $0x2d30] sm:$0xff]
  %v1496 = vld [vmem:[%s1 + $0x2d38] sm:$0xff]
  %v1497 = vld [vmem:[%s1 + $0x2d40] sm:$0xff]
  %v1498 = vld [vmem:[%s1 + $0x2d48] sm:$0xff]
  %v1499 = vld [vmem:[%s1 + $0x2d50] sm:$0xff]
  %v1500 = vld [vmem:[%s1 + $0x2d58] sm:$0xff]
  %v1501 = vld [vmem:[%s1 + $0x2d60] sm:$0xff]
  %v1502 = vld [vmem:[%s1 + $0x2d68] sm:$0xff]
  %v1503 = vld [vmem:[%s1 + $0x2d70] sm:$0xff]
  %v1504 = vld [vmem:[%s1 + $0x2d78] sm:$0xff]
  %v1505 = vld [vmem:[%s1 + $0x2d80] sm:$0xff]
  %v1506 = vld [vmem:[%s1 + $0x2d88] sm:$0xff]
  %v1507 = vld [vmem:[%s1 + $0x2d90] sm:$0xff]
  %v1508 = vld [vmem:[%s1 + $0x2d98] sm:$0xff]
  %v1509 = vld [vmem:[%s1 + $0x2da0] sm:$0xff]
  %v1510 = vld [vmem:[%s1 + $0x2da8] sm:$0xff]
  %v1511 = vld [vmem:[%s1 + $0x2db0] sm:$0xff]
  %v1512 = vld [vmem:[%s1 + $0x2db8] sm:$0xff]
  %v1513 = vld [vmem:[%s1 + $0x2dc0] sm:$0xff]
  %v1514 = vld [vmem:[%s1 + $0x2dc8] sm:$0xff]
  %v1515 = vld [vmem:[%s1 + $0x2dd0] sm:$0xff]
  %v1516 = vld [vmem:[%s1 + $0x2dd8] sm:$0xff]
  %v1517 = vld [vmem:[%s1 + $0x2de0] sm:$0xff]
  %v1518 = vld [vmem:[%s1 + $0x2de8] sm:$0xff]
  %v1519 = vld [vmem:[%s1 + $0x2df0] sm:$0xff]
  %v1520 = vld [vmem:[%s1 + $0x2df8] sm:$0xff]
  %v1521 = vld [vmem:[%s1 + $0x2e00] sm:$0xff]
  %v1522 = vld [vmem:[%s1 + $0x2e08] sm:$0xff]
  %v1523 = vld [vmem:[%s1 + $0x2e10] sm:$0xff]
  %v1524 = vld [vmem:[%s1 + $0x2e18] sm:$0xff]
  %v1525 = vld [vmem:[%s1 + $0x2e20] sm:$0xff]
  %v1526 = vld [vmem:[%s1 + $0x2e28] sm:$0xff]
  %v1527 = vld [vmem:[%s1 + $0x2e30] sm:$0xff]
  %v1528 = vld [vmem:[%s1 + $0x2e38] sm:$0xff]
  %v1529 = vld [vmem:[%s1 + $0x2e40] sm:$0xff]
  %v1530 = vld [vmem:[%s1 + $0x2e48] sm:$0xff]
  %v1531 = vld [vmem:[%s1 + $0x2e50] sm:$0xff]
  %v1532 = vld [vmem:[%s1 + $0x2e58] sm:$0xff]
  %v1533 = vld [vmem:[%s1 + $0x2e60] sm:$0xff]
  %v1534 = vld [vmem:[%s1 + $0x2e68] sm:$0xff]
  %v1535 = vld [vmem:[%s1 + $0x2e70] sm:$0xff]
  %v1536 = vld [vmem:[%s1 + $0x2e78] sm:$0xff]
  %v1537 = vld [vmem:[%s1 + $0x2e80] sm:$0xff]
  %v1538 = vld [vmem:[%s1 + $0x2e88] sm:$0xff]
  %v1539 = vld [vmem:[%s1 + $0x2e90] sm:$0xff]
  %v1540 = vld [vmem:[%s1 + $0x2e98] sm:$0xff]
  %v1541 = vld [vmem:[%s1 + $0x2ea0] sm:$0xff]
  %v1542 = vld [vmem:[%s1 + $0x2ea8] sm:$0xff]
  %v1543 = vld [vmem:[%s1 + $0x2eb0] sm:$0xff]
  %v1544 = vld [vmem:[%s1 + $0x2eb8] sm:$0xff]
  %v1545 = vld [vmem:[%s1 + $0x2ec0] sm:$0xff]
  %v1546 = vld [vmem:[%s1 + $0x2ec8] sm:$0xff]
  %v1547 = vld [vmem:[%s1 + $0x2ed0] sm:$0xff]
  %v1548 = vld [vmem:[%s1 + $0x2ed8] sm:$0xff]
  %v1549 = vld [vmem:[%s1 + $0x2ee0] sm:$0xff]
  %v1550 = vld [vmem:[%s1 + $0x2ee8] sm:$0xff]
  %v1551 = vld [vmem:[%s1 + $0x2ef0] sm:$0xff]
  %v1552 = vld [vmem:[%s1 + $0x2ef8] sm:$0xff]
  %v1553 = vld [vmem:[%s1 + $0x2f00] sm:$0xff]
  %v1554 = vld [vmem:[%s1 + $0x2f08] sm:$0xff]
  %v1555 = vld [vmem:[%s1 + $0x2f10] sm:$0xff]
  %v1556 = vld [vmem:[%s1 + $0x2f18] sm:$0xff]
  %v1557 = vld [vmem:[%s1 + $0x2f20] sm:$0xff]
  %v1558 = vld [vmem:[%s1 + $0x2f28] sm:$0xff]
  %v1559 = vld [vmem:[%s1 + $0x2f30] sm:$0xff]
  %v1560 = vld [vmem:[%s1 + $0x2f38] sm:$0xff]
  %v1561 = vld [vmem:[%s1 + $0x2f40] sm:$0xff]
  %v1562 = vld [vmem:[%s1 + $0x2f48] sm:$0xff]
  %v1563 = vld [vmem:[%s1 + $0x2f50] sm:$0xff]
  %v1564 = vld [vmem:[%s1 + $0x2f58] sm:$0xff]
  %v1565 = vld [vmem:[%s1 + $0x2f60] sm:$0xff]
  %v1566 = vld [vmem:[%s1 + $0x2f68] sm:$0xff]
  %v1567 = vld [vmem:[%s1 + $0x2f70] sm:$0xff]
  %v1568 = vld [vmem:[%s1 + $0x2f78] sm:$0xff]
  %v1569 = vld [vmem:[%s1 + $0x2f80] sm:$0xff]
  %v1570 = vld [vmem:[%s1 + $0x2f88] sm:$0xff]
  %v1571 = vld [vmem:[%s1 + $0x2f90] sm:$0xff]
  %v1572 = vld [vmem:[%s1 + $0x2f98] sm:$0xff]
  %v1573 = vld [vmem:[%s1 + $0x2fa0] sm:$0xff]
  %v1574 = vld [vmem:[%s1 + $0x2fa8] sm:$0xff]
  %v1575 = vld [vmem:[%s1 + $0x2fb0] sm:$0xff]
  %v1576 = vld [vmem:[%s1 + $0x2fb8] sm:$0xff]
  %v1577 = vld [vmem:[%s1 + $0x2fc0] sm:$0xff]
  %v1578 = vld [vmem:[%s1 + $0x2fc8] sm:$0xff]
  %v1579 = vld [vmem:[%s1 + $0x2fd0] sm:$0xff]
  %v1580 = vld [vmem:[%s1 + $0x2fd8] sm:$0xff]
  %v1581 = vld [vmem:[%s1 + $0x2fe0] sm:$0xff]
  %v1582 = vld [vmem:[%s1 + $0x2fe8] sm:$0xff]
  %v1583 = vld [vmem:[%s1 + $0x2ff0] sm:$0xff]
  %v1584 = vld [vmem:[%s1 + $0x2ff8] sm:$0xff]
  %1586 = vst [vmem:[#allocation1] ss:$4 sm:$0xff] %v37
  %s1588 = scalar_lea.vmem [#allocation1], 32
  %1589 = vst [vmem:[%s1588] ss:$4 sm:$0xff] %v38
  %v1590 = vld.sshfl [vmem:[#allocation1] sm:$0xff pattern:$0x73625140]
  %v1591 = vld.sshfl [vmem:[#allocation1 + $0x8] sm:$0xff pattern:$0x73625140]
  %v1592 = vld.sshfl [vmem:[#allocation1 + $0x10] sm:$0xff pattern:$0x73625140]
  %v1593 = vld.sshfl [vmem:[#allocation1 + $0x18] sm:$0xff pattern:$0x73625140]
  %v1594 = vld.sshfl [vmem:[#allocation1 + $0x20] sm:$0xff pattern:$0x73625140]
  %v1595 = vld.sshfl [vmem:[#allocation1 + $0x28] sm:$0xff pattern:$0x73625140]
  %v1596 = vld.sshfl [vmem:[#allocation1 + $0x30] sm:$0xff pattern:$0x73625140]
  %v1597 = vld.sshfl [vmem:[#allocation1 + $0x38] sm:$0xff pattern:$0x73625140]
  %1599 = vst [vmem:[#allocation1] ss:$4 sm:$0xff] %v39
  %1601 = vst [vmem:[%s1588] ss:$4 sm:$0xff] %v40
  %v1602 = vld.sshfl [vmem:[#allocation1] sm:$0xff pattern:$0x73625140]
  %v1603 = vld.sshfl [vmem:[#allocation1 + $0x8] sm:$0xff pattern:$0x73625140]
  %v1604 = vld.sshfl [vmem:[#allocation1 + $0x10] sm:$0xff pattern:$0x73625140]
  %v1605 = vld.sshfl [vmem:[#allocation1 + $0x18] sm:$0xff pattern:$0x73625140]
  %v1606 = vld.sshfl [vmem:[#allocation1 + $0x20] sm:$0xff pattern:$0x73625140]
  %v1607 = vld.sshfl [vmem:[#allocation1 + $0x28] sm:$0xff pattern:$0x73625140]
  %v1608 = vld.sshfl [vmem:[#allocation1 + $0x30] sm:$0xff pattern:$0x73625140]
  %v1609 = vld.sshfl [vmem:[#allocation1 + $0x38] sm:$0xff pattern:$0x73625140]
  %1611 = vst [vmem:[#allocation1] ss:$4 sm:$0xff] %v41
  %1613 = vst [vmem:[%s1588] ss:$4 sm:$0xff] %v42
  %v1614 = vld.sshfl [vmem:[#allocation1] sm:$0xff pattern:$0x73625140]
  %v1615 = vld.sshfl [vmem:[#allocation1 + $0x8] sm:$0xff pattern:$0x73625140]
  %v1616 = vld.sshfl [vmem:[#allocation1 + $0x10] sm:$0xff pattern:$0x73625140]
  %v1617 = vld.sshfl [vmem:[#allocation1 + $0x18] sm:$0xff pattern:$0x73625140]
  %v1618 = vld.sshfl [vmem:[#allocation1 + $0x20] sm:$0xff pattern:$0x73625140]
  %v1619 = vld.sshfl [vmem:[#allocation1 + $0x28] sm:$0xff pattern:$0x73625140]
  %v1620 = vld.sshfl [vmem:[#allocation1 + $0x30] sm:$0xff pattern:$0x73625140]
  %v1621 = vld.sshfl [vmem:[#allocation1 + $0x38] sm:$0xff pattern:$0x73625140]
  %1623 = vst [vmem:[#allocation1] ss:$4 sm:$0xff] %v43
  %1625 = vst [vmem:[%s1588] ss:$4 sm:$0xff] %v44
  %v1626 = vld.sshfl [vmem:[#allocation1] sm:$0xff pattern:$0x73625140]
  %v1627 = vld.sshfl [vmem:[#allocation1 + $0x8] sm:$0xff pattern:$0x73625140]
  %v1628 = vld.sshfl [vmem:[#allocation1 + $0x10] sm:$0xff pattern:$0x73625140]
  %v1629 = vld.sshfl [vmem:[#allocation1 + $0x18] sm:$0xff pattern:$0x73625140]
  %v1630 = vld.sshfl [vmem:[#allocation1 + $0x20] sm:$0xff pattern:$0x73625140]
  %v1631 = vld.sshfl [vmem:[#allocation1 + $0x28] sm:$0xff pattern:$0x73625140]
  %v1632 = vld.sshfl [vmem:[#allocation1 + $0x30] sm:$0xff pattern:$0x73625140]
  %v1633 = vld.sshfl [vmem:[#allocation1 + $0x38] sm:$0xff pattern:$0x73625140]
  %1635 = vst [vmem:[#allocation1] ss:$4 sm:$0xff] %v45
  %1637 = vst [vmem:[%s1588] ss:$4 sm:$0xff] %v46
  %v1638 = vld.sshfl [vmem:[#allocation1] sm:$0xff pattern:$0x73625140]
  %v1639 = vld.sshfl [vmem:[#allocation1 + $0x8] sm:$0xff pattern:$0x73625140]
  %v1640 = vld.sshfl [vmem:[#allocation1 + $0x10] sm:$0xff pattern:$0x73625140]
  %v1641 = vld.sshfl [vmem:[#allocation1 + $0x18] sm:$0xff pattern:$0x73625140]
  %v1642 = vld.sshfl [vmem:[#allocation1 + $0x20] sm:$0xff pattern:$0x73625140]
  %v1643 = vld.sshfl [vmem:[#allocation1 + $0x28] sm:$0xff pattern:$0x73625140]
  %v1644 = vld.sshfl [vmem:[#allocation1 + $0x30] sm:$0xff pattern:$0x73625140]
  %v1645 = vld.sshfl [vmem:[#allocation1 + $0x38] sm:$0xff pattern:$0x73625140]
  %1647 = vst [vmem:[#allocation1] ss:$4 sm:$0xff] %v47
  %1649 = vst [vmem:[%s1588] ss:$4 sm:$0xff] %v48
  %v1650 = vld.sshfl [vmem:[#allocation1] sm:$0xff pattern:$0x73625140]
  %v1651 = vld.sshfl [vmem:[#allocation1 + $0x8] sm:$0xff pattern:$0x73625140]
  %v1652 = vld.sshfl [vmem:[#allocation1 + $0x10] sm:$0xff pattern:$0x73625140]
  %v1653 = vld.sshfl [vmem:[#allocation1 + $0x18] sm:$0xff pattern:$0x73625140]
  %v1654 = vld.sshfl [vmem:[#allocation1 + $0x20] sm:$0xff pattern:$0x73625140]
  %v1655 = vld.sshfl [vmem:[#allocation1 + $0x28] sm:$0xff pattern:$0x73625140]
  %v1656 = vld.sshfl [vmem:[#allocation1 + $0x30] sm:$0xff pattern:$0x73625140]
  %v1657 = vld.sshfl [vmem:[#allocation1 + $0x38] sm:$0xff pattern:$0x73625140]
  %v3242 = vunpack.c.l.b16 %v49
  %v3243 = vunpack.c.h.b16 %v49
  %v3244 = vunpack.c.l.b16 %v50
  %v3245 = vunpack.c.h.b16 %v50
  %v3246 = vunpack.c.l.b16 %v51
  %v3247 = vunpack.c.h.b16 %v51
  %v3248 = vunpack.c.l.b16 %v52
  %v3249 = vunpack.c.h.b16 %v52
  %v3250 = vunpack.c.l.b16 %v53
  %v3251 = vunpack.c.h.b16 %v53
  %v3252 = vunpack.c.l.b16 %v54
  %v3253 = vunpack.c.h.b16 %v54
  %v3254 = vunpack.c.l.b16 %v55
  %v3255 = vunpack.c.h.b16 %v55
  %v3256 = vunpack.c.l.b16 %v56
  %v3257 = vunpack.c.h.b16 %v56
  %v3258 = vunpack.c.l.b16 %v57
  %v3259 = vunpack.c.h.b16 %v57
  %v3260 = vunpack.c.l.b16 %v58
  %v3261 = vunpack.c.h.b16 %v58
  %v3262 = vunpack.c.l.b16 %v59
  %v3263 = vunpack.c.h.b16 %v59
  %v3264 = vunpack.c.l.b16 %v60
  %v3265 = vunpack.c.h.b16 %v60
  %v3266 = vunpack.c.l.b16 %v61
  %v3267 = vunpack.c.h.b16 %v61
  %v3268 = vunpack.c.l.b16 %v62
  %v3269 = vunpack.c.h.b16 %v62
  %v3270 = vunpack.c.l.b16 %v63
  %v3271 = vunpack.c.h.b16 %v63
  %v3272 = vunpack.c.l.b16 %v64
  %v3273 = vunpack.c.h.b16 %v64
  %v3274 = vunpack.c.l.b16 %v65
  %v3275 = vunpack.c.h.b16 %v65
  %v3276 = vunpack.c.l.b16 %v66
  %v3277 = vunpack.c.h.b16 %v66
  %v3278 = vunpack.c.l.b16 %v67
  %v3279 = vunpack.c.h.b16 %v67
  %v3280 = vunpack.c.l.b16 %v68
  %v3281 = vunpack.c.h.b16 %v68
  %v3282 = vunpack.c.l.b16 %v69
  %v3283 = vunpack.c.h.b16 %v69
  %v3284 = vunpack.c.l.b16 %v70
  %v3285 = vunpack.c.h.b16 %v70
  %v3286 = vunpack.c.l.b16 %v71
  %v3287 = vunpack.c.h.b16 %v71
  %v3288 = vunpack.c.l.b16 %v72
  %v3289 = vunpack.c.h.b16 %v72
  %v3290 = vunpack.c.l.b16 %v73
  %v3291 = vunpack.c.h.b16 %v73
  %v3292 = vunpack.c.l.b16 %v74
  %v3293 = vunpack.c.h.b16 %v74
  %v3294 = vunpack.c.l.b16 %v75
  %v3295 = vunpack.c.h.b16 %v75
  %v3296 = vunpack.c.l.b16 %v76
  %v3297 = vunpack.c.h.b16 %v76
  %v3298 = vunpack.c.l.b16 %v77
  %v3299 = vunpack.c.h.b16 %v77
  %v3300 = vunpack.c.l.b16 %v78
  %v3301 = vunpack.c.h.b16 %v78
  %v3302 = vunpack.c.l.b16 %v79
  %v3303 = vunpack.c.h.b16 %v79
  %v3304 = vunpack.c.l.b16 %v80
  %v3305 = vunpack.c.h.b16 %v80
  %v3306 = vunpack.c.l.b16 %v81
  %v3307 = vunpack.c.h.b16 %v81
  %v3308 = vunpack.c.l.b16 %v82
  %v3309 = vunpack.c.h.b16 %v82
  %v3310 = vunpack.c.l.b16 %v83
  %v3311 = vunpack.c.h.b16 %v83
  %v3312 = vunpack.c.l.b16 %v84
  %v3313 = vunpack.c.h.b16 %v84
  %v3314 = vunpack.c.l.b16 %v85
  %v3315 = vunpack.c.h.b16 %v85
  %v3316 = vunpack.c.l.b16 %v86
  %v3317 = vunpack.c.h.b16 %v86
  %v3318 = vunpack.c.l.b16 %v87
  %v3319 = vunpack.c.h.b16 %v87
  %v3320 = vunpack.c.l.b16 %v88
  %v3321 = vunpack.c.h.b16 %v88
  %v3322 = vunpack.c.l.b16 %v89
  %v3323 = vunpack.c.h.b16 %v89
  %v3324 = vunpack.c.l.b16 %v90
  %v3325 = vunpack.c.h.b16 %v90
  %v3326 = vunpack.c.l.b16 %v91
  %v3327 = vunpack.c.h.b16 %v91
  %v3328 = vunpack.c.l.b16 %v92
  %v3329 = vunpack.c.h.b16 %v92
  %v3330 = vunpack.c.l.b16 %v93
  %v3331 = vunpack.c.h.b16 %v93
  %v3332 = vunpack.c.l.b16 %v94
  %v3333 = vunpack.c.h.b16 %v94
  %v3334 = vunpack.c.l.b16 %v95
  %v3335 = vunpack.c.h.b16 %v95
  %v3336 = vunpack.c.l.b16 %v96
  %v3337 = vunpack.c.h.b16 %v96
  %v3338 = vunpack.c.l.b16 %v97
  %v3339 = vunpack.c.h.b16 %v97
  %v3340 = vunpack.c.l.b16 %v98
  %v3341 = vunpack.c.h.b16 %v98
  %v3342 = vunpack.c.l.b16 %v99
  %v3343 = vunpack.c.h.b16 %v99
  %v3344 = vunpack.c.l.b16 %v100
  %v3345 = vunpack.c.h.b16 %v100
  %v3346 = vunpack.c.l.b16 %v101
  %v3347 = vunpack.c.h.b16 %v101
  %v3348 = vunpack.c.l.b16 %v102
  %v3349 = vunpack.c.h.b16 %v102
  %v3350 = vunpack.c.l.b16 %v103
  %v3351 = vunpack.c.h.b16 %v103
  %v3352 = vunpack.c.l.b16 %v104
  %v3353 = vunpack.c.h.b16 %v104
  %v3354 = vunpack.c.l.b16 %v105
  %v3355 = vunpack.c.h.b16 %v105
  %v3356 = vunpack.c.l.b16 %v106
  %v3357 = vunpack.c.h.b16 %v106
  %v3358 = vunpack.c.l.b16 %v107
  %v3359 = vunpack.c.h.b16 %v107
  %v3360 = vunpack.c.l.b16 %v108
  %v3361 = vunpack.c.h.b16 %v108
  %v3362 = vunpack.c.l.b16 %v109
  %v3363 = vunpack.c.h.b16 %v109
  %v3364 = vunpack.c.l.b16 %v110
  %v3365 = vunpack.c.h.b16 %v110
  %v3366 = vunpack.c.l.b16 %v111
  %v3367 = vunpack.c.h.b16 %v111
  %v3368 = vunpack.c.l.b16 %v112
  %v3369 = vunpack.c.h.b16 %v112
  %v3370 = vunpack.c.l.b16 %v113
  %v3371 = vunpack.c.h.b16 %v113
  %v3372 = vunpack.c.l.b16 %v114
  %v3373 = vunpack.c.h.b16 %v114
  %v3374 = vunpack.c.l.b16 %v115
  %v3375 = vunpack.c.h.b16 %v115
  %v3376 = vunpack.c.l.b16 %v116
  %v3377 = vunpack.c.h.b16 %v116
  %v3378 = vunpack.c.l.b16 %v117
  %v3379 = vunpack.c.h.b16 %v117
  %v3380 = vunpack.c.l.b16 %v118
  %v3381 = vunpack.c.h.b16 %v118
  %v3382 = vunpack.c.l.b16 %v119
  %v3383 = vunpack.c.h.b16 %v119
  %v3384 = vunpack.c.l.b16 %v120
  %v3385 = vunpack.c.h.b16 %v120
  %v3386 = vunpack.c.l.b16 %v121
  %v3387 = vunpack.c.h.b16 %v121
  %v3388 = vunpack.c.l.b16 %v122
  %v3389 = vunpack.c.h.b16 %v122
  %v3390 = vunpack.c.l.b16 %v123
  %v3391 = vunpack.c.h.b16 %v123
  %v3392 = vunpack.c.l.b16 %v124
  %v3393 = vunpack.c.h.b16 %v124
  %v3394 = vunpack.c.l.b16 %v125
  %v3395 = vunpack.c.h.b16 %v125
  %v3396 = vunpack.c.l.b16 %v126
  %v3397 = vunpack.c.h.b16 %v126
  %v3398 = vunpack.c.l.b16 %v127
  %v3399 = vunpack.c.h.b16 %v127
  %v3400 = vunpack.c.l.b16 %v128
  %v3401 = vunpack.c.h.b16 %v128
  %v3402 = vunpack.c.l.b16 %v129
  %v3403 = vunpack.c.h.b16 %v129
  %v3404 = vunpack.c.l.b16 %v130
  %v3405 = vunpack.c.h.b16 %v130
  %v3406 = vunpack.c.l.b16 %v131
  %v3407 = vunpack.c.h.b16 %v131
  %v3408 = vunpack.c.l.b16 %v132
  %v3409 = vunpack.c.h.b16 %v132
  %v3410 = vunpack.c.l.b16 %v133
  %v3411 = vunpack.c.h.b16 %v133
  %v3412 = vunpack.c.l.b16 %v134
  %v3413 = vunpack.c.h.b16 %v134
  %v3414 = vunpack.c.l.b16 %v135
  %v3415 = vunpack.c.h.b16 %v135
  %v3416 = vunpack.c.l.b16 %v136
  %v3417 = vunpack.c.h.b16 %v136
  %v3418 = vunpack.c.l.b16 %v137
  %v3419 = vunpack.c.h.b16 %v137
  %v3420 = vunpack.c.l.b16 %v138
  %v3421 = vunpack.c.h.b16 %v138
  %v3422 = vunpack.c.l.b16 %v139
  %v3423 = vunpack.c.h.b16 %v139
  %v3424 = vunpack.c.l.b16 %v140
  %v3425 = vunpack.c.h.b16 %v140
  %v3426 = vunpack.c.l.b16 %v141
  %v3427 = vunpack.c.h.b16 %v141
  %v3428 = vunpack.c.l.b16 %v142
  %v3429 = vunpack.c.h.b16 %v142
  %v3430 = vunpack.c.l.b16 %v143
  %v3431 = vunpack.c.h.b16 %v143
  %v3432 = vunpack.c.l.b16 %v144
  %v3433 = vunpack.c.h.b16 %v144
  %v3434 = vunpack.c.l.b16 %v145
  %v3435 = vunpack.c.h.b16 %v145
  %v3436 = vunpack.c.l.b16 %v146
  %v3437 = vunpack.c.h.b16 %v146
  %v3438 = vunpack.c.l.b16 %v147
  %v3439 = vunpack.c.h.b16 %v147
  %v3440 = vunpack.c.l.b16 %v148
  %v3441 = vunpack.c.h.b16 %v148
  %v3442 = vunpack.c.l.b16 %v149
  %v3443 = vunpack.c.h.b16 %v149
  %v3444 = vunpack.c.l.b16 %v150
  %v3445 = vunpack.c.h.b16 %v150
  %v3446 = vunpack.c.l.b16 %v151
  %v3447 = vunpack.c.h.b16 %v151
  %v3448 = vunpack.c.l.b16 %v152
  %v3449 = vunpack.c.h.b16 %v152
  %v3450 = vunpack.c.l.b16 %v153
  %v3451 = vunpack.c.h.b16 %v153
  %v3452 = vunpack.c.l.b16 %v154
  %v3453 = vunpack.c.h.b16 %v154
  %v3454 = vunpack.c.l.b16 %v155
  %v3455 = vunpack.c.h.b16 %v155
  %v3456 = vunpack.c.l.b16 %v156
  %v3457 = vunpack.c.h.b16 %v156
  %v3458 = vunpack.c.l.b16 %v157
  %v3459 = vunpack.c.h.b16 %v157
  %v3460 = vunpack.c.l.b16 %v158
  %v3461 = vunpack.c.h.b16 %v158
  %v3462 = vunpack.c.l.b16 %v159
  %v3463 = vunpack.c.h.b16 %v159
  %v3464 = vunpack.c.l.b16 %v160
  %v3465 = vunpack.c.h.b16 %v160
  %v3466 = vunpack.c.l.b16 %v161
  %v3467 = vunpack.c.h.b16 %v161
  %v3468 = vunpack.c.l.b16 %v162
  %v3469 = vunpack.c.h.b16 %v162
  %v3470 = vunpack.c.l.b16 %v163
  %v3471 = vunpack.c.h.b16 %v163
  %v3472 = vunpack.c.l.b16 %v164
  %v3473 = vunpack.c.h.b16 %v164
  %v3474 = vunpack.c.l.b16 %v165
  %v3475 = vunpack.c.h.b16 %v165
  %v3476 = vunpack.c.l.b16 %v166
  %v3477 = vunpack.c.h.b16 %v166
  %v3478 = vunpack.c.l.b16 %v167
  %v3479 = vunpack.c.h.b16 %v167
  %v3480 = vunpack.c.l.b16 %v168
  %v3481 = vunpack.c.h.b16 %v168
  %v3482 = vunpack.c.l.b16 %v169
  %v3483 = vunpack.c.h.b16 %v169
  %v3484 = vunpack.c.l.b16 %v170
  %v3485 = vunpack.c.h.b16 %v170
  %v3486 = vunpack.c.l.b16 %v171
  %v3487 = vunpack.c.h.b16 %v171
  %v3488 = vunpack.c.l.b16 %v172
  %v3489 = vunpack.c.h.b16 %v172
  %v3490 = vunpack.c.l.b16 %v173
  %v3491 = vunpack.c.h.b16 %v173
  %v3492 = vunpack.c.l.b16 %v174
  %v3493 = vunpack.c.h.b16 %v174
  %v3494 = vunpack.c.l.b16 %v175
  %v3495 = vunpack.c.h.b16 %v175
  %v3496 = vunpack.c.l.b16 %v176
  %v3497 = vunpack.c.h.b16 %v176
  %v3498 = vunpack.c.l.b16 %v177
  %v3499 = vunpack.c.h.b16 %v177
  %v3500 = vunpack.c.l.b16 %v178
  %v3501 = vunpack.c.h.b16 %v178
  %v3502 = vunpack.c.l.b16 %v179
  %v3503 = vunpack.c.h.b16 %v179
  %v3504 = vunpack.c.l.b16 %v180
  %v3505 = vunpack.c.h.b16 %v180
  %v3506 = vunpack.c.l.b16 %v181
  %v3507 = vunpack.c.h.b16 %v181
  %v3508 = vunpack.c.l.b16 %v182
  %v3509 = vunpack.c.h.b16 %v182
  %v3510 = vunpack.c.l.b16 %v183
  %v3511 = vunpack.c.h.b16 %v183
  %v3512 = vunpack.c.l.b16 %v184
  %v3513 = vunpack.c.h.b16 %v184
  %v3514 = vunpack.c.l.b16 %v185
  %v3515 = vunpack.c.h.b16 %v185
  %v3516 = vunpack.c.l.b16 %v186
  %v3517 = vunpack.c.h.b16 %v186
  %v3518 = vunpack.c.l.b16 %v187
  %v3519 = vunpack.c.h.b16 %v187
  %v3520 = vunpack.c.l.b16 %v188
  %v3521 = vunpack.c.h.b16 %v188
  %v3522 = vunpack.c.l.b16 %v189
  %v3523 = vunpack.c.h.b16 %v189
  %v3524 = vunpack.c.l.b16 %v190
  %v3525 = vunpack.c.h.b16 %v190
  %v3526 = vunpack.c.l.b16 %v191
  %v3527 = vunpack.c.h.b16 %v191
  %v3528 = vunpack.c.l.b16 %v192
  %v3529 = vunpack.c.h.b16 %v192
  %v3530 = vunpack.c.l.b16 %v193
  %v3531 = vunpack.c.h.b16 %v193
  %v3532 = vunpack.c.l.b16 %v194
  %v3533 = vunpack.c.h.b16 %v194
  %v3534 = vunpack.c.l.b16 %v195
  %v3535 = vunpack.c.h.b16 %v195
  %v3536 = vunpack.c.l.b16 %v196
  %v3537 = vunpack.c.h.b16 %v196
  %v3538 = vunpack.c.l.b16 %v197
  %v3539 = vunpack.c.h.b16 %v197
  %v3540 = vunpack.c.l.b16 %v198
  %v3541 = vunpack.c.h.b16 %v198
  %v3542 = vunpack.c.l.b16 %v199
  %v3543 = vunpack.c.h.b16 %v199
  %v3544 = vunpack.c.l.b16 %v200
  %v3545 = vunpack.c.h.b16 %v200
  %v3546 = vunpack.c.l.b16 %v201
  %v3547 = vunpack.c.h.b16 %v201
  %v3548 = vunpack.c.l.b16 %v202
  %v3549 = vunpack.c.h.b16 %v202
  %v3550 = vunpack.c.l.b16 %v203
  %v3551 = vunpack.c.h.b16 %v203
  %v3552 = vunpack.c.l.b16 %v204
  %v3553 = vunpack.c.h.b16 %v204
  %v3554 = vunpack.c.l.b16 %v205
  %v3555 = vunpack.c.h.b16 %v205
  %v3556 = vunpack.c.l.b16 %v206
  %v3557 = vunpack.c.h.b16 %v206
  %v3558 = vunpack.c.l.b16 %v207
  %v3559 = vunpack.c.h.b16 %v207
  %v3560 = vunpack.c.l.b16 %v208
  %v3561 = vunpack.c.h.b16 %v208
  %v3562 = vunpack.c.l.b16 %v209
  %v3563 = vunpack.c.h.b16 %v209
  %v3564 = vunpack.c.l.b16 %v210
  %v3565 = vunpack.c.h.b16 %v210
  %v3566 = vunpack.c.l.b16 %v211
  %v3567 = vunpack.c.h.b16 %v211
  %v3568 = vunpack.c.l.b16 %v212
  %v3569 = vunpack.c.h.b16 %v212
  %v3570 = vunpack.c.l.b16 %v213
  %v3571 = vunpack.c.h.b16 %v213
  %v3572 = vunpack.c.l.b16 %v214
  %v3573 = vunpack.c.h.b16 %v214
  %v3574 = vunpack.c.l.b16 %v215
  %v3575 = vunpack.c.h.b16 %v215
  %v3576 = vunpack.c.l.b16 %v216
  %v3577 = vunpack.c.h.b16 %v216
  %v3578 = vunpack.c.l.b16 %v217
  %v3579 = vunpack.c.h.b16 %v217
  %v3580 = vunpack.c.l.b16 %v218
  %v3581 = vunpack.c.h.b16 %v218
  %v3582 = vunpack.c.l.b16 %v219
  %v3583 = vunpack.c.h.b16 %v219
  %v3584 = vunpack.c.l.b16 %v220
  %v3585 = vunpack.c.h.b16 %v220
  %v3586 = vunpack.c.l.b16 %v221
  %v3587 = vunpack.c.h.b16 %v221
  %v3588 = vunpack.c.l.b16 %v222
  %v3589 = vunpack.c.h.b16 %v222
  %v3590 = vunpack.c.l.b16 %v223
  %v3591 = vunpack.c.h.b16 %v223
  %v3592 = vunpack.c.l.b16 %v224
  %v3593 = vunpack.c.h.b16 %v224
  %v3594 = vunpack.c.l.b16 %v225
  %v3595 = vunpack.c.h.b16 %v225
  %v3596 = vunpack.c.l.b16 %v226
  %v3597 = vunpack.c.h.b16 %v226
  %v3598 = vunpack.c.l.b16 %v227
  %v3599 = vunpack.c.h.b16 %v227
  %v3600 = vunpack.c.l.b16 %v228
  %v3601 = vunpack.c.h.b16 %v228
  %v3602 = vunpack.c.l.b16 %v229
  %v3603 = vunpack.c.h.b16 %v229
  %v3604 = vunpack.c.l.b16 %v230
  %v3605 = vunpack.c.h.b16 %v230
  %v3606 = vunpack.c.l.b16 %v231
  %v3607 = vunpack.c.h.b16 %v231
  %v3608 = vunpack.c.l.b16 %v232
  %v3609 = vunpack.c.h.b16 %v232
  %v3610 = vunpack.c.l.b16 %v233
  %v3611 = vunpack.c.h.b16 %v233
  %v3612 = vunpack.c.l.b16 %v234
  %v3613 = vunpack.c.h.b16 %v234
  %v3614 = vunpack.c.l.b16 %v235
  %v3615 = vunpack.c.h.b16 %v235
  %v3616 = vunpack.c.l.b16 %v236
  %v3617 = vunpack.c.h.b16 %v236
  %v3618 = vunpack.c.l.b16 %v237
  %v3619 = vunpack.c.h.b16 %v237
  %v3620 = vunpack.c.l.b16 %v238
  %v3621 = vunpack.c.h.b16 %v238
  %v3622 = vunpack.c.l.b16 %v239
  %v3623 = vunpack.c.h.b16 %v239
  %v3624 = vunpack.c.l.b16 %v240
  %v3625 = vunpack.c.h.b16 %v240
  %v3626 = vunpack.c.l.b16 %v241
  %v3627 = vunpack.c.h.b16 %v241
  %v3628 = vunpack.c.l.b16 %v242
  %v3629 = vunpack.c.h.b16 %v242
  %v3630 = vunpack.c.l.b16 %v243
  %v3631 = vunpack.c.h.b16 %v243
  %v3632 = vunpack.c.l.b16 %v244
  %v3633 = vunpack.c.h.b16 %v244
  %v3634 = vunpack.c.l.b16 %v245
  %v3635 = vunpack.c.h.b16 %v245
  %v3636 = vunpack.c.l.b16 %v246
  %v3637 = vunpack.c.h.b16 %v246
  %v3638 = vunpack.c.l.b16 %v247
  %v3639 = vunpack.c.h.b16 %v247
  %v3640 = vunpack.c.l.b16 %v248
  %v3641 = vunpack.c.h.b16 %v248
  %v3642 = vunpack.c.l.b16 %v249
  %v3643 = vunpack.c.h.b16 %v249
  %v3644 = vunpack.c.l.b16 %v250
  %v3645 = vunpack.c.h.b16 %v250
  %v3646 = vunpack.c.l.b16 %v251
  %v3647 = vunpack.c.h.b16 %v251
  %v3648 = vunpack.c.l.b16 %v252
  %v3649 = vunpack.c.h.b16 %v252
  %v3650 = vunpack.c.l.b16 %v253
  %v3651 = vunpack.c.h.b16 %v253
  %v3652 = vunpack.c.l.b16 %v254
  %v3653 = vunpack.c.h.b16 %v254
  %v3654 = vunpack.c.l.b16 %v255
  %v3655 = vunpack.c.h.b16 %v255
  %v3656 = vunpack.c.l.b16 %v256
  %v3657 = vunpack.c.h.b16 %v256
  %v3658 = vunpack.c.l.b16 %v257
  %v3659 = vunpack.c.h.b16 %v257
  %v3660 = vunpack.c.l.b16 %v258
  %v3661 = vunpack.c.h.b16 %v258
  %v3662 = vunpack.c.l.b16 %v259
  %v3663 = vunpack.c.h.b16 %v259
  %v3664 = vunpack.c.l.b16 %v260
  %v3665 = vunpack.c.h.b16 %v260
  %v3666 = vunpack.c.l.b16 %v261
  %v3667 = vunpack.c.h.b16 %v261
  %v3668 = vunpack.c.l.b16 %v262
  %v3669 = vunpack.c.h.b16 %v262
  %v3670 = vunpack.c.l.b16 %v263
  %v3671 = vunpack.c.h.b16 %v263
  %v3672 = vunpack.c.l.b16 %v264
  %v3673 = vunpack.c.h.b16 %v264
  %v3674 = vunpack.c.l.b16 %v265
  %v3675 = vunpack.c.h.b16 %v265
  %v3676 = vunpack.c.l.b16 %v266
  %v3677 = vunpack.c.h.b16 %v266
  %v3678 = vunpack.c.l.b16 %v267
  %v3679 = vunpack.c.h.b16 %v267
  %v3680 = vunpack.c.l.b16 %v268
  %v3681 = vunpack.c.h.b16 %v268
  %v3682 = vunpack.c.l.b16 %v269
  %v3683 = vunpack.c.h.b16 %v269
  %v3684 = vunpack.c.l.b16 %v270
  %v3685 = vunpack.c.h.b16 %v270
  %v3686 = vunpack.c.l.b16 %v271
  %v3687 = vunpack.c.h.b16 %v271
  %v3688 = vunpack.c.l.b16 %v272
  %v3689 = vunpack.c.h.b16 %v272
  %v3690 = vunpack.c.l.b16 %v273
  %v3691 = vunpack.c.h.b16 %v273
  %v3692 = vunpack.c.l.b16 %v274
  %v3693 = vunpack.c.h.b16 %v274
  %v3694 = vunpack.c.l.b16 %v275
  %v3695 = vunpack.c.h.b16 %v275
  %v3696 = vunpack.c.l.b16 %v276
  %v3697 = vunpack.c.h.b16 %v276
  %v3698 = vunpack.c.l.b16 %v277
  %v3699 = vunpack.c.h.b16 %v277
  %v3700 = vunpack.c.l.b16 %v278
  %v3701 = vunpack.c.h.b16 %v278
  %v3702 = vunpack.c.l.b16 %v279
  %v3703 = vunpack.c.h.b16 %v279
  %v3704 = vunpack.c.l.b16 %v280
  %v3705 = vunpack.c.h.b16 %v280
  %v3706 = vunpack.c.l.b16 %v281
  %v3707 = vunpack.c.h.b16 %v281
  %v3708 = vunpack.c.l.b16 %v282
  %v3709 = vunpack.c.h.b16 %v282
  %v3710 = vunpack.c.l.b16 %v283
  %v3711 = vunpack.c.h.b16 %v283
  %v3712 = vunpack.c.l.b16 %v284
  %v3713 = vunpack.c.h.b16 %v284
  %v3714 = vunpack.c.l.b16 %v285
  %v3715 = vunpack.c.h.b16 %v285
  %v3716 = vunpack.c.l.b16 %v286
  %v3717 = vunpack.c.h.b16 %v286
  %v3718 = vunpack.c.l.b16 %v287
  %v3719 = vunpack.c.h.b16 %v287
  %v3720 = vunpack.c.l.b16 %v288
  %v3721 = vunpack.c.h.b16 %v288
  %v3722 = vunpack.c.l.b16 %v289
  %v3723 = vunpack.c.h.b16 %v289
  %v3724 = vunpack.c.l.b16 %v290
  %v3725 = vunpack.c.h.b16 %v290
  %v3726 = vunpack.c.l.b16 %v291
  %v3727 = vunpack.c.h.b16 %v291
  %v3728 = vunpack.c.l.b16 %v292
  %v3729 = vunpack.c.h.b16 %v292
  %v3730 = vunpack.c.l.b16 %v293
  %v3731 = vunpack.c.h.b16 %v293
  %v3732 = vunpack.c.l.b16 %v294
  %v3733 = vunpack.c.h.b16 %v294
  %v3734 = vunpack.c.l.b16 %v295
  %v3735 = vunpack.c.h.b16 %v295
  %v3736 = vunpack.c.l.b16 %v296
  %v3737 = vunpack.c.h.b16 %v296
  %v3738 = vunpack.c.l.b16 %v297
  %v3739 = vunpack.c.h.b16 %v297
  %v3740 = vunpack.c.l.b16 %v298
  %v3741 = vunpack.c.h.b16 %v298
  %v3742 = vunpack.c.l.b16 %v299
  %v3743 = vunpack.c.h.b16 %v299
  %v3744 = vunpack.c.l.b16 %v300
  %v3745 = vunpack.c.h.b16 %v300
  %v3746 = vunpack.c.l.b16 %v301
  %v3747 = vunpack.c.h.b16 %v301
  %v3748 = vunpack.c.l.b16 %v302
  %v3749 = vunpack.c.h.b16 %v302
  %v3750 = vunpack.c.l.b16 %v303
  %v3751 = vunpack.c.h.b16 %v303
  %v3752 = vunpack.c.l.b16 %v304
  %v3753 = vunpack.c.h.b16 %v304
  %v3754 = vunpack.c.l.b16 %v305
  %v3755 = vunpack.c.h.b16 %v305
  %v3756 = vunpack.c.l.b16 %v306
  %v3757 = vunpack.c.h.b16 %v306
  %v3758 = vunpack.c.l.b16 %v307
  %v3759 = vunpack.c.h.b16 %v307
  %v3760 = vunpack.c.l.b16 %v308
  %v3761 = vunpack.c.h.b16 %v308
  %v3762 = vunpack.c.l.b16 %v309
  %v3763 = vunpack.c.h.b16 %v309
  %v3764 = vunpack.c.l.b16 %v310
  %v3765 = vunpack.c.h.b16 %v310
  %v3766 = vunpack.c.l.b16 %v311
  %v3767 = vunpack.c.h.b16 %v311
  %v3768 = vunpack.c.l.b16 %v312
  %v3769 = vunpack.c.h.b16 %v312
  %v3770 = vunpack.c.l.b16 %v313
  %v3771 = vunpack.c.h.b16 %v313
  %v3772 = vunpack.c.l.b16 %v314
  %v3773 = vunpack.c.h.b16 %v314
  %v3774 = vunpack.c.l.b16 %v315
  %v3775 = vunpack.c.h.b16 %v315
  %v3776 = vunpack.c.l.b16 %v316
  %v3777 = vunpack.c.h.b16 %v316
  %v3778 = vunpack.c.l.b16 %v317
  %v3779 = vunpack.c.h.b16 %v317
  %v3780 = vunpack.c.l.b16 %v318
  %v3781 = vunpack.c.h.b16 %v318
  %v3782 = vunpack.c.l.b16 %v319
  %v3783 = vunpack.c.h.b16 %v319
  %v3784 = vunpack.c.l.b16 %v320
  %v3785 = vunpack.c.h.b16 %v320
  %v3786 = vunpack.c.l.b16 %v321
  %v3787 = vunpack.c.h.b16 %v321
  %v3788 = vunpack.c.l.b16 %v322
  %v3789 = vunpack.c.h.b16 %v322
  %v3790 = vunpack.c.l.b16 %v323
  %v3791 = vunpack.c.h.b16 %v323
  %v3792 = vunpack.c.l.b16 %v324
  %v3793 = vunpack.c.h.b16 %v324
  %v3794 = vunpack.c.l.b16 %v325
  %v3795 = vunpack.c.h.b16 %v325
  %v3796 = vunpack.c.l.b16 %v326
  %v3797 = vunpack.c.h.b16 %v326
  %v3798 = vunpack.c.l.b16 %v327
  %v3799 = vunpack.c.h.b16 %v327
  %v3800 = vunpack.c.l.b16 %v328
  %v3801 = vunpack.c.h.b16 %v328
  %v3802 = vunpack.c.l.b16 %v329
  %v3803 = vunpack.c.h.b16 %v329
  %v3804 = vunpack.c.l.b16 %v330
  %v3805 = vunpack.c.h.b16 %v330
  %v3806 = vunpack.c.l.b16 %v331
  %v3807 = vunpack.c.h.b16 %v331
  %v3808 = vunpack.c.l.b16 %v332
  %v3809 = vunpack.c.h.b16 %v332
  %v3810 = vunpack.c.l.b16 %v333
  %v3811 = vunpack.c.h.b16 %v333
  %v3812 = vunpack.c.l.b16 %v334
  %v3813 = vunpack.c.h.b16 %v334
  %v3814 = vunpack.c.l.b16 %v335
  %v3815 = vunpack.c.h.b16 %v335
  %v3816 = vunpack.c.l.b16 %v336
  %v3817 = vunpack.c.h.b16 %v336
  %v3818 = vunpack.c.l.b16 %v337
  %v3819 = vunpack.c.h.b16 %v337
  %v3820 = vunpack.c.l.b16 %v338
  %v3821 = vunpack.c.h.b16 %v338
  %v3822 = vunpack.c.l.b16 %v339
  %v3823 = vunpack.c.h.b16 %v339
  %v3824 = vunpack.c.l.b16 %v340
  %v3825 = vunpack.c.h.b16 %v340
  %v3826 = vunpack.c.l.b16 %v341
  %v3827 = vunpack.c.h.b16 %v341
  %v3828 = vunpack.c.l.b16 %v342
  %v3829 = vunpack.c.h.b16 %v342
  %v3830 = vunpack.c.l.b16 %v343
  %v3831 = vunpack.c.h.b16 %v343
  %v3832 = vunpack.c.l.b16 %v344
  %v3833 = vunpack.c.h.b16 %v344
  %v3834 = vunpack.c.l.b16 %v345
  %v3835 = vunpack.c.h.b16 %v345
  %v3836 = vunpack.c.l.b16 %v346
  %v3837 = vunpack.c.h.b16 %v346
  %v3838 = vunpack.c.l.b16 %v347
  %v3839 = vunpack.c.h.b16 %v347
  %v3840 = vunpack.c.l.b16 %v348
  %v3841 = vunpack.c.h.b16 %v348
  %v3842 = vunpack.c.l.b16 %v349
  %v3843 = vunpack.c.h.b16 %v349
  %v3844 = vunpack.c.l.b16 %v350
  %v3845 = vunpack.c.h.b16 %v350
  %v3846 = vunpack.c.l.b16 %v351
  %v3847 = vunpack.c.h.b16 %v351
  %v3848 = vunpack.c.l.b16 %v352
  %v3849 = vunpack.c.h.b16 %v352
  %v3850 = vunpack.c.l.b16 %v353
  %v3851 = vunpack.c.h.b16 %v353
  %v3852 = vunpack.c.l.b16 %v354
  %v3853 = vunpack.c.h.b16 %v354
  %v3854 = vunpack.c.l.b16 %v355
  %v3855 = vunpack.c.h.b16 %v355
  %v3856 = vunpack.c.l.b16 %v356
  %v3857 = vunpack.c.h.b16 %v356
  %v3858 = vunpack.c.l.b16 %v357
  %v3859 = vunpack.c.h.b16 %v357
  %v3860 = vunpack.c.l.b16 %v358
  %v3861 = vunpack.c.h.b16 %v358
  %v3862 = vunpack.c.l.b16 %v359
  %v3863 = vunpack.c.h.b16 %v359
  %v3864 = vunpack.c.l.b16 %v360
  %v3865 = vunpack.c.h.b16 %v360
  %v3866 = vunpack.c.l.b16 %v361
  %v3867 = vunpack.c.h.b16 %v361
  %v3868 = vunpack.c.l.b16 %v362
  %v3869 = vunpack.c.h.b16 %v362
  %v3870 = vunpack.c.l.b16 %v363
  %v3871 = vunpack.c.h.b16 %v363
  %v3872 = vunpack.c.l.b16 %v364
  %v3873 = vunpack.c.h.b16 %v364
  %v3874 = vunpack.c.l.b16 %v365
  %v3875 = vunpack.c.h.b16 %v365
  %v3876 = vunpack.c.l.b16 %v366
  %v3877 = vunpack.c.h.b16 %v366
  %v3878 = vunpack.c.l.b16 %v367
  %v3879 = vunpack.c.h.b16 %v367
  %v3880 = vunpack.c.l.b16 %v368
  %v3881 = vunpack.c.h.b16 %v368
  %v3882 = vunpack.c.l.b16 %v369
  %v3883 = vunpack.c.h.b16 %v369
  %v3884 = vunpack.c.l.b16 %v370
  %v3885 = vunpack.c.h.b16 %v370
  %v3886 = vunpack.c.l.b16 %v371
  %v3887 = vunpack.c.h.b16 %v371
  %v3888 = vunpack.c.l.b16 %v372
  %v3889 = vunpack.c.h.b16 %v372
  %v3890 = vunpack.c.l.b16 %v373
  %v3891 = vunpack.c.h.b16 %v373
  %v3892 = vunpack.c.l.b16 %v374
  %v3893 = vunpack.c.h.b16 %v374
  %v3894 = vunpack.c.l.b16 %v375
  %v3895 = vunpack.c.h.b16 %v375
  %v3896 = vunpack.c.l.b16 %v376
  %v3897 = vunpack.c.h.b16 %v376
  %v3898 = vunpack.c.l.b16 %v377
  %v3899 = vunpack.c.h.b16 %v377
  %v3900 = vunpack.c.l.b16 %v378
  %v3901 = vunpack.c.h.b16 %v378
  %v3902 = vunpack.c.l.b16 %v379
  %v3903 = vunpack.c.h.b16 %v379
  %v3904 = vunpack.c.l.b16 %v380
  %v3905 = vunpack.c.h.b16 %v380
  %v3906 = vunpack.c.l.b16 %v381
  %v3907 = vunpack.c.h.b16 %v381
  %v3908 = vunpack.c.l.b16 %v382
  %v3909 = vunpack.c.h.b16 %v382
  %v3910 = vunpack.c.l.b16 %v383
  %v3911 = vunpack.c.h.b16 %v383
  %v3912 = vunpack.c.l.b16 %v384
  %v3913 = vunpack.c.h.b16 %v384
  %v3914 = vunpack.c.l.b16 %v385
  %v3915 = vunpack.c.h.b16 %v385
  %v3916 = vunpack.c.l.b16 %v386
  %v3917 = vunpack.c.h.b16 %v386
  %v3918 = vunpack.c.l.b16 %v387
  %v3919 = vunpack.c.h.b16 %v387
  %v3920 = vunpack.c.l.b16 %v388
  %v3921 = vunpack.c.h.b16 %v388
  %v3922 = vunpack.c.l.b16 %v389
  %v3923 = vunpack.c.h.b16 %v389
  %v3924 = vunpack.c.l.b16 %v390
  %v3925 = vunpack.c.h.b16 %v390
  %v3926 = vunpack.c.l.b16 %v391
  %v3927 = vunpack.c.h.b16 %v391
  %v3928 = vunpack.c.l.b16 %v392
  %v3929 = vunpack.c.h.b16 %v392
  %v3930 = vunpack.c.l.b16 %v393
  %v3931 = vunpack.c.h.b16 %v393
  %v3932 = vunpack.c.l.b16 %v394
  %v3933 = vunpack.c.h.b16 %v394
  %v3934 = vunpack.c.l.b16 %v395
  %v3935 = vunpack.c.h.b16 %v395
  %v3936 = vunpack.c.l.b16 %v396
  %v3937 = vunpack.c.h.b16 %v396
  %v3938 = vunpack.c.l.b16 %v397
  %v3939 = vunpack.c.h.b16 %v397
  %v3940 = vunpack.c.l.b16 %v398
  %v3941 = vunpack.c.h.b16 %v398
  %v3942 = vunpack.c.l.b16 %v399
  %v3943 = vunpack.c.h.b16 %v399
  %v3944 = vunpack.c.l.b16 %v400
  %v3945 = vunpack.c.h.b16 %v400
  %v3946 = vunpack.c.l.b16 %v401
  %v3947 = vunpack.c.h.b16 %v401
  %v3948 = vunpack.c.l.b16 %v402
  %v3949 = vunpack.c.h.b16 %v402
  %v3950 = vunpack.c.l.b16 %v403
  %v3951 = vunpack.c.h.b16 %v403
  %v3952 = vunpack.c.l.b16 %v404
  %v3953 = vunpack.c.h.b16 %v404
  %v3954 = vunpack.c.l.b16 %v405
  %v3955 = vunpack.c.h.b16 %v405
  %v3956 = vunpack.c.l.b16 %v406
  %v3957 = vunpack.c.h.b16 %v406
  %v3958 = vunpack.c.l.b16 %v407
  %v3959 = vunpack.c.h.b16 %v407
  %v3960 = vunpack.c.l.b16 %v408
  %v3961 = vunpack.c.h.b16 %v408
  %v3962 = vunpack.c.l.b16 %v409
  %v3963 = vunpack.c.h.b16 %v409
  %v3964 = vunpack.c.l.b16 %v410
  %v3965 = vunpack.c.h.b16 %v410
  %v3966 = vunpack.c.l.b16 %v411
  %v3967 = vunpack.c.h.b16 %v411
  %v3968 = vunpack.c.l.b16 %v412
  %v3969 = vunpack.c.h.b16 %v412
  %v3970 = vunpack.c.l.b16 %v413
  %v3971 = vunpack.c.h.b16 %v413
  %v3972 = vunpack.c.l.b16 %v414
  %v3973 = vunpack.c.h.b16 %v414
  %v3974 = vunpack.c.l.b16 %v415
  %v3975 = vunpack.c.h.b16 %v415
  %v3976 = vunpack.c.l.b16 %v416
  %v3977 = vunpack.c.h.b16 %v416
  %v3978 = vunpack.c.l.b16 %v417
  %v3979 = vunpack.c.h.b16 %v417
  %v3980 = vunpack.c.l.b16 %v418
  %v3981 = vunpack.c.h.b16 %v418
  %v3982 = vunpack.c.l.b16 %v419
  %v3983 = vunpack.c.h.b16 %v419
  %v3984 = vunpack.c.l.b16 %v420
  %v3985 = vunpack.c.h.b16 %v420
  %v3986 = vunpack.c.l.b16 %v421
  %v3987 = vunpack.c.h.b16 %v421
  %v3988 = vunpack.c.l.b16 %v422
  %v3989 = vunpack.c.h.b16 %v422
  %v3990 = vunpack.c.l.b16 %v423
  %v3991 = vunpack.c.h.b16 %v423
  %v3992 = vunpack.c.l.b16 %v424
  %v3993 = vunpack.c.h.b16 %v424
  %v3994 = vunpack.c.l.b16 %v425
  %v3995 = vunpack.c.h.b16 %v425
  %v3996 = vunpack.c.l.b16 %v426
  %v3997 = vunpack.c.h.b16 %v426
  %v3998 = vunpack.c.l.b16 %v427
  %v3999 = vunpack.c.h.b16 %v427
  %v4000 = vunpack.c.l.b16 %v428
  %v4001 = vunpack.c.h.b16 %v428
  %v4002 = vunpack.c.l.b16 %v429
  %v4003 = vunpack.c.h.b16 %v429
  %v4004 = vunpack.c.l.b16 %v430
  %v4005 = vunpack.c.h.b16 %v430
  %v4006 = vunpack.c.l.b16 %v431
  %v4007 = vunpack.c.h.b16 %v431
  %v4008 = vunpack.c.l.b16 %v432
  %v4009 = vunpack.c.h.b16 %v432
  %v4010 = vunpack.c.l.b16 %v433
  %v4011 = vunpack.c.h.b16 %v433
  %v4012 = vunpack.c.l.b16 %v434
  %v4013 = vunpack.c.h.b16 %v434
  %v4014 = vunpack.c.l.b16 %v435
  %v4015 = vunpack.c.h.b16 %v435
  %v4016 = vunpack.c.l.b16 %v436
  %v4017 = vunpack.c.h.b16 %v436
  %v4018 = vunpack.c.l.b16 %v437
  %v4019 = vunpack.c.h.b16 %v437
  %v4020 = vunpack.c.l.b16 %v438
  %v4021 = vunpack.c.h.b16 %v438
  %v4022 = vunpack.c.l.b16 %v439
  %v4023 = vunpack.c.h.b16 %v439
  %v4024 = vunpack.c.l.b16 %v440
  %v4025 = vunpack.c.h.b16 %v440
  %v4026 = vunpack.c.l.b16 %v441
  %v4027 = vunpack.c.h.b16 %v441
  %v4028 = vunpack.c.l.b16 %v442
  %v4029 = vunpack.c.h.b16 %v442
  %v4030 = vunpack.c.l.b16 %v443
  %v4031 = vunpack.c.h.b16 %v443
  %v4032 = vunpack.c.l.b16 %v444
  %v4033 = vunpack.c.h.b16 %v444
  %v4034 = vunpack.c.l.b16 %v445
  %v4035 = vunpack.c.h.b16 %v445
  %v4036 = vunpack.c.l.b16 %v446
  %v4037 = vunpack.c.h.b16 %v446
  %v4038 = vunpack.c.l.b16 %v447
  %v4039 = vunpack.c.h.b16 %v447
  %v4040 = vunpack.c.l.b16 %v448
  %v4041 = vunpack.c.h.b16 %v448
  %v4042 = vunpack.c.l.b16 %v449
  %v4043 = vunpack.c.h.b16 %v449
  %v4044 = vunpack.c.l.b16 %v450
  %v4045 = vunpack.c.h.b16 %v450
  %v4046 = vunpack.c.l.b16 %v451
  %v4047 = vunpack.c.h.b16 %v451
  %v4048 = vunpack.c.l.b16 %v452
  %v4049 = vunpack.c.h.b16 %v452
  %v4050 = vunpack.c.l.b16 %v453
  %v4051 = vunpack.c.h.b16 %v453
  %v4052 = vunpack.c.l.b16 %v454
  %v4053 = vunpack.c.h.b16 %v454
  %v4054 = vunpack.c.l.b16 %v455
  %v4055 = vunpack.c.h.b16 %v455
  %v4056 = vunpack.c.l.b16 %v456
  %v4057 = vunpack.c.h.b16 %v456
  %v4058 = vunpack.c.l.b16 %v457
  %v4059 = vunpack.c.h.b16 %v457
  %v4060 = vunpack.c.l.b16 %v458
  %v4061 = vunpack.c.h.b16 %v458
  %v4062 = vunpack.c.l.b16 %v459
  %v4063 = vunpack.c.h.b16 %v459
  %v4064 = vunpack.c.l.b16 %v460
  %v4065 = vunpack.c.h.b16 %v460
  %v4066 = vunpack.c.l.b16 %v461
  %v4067 = vunpack.c.h.b16 %v461
  %v4068 = vunpack.c.l.b16 %v462
  %v4069 = vunpack.c.h.b16 %v462
  %v4070 = vunpack.c.l.b16 %v463
  %v4071 = vunpack.c.h.b16 %v463
  %v4072 = vunpack.c.l.b16 %v464
  %v4073 = vunpack.c.h.b16 %v464
  %v4074 = vunpack.c.l.b16 %v465
  %v4075 = vunpack.c.h.b16 %v465
  %v4076 = vunpack.c.l.b16 %v466
  %v4077 = vunpack.c.h.b16 %v466
  %v4078 = vunpack.c.l.b16 %v467
  %v4079 = vunpack.c.h.b16 %v467
  %v4080 = vunpack.c.l.b16 %v468
  %v4081 = vunpack.c.h.b16 %v468
  %v4082 = vunpack.c.l.b16 %v469
  %v4083 = vunpack.c.h.b16 %v469
  %v4084 = vunpack.c.l.b16 %v470
  %v4085 = vunpack.c.h.b16 %v470
  %v4086 = vunpack.c.l.b16 %v471
  %v4087 = vunpack.c.h.b16 %v471
  %v4088 = vunpack.c.l.b16 %v472
  %v4089 = vunpack.c.h.b16 %v472
  %v4090 = vunpack.c.l.b16 %v473
  %v4091 = vunpack.c.h.b16 %v473
  %v4092 = vunpack.c.l.b16 %v474
  %v4093 = vunpack.c.h.b16 %v474
  %v4094 = vunpack.c.l.b16 %v475
  %v4095 = vunpack.c.h.b16 %v475
  %v4096 = vunpack.c.l.b16 %v476
  %v4097 = vunpack.c.h.b16 %v476
  %v4098 = vunpack.c.l.b16 %v477
  %v4099 = vunpack.c.h.b16 %v477
  %v4100 = vunpack.c.l.b16 %v478
  %v4101 = vunpack.c.h.b16 %v478
  %v4102 = vunpack.c.l.b16 %v479
  %v4103 = vunpack.c.h.b16 %v479
  %v4104 = vunpack.c.l.b16 %v480
  %v4105 = vunpack.c.h.b16 %v480
  %v4106 = vunpack.c.l.b16 %v481
  %v4107 = vunpack.c.h.b16 %v481
  %v4108 = vunpack.c.l.b16 %v482
  %v4109 = vunpack.c.h.b16 %v482
  %v4110 = vunpack.c.l.b16 %v483
  %v4111 = vunpack.c.h.b16 %v483
  %v4112 = vunpack.c.l.b16 %v484
  %v4113 = vunpack.c.h.b16 %v484
  %v4114 = vunpack.c.l.b16 %v485
  %v4115 = vunpack.c.h.b16 %v485
  %v4116 = vunpack.c.l.b16 %v486
  %v4117 = vunpack.c.h.b16 %v486
  %v4118 = vunpack.c.l.b16 %v487
  %v4119 = vunpack.c.h.b16 %v487
  %v4120 = vunpack.c.l.b16 %v488
  %v4121 = vunpack.c.h.b16 %v488
  %v4122 = vunpack.c.l.b16 %v489
  %v4123 = vunpack.c.h.b16 %v489
  %v4124 = vunpack.c.l.b16 %v490
  %v4125 = vunpack.c.h.b16 %v490
  %v4126 = vunpack.c.l.b16 %v491
  %v4127 = vunpack.c.h.b16 %v491
  %v4128 = vunpack.c.l.b16 %v492
  %v4129 = vunpack.c.h.b16 %v492
  %v4130 = vunpack.c.l.b16 %v493
  %v4131 = vunpack.c.h.b16 %v493
  %v4132 = vunpack.c.l.b16 %v494
  %v4133 = vunpack.c.h.b16 %v494
  %v4134 = vunpack.c.l.b16 %v495
  %v4135 = vunpack.c.h.b16 %v495
  %v4136 = vunpack.c.l.b16 %v496
  %v4137 = vunpack.c.h.b16 %v496
  %v4138 = vunpack.c.l.b16 %v497
  %v4139 = vunpack.c.h.b16 %v497
  %v4140 = vunpack.c.l.b16 %v498
  %v4141 = vunpack.c.h.b16 %v498
  %v4142 = vunpack.c.l.b16 %v499
  %v4143 = vunpack.c.h.b16 %v499
  %v4144 = vunpack.c.l.b16 %v500
  %v4145 = vunpack.c.h.b16 %v500
  %v4146 = vunpack.c.l.b16 %v501
  %v4147 = vunpack.c.h.b16 %v501
  %v4148 = vunpack.c.l.b16 %v502
  %v4149 = vunpack.c.h.b16 %v502
  %v4150 = vunpack.c.l.b16 %v503
  %v4151 = vunpack.c.h.b16 %v503
  %v4152 = vunpack.c.l.b16 %v504
  %v4153 = vunpack.c.h.b16 %v504
  %v4154 = vunpack.c.l.b16 %v505
  %v4155 = vunpack.c.h.b16 %v505
  %v4156 = vunpack.c.l.b16 %v506
  %v4157 = vunpack.c.h.b16 %v506
  %v4158 = vunpack.c.l.b16 %v507
  %v4159 = vunpack.c.h.b16 %v507
  %v4160 = vunpack.c.l.b16 %v508
  %v4161 = vunpack.c.h.b16 %v508
  %v4162 = vunpack.c.l.b16 %v509
  %v4163 = vunpack.c.h.b16 %v509
  %v4164 = vunpack.c.l.b16 %v510
  %v4165 = vunpack.c.h.b16 %v510
  %v4166 = vunpack.c.l.b16 %v511
  %v4167 = vunpack.c.h.b16 %v511
  %v4168 = vunpack.c.l.b16 %v512
  %v4169 = vunpack.c.h.b16 %v512
  %v4170 = vunpack.c.l.b16 %v513
  %v4171 = vunpack.c.h.b16 %v513
  %v4172 = vunpack.c.l.b16 %v514
  %v4173 = vunpack.c.h.b16 %v514
  %v4174 = vunpack.c.l.b16 %v515
  %v4175 = vunpack.c.h.b16 %v515
  %v4176 = vunpack.c.l.b16 %v516
  %v4177 = vunpack.c.h.b16 %v516
  %v4178 = vunpack.c.l.b16 %v517
  %v4179 = vunpack.c.h.b16 %v517
  %v4180 = vunpack.c.l.b16 %v518
  %v4181 = vunpack.c.h.b16 %v518
  %v4182 = vunpack.c.l.b16 %v519
  %v4183 = vunpack.c.h.b16 %v519
  %v4184 = vunpack.c.l.b16 %v520
  %v4185 = vunpack.c.h.b16 %v520
  %v4186 = vunpack.c.l.b16 %v521
  %v4187 = vunpack.c.h.b16 %v521
  %v4188 = vunpack.c.l.b16 %v522
  %v4189 = vunpack.c.h.b16 %v522
  %v4190 = vunpack.c.l.b16 %v523
  %v4191 = vunpack.c.h.b16 %v523
  %v4192 = vunpack.c.l.b16 %v524
  %v4193 = vunpack.c.h.b16 %v524
  %v4194 = vunpack.c.l.b16 %v525
  %v4195 = vunpack.c.h.b16 %v525
  %v4196 = vunpack.c.l.b16 %v526
  %v4197 = vunpack.c.h.b16 %v526
  %v4198 = vunpack.c.l.b16 %v527
  %v4199 = vunpack.c.h.b16 %v527
  %v4200 = vunpack.c.l.b16 %v528
  %v4201 = vunpack.c.h.b16 %v528
  %v4202 = vunpack.c.l.b16 %v529
  %v4203 = vunpack.c.h.b16 %v529
  %v4204 = vunpack.c.l.b16 %v530
  %v4205 = vunpack.c.h.b16 %v530
  %v4206 = vunpack.c.l.b16 %v531
  %v4207 = vunpack.c.h.b16 %v531
  %v4208 = vunpack.c.l.b16 %v532
  %v4209 = vunpack.c.h.b16 %v532
  %v4210 = vunpack.c.l.b16 %v533
  %v4211 = vunpack.c.h.b16 %v533
  %v4212 = vunpack.c.l.b16 %v534
  %v4213 = vunpack.c.h.b16 %v534
  %v4214 = vunpack.c.l.b16 %v535
  %v4215 = vunpack.c.h.b16 %v535
  %v4216 = vunpack.c.l.b16 %v536
  %v4217 = vunpack.c.h.b16 %v536
  %v4218 = vunpack.c.l.b16 %v537
  %v4219 = vunpack.c.h.b16 %v537
  %v4220 = vunpack.c.l.b16 %v538
  %v4221 = vunpack.c.h.b16 %v538
  %v4222 = vunpack.c.l.b16 %v539
  %v4223 = vunpack.c.h.b16 %v539
  %v4224 = vunpack.c.l.b16 %v540
  %v4225 = vunpack.c.h.b16 %v540
  %v4226 = vunpack.c.l.b16 %v541
  %v4227 = vunpack.c.h.b16 %v541
  %v4228 = vunpack.c.l.b16 %v542
  %v4229 = vunpack.c.h.b16 %v542
  %v4230 = vunpack.c.l.b16 %v543
  %v4231 = vunpack.c.h.b16 %v543
  %v4232 = vunpack.c.l.b16 %v544
  %v4233 = vunpack.c.h.b16 %v544
  %v4234 = vunpack.c.l.b16 %v545
  %v4235 = vunpack.c.h.b16 %v545
  %v4236 = vunpack.c.l.b16 %v546
  %v4237 = vunpack.c.h.b16 %v546
  %v4238 = vunpack.c.l.b16 %v547
  %v4239 = vunpack.c.h.b16 %v547
  %v4240 = vunpack.c.l.b16 %v548
  %v4241 = vunpack.c.h.b16 %v548
  %v4242 = vunpack.c.l.b16 %v549
  %v4243 = vunpack.c.h.b16 %v549
  %v4244 = vunpack.c.l.b16 %v550
  %v4245 = vunpack.c.h.b16 %v550
  %v4246 = vunpack.c.l.b16 %v551
  %v4247 = vunpack.c.h.b16 %v551
  %v4248 = vunpack.c.l.b16 %v552
  %v4249 = vunpack.c.h.b16 %v552
  %v4250 = vunpack.c.l.b16 %v553
  %v4251 = vunpack.c.h.b16 %v553
  %v4252 = vunpack.c.l.b16 %v554
  %v4253 = vunpack.c.h.b16 %v554
  %v4254 = vunpack.c.l.b16 %v555
  %v4255 = vunpack.c.h.b16 %v555
  %v4256 = vunpack.c.l.b16 %v556
  %v4257 = vunpack.c.h.b16 %v556
  %v4258 = vunpack.c.l.b16 %v557
  %v4259 = vunpack.c.h.b16 %v557
  %v4260 = vunpack.c.l.b16 %v558
  %v4261 = vunpack.c.h.b16 %v558
  %v4262 = vunpack.c.l.b16 %v559
  %v4263 = vunpack.c.h.b16 %v559
  %v4264 = vunpack.c.l.b16 %v560
  %v4265 = vunpack.c.h.b16 %v560
  %v4266 = vunpack.c.l.b16 %v561
  %v4267 = vunpack.c.h.b16 %v561
  %v4268 = vunpack.c.l.b16 %v562
  %v4269 = vunpack.c.h.b16 %v562
  %v4270 = vunpack.c.l.b16 %v563
  %v4271 = vunpack.c.h.b16 %v563
  %v4272 = vunpack.c.l.b16 %v564
  %v4273 = vunpack.c.h.b16 %v564
  %v4274 = vunpack.c.l.b16 %v565
  %v4275 = vunpack.c.h.b16 %v565
  %v4276 = vunpack.c.l.b16 %v566
  %v4277 = vunpack.c.h.b16 %v566
  %v4278 = vunpack.c.l.b16 %v567
  %v4279 = vunpack.c.h.b16 %v567
  %v4280 = vunpack.c.l.b16 %v568
  %v4281 = vunpack.c.h.b16 %v568
  %v4282 = vunpack.c.l.b16 %v569
  %v4283 = vunpack.c.h.b16 %v569
  %v4284 = vunpack.c.l.b16 %v570
  %v4285 = vunpack.c.h.b16 %v570
  %v4286 = vunpack.c.l.b16 %v571
  %v4287 = vunpack.c.h.b16 %v571
  %v4288 = vunpack.c.l.b16 %v572
  %v4289 = vunpack.c.h.b16 %v572
  %v4290 = vunpack.c.l.b16 %v573
  %v4291 = vunpack.c.h.b16 %v573
  %v4292 = vunpack.c.l.b16 %v574
  %v4293 = vunpack.c.h.b16 %v574
  %v4294 = vunpack.c.l.b16 %v575
  %v4295 = vunpack.c.h.b16 %v575
  %v4296 = vunpack.c.l.b16 %v576
  %v4297 = vunpack.c.h.b16 %v576
  %v4298 = vunpack.c.l.b16 %v577
  %v4299 = vunpack.c.h.b16 %v577
  %v4300 = vunpack.c.l.b16 %v578
  %v4301 = vunpack.c.h.b16 %v578
  %v4302 = vunpack.c.l.b16 %v579
  %v4303 = vunpack.c.h.b16 %v579
  %v4304 = vunpack.c.l.b16 %v580
  %v4305 = vunpack.c.h.b16 %v580
  %v4306 = vunpack.c.l.b16 %v581
  %v4307 = vunpack.c.h.b16 %v581
  %v4308 = vunpack.c.l.b16 %v582
  %v4309 = vunpack.c.h.b16 %v582
  %v4310 = vunpack.c.l.b16 %v583
  %v4311 = vunpack.c.h.b16 %v583
  %v4312 = vunpack.c.l.b16 %v584
  %v4313 = vunpack.c.h.b16 %v584
  %v4314 = vunpack.c.l.b16 %v585
  %v4315 = vunpack.c.h.b16 %v585
  %v4316 = vunpack.c.l.b16 %v586
  %v4317 = vunpack.c.h.b16 %v586
  %v4318 = vunpack.c.l.b16 %v587
  %v4319 = vunpack.c.h.b16 %v587
  %v4320 = vunpack.c.l.b16 %v588
  %v4321 = vunpack.c.h.b16 %v588
  %v4322 = vunpack.c.l.b16 %v589
  %v4323 = vunpack.c.h.b16 %v589
  %v4324 = vunpack.c.l.b16 %v590
  %v4325 = vunpack.c.h.b16 %v590
  %v4326 = vunpack.c.l.b16 %v591
  %v4327 = vunpack.c.h.b16 %v591
  %v4328 = vunpack.c.l.b16 %v592
  %v4329 = vunpack.c.h.b16 %v592
  %v4330 = vunpack.c.l.b16 %v593
  %v4331 = vunpack.c.h.b16 %v593
  %v4332 = vunpack.c.l.b16 %v594
  %v4333 = vunpack.c.h.b16 %v594
  %v4334 = vunpack.c.l.b16 %v595
  %v4335 = vunpack.c.h.b16 %v595
  %v4336 = vunpack.c.l.b16 %v596
  %v4337 = vunpack.c.h.b16 %v596
  %v4338 = vunpack.c.l.b16 %v597
  %v4339 = vunpack.c.h.b16 %v597
  %v4340 = vunpack.c.l.b16 %v598
  %v4341 = vunpack.c.h.b16 %v598
  %v4342 = vunpack.c.l.b16 %v599
  %v4343 = vunpack.c.h.b16 %v599
  %v4344 = vunpack.c.l.b16 %v600
  %v4345 = vunpack.c.h.b16 %v600
  %v4346 = vunpack.c.l.b16 %v601
  %v4347 = vunpack.c.h.b16 %v601
  %v4348 = vunpack.c.l.b16 %v602
  %v4349 = vunpack.c.h.b16 %v602
  %v4350 = vunpack.c.l.b16 %v603
  %v4351 = vunpack.c.h.b16 %v603
  %v4352 = vunpack.c.l.b16 %v604
  %v4353 = vunpack.c.h.b16 %v604
  %v4354 = vunpack.c.l.b16 %v605
  %v4355 = vunpack.c.h.b16 %v605
  %v4356 = vunpack.c.l.b16 %v606
  %v4357 = vunpack.c.h.b16 %v606
  %v4358 = vunpack.c.l.b16 %v607
  %v4359 = vunpack.c.h.b16 %v607
  %v4360 = vunpack.c.l.b16 %v608
  %v4361 = vunpack.c.h.b16 %v608
  %v4362 = vunpack.c.l.b16 %v609
  %v4363 = vunpack.c.h.b16 %v609
  %v4364 = vunpack.c.l.b16 %v610
  %v4365 = vunpack.c.h.b16 %v610
  %v4366 = vunpack.c.l.b16 %v611
  %v4367 = vunpack.c.h.b16 %v611
  %v4368 = vunpack.c.l.b16 %v612
  %v4369 = vunpack.c.h.b16 %v612
  %v4370 = vunpack.c.l.b16 %v613
  %v4371 = vunpack.c.h.b16 %v613
  %v4372 = vunpack.c.l.b16 %v614
  %v4373 = vunpack.c.h.b16 %v614
  %v4374 = vunpack.c.l.b16 %v615
  %v4375 = vunpack.c.h.b16 %v615
  %v4376 = vunpack.c.l.b16 %v616
  %v4377 = vunpack.c.h.b16 %v616
  %v4378 = vunpack.c.l.b16 %v617
  %v4379 = vunpack.c.h.b16 %v617
  %v4380 = vunpack.c.l.b16 %v618
  %v4381 = vunpack.c.h.b16 %v618
  %v4382 = vunpack.c.l.b16 %v619
  %v4383 = vunpack.c.h.b16 %v619
  %v4384 = vunpack.c.l.b16 %v620
  %v4385 = vunpack.c.h.b16 %v620
  %v4386 = vunpack.c.l.b16 %v621
  %v4387 = vunpack.c.h.b16 %v621
  %v4388 = vunpack.c.l.b16 %v622
  %v4389 = vunpack.c.h.b16 %v622
  %v4390 = vunpack.c.l.b16 %v623
  %v4391 = vunpack.c.h.b16 %v623
  %v4392 = vunpack.c.l.b16 %v624
  %v4393 = vunpack.c.h.b16 %v624
  %v4394 = vunpack.c.l.b16 %v625
  %v4395 = vunpack.c.h.b16 %v625
  %v4396 = vunpack.c.l.b16 %v626
  %v4397 = vunpack.c.h.b16 %v626
  %v4398 = vunpack.c.l.b16 %v627
  %v4399 = vunpack.c.h.b16 %v627
  %v4400 = vunpack.c.l.b16 %v628
  %v4401 = vunpack.c.h.b16 %v628
  %v4402 = vunpack.c.l.b16 %v629
  %v4403 = vunpack.c.h.b16 %v629
  %v4404 = vunpack.c.l.b16 %v630
  %v4405 = vunpack.c.h.b16 %v630
  %v4406 = vunpack.c.l.b16 %v631
  %v4407 = vunpack.c.h.b16 %v631
  %v4408 = vunpack.c.l.b16 %v632
  %v4409 = vunpack.c.h.b16 %v632
  %v4410 = vunpack.c.l.b16 %v633
  %v4411 = vunpack.c.h.b16 %v633
  %v4412 = vunpack.c.l.b16 %v634
  %v4413 = vunpack.c.h.b16 %v634
  %v4414 = vunpack.c.l.b16 %v635
  %v4415 = vunpack.c.h.b16 %v635
  %v4416 = vunpack.c.l.b16 %v636
  %v4417 = vunpack.c.h.b16 %v636
  %v4418 = vunpack.c.l.b16 %v637
  %v4419 = vunpack.c.h.b16 %v637
  %v4420 = vunpack.c.l.b16 %v638
  %v4421 = vunpack.c.h.b16 %v638
  %v4422 = vunpack.c.l.b16 %v639
  %v4423 = vunpack.c.h.b16 %v639
  %v4424 = vunpack.c.l.b16 %v640
  %v4425 = vunpack.c.h.b16 %v640
  %v4426 = vunpack.c.l.b16 %v641
  %v4427 = vunpack.c.h.b16 %v641
  %v4428 = vunpack.c.l.b16 %v642
  %v4429 = vunpack.c.h.b16 %v642
  %v4430 = vunpack.c.l.b16 %v643
  %v4431 = vunpack.c.h.b16 %v643
  %v4432 = vunpack.c.l.b16 %v644
  %v4433 = vunpack.c.h.b16 %v644
  %v4434 = vunpack.c.l.b16 %v645
  %v4435 = vunpack.c.h.b16 %v645
  %v4436 = vunpack.c.l.b16 %v646
  %v4437 = vunpack.c.h.b16 %v646
  %v4438 = vunpack.c.l.b16 %v647
  %v4439 = vunpack.c.h.b16 %v647
  %v4440 = vunpack.c.l.b16 %v648
  %v4441 = vunpack.c.h.b16 %v648
  %v4442 = vunpack.c.l.b16 %v649
  %v4443 = vunpack.c.h.b16 %v649
  %v4444 = vunpack.c.l.b16 %v650
  %v4445 = vunpack.c.h.b16 %v650
  %v4446 = vunpack.c.l.b16 %v651
  %v4447 = vunpack.c.h.b16 %v651
  %v4448 = vunpack.c.l.b16 %v652
  %v4449 = vunpack.c.h.b16 %v652
  %v4450 = vunpack.c.l.b16 %v653
  %v4451 = vunpack.c.h.b16 %v653
  %v4452 = vunpack.c.l.b16 %v654
  %v4453 = vunpack.c.h.b16 %v654
  %v4454 = vunpack.c.l.b16 %v655
  %v4455 = vunpack.c.h.b16 %v655
  %v4456 = vunpack.c.l.b16 %v656
  %v4457 = vunpack.c.h.b16 %v656
  %v4458 = vunpack.c.l.b16 %v657
  %v4459 = vunpack.c.h.b16 %v657
  %v4460 = vunpack.c.l.b16 %v658
  %v4461 = vunpack.c.h.b16 %v658
  %v4462 = vunpack.c.l.b16 %v659
  %v4463 = vunpack.c.h.b16 %v659
  %v4464 = vunpack.c.l.b16 %v660
  %v4465 = vunpack.c.h.b16 %v660
  %v4466 = vunpack.c.l.b16 %v661
  %v4467 = vunpack.c.h.b16 %v661
  %v4468 = vunpack.c.l.b16 %v662
  %v4469 = vunpack.c.h.b16 %v662
  %v4470 = vunpack.c.l.b16 %v663
  %v4471 = vunpack.c.h.b16 %v663
  %v4472 = vunpack.c.l.b16 %v664
  %v4473 = vunpack.c.h.b16 %v664
  %v4474 = vunpack.c.l.b16 %v665
  %v4475 = vunpack.c.h.b16 %v665
  %v4476 = vunpack.c.l.b16 %v666
  %v4477 = vunpack.c.h.b16 %v666
  %v4478 = vunpack.c.l.b16 %v667
  %v4479 = vunpack.c.h.b16 %v667
  %v4480 = vunpack.c.l.b16 %v668
  %v4481 = vunpack.c.h.b16 %v668
  %v4482 = vunpack.c.l.b16 %v669
  %v4483 = vunpack.c.h.b16 %v669
  %v4484 = vunpack.c.l.b16 %v670
  %v4485 = vunpack.c.h.b16 %v670
  %v4486 = vunpack.c.l.b16 %v671
  %v4487 = vunpack.c.h.b16 %v671
  %v4488 = vunpack.c.l.b16 %v672
  %v4489 = vunpack.c.h.b16 %v672
  %v4490 = vunpack.c.l.b16 %v673
  %v4491 = vunpack.c.h.b16 %v673
  %v4492 = vunpack.c.l.b16 %v674
  %v4493 = vunpack.c.h.b16 %v674
  %v4494 = vunpack.c.l.b16 %v675
  %v4495 = vunpack.c.h.b16 %v675
  %v4496 = vunpack.c.l.b16 %v676
  %v4497 = vunpack.c.h.b16 %v676
  %v4498 = vunpack.c.l.b16 %v677
  %v4499 = vunpack.c.h.b16 %v677
  %v4500 = vunpack.c.l.b16 %v678
  %v4501 = vunpack.c.h.b16 %v678
  %v4502 = vunpack.c.l.b16 %v679
  %v4503 = vunpack.c.h.b16 %v679
  %v4504 = vunpack.c.l.b16 %v680
  %v4505 = vunpack.c.h.b16 %v680
  %v4506 = vunpack.c.l.b16 %v681
  %v4507 = vunpack.c.h.b16 %v681
  %v4508 = vunpack.c.l.b16 %v682
  %v4509 = vunpack.c.h.b16 %v682
  %v4510 = vunpack.c.l.b16 %v683
  %v4511 = vunpack.c.h.b16 %v683
  %v4512 = vunpack.c.l.b16 %v684
  %v4513 = vunpack.c.h.b16 %v684
  %v4514 = vunpack.c.l.b16 %v685
  %v4515 = vunpack.c.h.b16 %v685
  %v4516 = vunpack.c.l.b16 %v686
  %v4517 = vunpack.c.h.b16 %v686
  %v4518 = vunpack.c.l.b16 %v687
  %v4519 = vunpack.c.h.b16 %v687
  %v4520 = vunpack.c.l.b16 %v688
  %v4521 = vunpack.c.h.b16 %v688
  %v4522 = vunpack.c.l.b16 %v689
  %v4523 = vunpack.c.h.b16 %v689
  %v4524 = vunpack.c.l.b16 %v690
  %v4525 = vunpack.c.h.b16 %v690
  %v4526 = vunpack.c.l.b16 %v691
  %v4527 = vunpack.c.h.b16 %v691
  %v4528 = vunpack.c.l.b16 %v692
  %v4529 = vunpack.c.h.b16 %v692
  %v4530 = vunpack.c.l.b16 %v693
  %v4531 = vunpack.c.h.b16 %v693
  %v4532 = vunpack.c.l.b16 %v694
  %v4533 = vunpack.c.h.b16 %v694
  %v4534 = vunpack.c.l.b16 %v695
  %v4535 = vunpack.c.h.b16 %v695
  %v4536 = vunpack.c.l.b16 %v696
  %v4537 = vunpack.c.h.b16 %v696
  %v4538 = vunpack.c.l.b16 %v697
  %v4539 = vunpack.c.h.b16 %v697
  %v4540 = vunpack.c.l.b16 %v698
  %v4541 = vunpack.c.h.b16 %v698
  %v4542 = vunpack.c.l.b16 %v699
  %v4543 = vunpack.c.h.b16 %v699
  %v4544 = vunpack.c.l.b16 %v700
  %v4545 = vunpack.c.h.b16 %v700
  %v4546 = vunpack.c.l.b16 %v701
  %v4547 = vunpack.c.h.b16 %v701
  %v4548 = vunpack.c.l.b16 %v702
  %v4549 = vunpack.c.h.b16 %v702
  %v4550 = vunpack.c.l.b16 %v703
  %v4551 = vunpack.c.h.b16 %v703
  %v4552 = vunpack.c.l.b16 %v704
  %v4553 = vunpack.c.h.b16 %v704
  %v4554 = vunpack.c.l.b16 %v705
  %v4555 = vunpack.c.h.b16 %v705
  %v4556 = vunpack.c.l.b16 %v706
  %v4557 = vunpack.c.h.b16 %v706
  %v4558 = vunpack.c.l.b16 %v707
  %v4559 = vunpack.c.h.b16 %v707
  %v4560 = vunpack.c.l.b16 %v708
  %v4561 = vunpack.c.h.b16 %v708
  %v4562 = vunpack.c.l.b16 %v709
  %v4563 = vunpack.c.h.b16 %v709
  %v4564 = vunpack.c.l.b16 %v710
  %v4565 = vunpack.c.h.b16 %v710
  %v4566 = vunpack.c.l.b16 %v711
  %v4567 = vunpack.c.h.b16 %v711
  %v4568 = vunpack.c.l.b16 %v712
  %v4569 = vunpack.c.h.b16 %v712
  %v4570 = vunpack.c.l.b16 %v713
  %v4571 = vunpack.c.h.b16 %v713
  %v4572 = vunpack.c.l.b16 %v714
  %v4573 = vunpack.c.h.b16 %v714
  %v4574 = vunpack.c.l.b16 %v715
  %v4575 = vunpack.c.h.b16 %v715
  %v4576 = vunpack.c.l.b16 %v716
  %v4577 = vunpack.c.h.b16 %v716
  %v4578 = vunpack.c.l.b16 %v717
  %v4579 = vunpack.c.h.b16 %v717
  %v4580 = vunpack.c.l.b16 %v718
  %v4581 = vunpack.c.h.b16 %v718
  %v4582 = vunpack.c.l.b16 %v719
  %v4583 = vunpack.c.h.b16 %v719
  %v4584 = vunpack.c.l.b16 %v720
  %v4585 = vunpack.c.h.b16 %v720
  %v4586 = vunpack.c.l.b16 %v721
  %v4587 = vunpack.c.h.b16 %v721
  %v4588 = vunpack.c.l.b16 %v722
  %v4589 = vunpack.c.h.b16 %v722
  %v4590 = vunpack.c.l.b16 %v723
  %v4591 = vunpack.c.h.b16 %v723
  %v4592 = vunpack.c.l.b16 %v724
  %v4593 = vunpack.c.h.b16 %v724
  %v4594 = vunpack.c.l.b16 %v725
  %v4595 = vunpack.c.h.b16 %v725
  %v4596 = vunpack.c.l.b16 %v726
  %v4597 = vunpack.c.h.b16 %v726
  %v4598 = vunpack.c.l.b16 %v727
  %v4599 = vunpack.c.h.b16 %v727
  %v4600 = vunpack.c.l.b16 %v728
  %v4601 = vunpack.c.h.b16 %v728
  %v4602 = vunpack.c.l.b16 %v729
  %v4603 = vunpack.c.h.b16 %v729
  %v4604 = vunpack.c.l.b16 %v730
  %v4605 = vunpack.c.h.b16 %v730
  %v4606 = vunpack.c.l.b16 %v731
  %v4607 = vunpack.c.h.b16 %v731
  %v4608 = vunpack.c.l.b16 %v732
  %v4609 = vunpack.c.h.b16 %v732
  %v4610 = vunpack.c.l.b16 %v733
  %v4611 = vunpack.c.h.b16 %v733
  %v4612 = vunpack.c.l.b16 %v734
  %v4613 = vunpack.c.h.b16 %v734
  %v4614 = vunpack.c.l.b16 %v735
  %v4615 = vunpack.c.h.b16 %v735
  %v4616 = vunpack.c.l.b16 %v736
  %v4617 = vunpack.c.h.b16 %v736
  %v4618 = vunpack.c.l.b16 %v737
  %v4619 = vunpack.c.h.b16 %v737
  %v4620 = vunpack.c.l.b16 %v738
  %v4621 = vunpack.c.h.b16 %v738
  %v4622 = vunpack.c.l.b16 %v739
  %v4623 = vunpack.c.h.b16 %v739
  %v4624 = vunpack.c.l.b16 %v740
  %v4625 = vunpack.c.h.b16 %v740
  %v4626 = vunpack.c.l.b16 %v741
  %v4627 = vunpack.c.h.b16 %v741
  %v4628 = vunpack.c.l.b16 %v742
  %v4629 = vunpack.c.h.b16 %v742
  %v4630 = vunpack.c.l.b16 %v743
  %v4631 = vunpack.c.h.b16 %v743
  %v4632 = vunpack.c.l.b16 %v744
  %v4633 = vunpack.c.h.b16 %v744
  %v4634 = vunpack.c.l.b16 %v745
  %v4635 = vunpack.c.h.b16 %v745
  %v4636 = vunpack.c.l.b16 %v746
  %v4637 = vunpack.c.h.b16 %v746
  %v4638 = vunpack.c.l.b16 %v747
  %v4639 = vunpack.c.h.b16 %v747
  %v4640 = vunpack.c.l.b16 %v748
  %v4641 = vunpack.c.h.b16 %v748
  %v4642 = vunpack.c.l.b16 %v749
  %v4643 = vunpack.c.h.b16 %v749
  %v4644 = vunpack.c.l.b16 %v750
  %v4645 = vunpack.c.h.b16 %v750
  %v4646 = vunpack.c.l.b16 %v751
  %v4647 = vunpack.c.h.b16 %v751
  %v4648 = vunpack.c.l.b16 %v752
  %v4649 = vunpack.c.h.b16 %v752
  %v4650 = vunpack.c.l.b16 %v753
  %v4651 = vunpack.c.h.b16 %v753
  %v4652 = vunpack.c.l.b16 %v754
  %v4653 = vunpack.c.h.b16 %v754
  %v4654 = vunpack.c.l.b16 %v755
  %v4655 = vunpack.c.h.b16 %v755
  %v4656 = vunpack.c.l.b16 %v756
  %v4657 = vunpack.c.h.b16 %v756
  %v4658 = vunpack.c.l.b16 %v757
  %v4659 = vunpack.c.h.b16 %v757
  %v4660 = vunpack.c.l.b16 %v758
  %v4661 = vunpack.c.h.b16 %v758
  %v4662 = vunpack.c.l.b16 %v759
  %v4663 = vunpack.c.h.b16 %v759
  %v4664 = vunpack.c.l.b16 %v760
  %v4665 = vunpack.c.h.b16 %v760
  %v4666 = vunpack.c.l.b16 %v761
  %v4667 = vunpack.c.h.b16 %v761
  %v4668 = vunpack.c.l.b16 %v762
  %v4669 = vunpack.c.h.b16 %v762
  %v4670 = vunpack.c.l.b16 %v763
  %v4671 = vunpack.c.h.b16 %v763
  %v4672 = vunpack.c.l.b16 %v764
  %v4673 = vunpack.c.h.b16 %v764
  %v4674 = vunpack.c.l.b16 %v765
  %v4675 = vunpack.c.h.b16 %v765
  %v4676 = vunpack.c.l.b16 %v766
  %v4677 = vunpack.c.h.b16 %v766
  %v4678 = vunpack.c.l.b16 %v767
  %v4679 = vunpack.c.h.b16 %v767
  %v4680 = vunpack.c.l.b16 %v768
  %v4681 = vunpack.c.h.b16 %v768
  %v4682 = vunpack.c.l.b16 %v769
  %v4683 = vunpack.c.h.b16 %v769
  %v4684 = vunpack.c.l.b16 %v770
  %v4685 = vunpack.c.h.b16 %v770
  %v4686 = vunpack.c.l.b16 %v771
  %v4687 = vunpack.c.h.b16 %v771
  %v4688 = vunpack.c.l.b16 %v772
  %v4689 = vunpack.c.h.b16 %v772
  %v4690 = vunpack.c.l.b16 %v773
  %v4691 = vunpack.c.h.b16 %v773
  %v4692 = vunpack.c.l.b16 %v774
  %v4693 = vunpack.c.h.b16 %v774
  %v4694 = vunpack.c.l.b16 %v775
  %v4695 = vunpack.c.h.b16 %v775
  %v4696 = vunpack.c.l.b16 %v776
  %v4697 = vunpack.c.h.b16 %v776
  %v4698 = vunpack.c.l.b16 %v777
  %v4699 = vunpack.c.h.b16 %v777
  %v4700 = vunpack.c.l.b16 %v778
  %v4701 = vunpack.c.h.b16 %v778
  %v4702 = vunpack.c.l.b16 %v779
  %v4703 = vunpack.c.h.b16 %v779
  %v4704 = vunpack.c.l.b16 %v780
  %v4705 = vunpack.c.h.b16 %v780
  %v4706 = vunpack.c.l.b16 %v781
  %v4707 = vunpack.c.h.b16 %v781
  %v4708 = vunpack.c.l.b16 %v782
  %v4709 = vunpack.c.h.b16 %v782
  %v4710 = vunpack.c.l.b16 %v783
  %v4711 = vunpack.c.h.b16 %v783
  %v4712 = vunpack.c.l.b16 %v784
  %v4713 = vunpack.c.h.b16 %v784
  %v4714 = vunpack.c.l.b16 %v785
  %v4715 = vunpack.c.h.b16 %v785
  %v4716 = vunpack.c.l.b16 %v786
  %v4717 = vunpack.c.h.b16 %v786
  %v4718 = vunpack.c.l.b16 %v787
  %v4719 = vunpack.c.h.b16 %v787
  %v4720 = vunpack.c.l.b16 %v788
  %v4721 = vunpack.c.h.b16 %v788
  %v4722 = vunpack.c.l.b16 %v789
  %v4723 = vunpack.c.h.b16 %v789
  %v4724 = vunpack.c.l.b16 %v790
  %v4725 = vunpack.c.h.b16 %v790
  %v4726 = vunpack.c.l.b16 %v791
  %v4727 = vunpack.c.h.b16 %v791
  %v4728 = vunpack.c.l.b16 %v792
  %v4729 = vunpack.c.h.b16 %v792
  %v4730 = vunpack.c.l.b16 %v793
  %v4731 = vunpack.c.h.b16 %v793
  %v4732 = vunpack.c.l.b16 %v794
  %v4733 = vunpack.c.h.b16 %v794
  %v4734 = vunpack.c.l.b16 %v795
  %v4735 = vunpack.c.h.b16 %v795
  %v4736 = vunpack.c.l.b16 %v796
  %v4737 = vunpack.c.h.b16 %v796
  %v4738 = vunpack.c.l.b16 %v797
  %v4739 = vunpack.c.h.b16 %v797
  %v4740 = vunpack.c.l.b16 %v798
  %v4741 = vunpack.c.h.b16 %v798
  %v4742 = vunpack.c.l.b16 %v799
  %v4743 = vunpack.c.h.b16 %v799
  %v4744 = vunpack.c.l.b16 %v800
  %v4745 = vunpack.c.h.b16 %v800
  %v4746 = vunpack.c.l.b16 %v801
  %v4747 = vunpack.c.h.b16 %v801
  %v4748 = vunpack.c.l.b16 %v802
  %v4749 = vunpack.c.h.b16 %v802
  %v4750 = vunpack.c.l.b16 %v803
  %v4751 = vunpack.c.h.b16 %v803
  %v4752 = vunpack.c.l.b16 %v804
  %v4753 = vunpack.c.h.b16 %v804
  %v4754 = vunpack.c.l.b16 %v805
  %v4755 = vunpack.c.h.b16 %v805
  %v4756 = vunpack.c.l.b16 %v806
  %v4757 = vunpack.c.h.b16 %v806
  %v4758 = vunpack.c.l.b16 %v807
  %v4759 = vunpack.c.h.b16 %v807
  %v4760 = vunpack.c.l.b16 %v808
  %v4761 = vunpack.c.h.b16 %v808
  %v4762 = vunpack.c.l.b16 %v809
  %v4763 = vunpack.c.h.b16 %v809
  %v4764 = vunpack.c.l.b16 %v810
  %v4765 = vunpack.c.h.b16 %v810
  %v4766 = vunpack.c.l.b16 %v811
  %v4767 = vunpack.c.h.b16 %v811
  %v4768 = vunpack.c.l.b16 %v812
  %v4769 = vunpack.c.h.b16 %v812
  %v4770 = vunpack.c.l.b16 %v813
  %v4771 = vunpack.c.h.b16 %v813
  %v4772 = vunpack.c.l.b16 %v814
  %v4773 = vunpack.c.h.b16 %v814
  %v4774 = vunpack.c.l.b16 %v815
  %v4775 = vunpack.c.h.b16 %v815
  %v4776 = vunpack.c.l.b16 %v816
  %v4777 = vunpack.c.h.b16 %v816
  %v4778 = vunpack.c.l.b16 %v817
  %v4779 = vunpack.c.h.b16 %v817
  %v4780 = vunpack.c.l.b16 %v818
  %v4781 = vunpack.c.h.b16 %v818
  %v4782 = vunpack.c.l.b16 %v819
  %v4783 = vunpack.c.h.b16 %v819
  %v4784 = vunpack.c.l.b16 %v820
  %v4785 = vunpack.c.h.b16 %v820
  %v4786 = vunpack.c.l.b16 %v821
  %v4787 = vunpack.c.h.b16 %v821
  %v4788 = vunpack.c.l.b16 %v822
  %v4789 = vunpack.c.h.b16 %v822
  %v4790 = vunpack.c.l.b16 %v823
  %v4791 = vunpack.c.h.b16 %v823
  %v4792 = vunpack.c.l.b16 %v824
  %v4793 = vunpack.c.h.b16 %v824
  %v4794 = vunpack.c.l.b16 %v825
  %v4795 = vunpack.c.h.b16 %v825
  %v4796 = vunpack.c.l.b16 %v826
  %v4797 = vunpack.c.h.b16 %v826
  %v4798 = vunpack.c.l.b16 %v827
  %v4799 = vunpack.c.h.b16 %v827
  %v4800 = vunpack.c.l.b16 %v828
  %v4801 = vunpack.c.h.b16 %v828
  %v4802 = vunpack.c.l.b16 %v829
  %v4803 = vunpack.c.h.b16 %v829
  %v4804 = vunpack.c.l.b16 %v830
  %v4805 = vunpack.c.h.b16 %v830
  %v4806 = vunpack.c.l.b16 %v831
  %v4807 = vunpack.c.h.b16 %v831
  %v4808 = vunpack.c.l.b16 %v832
  %v4809 = vunpack.c.h.b16 %v832
  %v4810 = vunpack.c.l.b16 %v833
  %v4811 = vunpack.c.h.b16 %v833
  %v4812 = vunpack.c.l.b16 %v834
  %v4813 = vunpack.c.h.b16 %v834
  %v4814 = vunpack.c.l.b16 %v835
  %v4815 = vunpack.c.h.b16 %v835
  %v4816 = vunpack.c.l.b16 %v836
  %v4817 = vunpack.c.h.b16 %v836
  %v4818 = vunpack.c.l.b16 %v837
  %v4819 = vunpack.c.h.b16 %v837
  %v4820 = vunpack.c.l.b16 %v838
  %v4821 = vunpack.c.h.b16 %v838
  %v4822 = vunpack.c.l.b16 %v839
  %v4823 = vunpack.c.h.b16 %v839
  %v4824 = vunpack.c.l.b16 %v840
  %v4825 = vunpack.c.h.b16 %v840
  %v4826 = vunpack.c.l.b16 %v841
  %v4827 = vunpack.c.h.b16 %v841
  %v4828 = vunpack.c.l.b16 %v842
  %v4829 = vunpack.c.h.b16 %v842
  %v4830 = vunpack.c.l.b16 %v843
  %v4831 = vunpack.c.h.b16 %v843
  %v4832 = vunpack.c.l.b16 %v844
  %v4833 = vunpack.c.h.b16 %v844
  %v4834 = vunpack.c.l.b16 %v845
  %v4835 = vunpack.c.h.b16 %v845
  %v4836 = vunpack.c.l.b16 %v846
  %v4837 = vunpack.c.h.b16 %v846
  %v4838 = vunpack.c.l.b16 %v847
  %v4839 = vunpack.c.h.b16 %v847
  %v4840 = vunpack.c.l.b16 %v848
  %v4841 = vunpack.c.h.b16 %v848
  %v4842 = vunpack.c.l.b16 %v849
  %v4843 = vunpack.c.h.b16 %v849
  %v4844 = vunpack.c.l.b16 %v850
  %v4845 = vunpack.c.h.b16 %v850
  %v4846 = vunpack.c.l.b16 %v851
  %v4847 = vunpack.c.h.b16 %v851
  %v4848 = vunpack.c.l.b16 %v852
  %v4849 = vunpack.c.h.b16 %v852
  %v4850 = vunpack.c.l.b16 %v853
  %v4851 = vunpack.c.h.b16 %v853
  %v4852 = vunpack.c.l.b16 %v854
  %v4853 = vunpack.c.h.b16 %v854
  %v4854 = vunpack.c.l.b16 %v855
  %v4855 = vunpack.c.h.b16 %v855
  %v4856 = vunpack.c.l.b16 %v856
  %v4857 = vunpack.c.h.b16 %v856
  %v4858 = vunpack.c.l.b16 %v857
  %v4859 = vunpack.c.h.b16 %v857
  %v4860 = vunpack.c.l.b16 %v858
  %v4861 = vunpack.c.h.b16 %v858
  %v4862 = vunpack.c.l.b16 %v859
  %v4863 = vunpack.c.h.b16 %v859
  %v4864 = vunpack.c.l.b16 %v860
  %v4865 = vunpack.c.h.b16 %v860
  %v4866 = vunpack.c.l.b16 %v861
  %v4867 = vunpack.c.h.b16 %v861
  %v4868 = vunpack.c.l.b16 %v862
  %v4869 = vunpack.c.h.b16 %v862
  %v4870 = vunpack.c.l.b16 %v863
  %v4871 = vunpack.c.h.b16 %v863
  %v4872 = vunpack.c.l.b16 %v864
  %v4873 = vunpack.c.h.b16 %v864
  %v4874 = vunpack.c.l.b16 %v865
  %v4875 = vunpack.c.h.b16 %v865
  %v4876 = vunpack.c.l.b16 %v866
  %v4877 = vunpack.c.h.b16 %v866
  %v4878 = vunpack.c.l.b16 %v867
  %v4879 = vunpack.c.h.b16 %v867
  %v4880 = vunpack.c.l.b16 %v868
  %v4881 = vunpack.c.h.b16 %v868
  %v4882 = vunpack.c.l.b16 %v869
  %v4883 = vunpack.c.h.b16 %v869
  %v4884 = vunpack.c.l.b16 %v870
  %v4885 = vunpack.c.h.b16 %v870
  %v4886 = vunpack.c.l.b16 %v871
  %v4887 = vunpack.c.h.b16 %v871
  %v4888 = vunpack.c.l.b16 %v872
  %v4889 = vunpack.c.h.b16 %v872
  %v4890 = vunpack.c.l.b16 %v873
  %v4891 = vunpack.c.h.b16 %v873
  %v4892 = vunpack.c.l.b16 %v874
  %v4893 = vunpack.c.h.b16 %v874
  %v4894 = vunpack.c.l.b16 %v875
  %v4895 = vunpack.c.h.b16 %v875
  %v4896 = vunpack.c.l.b16 %v876
  %v4897 = vunpack.c.h.b16 %v876
  %v4898 = vunpack.c.l.b16 %v877
  %v4899 = vunpack.c.h.b16 %v877
  %v4900 = vunpack.c.l.b16 %v878
  %v4901 = vunpack.c.h.b16 %v878
  %v4902 = vunpack.c.l.b16 %v879
  %v4903 = vunpack.c.h.b16 %v879
  %v4904 = vunpack.c.l.b16 %v880
  %v4905 = vunpack.c.h.b16 %v880
  %v4906 = vunpack.c.l.b16 %v881
  %v4907 = vunpack.c.h.b16 %v881
  %v4908 = vunpack.c.l.b16 %v882
  %v4909 = vunpack.c.h.b16 %v882
  %v4910 = vunpack.c.l.b16 %v883
  %v4911 = vunpack.c.h.b16 %v883
  %v4912 = vunpack.c.l.b16 %v884
  %v4913 = vunpack.c.h.b16 %v884
  %v4914 = vunpack.c.l.b16 %v885
  %v4915 = vunpack.c.h.b16 %v885
  %v4916 = vunpack.c.l.b16 %v886
  %v4917 = vunpack.c.h.b16 %v886
  %v4918 = vunpack.c.l.b16 %v887
  %v4919 = vunpack.c.h.b16 %v887
  %v4920 = vunpack.c.l.b16 %v888
  %v4921 = vunpack.c.h.b16 %v888
  %v4922 = vunpack.c.l.b16 %v889
  %v4923 = vunpack.c.h.b16 %v889
  %v4924 = vunpack.c.l.b16 %v890
  %v4925 = vunpack.c.h.b16 %v890
  %v4926 = vunpack.c.l.b16 %v891
  %v4927 = vunpack.c.h.b16 %v891
  %v4928 = vunpack.c.l.b16 %v892
  %v4929 = vunpack.c.h.b16 %v892
  %v4930 = vunpack.c.l.b16 %v893
  %v4931 = vunpack.c.h.b16 %v893
  %v4932 = vunpack.c.l.b16 %v894
  %v4933 = vunpack.c.h.b16 %v894
  %v4934 = vunpack.c.l.b16 %v895
  %v4935 = vunpack.c.h.b16 %v895
  %v4936 = vunpack.c.l.b16 %v896
  %v4937 = vunpack.c.h.b16 %v896
  %v4938 = vunpack.c.l.b16 %v897
  %v4939 = vunpack.c.h.b16 %v897
  %v4940 = vunpack.c.l.b16 %v898
  %v4941 = vunpack.c.h.b16 %v898
  %v4942 = vunpack.c.l.b16 %v899
  %v4943 = vunpack.c.h.b16 %v899
  %v4944 = vunpack.c.l.b16 %v900
  %v4945 = vunpack.c.h.b16 %v900
  %v4946 = vunpack.c.l.b16 %v901
  %v4947 = vunpack.c.h.b16 %v901
  %v4948 = vunpack.c.l.b16 %v902
  %v4949 = vunpack.c.h.b16 %v902
  %v4950 = vunpack.c.l.b16 %v903
  %v4951 = vunpack.c.h.b16 %v903
  %v4952 = vunpack.c.l.b16 %v904
  %v4953 = vunpack.c.h.b16 %v904
  %v4954 = vunpack.c.l.b16 %v905
  %v4955 = vunpack.c.h.b16 %v905
  %v4956 = vunpack.c.l.b16 %v906
  %v4957 = vunpack.c.h.b16 %v906
  %v4958 = vunpack.c.l.b16 %v907
  %v4959 = vunpack.c.h.b16 %v907
  %v4960 = vunpack.c.l.b16 %v908
  %v4961 = vunpack.c.h.b16 %v908
  %v4962 = vunpack.c.l.b16 %v909
  %v4963 = vunpack.c.h.b16 %v909
  %v4964 = vunpack.c.l.b16 %v910
  %v4965 = vunpack.c.h.b16 %v910
  %v4966 = vunpack.c.l.b16 %v911
  %v4967 = vunpack.c.h.b16 %v911
  %v4968 = vunpack.c.l.b16 %v912
  %v4969 = vunpack.c.h.b16 %v912
  %v4970 = vunpack.c.l.b16 %v913
  %v4971 = vunpack.c.h.b16 %v913
  %v4972 = vunpack.c.l.b16 %v914
  %v4973 = vunpack.c.h.b16 %v914
  %v4974 = vunpack.c.l.b16 %v915
  %v4975 = vunpack.c.h.b16 %v915
  %v4976 = vunpack.c.l.b16 %v916
  %v4977 = vunpack.c.h.b16 %v916
  %v4978 = vunpack.c.l.b16 %v917
  %v4979 = vunpack.c.h.b16 %v917
  %v4980 = vunpack.c.l.b16 %v918
  %v4981 = vunpack.c.h.b16 %v918
  %v4982 = vunpack.c.l.b16 %v919
  %v4983 = vunpack.c.h.b16 %v919
  %v4984 = vunpack.c.l.b16 %v920
  %v4985 = vunpack.c.h.b16 %v920
  %v4986 = vunpack.c.l.b16 %v921
  %v4987 = vunpack.c.h.b16 %v921
  %v4988 = vunpack.c.l.b16 %v922
  %v4989 = vunpack.c.h.b16 %v922
  %v4990 = vunpack.c.l.b16 %v923
  %v4991 = vunpack.c.h.b16 %v923
  %v4992 = vunpack.c.l.b16 %v924
  %v4993 = vunpack.c.h.b16 %v924
  %v4994 = vunpack.c.l.b16 %v925
  %v4995 = vunpack.c.h.b16 %v925
  %v4996 = vunpack.c.l.b16 %v926
  %v4997 = vunpack.c.h.b16 %v926
  %v4998 = vunpack.c.l.b16 %v927
  %v4999 = vunpack.c.h.b16 %v927
  %v5000 = vunpack.c.l.b16 %v928
  %v5001 = vunpack.c.h.b16 %v928
  %v5002 = vunpack.c.l.b16 %v929
  %v5003 = vunpack.c.h.b16 %v929
  %v5004 = vunpack.c.l.b16 %v930
  %v5005 = vunpack.c.h.b16 %v930
  %v5006 = vunpack.c.l.b16 %v931
  %v5007 = vunpack.c.h.b16 %v931
  %v5008 = vunpack.c.l.b16 %v932
  %v5009 = vunpack.c.h.b16 %v932
  %v5010 = vunpack.c.l.b16 %v933
  %v5011 = vunpack.c.h.b16 %v933
  %v5012 = vunpack.c.l.b16 %v934
  %v5013 = vunpack.c.h.b16 %v934
  %v5014 = vunpack.c.l.b16 %v935
  %v5015 = vunpack.c.h.b16 %v935
  %v5016 = vunpack.c.l.b16 %v936
  %v5017 = vunpack.c.h.b16 %v936
  %v5018 = vunpack.c.l.b16 %v937
  %v5019 = vunpack.c.h.b16 %v937
  %v5020 = vunpack.c.l.b16 %v938
  %v5021 = vunpack.c.h.b16 %v938
  %v5022 = vunpack.c.l.b16 %v939
  %v5023 = vunpack.c.h.b16 %v939
  %v5024 = vunpack.c.l.b16 %v940
  %v5025 = vunpack.c.h.b16 %v940
  %v5026 = vunpack.c.l.b16 %v941
  %v5027 = vunpack.c.h.b16 %v941
  %v5028 = vunpack.c.l.b16 %v942
  %v5029 = vunpack.c.h.b16 %v942
  %v5030 = vunpack.c.l.b16 %v943
  %v5031 = vunpack.c.h.b16 %v943
  %v5032 = vunpack.c.l.b16 %v944
  %v5033 = vunpack.c.h.b16 %v944
  %v5034 = vunpack.c.l.b16 %v945
  %v5035 = vunpack.c.h.b16 %v945
  %v5036 = vunpack.c.l.b16 %v946
  %v5037 = vunpack.c.h.b16 %v946
  %v5038 = vunpack.c.l.b16 %v947
  %v5039 = vunpack.c.h.b16 %v947
  %v5040 = vunpack.c.l.b16 %v948
  %v5041 = vunpack.c.h.b16 %v948
  %v5042 = vunpack.c.l.b16 %v949
  %v5043 = vunpack.c.h.b16 %v949
  %v5044 = vunpack.c.l.b16 %v950
  %v5045 = vunpack.c.h.b16 %v950
  %v5046 = vunpack.c.l.b16 %v951
  %v5047 = vunpack.c.h.b16 %v951
  %v5048 = vunpack.c.l.b16 %v952
  %v5049 = vunpack.c.h.b16 %v952
  %v5050 = vunpack.c.l.b16 %v953
  %v5051 = vunpack.c.h.b16 %v953
  %v5052 = vunpack.c.l.b16 %v954
  %v5053 = vunpack.c.h.b16 %v954
  %v5054 = vunpack.c.l.b16 %v955
  %v5055 = vunpack.c.h.b16 %v955
  %v5056 = vunpack.c.l.b16 %v956
  %v5057 = vunpack.c.h.b16 %v956
  %v5058 = vunpack.c.l.b16 %v957
  %v5059 = vunpack.c.h.b16 %v957
  %v5060 = vunpack.c.l.b16 %v958
  %v5061 = vunpack.c.h.b16 %v958
  %v5062 = vunpack.c.l.b16 %v959
  %v5063 = vunpack.c.h.b16 %v959
  %v5064 = vunpack.c.l.b16 %v960
  %v5065 = vunpack.c.h.b16 %v960
  %v5066 = vunpack.c.l.b16 %v961
  %v5067 = vunpack.c.h.b16 %v961
  %v5068 = vunpack.c.l.b16 %v962
  %v5069 = vunpack.c.h.b16 %v962
  %v5070 = vunpack.c.l.b16 %v963
  %v5071 = vunpack.c.h.b16 %v963
  %v5072 = vunpack.c.l.b16 %v964
  %v5073 = vunpack.c.h.b16 %v964
  %v5074 = vunpack.c.l.b16 %v965
  %v5075 = vunpack.c.h.b16 %v965
  %v5076 = vunpack.c.l.b16 %v966
  %v5077 = vunpack.c.h.b16 %v966
  %v5078 = vunpack.c.l.b16 %v967
  %v5079 = vunpack.c.h.b16 %v967
  %v5080 = vunpack.c.l.b16 %v968
  %v5081 = vunpack.c.h.b16 %v968
  %v5082 = vunpack.c.l.b16 %v969
  %v5083 = vunpack.c.h.b16 %v969
  %v5084 = vunpack.c.l.b16 %v970
  %v5085 = vunpack.c.h.b16 %v970
  %v5086 = vunpack.c.l.b16 %v971
  %v5087 = vunpack.c.h.b16 %v971
  %v5088 = vunpack.c.l.b16 %v972
  %v5089 = vunpack.c.h.b16 %v972
  %v5090 = vunpack.c.l.b16 %v973
  %v5091 = vunpack.c.h.b16 %v973
  %v5092 = vunpack.c.l.b16 %v974
  %v5093 = vunpack.c.h.b16 %v974
  %v5094 = vunpack.c.l.b16 %v975
  %v5095 = vunpack.c.h.b16 %v975
  %v5096 = vunpack.c.l.b16 %v976
  %v5097 = vunpack.c.h.b16 %v976
  %v5098 = vunpack.c.l.b16 %v977
  %v5099 = vunpack.c.h.b16 %v977
  %v5100 = vunpack.c.l.b16 %v978
  %v5101 = vunpack.c.h.b16 %v978
  %v5102 = vunpack.c.l.b16 %v979
  %v5103 = vunpack.c.h.b16 %v979
  %v5104 = vunpack.c.l.b16 %v980
  %v5105 = vunpack.c.h.b16 %v980
  %v5106 = vunpack.c.l.b16 %v981
  %v5107 = vunpack.c.h.b16 %v981
  %v5108 = vunpack.c.l.b16 %v982
  %v5109 = vunpack.c.h.b16 %v982
  %v5110 = vunpack.c.l.b16 %v983
  %v5111 = vunpack.c.h.b16 %v983
  %v5112 = vunpack.c.l.b16 %v984
  %v5113 = vunpack.c.h.b16 %v984
  %v5114 = vunpack.c.l.b16 %v985
  %v5115 = vunpack.c.h.b16 %v985
  %v5116 = vunpack.c.l.b16 %v986
  %v5117 = vunpack.c.h.b16 %v986
  %v5118 = vunpack.c.l.b16 %v987
  %v5119 = vunpack.c.h.b16 %v987
  %v5120 = vunpack.c.l.b16 %v988
  %v5121 = vunpack.c.h.b16 %v988
  %v5122 = vunpack.c.l.b16 %v989
  %v5123 = vunpack.c.h.b16 %v989
  %v5124 = vunpack.c.l.b16 %v990
  %v5125 = vunpack.c.h.b16 %v990
  %v5126 = vunpack.c.l.b16 %v991
  %v5127 = vunpack.c.h.b16 %v991
  %v5128 = vunpack.c.l.b16 %v992
  %v5129 = vunpack.c.h.b16 %v992
  %v5130 = vunpack.c.l.b16 %v993
  %v5131 = vunpack.c.h.b16 %v993
  %v5132 = vunpack.c.l.b16 %v994
  %v5133 = vunpack.c.h.b16 %v994
  %v5134 = vunpack.c.l.b16 %v995
  %v5135 = vunpack.c.h.b16 %v995
  %v5136 = vunpack.c.l.b16 %v996
  %v5137 = vunpack.c.h.b16 %v996
  %v5138 = vunpack.c.l.b16 %v997
  %v5139 = vunpack.c.h.b16 %v997
  %v5140 = vunpack.c.l.b16 %v998
  %v5141 = vunpack.c.h.b16 %v998
  %v5142 = vunpack.c.l.b16 %v999
  %v5143 = vunpack.c.h.b16 %v999
  %v5144 = vunpack.c.l.b16 %v1000
  %v5145 = vunpack.c.h.b16 %v1000
  %v5146 = vunpack.c.l.b16 %v1001
  %v5147 = vunpack.c.h.b16 %v1001
  %v5148 = vunpack.c.l.b16 %v1002
  %v5149 = vunpack.c.h.b16 %v1002
  %v5150 = vunpack.c.l.b16 %v1003
  %v5151 = vunpack.c.h.b16 %v1003
  %v5152 = vunpack.c.l.b16 %v1004
  %v5153 = vunpack.c.h.b16 %v1004
  %v5154 = vunpack.c.l.b16 %v1005
  %v5155 = vunpack.c.h.b16 %v1005
  %v5156 = vunpack.c.l.b16 %v1006
  %v5157 = vunpack.c.h.b16 %v1006
  %v5158 = vunpack.c.l.b16 %v1007
  %v5159 = vunpack.c.h.b16 %v1007
  %v5160 = vunpack.c.l.b16 %v1008
  %v5161 = vunpack.c.h.b16 %v1008
  %v5162 = vunpack.c.l.b16 %v1009
  %v5163 = vunpack.c.h.b16 %v1009
  %v5164 = vunpack.c.l.b16 %v1010
  %v5165 = vunpack.c.h.b16 %v1010
  %v5166 = vunpack.c.l.b16 %v1011
  %v5167 = vunpack.c.h.b16 %v1011
  %v5168 = vunpack.c.l.b16 %v1012
  %v5169 = vunpack.c.h.b16 %v1012
  %v5170 = vunpack.c.l.b16 %v1013
  %v5171 = vunpack.c.h.b16 %v1013
  %v5172 = vunpack.c.l.b16 %v1014
  %v5173 = vunpack.c.h.b16 %v1014
  %v5174 = vunpack.c.l.b16 %v1015
  %v5175 = vunpack.c.h.b16 %v1015
  %v5176 = vunpack.c.l.b16 %v1016
  %v5177 = vunpack.c.h.b16 %v1016
  %v5178 = vunpack.c.l.b16 %v1017
  %v5179 = vunpack.c.h.b16 %v1017
  %v5180 = vunpack.c.l.b16 %v1018
  %v5181 = vunpack.c.h.b16 %v1018
  %v5182 = vunpack.c.l.b16 %v1019
  %v5183 = vunpack.c.h.b16 %v1019
  %v5184 = vunpack.c.l.b16 %v1020
  %v5185 = vunpack.c.h.b16 %v1020
  %v5186 = vunpack.c.l.b16 %v1021
  %v5187 = vunpack.c.h.b16 %v1021
  %v5188 = vunpack.c.l.b16 %v1022
  %v5189 = vunpack.c.h.b16 %v1022
  %v5190 = vunpack.c.l.b16 %v1023
  %v5191 = vunpack.c.h.b16 %v1023
  %v5192 = vunpack.c.l.b16 %v1024
  %v5193 = vunpack.c.h.b16 %v1024
  %v5194 = vunpack.c.l.b16 %v1025
  %v5195 = vunpack.c.h.b16 %v1025
  %v5196 = vunpack.c.l.b16 %v1026
  %v5197 = vunpack.c.h.b16 %v1026
  %v5198 = vunpack.c.l.b16 %v1027
  %v5199 = vunpack.c.h.b16 %v1027
  %v5200 = vunpack.c.l.b16 %v1028
  %v5201 = vunpack.c.h.b16 %v1028
  %v5202 = vunpack.c.l.b16 %v1029
  %v5203 = vunpack.c.h.b16 %v1029
  %v5204 = vunpack.c.l.b16 %v1030
  %v5205 = vunpack.c.h.b16 %v1030
  %v5206 = vunpack.c.l.b16 %v1031
  %v5207 = vunpack.c.h.b16 %v1031
  %v5208 = vunpack.c.l.b16 %v1032
  %v5209 = vunpack.c.h.b16 %v1032
  %v5210 = vunpack.c.l.b16 %v1033
  %v5211 = vunpack.c.h.b16 %v1033
  %v5212 = vunpack.c.l.b16 %v1034
  %v5213 = vunpack.c.h.b16 %v1034
  %v5214 = vunpack.c.l.b16 %v1035
  %v5215 = vunpack.c.h.b16 %v1035
  %v5216 = vunpack.c.l.b16 %v1036
  %v5217 = vunpack.c.h.b16 %v1036
  %v5218 = vunpack.c.l.b16 %v1037
  %v5219 = vunpack.c.h.b16 %v1037
  %v5220 = vunpack.c.l.b16 %v1038
  %v5221 = vunpack.c.h.b16 %v1038
  %v5222 = vunpack.c.l.b16 %v1039
  %v5223 = vunpack.c.h.b16 %v1039
  %v5224 = vunpack.c.l.b16 %v1040
  %v5225 = vunpack.c.h.b16 %v1040
  %v5226 = vunpack.c.l.b16 %v1041
  %v5227 = vunpack.c.h.b16 %v1041
  %v5228 = vunpack.c.l.b16 %v1042
  %v5229 = vunpack.c.h.b16 %v1042
  %v5230 = vunpack.c.l.b16 %v1043
  %v5231 = vunpack.c.h.b16 %v1043
  %v5232 = vunpack.c.l.b16 %v1044
  %v5233 = vunpack.c.h.b16 %v1044
  %v5234 = vunpack.c.l.b16 %v1045
  %v5235 = vunpack.c.h.b16 %v1045
  %v5236 = vunpack.c.l.b16 %v1046
  %v5237 = vunpack.c.h.b16 %v1046
  %v5238 = vunpack.c.l.b16 %v1047
  %v5239 = vunpack.c.h.b16 %v1047
  %v5240 = vunpack.c.l.b16 %v1048
  %v5241 = vunpack.c.h.b16 %v1048
  %v5242 = vunpack.c.l.b16 %v1049
  %v5243 = vunpack.c.h.b16 %v1049
  %v5244 = vunpack.c.l.b16 %v1050
  %v5245 = vunpack.c.h.b16 %v1050
  %v5246 = vunpack.c.l.b16 %v1051
  %v5247 = vunpack.c.h.b16 %v1051
  %v5248 = vunpack.c.l.b16 %v1052
  %v5249 = vunpack.c.h.b16 %v1052
  %v5250 = vunpack.c.l.b16 %v1053
  %v5251 = vunpack.c.h.b16 %v1053
  %v5252 = vunpack.c.l.b16 %v1054
  %v5253 = vunpack.c.h.b16 %v1054
  %v5254 = vunpack.c.l.b16 %v1055
  %v5255 = vunpack.c.h.b16 %v1055
  %v5256 = vunpack.c.l.b16 %v1056
  %v5257 = vunpack.c.h.b16 %v1056
  %v5258 = vunpack.c.l.b16 %v1057
  %v5259 = vunpack.c.h.b16 %v1057
  %v5260 = vunpack.c.l.b16 %v1058
  %v5261 = vunpack.c.h.b16 %v1058
  %v5262 = vunpack.c.l.b16 %v1059
  %v5263 = vunpack.c.h.b16 %v1059
  %v5264 = vunpack.c.l.b16 %v1060
  %v5265 = vunpack.c.h.b16 %v1060
  %v5266 = vunpack.c.l.b16 %v1061
  %v5267 = vunpack.c.h.b16 %v1061
  %v5268 = vunpack.c.l.b16 %v1062
  %v5269 = vunpack.c.h.b16 %v1062
  %v5270 = vunpack.c.l.b16 %v1063
  %v5271 = vunpack.c.h.b16 %v1063
  %v5272 = vunpack.c.l.b16 %v1064
  %v5273 = vunpack.c.h.b16 %v1064
  %v5274 = vunpack.c.l.b16 %v1065
  %v5275 = vunpack.c.h.b16 %v1065
  %v5276 = vunpack.c.l.b16 %v1066
  %v5277 = vunpack.c.h.b16 %v1066
  %v5278 = vunpack.c.l.b16 %v1067
  %v5279 = vunpack.c.h.b16 %v1067
  %v5280 = vunpack.c.l.b16 %v1068
  %v5281 = vunpack.c.h.b16 %v1068
  %v5282 = vunpack.c.l.b16 %v1069
  %v5283 = vunpack.c.h.b16 %v1069
  %v5284 = vunpack.c.l.b16 %v1070
  %v5285 = vunpack.c.h.b16 %v1070
  %v5286 = vunpack.c.l.b16 %v1071
  %v5287 = vunpack.c.h.b16 %v1071
  %v5288 = vunpack.c.l.b16 %v1072
  %v5289 = vunpack.c.h.b16 %v1072
  %v5290 = vunpack.c.l.b16 %v1073
  %v5291 = vunpack.c.h.b16 %v1073
  %v5292 = vunpack.c.l.b16 %v1074
  %v5293 = vunpack.c.h.b16 %v1074
  %v5294 = vunpack.c.l.b16 %v1075
  %v5295 = vunpack.c.h.b16 %v1075
  %v5296 = vunpack.c.l.b16 %v1076
  %v5297 = vunpack.c.h.b16 %v1076
  %v5298 = vunpack.c.l.b16 %v1077
  %v5299 = vunpack.c.h.b16 %v1077
  %v5300 = vunpack.c.l.b16 %v1078
  %v5301 = vunpack.c.h.b16 %v1078
  %v5302 = vunpack.c.l.b16 %v1079
  %v5303 = vunpack.c.h.b16 %v1079
  %v5304 = vunpack.c.l.b16 %v1080
  %v5305 = vunpack.c.h.b16 %v1080
  %v5306 = vunpack.c.l.b16 %v1081
  %v5307 = vunpack.c.h.b16 %v1081
  %v5308 = vunpack.c.l.b16 %v1082
  %v5309 = vunpack.c.h.b16 %v1082
  %v5310 = vunpack.c.l.b16 %v1083
  %v5311 = vunpack.c.h.b16 %v1083
  %v5312 = vunpack.c.l.b16 %v1084
  %v5313 = vunpack.c.h.b16 %v1084
  %v5314 = vunpack.c.l.b16 %v1085
  %v5315 = vunpack.c.h.b16 %v1085
  %v5316 = vunpack.c.l.b16 %v1086
  %v5317 = vunpack.c.h.b16 %v1086
  %v5318 = vunpack.c.l.b16 %v1087
  %v5319 = vunpack.c.h.b16 %v1087
  %v5320 = vunpack.c.l.b16 %v1088
  %v5321 = vunpack.c.h.b16 %v1088
  %v5322 = vunpack.c.l.b16 %v1089
  %v5323 = vunpack.c.h.b16 %v1089
  %v5324 = vunpack.c.l.b16 %v1090
  %v5325 = vunpack.c.h.b16 %v1090
  %v5326 = vunpack.c.l.b16 %v1091
  %v5327 = vunpack.c.h.b16 %v1091
  %v5328 = vunpack.c.l.b16 %v1092
  %v5329 = vunpack.c.h.b16 %v1092
  %v5330 = vunpack.c.l.b16 %v1093
  %v5331 = vunpack.c.h.b16 %v1093
  %v5332 = vunpack.c.l.b16 %v1094
  %v5333 = vunpack.c.h.b16 %v1094
  %v5334 = vunpack.c.l.b16 %v1095
  %v5335 = vunpack.c.h.b16 %v1095
  %v5336 = vunpack.c.l.b16 %v1096
  %v5337 = vunpack.c.h.b16 %v1096
  %v5338 = vunpack.c.l.b16 %v1097
  %v5339 = vunpack.c.h.b16 %v1097
  %v5340 = vunpack.c.l.b16 %v1098
  %v5341 = vunpack.c.h.b16 %v1098
  %v5342 = vunpack.c.l.b16 %v1099
  %v5343 = vunpack.c.h.b16 %v1099
  %v5344 = vunpack.c.l.b16 %v1100
  %v5345 = vunpack.c.h.b16 %v1100
  %v5346 = vunpack.c.l.b16 %v1101
  %v5347 = vunpack.c.h.b16 %v1101
  %v5348 = vunpack.c.l.b16 %v1102
  %v5349 = vunpack.c.h.b16 %v1102
  %v5350 = vunpack.c.l.b16 %v1103
  %v5351 = vunpack.c.h.b16 %v1103
  %v5352 = vunpack.c.l.b16 %v1104
  %v5353 = vunpack.c.h.b16 %v1104
  %v5354 = vunpack.c.l.b16 %v1105
  %v5355 = vunpack.c.h.b16 %v1105
  %v5356 = vunpack.c.l.b16 %v1106
  %v5357 = vunpack.c.h.b16 %v1106
  %v5358 = vunpack.c.l.b16 %v1107
  %v5359 = vunpack.c.h.b16 %v1107
  %v5360 = vunpack.c.l.b16 %v1108
  %v5361 = vunpack.c.h.b16 %v1108
  %v5362 = vunpack.c.l.b16 %v1109
  %v5363 = vunpack.c.h.b16 %v1109
  %v5364 = vunpack.c.l.b16 %v1110
  %v5365 = vunpack.c.h.b16 %v1110
  %v5366 = vunpack.c.l.b16 %v1111
  %v5367 = vunpack.c.h.b16 %v1111
  %v5368 = vunpack.c.l.b16 %v1112
  %v5369 = vunpack.c.h.b16 %v1112
  %v5370 = vunpack.c.l.b16 %v1113
  %v5371 = vunpack.c.h.b16 %v1113
  %v5372 = vunpack.c.l.b16 %v1114
  %v5373 = vunpack.c.h.b16 %v1114
  %v5374 = vunpack.c.l.b16 %v1115
  %v5375 = vunpack.c.h.b16 %v1115
  %v5376 = vunpack.c.l.b16 %v1116
  %v5377 = vunpack.c.h.b16 %v1116
  %v5378 = vunpack.c.l.b16 %v1117
  %v5379 = vunpack.c.h.b16 %v1117
  %v5380 = vunpack.c.l.b16 %v1118
  %v5381 = vunpack.c.h.b16 %v1118
  %v5382 = vunpack.c.l.b16 %v1119
  %v5383 = vunpack.c.h.b16 %v1119
  %v5384 = vunpack.c.l.b16 %v1120
  %v5385 = vunpack.c.h.b16 %v1120
  %v5386 = vunpack.c.l.b16 %v1121
  %v5387 = vunpack.c.h.b16 %v1121
  %v5388 = vunpack.c.l.b16 %v1122
  %v5389 = vunpack.c.h.b16 %v1122
  %v5390 = vunpack.c.l.b16 %v1123
  %v5391 = vunpack.c.h.b16 %v1123
  %v5392 = vunpack.c.l.b16 %v1124
  %v5393 = vunpack.c.h.b16 %v1124
  %v5394 = vunpack.c.l.b16 %v1125
  %v5395 = vunpack.c.h.b16 %v1125
  %v5396 = vunpack.c.l.b16 %v1126
  %v5397 = vunpack.c.h.b16 %v1126
  %v5398 = vunpack.c.l.b16 %v1127
  %v5399 = vunpack.c.h.b16 %v1127
  %v5400 = vunpack.c.l.b16 %v1128
  %v5401 = vunpack.c.h.b16 %v1128
  %v5402 = vunpack.c.l.b16 %v1129
  %v5403 = vunpack.c.h.b16 %v1129
  %v5404 = vunpack.c.l.b16 %v1130
  %v5405 = vunpack.c.h.b16 %v1130
  %v5406 = vunpack.c.l.b16 %v1131
  %v5407 = vunpack.c.h.b16 %v1131
  %v5408 = vunpack.c.l.b16 %v1132
  %v5409 = vunpack.c.h.b16 %v1132
  %v5410 = vunpack.c.l.b16 %v1133
  %v5411 = vunpack.c.h.b16 %v1133
  %v5412 = vunpack.c.l.b16 %v1134
  %v5413 = vunpack.c.h.b16 %v1134
  %v5414 = vunpack.c.l.b16 %v1135
  %v5415 = vunpack.c.h.b16 %v1135
  %v5416 = vunpack.c.l.b16 %v1136
  %v5417 = vunpack.c.h.b16 %v1136
  %v5418 = vunpack.c.l.b16 %v1137
  %v5419 = vunpack.c.h.b16 %v1137
  %v5420 = vunpack.c.l.b16 %v1138
  %v5421 = vunpack.c.h.b16 %v1138
  %v5422 = vunpack.c.l.b16 %v1139
  %v5423 = vunpack.c.h.b16 %v1139
  %v5424 = vunpack.c.l.b16 %v1140
  %v5425 = vunpack.c.h.b16 %v1140
  %v5426 = vunpack.c.l.b16 %v1141
  %v5427 = vunpack.c.h.b16 %v1141
  %v5428 = vunpack.c.l.b16 %v1142
  %v5429 = vunpack.c.h.b16 %v1142
  %v5430 = vunpack.c.l.b16 %v1143
  %v5431 = vunpack.c.h.b16 %v1143
  %v5432 = vunpack.c.l.b16 %v1144
  %v5433 = vunpack.c.h.b16 %v1144
  %v5434 = vunpack.c.l.b16 %v1145
  %v5435 = vunpack.c.h.b16 %v1145
  %v5436 = vunpack.c.l.b16 %v1146
  %v5437 = vunpack.c.h.b16 %v1146
  %v5438 = vunpack.c.l.b16 %v1147
  %v5439 = vunpack.c.h.b16 %v1147
  %v5440 = vunpack.c.l.b16 %v1148
  %v5441 = vunpack.c.h.b16 %v1148
  %v5442 = vunpack.c.l.b16 %v1149
  %v5443 = vunpack.c.h.b16 %v1149
  %v5444 = vunpack.c.l.b16 %v1150
  %v5445 = vunpack.c.h.b16 %v1150
  %v5446 = vunpack.c.l.b16 %v1151
  %v5447 = vunpack.c.h.b16 %v1151
  %v5448 = vunpack.c.l.b16 %v1152
  %v5449 = vunpack.c.h.b16 %v1152
  %v5450 = vunpack.c.l.b16 %v1153
  %v5451 = vunpack.c.h.b16 %v1153
  %v5452 = vunpack.c.l.b16 %v1154
  %v5453 = vunpack.c.h.b16 %v1154
  %v5454 = vunpack.c.l.b16 %v1155
  %v5455 = vunpack.c.h.b16 %v1155
  %v5456 = vunpack.c.l.b16 %v1156
  %v5457 = vunpack.c.h.b16 %v1156
  %v5458 = vunpack.c.l.b16 %v1157
  %v5459 = vunpack.c.h.b16 %v1157
  %v5460 = vunpack.c.l.b16 %v1158
  %v5461 = vunpack.c.h.b16 %v1158
  %v5462 = vunpack.c.l.b16 %v1159
  %v5463 = vunpack.c.h.b16 %v1159
  %v5464 = vunpack.c.l.b16 %v1160
  %v5465 = vunpack.c.h.b16 %v1160
  %v5466 = vunpack.c.l.b16 %v1161
  %v5467 = vunpack.c.h.b16 %v1161
  %v5468 = vunpack.c.l.b16 %v1162
  %v5469 = vunpack.c.h.b16 %v1162
  %v5470 = vunpack.c.l.b16 %v1163
  %v5471 = vunpack.c.h.b16 %v1163
  %v5472 = vunpack.c.l.b16 %v1164
  %v5473 = vunpack.c.h.b16 %v1164
  %v5474 = vunpack.c.l.b16 %v1165
  %v5475 = vunpack.c.h.b16 %v1165
  %v5476 = vunpack.c.l.b16 %v1166
  %v5477 = vunpack.c.h.b16 %v1166
  %v5478 = vunpack.c.l.b16 %v1167
  %v5479 = vunpack.c.h.b16 %v1167
  %v5480 = vunpack.c.l.b16 %v1168
  %v5481 = vunpack.c.h.b16 %v1168
  %v5482 = vunpack.c.l.b16 %v1169
  %v5483 = vunpack.c.h.b16 %v1169
  %v5484 = vunpack.c.l.b16 %v1170
  %v5485 = vunpack.c.h.b16 %v1170
  %v5486 = vunpack.c.l.b16 %v1171
  %v5487 = vunpack.c.h.b16 %v1171
  %v5488 = vunpack.c.l.b16 %v1172
  %v5489 = vunpack.c.h.b16 %v1172
  %v5490 = vunpack.c.l.b16 %v1173
  %v5491 = vunpack.c.h.b16 %v1173
  %v5492 = vunpack.c.l.b16 %v1174
  %v5493 = vunpack.c.h.b16 %v1174
  %v5494 = vunpack.c.l.b16 %v1175
  %v5495 = vunpack.c.h.b16 %v1175
  %v5496 = vunpack.c.l.b16 %v1176
  %v5497 = vunpack.c.h.b16 %v1176
  %v5498 = vunpack.c.l.b16 %v1177
  %v5499 = vunpack.c.h.b16 %v1177
  %v5500 = vunpack.c.l.b16 %v1178
  %v5501 = vunpack.c.h.b16 %v1178
  %v5502 = vunpack.c.l.b16 %v1179
  %v5503 = vunpack.c.h.b16 %v1179
  %v5504 = vunpack.c.l.b16 %v1180
  %v5505 = vunpack.c.h.b16 %v1180
  %v5506 = vunpack.c.l.b16 %v1181
  %v5507 = vunpack.c.h.b16 %v1181
  %v5508 = vunpack.c.l.b16 %v1182
  %v5509 = vunpack.c.h.b16 %v1182
  %v5510 = vunpack.c.l.b16 %v1183
  %v5511 = vunpack.c.h.b16 %v1183
  %v5512 = vunpack.c.l.b16 %v1184
  %v5513 = vunpack.c.h.b16 %v1184
  %v5514 = vunpack.c.l.b16 %v1185
  %v5515 = vunpack.c.h.b16 %v1185
  %v5516 = vunpack.c.l.b16 %v1186
  %v5517 = vunpack.c.h.b16 %v1186
  %v5518 = vunpack.c.l.b16 %v1187
  %v5519 = vunpack.c.h.b16 %v1187
  %v5520 = vunpack.c.l.b16 %v1188
  %v5521 = vunpack.c.h.b16 %v1188
  %v5522 = vunpack.c.l.b16 %v1189
  %v5523 = vunpack.c.h.b16 %v1189
  %v5524 = vunpack.c.l.b16 %v1190
  %v5525 = vunpack.c.h.b16 %v1190
  %v5526 = vunpack.c.l.b16 %v1191
  %v5527 = vunpack.c.h.b16 %v1191
  %v5528 = vunpack.c.l.b16 %v1192
  %v5529 = vunpack.c.h.b16 %v1192
  %v5530 = vunpack.c.l.b16 %v1193
  %v5531 = vunpack.c.h.b16 %v1193
  %v5532 = vunpack.c.l.b16 %v1194
  %v5533 = vunpack.c.h.b16 %v1194
  %v5534 = vunpack.c.l.b16 %v1195
  %v5535 = vunpack.c.h.b16 %v1195
  %v5536 = vunpack.c.l.b16 %v1196
  %v5537 = vunpack.c.h.b16 %v1196
  %v5538 = vunpack.c.l.b16 %v1197
  %v5539 = vunpack.c.h.b16 %v1197
  %v5540 = vunpack.c.l.b16 %v1198
  %v5541 = vunpack.c.h.b16 %v1198
  %v5542 = vunpack.c.l.b16 %v1199
  %v5543 = vunpack.c.h.b16 %v1199
  %v5544 = vunpack.c.l.b16 %v1200
  %v5545 = vunpack.c.h.b16 %v1200
  %v5546 = vunpack.c.l.b16 %v1201
  %v5547 = vunpack.c.h.b16 %v1201
  %v5548 = vunpack.c.l.b16 %v1202
  %v5549 = vunpack.c.h.b16 %v1202
  %v5550 = vunpack.c.l.b16 %v1203
  %v5551 = vunpack.c.h.b16 %v1203
  %v5552 = vunpack.c.l.b16 %v1204
  %v5553 = vunpack.c.h.b16 %v1204
  %v5554 = vunpack.c.l.b16 %v1205
  %v5555 = vunpack.c.h.b16 %v1205
  %v5556 = vunpack.c.l.b16 %v1206
  %v5557 = vunpack.c.h.b16 %v1206
  %v5558 = vunpack.c.l.b16 %v1207
  %v5559 = vunpack.c.h.b16 %v1207
  %v5560 = vunpack.c.l.b16 %v1208
  %v5561 = vunpack.c.h.b16 %v1208
  %v5562 = vunpack.c.l.b16 %v1209
  %v5563 = vunpack.c.h.b16 %v1209
  %v5564 = vunpack.c.l.b16 %v1210
  %v5565 = vunpack.c.h.b16 %v1210
  %v5566 = vunpack.c.l.b16 %v1211
  %v5567 = vunpack.c.h.b16 %v1211
  %v5568 = vunpack.c.l.b16 %v1212
  %v5569 = vunpack.c.h.b16 %v1212
  %v5570 = vunpack.c.l.b16 %v1213
  %v5571 = vunpack.c.h.b16 %v1213
  %v5572 = vunpack.c.l.b16 %v1214
  %v5573 = vunpack.c.h.b16 %v1214
  %v5574 = vunpack.c.l.b16 %v1215
  %v5575 = vunpack.c.h.b16 %v1215
  %v5576 = vunpack.c.l.b16 %v1216
  %v5577 = vunpack.c.h.b16 %v1216
  %v5578 = vunpack.c.l.b16 %v1217
  %v5579 = vunpack.c.h.b16 %v1217
  %v5580 = vunpack.c.l.b16 %v1218
  %v5581 = vunpack.c.h.b16 %v1218
  %v5582 = vunpack.c.l.b16 %v1219
  %v5583 = vunpack.c.h.b16 %v1219
  %v5584 = vunpack.c.l.b16 %v1220
  %v5585 = vunpack.c.h.b16 %v1220
  %v5586 = vunpack.c.l.b16 %v1221
  %v5587 = vunpack.c.h.b16 %v1221
  %v5588 = vunpack.c.l.b16 %v1222
  %v5589 = vunpack.c.h.b16 %v1222
  %v5590 = vunpack.c.l.b16 %v1223
  %v5591 = vunpack.c.h.b16 %v1223
  %v5592 = vunpack.c.l.b16 %v1224
  %v5593 = vunpack.c.h.b16 %v1224
  %v5594 = vunpack.c.l.b16 %v1225
  %v5595 = vunpack.c.h.b16 %v1225
  %v5596 = vunpack.c.l.b16 %v1226
  %v5597 = vunpack.c.h.b16 %v1226
  %v5598 = vunpack.c.l.b16 %v1227
  %v5599 = vunpack.c.h.b16 %v1227
  %v5600 = vunpack.c.l.b16 %v1228
  %v5601 = vunpack.c.h.b16 %v1228
  %v5602 = vunpack.c.l.b16 %v1229
  %v5603 = vunpack.c.h.b16 %v1229
  %v5604 = vunpack.c.l.b16 %v1230
  %v5605 = vunpack.c.h.b16 %v1230
  %v5606 = vunpack.c.l.b16 %v1231
  %v5607 = vunpack.c.h.b16 %v1231
  %v5608 = vunpack.c.l.b16 %v1232
  %v5609 = vunpack.c.h.b16 %v1232
  %v5610 = vunpack.c.l.b16 %v1233
  %v5611 = vunpack.c.h.b16 %v1233
  %v5612 = vunpack.c.l.b16 %v1234
  %v5613 = vunpack.c.h.b16 %v1234
  %v5614 = vunpack.c.l.b16 %v1235
  %v5615 = vunpack.c.h.b16 %v1235
  %v5616 = vunpack.c.l.b16 %v1236
  %v5617 = vunpack.c.h.b16 %v1236
  %v5618 = vunpack.c.l.b16 %v1237
  %v5619 = vunpack.c.h.b16 %v1237
  %v5620 = vunpack.c.l.b16 %v1238
  %v5621 = vunpack.c.h.b16 %v1238
  %v5622 = vunpack.c.l.b16 %v1239
  %v5623 = vunpack.c.h.b16 %v1239
  %v5624 = vunpack.c.l.b16 %v1240
  %v5625 = vunpack.c.h.b16 %v1240
  %v5626 = vunpack.c.l.b16 %v1241
  %v5627 = vunpack.c.h.b16 %v1241
  %v5628 = vunpack.c.l.b16 %v1242
  %v5629 = vunpack.c.h.b16 %v1242
  %v5630 = vunpack.c.l.b16 %v1243
  %v5631 = vunpack.c.h.b16 %v1243
  %v5632 = vunpack.c.l.b16 %v1244
  %v5633 = vunpack.c.h.b16 %v1244
  %v5634 = vunpack.c.l.b16 %v1245
  %v5635 = vunpack.c.h.b16 %v1245
  %v5636 = vunpack.c.l.b16 %v1246
  %v5637 = vunpack.c.h.b16 %v1246
  %v5638 = vunpack.c.l.b16 %v1247
  %v5639 = vunpack.c.h.b16 %v1247
  %v5640 = vunpack.c.l.b16 %v1248
  %v5641 = vunpack.c.h.b16 %v1248
  %v5642 = vunpack.c.l.b16 %v1249
  %v5643 = vunpack.c.h.b16 %v1249
  %v5644 = vunpack.c.l.b16 %v1250
  %v5645 = vunpack.c.h.b16 %v1250
  %v5646 = vunpack.c.l.b16 %v1251
  %v5647 = vunpack.c.h.b16 %v1251
  %v5648 = vunpack.c.l.b16 %v1252
  %v5649 = vunpack.c.h.b16 %v1252
  %v5650 = vunpack.c.l.b16 %v1253
  %v5651 = vunpack.c.h.b16 %v1253
  %v5652 = vunpack.c.l.b16 %v1254
  %v5653 = vunpack.c.h.b16 %v1254
  %v5654 = vunpack.c.l.b16 %v1255
  %v5655 = vunpack.c.h.b16 %v1255
  %v5656 = vunpack.c.l.b16 %v1256
  %v5657 = vunpack.c.h.b16 %v1256
  %v5658 = vunpack.c.l.b16 %v1257
  %v5659 = vunpack.c.h.b16 %v1257
  %v5660 = vunpack.c.l.b16 %v1258
  %v5661 = vunpack.c.h.b16 %v1258
  %v5662 = vunpack.c.l.b16 %v1259
  %v5663 = vunpack.c.h.b16 %v1259
  %v5664 = vunpack.c.l.b16 %v1260
  %v5665 = vunpack.c.h.b16 %v1260
  %v5666 = vunpack.c.l.b16 %v1261
  %v5667 = vunpack.c.h.b16 %v1261
  %v5668 = vunpack.c.l.b16 %v1262
  %v5669 = vunpack.c.h.b16 %v1262
  %v5670 = vunpack.c.l.b16 %v1263
  %v5671 = vunpack.c.h.b16 %v1263
  %v5672 = vunpack.c.l.b16 %v1264
  %v5673 = vunpack.c.h.b16 %v1264
  %v5674 = vunpack.c.l.b16 %v1265
  %v5675 = vunpack.c.h.b16 %v1265
  %v5676 = vunpack.c.l.b16 %v1266
  %v5677 = vunpack.c.h.b16 %v1266
  %v5678 = vunpack.c.l.b16 %v1267
  %v5679 = vunpack.c.h.b16 %v1267
  %v5680 = vunpack.c.l.b16 %v1268
  %v5681 = vunpack.c.h.b16 %v1268
  %v5682 = vunpack.c.l.b16 %v1269
  %v5683 = vunpack.c.h.b16 %v1269
  %v5684 = vunpack.c.l.b16 %v1270
  %v5685 = vunpack.c.h.b16 %v1270
  %v5686 = vunpack.c.l.b16 %v1271
  %v5687 = vunpack.c.h.b16 %v1271
  %v5688 = vunpack.c.l.b16 %v1272
  %v5689 = vunpack.c.h.b16 %v1272
  %v5690 = vunpack.c.l.b16 %v1273
  %v5691 = vunpack.c.h.b16 %v1273
  %v5692 = vunpack.c.l.b16 %v1274
  %v5693 = vunpack.c.h.b16 %v1274
  %v5694 = vunpack.c.l.b16 %v1275
  %v5695 = vunpack.c.h.b16 %v1275
  %v5696 = vunpack.c.l.b16 %v1276
  %v5697 = vunpack.c.h.b16 %v1276
  %v5698 = vunpack.c.l.b16 %v1277
  %v5699 = vunpack.c.h.b16 %v1277
  %v5700 = vunpack.c.l.b16 %v1278
  %v5701 = vunpack.c.h.b16 %v1278
  %v5702 = vunpack.c.l.b16 %v1279
  %v5703 = vunpack.c.h.b16 %v1279
  %v5704 = vunpack.c.l.b16 %v1280
  %v5705 = vunpack.c.h.b16 %v1280
  %v5706 = vunpack.c.l.b16 %v1281
  %v5707 = vunpack.c.h.b16 %v1281
  %v5708 = vunpack.c.l.b16 %v1282
  %v5709 = vunpack.c.h.b16 %v1282
  %v5710 = vunpack.c.l.b16 %v1283
  %v5711 = vunpack.c.h.b16 %v1283
  %v5712 = vunpack.c.l.b16 %v1284
  %v5713 = vunpack.c.h.b16 %v1284
  %v5714 = vunpack.c.l.b16 %v1285
  %v5715 = vunpack.c.h.b16 %v1285
  %v5716 = vunpack.c.l.b16 %v1286
  %v5717 = vunpack.c.h.b16 %v1286
  %v5718 = vunpack.c.l.b16 %v1287
  %v5719 = vunpack.c.h.b16 %v1287
  %v5720 = vunpack.c.l.b16 %v1288
  %v5721 = vunpack.c.h.b16 %v1288
  %v5722 = vunpack.c.l.b16 %v1289
  %v5723 = vunpack.c.h.b16 %v1289
  %v5724 = vunpack.c.l.b16 %v1290
  %v5725 = vunpack.c.h.b16 %v1290
  %v5726 = vunpack.c.l.b16 %v1291
  %v5727 = vunpack.c.h.b16 %v1291
  %v5728 = vunpack.c.l.b16 %v1292
  %v5729 = vunpack.c.h.b16 %v1292
  %v5730 = vunpack.c.l.b16 %v1293
  %v5731 = vunpack.c.h.b16 %v1293
  %v5732 = vunpack.c.l.b16 %v1294
  %v5733 = vunpack.c.h.b16 %v1294
  %v5734 = vunpack.c.l.b16 %v1295
  %v5735 = vunpack.c.h.b16 %v1295
  %v5736 = vunpack.c.l.b16 %v1296
  %v5737 = vunpack.c.h.b16 %v1296
  %v5738 = vunpack.c.l.b16 %v1297
  %v5739 = vunpack.c.h.b16 %v1297
  %v5740 = vunpack.c.l.b16 %v1298
  %v5741 = vunpack.c.h.b16 %v1298
  %v5742 = vunpack.c.l.b16 %v1299
  %v5743 = vunpack.c.h.b16 %v1299
  %v5744 = vunpack.c.l.b16 %v1300
  %v5745 = vunpack.c.h.b16 %v1300
  %v5746 = vunpack.c.l.b16 %v1301
  %v5747 = vunpack.c.h.b16 %v1301
  %v5748 = vunpack.c.l.b16 %v1302
  %v5749 = vunpack.c.h.b16 %v1302
  %v5750 = vunpack.c.l.b16 %v1303
  %v5751 = vunpack.c.h.b16 %v1303
  %v5752 = vunpack.c.l.b16 %v1304
  %v5753 = vunpack.c.h.b16 %v1304
  %v5754 = vunpack.c.l.b16 %v1305
  %v5755 = vunpack.c.h.b16 %v1305
  %v5756 = vunpack.c.l.b16 %v1306
  %v5757 = vunpack.c.h.b16 %v1306
  %v5758 = vunpack.c.l.b16 %v1307
  %v5759 = vunpack.c.h.b16 %v1307
  %v5760 = vunpack.c.l.b16 %v1308
  %v5761 = vunpack.c.h.b16 %v1308
  %v5762 = vunpack.c.l.b16 %v1309
  %v5763 = vunpack.c.h.b16 %v1309
  %v5764 = vunpack.c.l.b16 %v1310
  %v5765 = vunpack.c.h.b16 %v1310
  %v5766 = vunpack.c.l.b16 %v1311
  %v5767 = vunpack.c.h.b16 %v1311
  %v5768 = vunpack.c.l.b16 %v1312
  %v5769 = vunpack.c.h.b16 %v1312
  %v5770 = vunpack.c.l.b16 %v1313
  %v5771 = vunpack.c.h.b16 %v1313
  %v5772 = vunpack.c.l.b16 %v1314
  %v5773 = vunpack.c.h.b16 %v1314
  %v5774 = vunpack.c.l.b16 %v1315
  %v5775 = vunpack.c.h.b16 %v1315
  %v5776 = vunpack.c.l.b16 %v1316
  %v5777 = vunpack.c.h.b16 %v1316
  %v5778 = vunpack.c.l.b16 %v1317
  %v5779 = vunpack.c.h.b16 %v1317
  %v5780 = vunpack.c.l.b16 %v1318
  %v5781 = vunpack.c.h.b16 %v1318
  %v5782 = vunpack.c.l.b16 %v1319
  %v5783 = vunpack.c.h.b16 %v1319
  %v5784 = vunpack.c.l.b16 %v1320
  %v5785 = vunpack.c.h.b16 %v1320
  %v5786 = vunpack.c.l.b16 %v1321
  %v5787 = vunpack.c.h.b16 %v1321
  %v5788 = vunpack.c.l.b16 %v1322
  %v5789 = vunpack.c.h.b16 %v1322
  %v5790 = vunpack.c.l.b16 %v1323
  %v5791 = vunpack.c.h.b16 %v1323
  %v5792 = vunpack.c.l.b16 %v1324
  %v5793 = vunpack.c.h.b16 %v1324
  %v5794 = vunpack.c.l.b16 %v1325
  %v5795 = vunpack.c.h.b16 %v1325
  %v5796 = vunpack.c.l.b16 %v1326
  %v5797 = vunpack.c.h.b16 %v1326
  %v5798 = vunpack.c.l.b16 %v1327
  %v5799 = vunpack.c.h.b16 %v1327
  %v5800 = vunpack.c.l.b16 %v1328
  %v5801 = vunpack.c.h.b16 %v1328
  %v5802 = vunpack.c.l.b16 %v1329
  %v5803 = vunpack.c.h.b16 %v1329
  %v5804 = vunpack.c.l.b16 %v1330
  %v5805 = vunpack.c.h.b16 %v1330
  %v5806 = vunpack.c.l.b16 %v1331
  %v5807 = vunpack.c.h.b16 %v1331
  %v5808 = vunpack.c.l.b16 %v1332
  %v5809 = vunpack.c.h.b16 %v1332
  %v5810 = vunpack.c.l.b16 %v1333
  %v5811 = vunpack.c.h.b16 %v1333
  %v5812 = vunpack.c.l.b16 %v1334
  %v5813 = vunpack.c.h.b16 %v1334
  %v5814 = vunpack.c.l.b16 %v1335
  %v5815 = vunpack.c.h.b16 %v1335
  %v5816 = vunpack.c.l.b16 %v1336
  %v5817 = vunpack.c.h.b16 %v1336
  %v5818 = vunpack.c.l.b16 %v1337
  %v5819 = vunpack.c.h.b16 %v1337
  %v5820 = vunpack.c.l.b16 %v1338
  %v5821 = vunpack.c.h.b16 %v1338
  %v5822 = vunpack.c.l.b16 %v1339
  %v5823 = vunpack.c.h.b16 %v1339
  %v5824 = vunpack.c.l.b16 %v1340
  %v5825 = vunpack.c.h.b16 %v1340
  %v5826 = vunpack.c.l.b16 %v1341
  %v5827 = vunpack.c.h.b16 %v1341
  %v5828 = vunpack.c.l.b16 %v1342
  %v5829 = vunpack.c.h.b16 %v1342
  %v5830 = vunpack.c.l.b16 %v1343
  %v5831 = vunpack.c.h.b16 %v1343
  %v5832 = vunpack.c.l.b16 %v1344
  %v5833 = vunpack.c.h.b16 %v1344
  %v5834 = vunpack.c.l.b16 %v1345
  %v5835 = vunpack.c.h.b16 %v1345
  %v5836 = vunpack.c.l.b16 %v1346
  %v5837 = vunpack.c.h.b16 %v1346
  %v5838 = vunpack.c.l.b16 %v1347
  %v5839 = vunpack.c.h.b16 %v1347
  %v5840 = vunpack.c.l.b16 %v1348
  %v5841 = vunpack.c.h.b16 %v1348
  %v5842 = vunpack.c.l.b16 %v1349
  %v5843 = vunpack.c.h.b16 %v1349
  %v5844 = vunpack.c.l.b16 %v1350
  %v5845 = vunpack.c.h.b16 %v1350
  %v5846 = vunpack.c.l.b16 %v1351
  %v5847 = vunpack.c.h.b16 %v1351
  %v5848 = vunpack.c.l.b16 %v1352
  %v5849 = vunpack.c.h.b16 %v1352
  %v5850 = vunpack.c.l.b16 %v1353
  %v5851 = vunpack.c.h.b16 %v1353
  %v5852 = vunpack.c.l.b16 %v1354
  %v5853 = vunpack.c.h.b16 %v1354
  %v5854 = vunpack.c.l.b16 %v1355
  %v5855 = vunpack.c.h.b16 %v1355
  %v5856 = vunpack.c.l.b16 %v1356
  %v5857 = vunpack.c.h.b16 %v1356
  %v5858 = vunpack.c.l.b16 %v1357
  %v5859 = vunpack.c.h.b16 %v1357
  %v5860 = vunpack.c.l.b16 %v1358
  %v5861 = vunpack.c.h.b16 %v1358
  %v5862 = vunpack.c.l.b16 %v1359
  %v5863 = vunpack.c.h.b16 %v1359
  %v5864 = vunpack.c.l.b16 %v1360
  %v5865 = vunpack.c.h.b16 %v1360
  %v5866 = vunpack.c.l.b16 %v1361
  %v5867 = vunpack.c.h.b16 %v1361
  %v5868 = vunpack.c.l.b16 %v1362
  %v5869 = vunpack.c.h.b16 %v1362
  %v5870 = vunpack.c.l.b16 %v1363
  %v5871 = vunpack.c.h.b16 %v1363
  %v5872 = vunpack.c.l.b16 %v1364
  %v5873 = vunpack.c.h.b16 %v1364
  %v5874 = vunpack.c.l.b16 %v1365
  %v5875 = vunpack.c.h.b16 %v1365
  %v5876 = vunpack.c.l.b16 %v1366
  %v5877 = vunpack.c.h.b16 %v1366
  %v5878 = vunpack.c.l.b16 %v1367
  %v5879 = vunpack.c.h.b16 %v1367
  %v5880 = vunpack.c.l.b16 %v1368
  %v5881 = vunpack.c.h.b16 %v1368
  %v5882 = vunpack.c.l.b16 %v1369
  %v5883 = vunpack.c.h.b16 %v1369
  %v5884 = vunpack.c.l.b16 %v1370
  %v5885 = vunpack.c.h.b16 %v1370
  %v5886 = vunpack.c.l.b16 %v1371
  %v5887 = vunpack.c.h.b16 %v1371
  %v5888 = vunpack.c.l.b16 %v1372
  %v5889 = vunpack.c.h.b16 %v1372
  %v5890 = vunpack.c.l.b16 %v1373
  %v5891 = vunpack.c.h.b16 %v1373
  %v5892 = vunpack.c.l.b16 %v1374
  %v5893 = vunpack.c.h.b16 %v1374
  %v5894 = vunpack.c.l.b16 %v1375
  %v5895 = vunpack.c.h.b16 %v1375
  %v5896 = vunpack.c.l.b16 %v1376
  %v5897 = vunpack.c.h.b16 %v1376
  %v5898 = vunpack.c.l.b16 %v1377
  %v5899 = vunpack.c.h.b16 %v1377
  %v5900 = vunpack.c.l.b16 %v1378
  %v5901 = vunpack.c.h.b16 %v1378
  %v5902 = vunpack.c.l.b16 %v1379
  %v5903 = vunpack.c.h.b16 %v1379
  %v5904 = vunpack.c.l.b16 %v1380
  %v5905 = vunpack.c.h.b16 %v1380
  %v5906 = vunpack.c.l.b16 %v1381
  %v5907 = vunpack.c.h.b16 %v1381
  %v5908 = vunpack.c.l.b16 %v1382
  %v5909 = vunpack.c.h.b16 %v1382
  %v5910 = vunpack.c.l.b16 %v1383
  %v5911 = vunpack.c.h.b16 %v1383
  %v5912 = vunpack.c.l.b16 %v1384
  %v5913 = vunpack.c.h.b16 %v1384
  %v5914 = vunpack.c.l.b16 %v1385
  %v5915 = vunpack.c.h.b16 %v1385
  %v5916 = vunpack.c.l.b16 %v1386
  %v5917 = vunpack.c.h.b16 %v1386
  %v5918 = vunpack.c.l.b16 %v1387
  %v5919 = vunpack.c.h.b16 %v1387
  %v5920 = vunpack.c.l.b16 %v1388
  %v5921 = vunpack.c.h.b16 %v1388
  %v5922 = vunpack.c.l.b16 %v1389
  %v5923 = vunpack.c.h.b16 %v1389
  %v5924 = vunpack.c.l.b16 %v1390
  %v5925 = vunpack.c.h.b16 %v1390
  %v5926 = vunpack.c.l.b16 %v1391
  %v5927 = vunpack.c.h.b16 %v1391
  %v5928 = vunpack.c.l.b16 %v1392
  %v5929 = vunpack.c.h.b16 %v1392
  %v5930 = vunpack.c.l.b16 %v1393
  %v5931 = vunpack.c.h.b16 %v1393
  %v5932 = vunpack.c.l.b16 %v1394
  %v5933 = vunpack.c.h.b16 %v1394
  %v5934 = vunpack.c.l.b16 %v1395
  %v5935 = vunpack.c.h.b16 %v1395
  %v5936 = vunpack.c.l.b16 %v1396
  %v5937 = vunpack.c.h.b16 %v1396
  %v5938 = vunpack.c.l.b16 %v1397
  %v5939 = vunpack.c.h.b16 %v1397
  %v5940 = vunpack.c.l.b16 %v1398
  %v5941 = vunpack.c.h.b16 %v1398
  %v5942 = vunpack.c.l.b16 %v1399
  %v5943 = vunpack.c.h.b16 %v1399
  %v5944 = vunpack.c.l.b16 %v1400
  %v5945 = vunpack.c.h.b16 %v1400
  %v5946 = vunpack.c.l.b16 %v1401
  %v5947 = vunpack.c.h.b16 %v1401
  %v5948 = vunpack.c.l.b16 %v1402
  %v5949 = vunpack.c.h.b16 %v1402
  %v5950 = vunpack.c.l.b16 %v1403
  %v5951 = vunpack.c.h.b16 %v1403
  %v5952 = vunpack.c.l.b16 %v1404
  %v5953 = vunpack.c.h.b16 %v1404
  %v5954 = vunpack.c.l.b16 %v1405
  %v5955 = vunpack.c.h.b16 %v1405
  %v5956 = vunpack.c.l.b16 %v1406
  %v5957 = vunpack.c.h.b16 %v1406
  %v5958 = vunpack.c.l.b16 %v1407
  %v5959 = vunpack.c.h.b16 %v1407
  %v5960 = vunpack.c.l.b16 %v1408
  %v5961 = vunpack.c.h.b16 %v1408
  %v5962 = vunpack.c.l.b16 %v1409
  %v5963 = vunpack.c.h.b16 %v1409
  %v5964 = vunpack.c.l.b16 %v1410
  %v5965 = vunpack.c.h.b16 %v1410
  %v5966 = vunpack.c.l.b16 %v1411
  %v5967 = vunpack.c.h.b16 %v1411
  %v5968 = vunpack.c.l.b16 %v1412
  %v5969 = vunpack.c.h.b16 %v1412
  %v5970 = vunpack.c.l.b16 %v1413
  %v5971 = vunpack.c.h.b16 %v1413
  %v5972 = vunpack.c.l.b16 %v1414
  %v5973 = vunpack.c.h.b16 %v1414
  %v5974 = vunpack.c.l.b16 %v1415
  %v5975 = vunpack.c.h.b16 %v1415
  %v5976 = vunpack.c.l.b16 %v1416
  %v5977 = vunpack.c.h.b16 %v1416
  %v5978 = vunpack.c.l.b16 %v1417
  %v5979 = vunpack.c.h.b16 %v1417
  %v5980 = vunpack.c.l.b16 %v1418
  %v5981 = vunpack.c.h.b16 %v1418
  %v5982 = vunpack.c.l.b16 %v1419
  %v5983 = vunpack.c.h.b16 %v1419
  %v5984 = vunpack.c.l.b16 %v1420
  %v5985 = vunpack.c.h.b16 %v1420
  %v5986 = vunpack.c.l.b16 %v1421
  %v5987 = vunpack.c.h.b16 %v1421
  %v5988 = vunpack.c.l.b16 %v1422
  %v5989 = vunpack.c.h.b16 %v1422
  %v5990 = vunpack.c.l.b16 %v1423
  %v5991 = vunpack.c.h.b16 %v1423
  %v5992 = vunpack.c.l.b16 %v1424
  %v5993 = vunpack.c.h.b16 %v1424
  %v5994 = vunpack.c.l.b16 %v1425
  %v5995 = vunpack.c.h.b16 %v1425
  %v5996 = vunpack.c.l.b16 %v1426
  %v5997 = vunpack.c.h.b16 %v1426
  %v5998 = vunpack.c.l.b16 %v1427
  %v5999 = vunpack.c.h.b16 %v1427
  %v6000 = vunpack.c.l.b16 %v1428
  %v6001 = vunpack.c.h.b16 %v1428
  %v6002 = vunpack.c.l.b16 %v1429
  %v6003 = vunpack.c.h.b16 %v1429
  %v6004 = vunpack.c.l.b16 %v1430
  %v6005 = vunpack.c.h.b16 %v1430
  %v6006 = vunpack.c.l.b16 %v1431
  %v6007 = vunpack.c.h.b16 %v1431
  %v6008 = vunpack.c.l.b16 %v1432
  %v6009 = vunpack.c.h.b16 %v1432
  %v6010 = vunpack.c.l.b16 %v1433
  %v6011 = vunpack.c.h.b16 %v1433
  %v6012 = vunpack.c.l.b16 %v1434
  %v6013 = vunpack.c.h.b16 %v1434
  %v6014 = vunpack.c.l.b16 %v1435
  %v6015 = vunpack.c.h.b16 %v1435
  %v6016 = vunpack.c.l.b16 %v1436
  %v6017 = vunpack.c.h.b16 %v1436
  %v6018 = vunpack.c.l.b16 %v1437
  %v6019 = vunpack.c.h.b16 %v1437
  %v6020 = vunpack.c.l.b16 %v1438
  %v6021 = vunpack.c.h.b16 %v1438
  %v6022 = vunpack.c.l.b16 %v1439
  %v6023 = vunpack.c.h.b16 %v1439
  %v6024 = vunpack.c.l.b16 %v1440
  %v6025 = vunpack.c.h.b16 %v1440
  %v6026 = vunpack.c.l.b16 %v1441
  %v6027 = vunpack.c.h.b16 %v1441
  %v6028 = vunpack.c.l.b16 %v1442
  %v6029 = vunpack.c.h.b16 %v1442
  %v6030 = vunpack.c.l.b16 %v1443
  %v6031 = vunpack.c.h.b16 %v1443
  %v6032 = vunpack.c.l.b16 %v1444
  %v6033 = vunpack.c.h.b16 %v1444
  %v6034 = vunpack.c.l.b16 %v1445
  %v6035 = vunpack.c.h.b16 %v1445
  %v6036 = vunpack.c.l.b16 %v1446
  %v6037 = vunpack.c.h.b16 %v1446
  %v6038 = vunpack.c.l.b16 %v1447
  %v6039 = vunpack.c.h.b16 %v1447
  %v6040 = vunpack.c.l.b16 %v1448
  %v6041 = vunpack.c.h.b16 %v1448
  %v6042 = vunpack.c.l.b16 %v1449
  %v6043 = vunpack.c.h.b16 %v1449
  %v6044 = vunpack.c.l.b16 %v1450
  %v6045 = vunpack.c.h.b16 %v1450
  %v6046 = vunpack.c.l.b16 %v1451
  %v6047 = vunpack.c.h.b16 %v1451
  %v6048 = vunpack.c.l.b16 %v1452
  %v6049 = vunpack.c.h.b16 %v1452
  %v6050 = vunpack.c.l.b16 %v1453
  %v6051 = vunpack.c.h.b16 %v1453
  %v6052 = vunpack.c.l.b16 %v1454
  %v6053 = vunpack.c.h.b16 %v1454
  %v6054 = vunpack.c.l.b16 %v1455
  %v6055 = vunpack.c.h.b16 %v1455
  %v6056 = vunpack.c.l.b16 %v1456
  %v6057 = vunpack.c.h.b16 %v1456
  %v6058 = vunpack.c.l.b16 %v1457
  %v6059 = vunpack.c.h.b16 %v1457
  %v6060 = vunpack.c.l.b16 %v1458
  %v6061 = vunpack.c.h.b16 %v1458
  %v6062 = vunpack.c.l.b16 %v1459
  %v6063 = vunpack.c.h.b16 %v1459
  %v6064 = vunpack.c.l.b16 %v1460
  %v6065 = vunpack.c.h.b16 %v1460
  %v6066 = vunpack.c.l.b16 %v1461
  %v6067 = vunpack.c.h.b16 %v1461
  %v6068 = vunpack.c.l.b16 %v1462
  %v6069 = vunpack.c.h.b16 %v1462
  %v6070 = vunpack.c.l.b16 %v1463
  %v6071 = vunpack.c.h.b16 %v1463
  %v6072 = vunpack.c.l.b16 %v1464
  %v6073 = vunpack.c.h.b16 %v1464
  %v6074 = vunpack.c.l.b16 %v1465
  %v6075 = vunpack.c.h.b16 %v1465
  %v6076 = vunpack.c.l.b16 %v1466
  %v6077 = vunpack.c.h.b16 %v1466
  %v6078 = vunpack.c.l.b16 %v1467
  %v6079 = vunpack.c.h.b16 %v1467
  %v6080 = vunpack.c.l.b16 %v1468
  %v6081 = vunpack.c.h.b16 %v1468
  %v6082 = vunpack.c.l.b16 %v1469
  %v6083 = vunpack.c.h.b16 %v1469
  %v6084 = vunpack.c.l.b16 %v1470
  %v6085 = vunpack.c.h.b16 %v1470
  %v6086 = vunpack.c.l.b16 %v1471
  %v6087 = vunpack.c.h.b16 %v1471
  %v6088 = vunpack.c.l.b16 %v1472
  %v6089 = vunpack.c.h.b16 %v1472
  %v6090 = vunpack.c.l.b16 %v1473
  %v6091 = vunpack.c.h.b16 %v1473
  %v6092 = vunpack.c.l.b16 %v1474
  %v6093 = vunpack.c.h.b16 %v1474
  %v6094 = vunpack.c.l.b16 %v1475
  %v6095 = vunpack.c.h.b16 %v1475
  %v6096 = vunpack.c.l.b16 %v1476
  %v6097 = vunpack.c.h.b16 %v1476
  %v6098 = vunpack.c.l.b16 %v1477
  %v6099 = vunpack.c.h.b16 %v1477
  %v6100 = vunpack.c.l.b16 %v1478
  %v6101 = vunpack.c.h.b16 %v1478
  %v6102 = vunpack.c.l.b16 %v1479
  %v6103 = vunpack.c.h.b16 %v1479
  %v6104 = vunpack.c.l.b16 %v1480
  %v6105 = vunpack.c.h.b16 %v1480
  %v6106 = vunpack.c.l.b16 %v1481
  %v6107 = vunpack.c.h.b16 %v1481
  %v6108 = vunpack.c.l.b16 %v1482
  %v6109 = vunpack.c.h.b16 %v1482
  %v6110 = vunpack.c.l.b16 %v1483
  %v6111 = vunpack.c.h.b16 %v1483
  %v6112 = vunpack.c.l.b16 %v1484
  %v6113 = vunpack.c.h.b16 %v1484
  %v6114 = vunpack.c.l.b16 %v1485
  %v6115 = vunpack.c.h.b16 %v1485
  %v6116 = vunpack.c.l.b16 %v1486
  %v6117 = vunpack.c.h.b16 %v1486
  %v6118 = vunpack.c.l.b16 %v1487
  %v6119 = vunpack.c.h.b16 %v1487
  %v6120 = vunpack.c.l.b16 %v1488
  %v6121 = vunpack.c.h.b16 %v1488
  %v6122 = vunpack.c.l.b16 %v1489
  %v6123 = vunpack.c.h.b16 %v1489
  %v6124 = vunpack.c.l.b16 %v1490
  %v6125 = vunpack.c.h.b16 %v1490
  %v6126 = vunpack.c.l.b16 %v1491
  %v6127 = vunpack.c.h.b16 %v1491
  %v6128 = vunpack.c.l.b16 %v1492
  %v6129 = vunpack.c.h.b16 %v1492
  %v6130 = vunpack.c.l.b16 %v1493
  %v6131 = vunpack.c.h.b16 %v1493
  %v6132 = vunpack.c.l.b16 %v1494
  %v6133 = vunpack.c.h.b16 %v1494
  %v6134 = vunpack.c.l.b16 %v1495
  %v6135 = vunpack.c.h.b16 %v1495
  %v6136 = vunpack.c.l.b16 %v1496
  %v6137 = vunpack.c.h.b16 %v1496
  %v6138 = vunpack.c.l.b16 %v1497
  %v6139 = vunpack.c.h.b16 %v1497
  %v6140 = vunpack.c.l.b16 %v1498
  %v6141 = vunpack.c.h.b16 %v1498
  %v6142 = vunpack.c.l.b16 %v1499
  %v6143 = vunpack.c.h.b16 %v1499
  %v6144 = vunpack.c.l.b16 %v1500
  %v6145 = vunpack.c.h.b16 %v1500
  %v6146 = vunpack.c.l.b16 %v1501
  %v6147 = vunpack.c.h.b16 %v1501
  %v6148 = vunpack.c.l.b16 %v1502
  %v6149 = vunpack.c.h.b16 %v1502
  %v6150 = vunpack.c.l.b16 %v1503
  %v6151 = vunpack.c.h.b16 %v1503
  %v6152 = vunpack.c.l.b16 %v1504
  %v6153 = vunpack.c.h.b16 %v1504
  %v6154 = vunpack.c.l.b16 %v1505
  %v6155 = vunpack.c.h.b16 %v1505
  %v6156 = vunpack.c.l.b16 %v1506
  %v6157 = vunpack.c.h.b16 %v1506
  %v6158 = vunpack.c.l.b16 %v1507
  %v6159 = vunpack.c.h.b16 %v1507
  %v6160 = vunpack.c.l.b16 %v1508
  %v6161 = vunpack.c.h.b16 %v1508
  %v6162 = vunpack.c.l.b16 %v1509
  %v6163 = vunpack.c.h.b16 %v1509
  %v6164 = vunpack.c.l.b16 %v1510
  %v6165 = vunpack.c.h.b16 %v1510
  %v6166 = vunpack.c.l.b16 %v1511
  %v6167 = vunpack.c.h.b16 %v1511
  %v6168 = vunpack.c.l.b16 %v1512
  %v6169 = vunpack.c.h.b16 %v1512
  %v6170 = vunpack.c.l.b16 %v1513
  %v6171 = vunpack.c.h.b16 %v1513
  %v6172 = vunpack.c.l.b16 %v1514
  %v6173 = vunpack.c.h.b16 %v1514
  %v6174 = vunpack.c.l.b16 %v1515
  %v6175 = vunpack.c.h.b16 %v1515
  %v6176 = vunpack.c.l.b16 %v1516
  %v6177 = vunpack.c.h.b16 %v1516
  %v6178 = vunpack.c.l.b16 %v1517
  %v6179 = vunpack.c.h.b16 %v1517
  %v6180 = vunpack.c.l.b16 %v1518
  %v6181 = vunpack.c.h.b16 %v1518
  %v6182 = vunpack.c.l.b16 %v1519
  %v6183 = vunpack.c.h.b16 %v1519
  %v6184 = vunpack.c.l.b16 %v1520
  %v6185 = vunpack.c.h.b16 %v1520
  %v6186 = vunpack.c.l.b16 %v1521
  %v6187 = vunpack.c.h.b16 %v1521
  %v6188 = vunpack.c.l.b16 %v1522
  %v6189 = vunpack.c.h.b16 %v1522
  %v6190 = vunpack.c.l.b16 %v1523
  %v6191 = vunpack.c.h.b16 %v1523
  %v6192 = vunpack.c.l.b16 %v1524
  %v6193 = vunpack.c.h.b16 %v1524
  %v6194 = vunpack.c.l.b16 %v1525
  %v6195 = vunpack.c.h.b16 %v1525
  %v6196 = vunpack.c.l.b16 %v1526
  %v6197 = vunpack.c.h.b16 %v1526
  %v6198 = vunpack.c.l.b16 %v1527
  %v6199 = vunpack.c.h.b16 %v1527
  %v6200 = vunpack.c.l.b16 %v1528
  %v6201 = vunpack.c.h.b16 %v1528
  %v6202 = vunpack.c.l.b16 %v1529
  %v6203 = vunpack.c.h.b16 %v1529
  %v6204 = vunpack.c.l.b16 %v1530
  %v6205 = vunpack.c.h.b16 %v1530
  %v6206 = vunpack.c.l.b16 %v1531
  %v6207 = vunpack.c.h.b16 %v1531
  %v6208 = vunpack.c.l.b16 %v1532
  %v6209 = vunpack.c.h.b16 %v1532
  %v6210 = vunpack.c.l.b16 %v1533
  %v6211 = vunpack.c.h.b16 %v1533
  %v6212 = vunpack.c.l.b16 %v1534
  %v6213 = vunpack.c.h.b16 %v1534
  %v6214 = vunpack.c.l.b16 %v1535
  %v6215 = vunpack.c.h.b16 %v1535
  %v6216 = vunpack.c.l.b16 %v1536
  %v6217 = vunpack.c.h.b16 %v1536
  %v6218 = vunpack.c.l.b16 %v1537
  %v6219 = vunpack.c.h.b16 %v1537
  %v6220 = vunpack.c.l.b16 %v1538
  %v6221 = vunpack.c.h.b16 %v1538
  %v6222 = vunpack.c.l.b16 %v1539
  %v6223 = vunpack.c.h.b16 %v1539
  %v6224 = vunpack.c.l.b16 %v1540
  %v6225 = vunpack.c.h.b16 %v1540
  %v6226 = vunpack.c.l.b16 %v1541
  %v6227 = vunpack.c.h.b16 %v1541
  %v6228 = vunpack.c.l.b16 %v1542
  %v6229 = vunpack.c.h.b16 %v1542
  %v6230 = vunpack.c.l.b16 %v1543
  %v6231 = vunpack.c.h.b16 %v1543
  %v6232 = vunpack.c.l.b16 %v1544
  %v6233 = vunpack.c.h.b16 %v1544
  %v6234 = vunpack.c.l.b16 %v1545
  %v6235 = vunpack.c.h.b16 %v1545
  %v6236 = vunpack.c.l.b16 %v1546
  %v6237 = vunpack.c.h.b16 %v1546
  %v6238 = vunpack.c.l.b16 %v1547
  %v6239 = vunpack.c.h.b16 %v1547
  %v6240 = vunpack.c.l.b16 %v1548
  %v6241 = vunpack.c.h.b16 %v1548
  %v6242 = vunpack.c.l.b16 %v1549
  %v6243 = vunpack.c.h.b16 %v1549
  %v6244 = vunpack.c.l.b16 %v1550
  %v6245 = vunpack.c.h.b16 %v1550
  %v6246 = vunpack.c.l.b16 %v1551
  %v6247 = vunpack.c.h.b16 %v1551
  %v6248 = vunpack.c.l.b16 %v1552
  %v6249 = vunpack.c.h.b16 %v1552
  %v6250 = vunpack.c.l.b16 %v1553
  %v6251 = vunpack.c.h.b16 %v1553
  %v6252 = vunpack.c.l.b16 %v1554
  %v6253 = vunpack.c.h.b16 %v1554
  %v6254 = vunpack.c.l.b16 %v1555
  %v6255 = vunpack.c.h.b16 %v1555
  %v6256 = vunpack.c.l.b16 %v1556
  %v6257 = vunpack.c.h.b16 %v1556
  %v6258 = vunpack.c.l.b16 %v1557
  %v6259 = vunpack.c.h.b16 %v1557
  %v6260 = vunpack.c.l.b16 %v1558
  %v6261 = vunpack.c.h.b16 %v1558
  %v6262 = vunpack.c.l.b16 %v1559
  %v6263 = vunpack.c.h.b16 %v1559
  %v6264 = vunpack.c.l.b16 %v1560
  %v6265 = vunpack.c.h.b16 %v1560
  %v6266 = vunpack.c.l.b16 %v1561
  %v6267 = vunpack.c.h.b16 %v1561
  %v6268 = vunpack.c.l.b16 %v1562
  %v6269 = vunpack.c.h.b16 %v1562
  %v6270 = vunpack.c.l.b16 %v1563
  %v6271 = vunpack.c.h.b16 %v1563
  %v6272 = vunpack.c.l.b16 %v1564
  %v6273 = vunpack.c.h.b16 %v1564
  %v6274 = vunpack.c.l.b16 %v1565
  %v6275 = vunpack.c.h.b16 %v1565
  %v6276 = vunpack.c.l.b16 %v1566
  %v6277 = vunpack.c.h.b16 %v1566
  %v6278 = vunpack.c.l.b16 %v1567
  %v6279 = vunpack.c.h.b16 %v1567
  %v6280 = vunpack.c.l.b16 %v1568
  %v6281 = vunpack.c.h.b16 %v1568
  %v6282 = vunpack.c.l.b16 %v1569
  %v6283 = vunpack.c.h.b16 %v1569
  %v6284 = vunpack.c.l.b16 %v1570
  %v6285 = vunpack.c.h.b16 %v1570
  %v6286 = vunpack.c.l.b16 %v1571
  %v6287 = vunpack.c.h.b16 %v1571
  %v6288 = vunpack.c.l.b16 %v1572
  %v6289 = vunpack.c.h.b16 %v1572
  %v6290 = vunpack.c.l.b16 %v1573
  %v6291 = vunpack.c.h.b16 %v1573
  %v6292 = vunpack.c.l.b16 %v1574
  %v6293 = vunpack.c.h.b16 %v1574
  %v6294 = vunpack.c.l.b16 %v1575
  %v6295 = vunpack.c.h.b16 %v1575
  %v6296 = vunpack.c.l.b16 %v1576
  %v6297 = vunpack.c.h.b16 %v1576
  %v6298 = vunpack.c.l.b16 %v1577
  %v6299 = vunpack.c.h.b16 %v1577
  %v6300 = vunpack.c.l.b16 %v1578
  %v6301 = vunpack.c.h.b16 %v1578
  %v6302 = vunpack.c.l.b16 %v1579
  %v6303 = vunpack.c.h.b16 %v1579
  %v6304 = vunpack.c.l.b16 %v1580
  %v6305 = vunpack.c.h.b16 %v1580
  %v6306 = vunpack.c.l.b16 %v1581
  %v6307 = vunpack.c.h.b16 %v1581
  %v6308 = vunpack.c.l.b16 %v1582
  %v6309 = vunpack.c.h.b16 %v1582
  %v6310 = vunpack.c.l.b16 %v1583
  %v6311 = vunpack.c.h.b16 %v1583
  %v6312 = vunpack.c.l.b16 %v1584
  %v6313 = vunpack.c.h.b16 %v1584
  %v6314 = vpack.c.b16 %v3246, %v3242
  %v6315 = vpack.c.b16 %v3247, %v3243
  %v6316 = vpack.c.b16 %v3248, %v3244
  %v6317 = vpack.c.b16 %v3249, %v3245
  %v6318 = vpack.c.b16 %v3254, %v3250
  %v6319 = vpack.c.b16 %v3255, %v3251
  %v6320 = vpack.c.b16 %v3256, %v3252
  %v6321 = vpack.c.b16 %v3257, %v3253
  %v6322 = vpack.c.b16 %v3262, %v3258
  %v6323 = vpack.c.b16 %v3263, %v3259
  %v6324 = vpack.c.b16 %v3264, %v3260
  %v6325 = vpack.c.b16 %v3265, %v3261
  %v6326 = vpack.c.b16 %v3270, %v3266
  %v6327 = vpack.c.b16 %v3271, %v3267
  %v6328 = vpack.c.b16 %v3272, %v3268
  %v6329 = vpack.c.b16 %v3273, %v3269
  %v6330 = vpack.c.b16 %v3278, %v3274
  %v6331 = vpack.c.b16 %v3279, %v3275
  %v6332 = vpack.c.b16 %v3280, %v3276
  %v6333 = vpack.c.b16 %v3281, %v3277
  %v6334 = vpack.c.b16 %v3286, %v3282
  %v6335 = vpack.c.b16 %v3287, %v3283
  %v6336 = vpack.c.b16 %v3288, %v3284
  %v6337 = vpack.c.b16 %v3289, %v3285
  %v6338 = vpack.c.b16 %v3294, %v3290
  %v6339 = vpack.c.b16 %v3295, %v3291
  %v6340 = vpack.c.b16 %v3296, %v3292
  %v6341 = vpack.c.b16 %v3297, %v3293
  %v6342 = vpack.c.b16 %v3302, %v3298
  %v6343 = vpack.c.b16 %v3303, %v3299
  %v6344 = vpack.c.b16 %v3304, %v3300
  %v6345 = vpack.c.b16 %v3305, %v3301
  %v6346 = vpack.c.b16 %v3310, %v3306
  %v6347 = vpack.c.b16 %v3311, %v3307
  %v6348 = vpack.c.b16 %v3312, %v3308
  %v6349 = vpack.c.b16 %v3313, %v3309
  %v6350 = vpack.c.b16 %v3318, %v3314
  %v6351 = vpack.c.b16 %v3319, %v3315
  %v6352 = vpack.c.b16 %v3320, %v3316
  %v6353 = vpack.c.b16 %v3321, %v3317
  %v6354 = vpack.c.b16 %v3326, %v3322
  %v6355 = vpack.c.b16 %v3327, %v3323
  %v6356 = vpack.c.b16 %v3328, %v3324
  %v6357 = vpack.c.b16 %v3329, %v3325
  %v6358 = vpack.c.b16 %v3334, %v3330
  %v6359 = vpack.c.b16 %v3335, %v3331
  %v6360 = vpack.c.b16 %v3336, %v3332
  %v6361 = vpack.c.b16 %v3337, %v3333
  %v6362 = vpack.c.b16 %v3342, %v3338
  %v6363 = vpack.c.b16 %v3343, %v3339
  %v6364 = vpack.c.b16 %v3344, %v3340
  %v6365 = vpack.c.b16 %v3345, %v3341
  %v6366 = vpack.c.b16 %v3350, %v3346
  %v6367 = vpack.c.b16 %v3351, %v3347
  %v6368 = vpack.c.b16 %v3352, %v3348
  %v6369 = vpack.c.b16 %v3353, %v3349
  %v6370 = vpack.c.b16 %v3358, %v3354
  %v6371 = vpack.c.b16 %v3359, %v3355
  %v6372 = vpack.c.b16 %v3360, %v3356
  %v6373 = vpack.c.b16 %v3361, %v3357
  %v6374 = vpack.c.b16 %v3366, %v3362
  %v6375 = vpack.c.b16 %v3367, %v3363
  %v6376 = vpack.c.b16 %v3368, %v3364
  %v6377 = vpack.c.b16 %v3369, %v3365
  %v6378 = vpack.c.b16 %v3374, %v3370
  %v6379 = vpack.c.b16 %v3375, %v3371
  %v6380 = vpack.c.b16 %v3376, %v3372
  %v6381 = vpack.c.b16 %v3377, %v3373
  %v6382 = vpack.c.b16 %v3382, %v3378
  %v6383 = vpack.c.b16 %v3383, %v3379
  %v6384 = vpack.c.b16 %v3384, %v3380
  %v6385 = vpack.c.b16 %v3385, %v3381
  %v6386 = vpack.c.b16 %v3390, %v3386
  %v6387 = vpack.c.b16 %v3391, %v3387
  %v6388 = vpack.c.b16 %v3392, %v3388
  %v6389 = vpack.c.b16 %v3393, %v3389
  %v6390 = vpack.c.b16 %v3398, %v3394
  %v6391 = vpack.c.b16 %v3399, %v3395
  %v6392 = vpack.c.b16 %v3400, %v3396
  %v6393 = vpack.c.b16 %v3401, %v3397
  %v6394 = vpack.c.b16 %v3406, %v3402
  %v6395 = vpack.c.b16 %v3407, %v3403
  %v6396 = vpack.c.b16 %v3408, %v3404
  %v6397 = vpack.c.b16 %v3409, %v3405
  %v6398 = vpack.c.b16 %v3414, %v3410
  %v6399 = vpack.c.b16 %v3415, %v3411
  %v6400 = vpack.c.b16 %v3416, %v3412
  %v6401 = vpack.c.b16 %v3417, %v3413
  %v6402 = vpack.c.b16 %v3422, %v3418
  %v6403 = vpack.c.b16 %v3423, %v3419
  %v6404 = vpack.c.b16 %v3424, %v3420
  %v6405 = vpack.c.b16 %v3425, %v3421
  %v6406 = vpack.c.b16 %v3430, %v3426
  %v6407 = vpack.c.b16 %v3431, %v3427
  %v6408 = vpack.c.b16 %v3432, %v3428
  %v6409 = vpack.c.b16 %v3433, %v3429
  %v6410 = vpack.c.b16 %v3438, %v3434
  %v6411 = vpack.c.b16 %v3439, %v3435
  %v6412 = vpack.c.b16 %v3440, %v3436
  %v6413 = vpack.c.b16 %v3441, %v3437
  %v6414 = vpack.c.b16 %v3446, %v3442
  %v6415 = vpack.c.b16 %v3447, %v3443
  %v6416 = vpack.c.b16 %v3448, %v3444
  %v6417 = vpack.c.b16 %v3449, %v3445
  %v6418 = vpack.c.b16 %v3454, %v3450
  %v6419 = vpack.c.b16 %v3455, %v3451
  %v6420 = vpack.c.b16 %v3456, %v3452
  %v6421 = vpack.c.b16 %v3457, %v3453
  %v6422 = vpack.c.b16 %v3462, %v3458
  %v6423 = vpack.c.b16 %v3463, %v3459
  %v6424 = vpack.c.b16 %v3464, %v3460
  %v6425 = vpack.c.b16 %v3465, %v3461
  %v6426 = vpack.c.b16 %v3470, %v3466
  %v6427 = vpack.c.b16 %v3471, %v3467
  %v6428 = vpack.c.b16 %v3472, %v3468
  %v6429 = vpack.c.b16 %v3473, %v3469
  %v6430 = vpack.c.b16 %v3478, %v3474
  %v6431 = vpack.c.b16 %v3479, %v3475
  %v6432 = vpack.c.b16 %v3480, %v3476
  %v6433 = vpack.c.b16 %v3481, %v3477
  %v6434 = vpack.c.b16 %v3486, %v3482
  %v6435 = vpack.c.b16 %v3487, %v3483
  %v6436 = vpack.c.b16 %v3488, %v3484
  %v6437 = vpack.c.b16 %v3489, %v3485
  %v6438 = vpack.c.b16 %v3494, %v3490
  %v6439 = vpack.c.b16 %v3495, %v3491
  %v6440 = vpack.c.b16 %v3496, %v3492
  %v6441 = vpack.c.b16 %v3497, %v3493
  %v6442 = vpack.c.b16 %v3502, %v3498
  %v6443 = vpack.c.b16 %v3503, %v3499
  %v6444 = vpack.c.b16 %v3504, %v3500
  %v6445 = vpack.c.b16 %v3505, %v3501
  %v6446 = vpack.c.b16 %v3510, %v3506
  %v6447 = vpack.c.b16 %v3511, %v3507
  %v6448 = vpack.c.b16 %v3512, %v3508
  %v6449 = vpack.c.b16 %v3513, %v3509
  %v6450 = vpack.c.b16 %v3518, %v3514
  %v6451 = vpack.c.b16 %v3519, %v3515
  %v6452 = vpack.c.b16 %v3520, %v3516
  %v6453 = vpack.c.b16 %v3521, %v3517
  %v6454 = vpack.c.b16 %v3526, %v3522
  %v6455 = vpack.c.b16 %v3527, %v3523
  %v6456 = vpack.c.b16 %v3528, %v3524
  %v6457 = vpack.c.b16 %v3529, %v3525
  %v6458 = vpack.c.b16 %v3534, %v3530
  %v6459 = vpack.c.b16 %v3535, %v3531
  %v6460 = vpack.c.b16 %v3536, %v3532
  %v6461 = vpack.c.b16 %v3537, %v3533
  %v6462 = vpack.c.b16 %v3542, %v3538
  %v6463 = vpack.c.b16 %v3543, %v3539
  %v6464 = vpack.c.b16 %v3544, %v3540
  %v6465 = vpack.c.b16 %v3545, %v3541
  %v6466 = vpack.c.b16 %v3550, %v3546
  %v6467 = vpack.c.b16 %v3551, %v3547
  %v6468 = vpack.c.b16 %v3552, %v3548
  %v6469 = vpack.c.b16 %v3553, %v3549
  %v6470 = vpack.c.b16 %v3558, %v3554
  %v6471 = vpack.c.b16 %v3559, %v3555
  %v6472 = vpack.c.b16 %v3560, %v3556
  %v6473 = vpack.c.b16 %v3561, %v3557
  %v6474 = vpack.c.b16 %v3566, %v3562
  %v6475 = vpack.c.b16 %v3567, %v3563
  %v6476 = vpack.c.b16 %v3568, %v3564
  %v6477 = vpack.c.b16 %v3569, %v3565
  %v6478 = vpack.c.b16 %v3574, %v3570
  %v6479 = vpack.c.b16 %v3575, %v3571
  %v6480 = vpack.c.b16 %v3576, %v3572
  %v6481 = vpack.c.b16 %v3577, %v3573
  %v6482 = vpack.c.b16 %v3582, %v3578
  %v6483 = vpack.c.b16 %v3583, %v3579
  %v6484 = vpack.c.b16 %v3584, %v3580
  %v6485 = vpack.c.b16 %v3585, %v3581
  %v6486 = vpack.c.b16 %v3590, %v3586
  %v6487 = vpack.c.b16 %v3591, %v3587
  %v6488 = vpack.c.b16 %v3592, %v3588
  %v6489 = vpack.c.b16 %v3593, %v3589
  %v6490 = vpack.c.b16 %v3598, %v3594
  %v6491 = vpack.c.b16 %v3599, %v3595
  %v6492 = vpack.c.b16 %v3600, %v3596
  %v6493 = vpack.c.b16 %v3601, %v3597
  %v6494 = vpack.c.b16 %v3606, %v3602
  %v6495 = vpack.c.b16 %v3607, %v3603
  %v6496 = vpack.c.b16 %v3608, %v3604
  %v6497 = vpack.c.b16 %v3609, %v3605
  %v6498 = vpack.c.b16 %v3614, %v3610
  %v6499 = vpack.c.b16 %v3615, %v3611
  %v6500 = vpack.c.b16 %v3616, %v3612
  %v6501 = vpack.c.b16 %v3617, %v3613
  %v6502 = vpack.c.b16 %v3622, %v3618
  %v6503 = vpack.c.b16 %v3623, %v3619
  %v6504 = vpack.c.b16 %v3624, %v3620
  %v6505 = vpack.c.b16 %v3625, %v3621
  %v6506 = vpack.c.b16 %v3630, %v3626
  %v6507 = vpack.c.b16 %v3631, %v3627
  %v6508 = vpack.c.b16 %v3632, %v3628
  %v6509 = vpack.c.b16 %v3633, %v3629
  %v6510 = vpack.c.b16 %v3638, %v3634
  %v6511 = vpack.c.b16 %v3639, %v3635
  %v6512 = vpack.c.b16 %v3640, %v3636
  %v6513 = vpack.c.b16 %v3641, %v3637
  %v6514 = vpack.c.b16 %v3646, %v3642
  %v6515 = vpack.c.b16 %v3647, %v3643
  %v6516 = vpack.c.b16 %v3648, %v3644
  %v6517 = vpack.c.b16 %v3649, %v3645
  %v6518 = vpack.c.b16 %v3654, %v3650
  %v6519 = vpack.c.b16 %v3655, %v3651
  %v6520 = vpack.c.b16 %v3656, %v3652
  %v6521 = vpack.c.b16 %v3657, %v3653
  %v6522 = vpack.c.b16 %v3662, %v3658
  %v6523 = vpack.c.b16 %v3663, %v3659
  %v6524 = vpack.c.b16 %v3664, %v3660
  %v6525 = vpack.c.b16 %v3665, %v3661
  %v6526 = vpack.c.b16 %v3670, %v3666
  %v6527 = vpack.c.b16 %v3671, %v3667
  %v6528 = vpack.c.b16 %v3672, %v3668
  %v6529 = vpack.c.b16 %v3673, %v3669
  %v6530 = vpack.c.b16 %v3678, %v3674
  %v6531 = vpack.c.b16 %v3679, %v3675
  %v6532 = vpack.c.b16 %v3680, %v3676
  %v6533 = vpack.c.b16 %v3681, %v3677
  %v6534 = vpack.c.b16 %v3686, %v3682
  %v6535 = vpack.c.b16 %v3687, %v3683
  %v6536 = vpack.c.b16 %v3688, %v3684
  %v6537 = vpack.c.b16 %v3689, %v3685
  %v6538 = vpack.c.b16 %v3694, %v3690
  %v6539 = vpack.c.b16 %v3695, %v3691
  %v6540 = vpack.c.b16 %v3696, %v3692
  %v6541 = vpack.c.b16 %v3697, %v3693
  %v6542 = vpack.c.b16 %v3702, %v3698
  %v6543 = vpack.c.b16 %v3703, %v3699
  %v6544 = vpack.c.b16 %v3704, %v3700
  %v6545 = vpack.c.b16 %v3705, %v3701
  %v6546 = vpack.c.b16 %v3710, %v3706
  %v6547 = vpack.c.b16 %v3711, %v3707
  %v6548 = vpack.c.b16 %v3712, %v3708
  %v6549 = vpack.c.b16 %v3713, %v3709
  %v6550 = vpack.c.b16 %v3718, %v3714
  %v6551 = vpack.c.b16 %v3719, %v3715
  %v6552 = vpack.c.b16 %v3720, %v3716
  %v6553 = vpack.c.b16 %v3721, %v3717
  %v6554 = vpack.c.b16 %v3726, %v3722
  %v6555 = vpack.c.b16 %v3727, %v3723
  %v6556 = vpack.c.b16 %v3728, %v3724
  %v6557 = vpack.c.b16 %v3729, %v3725
  %v6558 = vpack.c.b16 %v3734, %v3730
  %v6559 = vpack.c.b16 %v3735, %v3731
  %v6560 = vpack.c.b16 %v3736, %v3732
  %v6561 = vpack.c.b16 %v3737, %v3733
  %v6562 = vpack.c.b16 %v3742, %v3738
  %v6563 = vpack.c.b16 %v3743, %v3739
  %v6564 = vpack.c.b16 %v3744, %v3740
  %v6565 = vpack.c.b16 %v3745, %v3741
  %v6566 = vpack.c.b16 %v3750, %v3746
  %v6567 = vpack.c.b16 %v3751, %v3747
  %v6568 = vpack.c.b16 %v3752, %v3748
  %v6569 = vpack.c.b16 %v3753, %v3749
  %v6570 = vpack.c.b16 %v3758, %v3754
  %v6571 = vpack.c.b16 %v3759, %v3755
  %v6572 = vpack.c.b16 %v3760, %v3756
  %v6573 = vpack.c.b16 %v3761, %v3757
  %v6574 = vpack.c.b16 %v3766, %v3762
  %v6575 = vpack.c.b16 %v3767, %v3763
  %v6576 = vpack.c.b16 %v3768, %v3764
  %v6577 = vpack.c.b16 %v3769, %v3765
  %v6578 = vpack.c.b16 %v3774, %v3770
  %v6579 = vpack.c.b16 %v3775, %v3771
  %v6580 = vpack.c.b16 %v3776, %v3772
  %v6581 = vpack.c.b16 %v3777, %v3773
  %v6582 = vpack.c.b16 %v3782, %v3778
  %v6583 = vpack.c.b16 %v3783, %v3779
  %v6584 = vpack.c.b16 %v3784, %v3780
  %v6585 = vpack.c.b16 %v3785, %v3781
  %v6586 = vpack.c.b16 %v3790, %v3786
  %v6587 = vpack.c.b16 %v3791, %v3787
  %v6588 = vpack.c.b16 %v3792, %v3788
  %v6589 = vpack.c.b16 %v3793, %v3789
  %v6590 = vpack.c.b16 %v3798, %v3794
  %v6591 = vpack.c.b16 %v3799, %v3795
  %v6592 = vpack.c.b16 %v3800, %v3796
  %v6593 = vpack.c.b16 %v3801, %v3797
  %v6594 = vpack.c.b16 %v3806, %v3802
  %v6595 = vpack.c.b16 %v3807, %v3803
  %v6596 = vpack.c.b16 %v3808, %v3804
  %v6597 = vpack.c.b16 %v3809, %v3805
  %v6598 = vpack.c.b16 %v3814, %v3810
  %v6599 = vpack.c.b16 %v3815, %v3811
  %v6600 = vpack.c.b16 %v3816, %v3812
  %v6601 = vpack.c.b16 %v3817, %v3813
  %v6602 = vpack.c.b16 %v3822, %v3818
  %v6603 = vpack.c.b16 %v3823, %v3819
  %v6604 = vpack.c.b16 %v3824, %v3820
  %v6605 = vpack.c.b16 %v3825, %v3821
  %v6606 = vpack.c.b16 %v3830, %v3826
  %v6607 = vpack.c.b16 %v3831, %v3827
  %v6608 = vpack.c.b16 %v3832, %v3828
  %v6609 = vpack.c.b16 %v3833, %v3829
  %v6610 = vpack.c.b16 %v3838, %v3834
  %v6611 = vpack.c.b16 %v3839, %v3835
  %v6612 = vpack.c.b16 %v3840, %v3836
  %v6613 = vpack.c.b16 %v3841, %v3837
  %v6614 = vpack.c.b16 %v3846, %v3842
  %v6615 = vpack.c.b16 %v3847, %v3843
  %v6616 = vpack.c.b16 %v3848, %v3844
  %v6617 = vpack.c.b16 %v3849, %v3845
  %v6618 = vpack.c.b16 %v3854, %v3850
  %v6619 = vpack.c.b16 %v3855, %v3851
  %v6620 = vpack.c.b16 %v3856, %v3852
  %v6621 = vpack.c.b16 %v3857, %v3853
  %v6622 = vpack.c.b16 %v3862, %v3858
  %v6623 = vpack.c.b16 %v3863, %v3859
  %v6624 = vpack.c.b16 %v3864, %v3860
  %v6625 = vpack.c.b16 %v3865, %v3861
  %v6626 = vpack.c.b16 %v3870, %v3866
  %v6627 = vpack.c.b16 %v3871, %v3867
  %v6628 = vpack.c.b16 %v3872, %v3868
  %v6629 = vpack.c.b16 %v3873, %v3869
  %v6630 = vpack.c.b16 %v3878, %v3874
  %v6631 = vpack.c.b16 %v3879, %v3875
  %v6632 = vpack.c.b16 %v3880, %v3876
  %v6633 = vpack.c.b16 %v3881, %v3877
  %v6634 = vpack.c.b16 %v3886, %v3882
  %v6635 = vpack.c.b16 %v3887, %v3883
  %v6636 = vpack.c.b16 %v3888, %v3884
  %v6637 = vpack.c.b16 %v3889, %v3885
  %v6638 = vpack.c.b16 %v3894, %v3890
  %v6639 = vpack.c.b16 %v3895, %v3891
  %v6640 = vpack.c.b16 %v3896, %v3892
  %v6641 = vpack.c.b16 %v3897, %v3893
  %v6642 = vpack.c.b16 %v3902, %v3898
  %v6643 = vpack.c.b16 %v3903, %v3899
  %v6644 = vpack.c.b16 %v3904, %v3900
  %v6645 = vpack.c.b16 %v3905, %v3901
  %v6646 = vpack.c.b16 %v3910, %v3906
  %v6647 = vpack.c.b16 %v3911, %v3907
  %v6648 = vpack.c.b16 %v3912, %v3908
  %v6649 = vpack.c.b16 %v3913, %v3909
  %v6650 = vpack.c.b16 %v3918, %v3914
  %v6651 = vpack.c.b16 %v3919, %v3915
  %v6652 = vpack.c.b16 %v3920, %v3916
  %v6653 = vpack.c.b16 %v3921, %v3917
  %v6654 = vpack.c.b16 %v3926, %v3922
  %v6655 = vpack.c.b16 %v3927, %v3923
  %v6656 = vpack.c.b16 %v3928, %v3924
  %v6657 = vpack.c.b16 %v3929, %v3925
  %v6658 = vpack.c.b16 %v3934, %v3930
  %v6659 = vpack.c.b16 %v3935, %v3931
  %v6660 = vpack.c.b16 %v3936, %v3932
  %v6661 = vpack.c.b16 %v3937, %v3933
  %v6662 = vpack.c.b16 %v3942, %v3938
  %v6663 = vpack.c.b16 %v3943, %v3939
  %v6664 = vpack.c.b16 %v3944, %v3940
  %v6665 = vpack.c.b16 %v3945, %v3941
  %v6666 = vpack.c.b16 %v3950, %v3946
  %v6667 = vpack.c.b16 %v3951, %v3947
  %v6668 = vpack.c.b16 %v3952, %v3948
  %v6669 = vpack.c.b16 %v3953, %v3949
  %v6670 = vpack.c.b16 %v3958, %v3954
  %v6671 = vpack.c.b16 %v3959, %v3955
  %v6672 = vpack.c.b16 %v3960, %v3956
  %v6673 = vpack.c.b16 %v3961, %v3957
  %v6674 = vpack.c.b16 %v3966, %v3962
  %v6675 = vpack.c.b16 %v3967, %v3963
  %v6676 = vpack.c.b16 %v3968, %v3964
  %v6677 = vpack.c.b16 %v3969, %v3965
  %v6678 = vpack.c.b16 %v3974, %v3970
  %v6679 = vpack.c.b16 %v3975, %v3971
  %v6680 = vpack.c.b16 %v3976, %v3972
  %v6681 = vpack.c.b16 %v3977, %v3973
  %v6682 = vpack.c.b16 %v3982, %v3978
  %v6683 = vpack.c.b16 %v3983, %v3979
  %v6684 = vpack.c.b16 %v3984, %v3980
  %v6685 = vpack.c.b16 %v3985, %v3981
  %v6686 = vpack.c.b16 %v3990, %v3986
  %v6687 = vpack.c.b16 %v3991, %v3987
  %v6688 = vpack.c.b16 %v3992, %v3988
  %v6689 = vpack.c.b16 %v3993, %v3989
  %v6690 = vpack.c.b16 %v3998, %v3994
  %v6691 = vpack.c.b16 %v3999, %v3995
  %v6692 = vpack.c.b16 %v4000, %v3996
  %v6693 = vpack.c.b16 %v4001, %v3997
  %v6694 = vpack.c.b16 %v4006, %v4002
  %v6695 = vpack.c.b16 %v4007, %v4003
  %v6696 = vpack.c.b16 %v4008, %v4004
  %v6697 = vpack.c.b16 %v4009, %v4005
  %v6698 = vpack.c.b16 %v4014, %v4010
  %v6699 = vpack.c.b16 %v4015, %v4011
  %v6700 = vpack.c.b16 %v4016, %v4012
  %v6701 = vpack.c.b16 %v4017, %v4013
  %v6702 = vpack.c.b16 %v4022, %v4018
  %v6703 = vpack.c.b16 %v4023, %v4019
  %v6704 = vpack.c.b16 %v4024, %v4020
  %v6705 = vpack.c.b16 %v4025, %v4021
  %v6706 = vpack.c.b16 %v4030, %v4026
  %v6707 = vpack.c.b16 %v4031, %v4027
  %v6708 = vpack.c.b16 %v4032, %v4028
  %v6709 = vpack.c.b16 %v4033, %v4029
  %v6710 = vpack.c.b16 %v4038, %v4034
  %v6711 = vpack.c.b16 %v4039, %v4035
  %v6712 = vpack.c.b16 %v4040, %v4036
  %v6713 = vpack.c.b16 %v4041, %v4037
  %v6714 = vpack.c.b16 %v4046, %v4042
  %v6715 = vpack.c.b16 %v4047, %v4043
  %v6716 = vpack.c.b16 %v4048, %v4044
  %v6717 = vpack.c.b16 %v4049, %v4045
  %v6718 = vpack.c.b16 %v4054, %v4050
  %v6719 = vpack.c.b16 %v4055, %v4051
  %v6720 = vpack.c.b16 %v4056, %v4052
  %v6721 = vpack.c.b16 %v4057, %v4053
  %v6722 = vpack.c.b16 %v4062, %v4058
  %v6723 = vpack.c.b16 %v4063, %v4059
  %v6724 = vpack.c.b16 %v4064, %v4060
  %v6725 = vpack.c.b16 %v4065, %v4061
  %v6726 = vpack.c.b16 %v4070, %v4066
  %v6727 = vpack.c.b16 %v4071, %v4067
  %v6728 = vpack.c.b16 %v4072, %v4068
  %v6729 = vpack.c.b16 %v4073, %v4069
  %v6730 = vpack.c.b16 %v4078, %v4074
  %v6731 = vpack.c.b16 %v4079, %v4075
  %v6732 = vpack.c.b16 %v4080, %v4076
  %v6733 = vpack.c.b16 %v4081, %v4077
  %v6734 = vpack.c.b16 %v4086, %v4082
  %v6735 = vpack.c.b16 %v4087, %v4083
  %v6736 = vpack.c.b16 %v4088, %v4084
  %v6737 = vpack.c.b16 %v4089, %v4085
  %v6738 = vpack.c.b16 %v4094, %v4090
  %v6739 = vpack.c.b16 %v4095, %v4091
  %v6740 = vpack.c.b16 %v4096, %v4092
  %v6741 = vpack.c.b16 %v4097, %v4093
  %v6742 = vpack.c.b16 %v4102, %v4098
  %v6743 = vpack.c.b16 %v4103, %v4099
  %v6744 = vpack.c.b16 %v4104, %v4100
  %v6745 = vpack.c.b16 %v4105, %v4101
  %v6746 = vpack.c.b16 %v4110, %v4106
  %v6747 = vpack.c.b16 %v4111, %v4107
  %v6748 = vpack.c.b16 %v4112, %v4108
  %v6749 = vpack.c.b16 %v4113, %v4109
  %v6750 = vpack.c.b16 %v4118, %v4114
  %v6751 = vpack.c.b16 %v4119, %v4115
  %v6752 = vpack.c.b16 %v4120, %v4116
  %v6753 = vpack.c.b16 %v4121, %v4117
  %v6754 = vpack.c.b16 %v4126, %v4122
  %v6755 = vpack.c.b16 %v4127, %v4123
  %v6756 = vpack.c.b16 %v4128, %v4124
  %v6757 = vpack.c.b16 %v4129, %v4125
  %v6758 = vpack.c.b16 %v4134, %v4130
  %v6759 = vpack.c.b16 %v4135, %v4131
  %v6760 = vpack.c.b16 %v4136, %v4132
  %v6761 = vpack.c.b16 %v4137, %v4133
  %v6762 = vpack.c.b16 %v4142, %v4138
  %v6763 = vpack.c.b16 %v4143, %v4139
  %v6764 = vpack.c.b16 %v4144, %v4140
  %v6765 = vpack.c.b16 %v4145, %v4141
  %v6766 = vpack.c.b16 %v4150, %v4146
  %v6767 = vpack.c.b16 %v4151, %v4147
  %v6768 = vpack.c.b16 %v4152, %v4148
  %v6769 = vpack.c.b16 %v4153, %v4149
  %v6770 = vpack.c.b16 %v4158, %v4154
  %v6771 = vpack.c.b16 %v4159, %v4155
  %v6772 = vpack.c.b16 %v4160, %v4156
  %v6773 = vpack.c.b16 %v4161, %v4157
  %v6774 = vpack.c.b16 %v4166, %v4162
  %v6775 = vpack.c.b16 %v4167, %v4163
  %v6776 = vpack.c.b16 %v4168, %v4164
  %v6777 = vpack.c.b16 %v4169, %v4165
  %v6778 = vpack.c.b16 %v4174, %v4170
  %v6779 = vpack.c.b16 %v4175, %v4171
  %v6780 = vpack.c.b16 %v4176, %v4172
  %v6781 = vpack.c.b16 %v4177, %v4173
  %v6782 = vpack.c.b16 %v4182, %v4178
  %v6783 = vpack.c.b16 %v4183, %v4179
  %v6784 = vpack.c.b16 %v4184, %v4180
  %v6785 = vpack.c.b16 %v4185, %v4181
  %v6786 = vpack.c.b16 %v4190, %v4186
  %v6787 = vpack.c.b16 %v4191, %v4187
  %v6788 = vpack.c.b16 %v4192, %v4188
  %v6789 = vpack.c.b16 %v4193, %v4189
  %v6790 = vpack.c.b16 %v4198, %v4194
  %v6791 = vpack.c.b16 %v4199, %v4195
  %v6792 = vpack.c.b16 %v4200, %v4196
  %v6793 = vpack.c.b16 %v4201, %v4197
  %v6794 = vpack.c.b16 %v4206, %v4202
  %v6795 = vpack.c.b16 %v4207, %v4203
  %v6796 = vpack.c.b16 %v4208, %v4204
  %v6797 = vpack.c.b16 %v4209, %v4205
  %v6798 = vpack.c.b16 %v4214, %v4210
  %v6799 = vpack.c.b16 %v4215, %v4211
  %v6800 = vpack.c.b16 %v4216, %v4212
  %v6801 = vpack.c.b16 %v4217, %v4213
  %v6802 = vpack.c.b16 %v4222, %v4218
  %v6803 = vpack.c.b16 %v4223, %v4219
  %v6804 = vpack.c.b16 %v4224, %v4220
  %v6805 = vpack.c.b16 %v4225, %v4221
  %v6806 = vpack.c.b16 %v4230, %v4226
  %v6807 = vpack.c.b16 %v4231, %v4227
  %v6808 = vpack.c.b16 %v4232, %v4228
  %v6809 = vpack.c.b16 %v4233, %v4229
  %v6810 = vpack.c.b16 %v4238, %v4234
  %v6811 = vpack.c.b16 %v4239, %v4235
  %v6812 = vpack.c.b16 %v4240, %v4236
  %v6813 = vpack.c.b16 %v4241, %v4237
  %v6814 = vpack.c.b16 %v4246, %v4242
  %v6815 = vpack.c.b16 %v4247, %v4243
  %v6816 = vpack.c.b16 %v4248, %v4244
  %v6817 = vpack.c.b16 %v4249, %v4245
  %v6818 = vpack.c.b16 %v4254, %v4250
  %v6819 = vpack.c.b16 %v4255, %v4251
  %v6820 = vpack.c.b16 %v4256, %v4252
  %v6821 = vpack.c.b16 %v4257, %v4253
  %v6822 = vpack.c.b16 %v4262, %v4258
  %v6823 = vpack.c.b16 %v4263, %v4259
  %v6824 = vpack.c.b16 %v4264, %v4260
  %v6825 = vpack.c.b16 %v4265, %v4261
  %v6826 = vpack.c.b16 %v4270, %v4266
  %v6827 = vpack.c.b16 %v4271, %v4267
  %v6828 = vpack.c.b16 %v4272, %v4268
  %v6829 = vpack.c.b16 %v4273, %v4269
  %v6830 = vpack.c.b16 %v4278, %v4274
  %v6831 = vpack.c.b16 %v4279, %v4275
  %v6832 = vpack.c.b16 %v4280, %v4276
  %v6833 = vpack.c.b16 %v4281, %v4277
  %v6834 = vpack.c.b16 %v4286, %v4282
  %v6835 = vpack.c.b16 %v4287, %v4283
  %v6836 = vpack.c.b16 %v4288, %v4284
  %v6837 = vpack.c.b16 %v4289, %v4285
  %v6838 = vpack.c.b16 %v4294, %v4290
  %v6839 = vpack.c.b16 %v4295, %v4291
  %v6840 = vpack.c.b16 %v4296, %v4292
  %v6841 = vpack.c.b16 %v4297, %v4293
  %v6842 = vpack.c.b16 %v4302, %v4298
  %v6843 = vpack.c.b16 %v4303, %v4299
  %v6844 = vpack.c.b16 %v4304, %v4300
  %v6845 = vpack.c.b16 %v4305, %v4301
  %v6846 = vpack.c.b16 %v4310, %v4306
  %v6847 = vpack.c.b16 %v4311, %v4307
  %v6848 = vpack.c.b16 %v4312, %v4308
  %v6849 = vpack.c.b16 %v4313, %v4309
  %v6850 = vpack.c.b16 %v4318, %v4314
  %v6851 = vpack.c.b16 %v4319, %v4315
  %v6852 = vpack.c.b16 %v4320, %v4316
  %v6853 = vpack.c.b16 %v4321, %v4317
  %v6854 = vpack.c.b16 %v4326, %v4322
  %v6855 = vpack.c.b16 %v4327, %v4323
  %v6856 = vpack.c.b16 %v4328, %v4324
  %v6857 = vpack.c.b16 %v4329, %v4325
  %v6858 = vpack.c.b16 %v4334, %v4330
  %v6859 = vpack.c.b16 %v4335, %v4331
  %v6860 = vpack.c.b16 %v4336, %v4332
  %v6861 = vpack.c.b16 %v4337, %v4333
  %v6862 = vpack.c.b16 %v4342, %v4338
  %v6863 = vpack.c.b16 %v4343, %v4339
  %v6864 = vpack.c.b16 %v4344, %v4340
  %v6865 = vpack.c.b16 %v4345, %v4341
  %v6866 = vpack.c.b16 %v4350, %v4346
  %v6867 = vpack.c.b16 %v4351, %v4347
  %v6868 = vpack.c.b16 %v4352, %v4348
  %v6869 = vpack.c.b16 %v4353, %v4349
  %v6870 = vpack.c.b16 %v4358, %v4354
  %v6871 = vpack.c.b16 %v4359, %v4355
  %v6872 = vpack.c.b16 %v4360, %v4356
  %v6873 = vpack.c.b16 %v4361, %v4357
  %v6874 = vpack.c.b16 %v4366, %v4362
  %v6875 = vpack.c.b16 %v4367, %v4363
  %v6876 = vpack.c.b16 %v4368, %v4364
  %v6877 = vpack.c.b16 %v4369, %v4365
  %v6878 = vpack.c.b16 %v4374, %v4370
  %v6879 = vpack.c.b16 %v4375, %v4371
  %v6880 = vpack.c.b16 %v4376, %v4372
  %v6881 = vpack.c.b16 %v4377, %v4373
  %v6882 = vpack.c.b16 %v4382, %v4378
  %v6883 = vpack.c.b16 %v4383, %v4379
  %v6884 = vpack.c.b16 %v4384, %v4380
  %v6885 = vpack.c.b16 %v4385, %v4381
  %v6886 = vpack.c.b16 %v4390, %v4386
  %v6887 = vpack.c.b16 %v4391, %v4387
  %v6888 = vpack.c.b16 %v4392, %v4388
  %v6889 = vpack.c.b16 %v4393, %v4389
  %v6890 = vpack.c.b16 %v4398, %v4394
  %v6891 = vpack.c.b16 %v4399, %v4395
  %v6892 = vpack.c.b16 %v4400, %v4396
  %v6893 = vpack.c.b16 %v4401, %v4397
  %v6894 = vpack.c.b16 %v4406, %v4402
  %v6895 = vpack.c.b16 %v4407, %v4403
  %v6896 = vpack.c.b16 %v4408, %v4404
  %v6897 = vpack.c.b16 %v4409, %v4405
  %v6898 = vpack.c.b16 %v4414, %v4410
  %v6899 = vpack.c.b16 %v4415, %v4411
  %v6900 = vpack.c.b16 %v4416, %v4412
  %v6901 = vpack.c.b16 %v4417, %v4413
  %v6902 = vpack.c.b16 %v4422, %v4418
  %v6903 = vpack.c.b16 %v4423, %v4419
  %v6904 = vpack.c.b16 %v4424, %v4420
  %v6905 = vpack.c.b16 %v4425, %v4421
  %v6906 = vpack.c.b16 %v4430, %v4426
  %v6907 = vpack.c.b16 %v4431, %v4427
  %v6908 = vpack.c.b16 %v4432, %v4428
  %v6909 = vpack.c.b16 %v4433, %v4429
  %v6910 = vpack.c.b16 %v4438, %v4434
  %v6911 = vpack.c.b16 %v4439, %v4435
  %v6912 = vpack.c.b16 %v4440, %v4436
  %v6913 = vpack.c.b16 %v4441, %v4437
  %v6914 = vpack.c.b16 %v4446, %v4442
  %v6915 = vpack.c.b16 %v4447, %v4443
  %v6916 = vpack.c.b16 %v4448, %v4444
  %v6917 = vpack.c.b16 %v4449, %v4445
  %v6918 = vpack.c.b16 %v4454, %v4450
  %v6919 = vpack.c.b16 %v4455, %v4451
  %v6920 = vpack.c.b16 %v4456, %v4452
  %v6921 = vpack.c.b16 %v4457, %v4453
  %v6922 = vpack.c.b16 %v4462, %v4458
  %v6923 = vpack.c.b16 %v4463, %v4459
  %v6924 = vpack.c.b16 %v4464, %v4460
  %v6925 = vpack.c.b16 %v4465, %v4461
  %v6926 = vpack.c.b16 %v4470, %v4466
  %v6927 = vpack.c.b16 %v4471, %v4467
  %v6928 = vpack.c.b16 %v4472, %v4468
  %v6929 = vpack.c.b16 %v4473, %v4469
  %v6930 = vpack.c.b16 %v4478, %v4474
  %v6931 = vpack.c.b16 %v4479, %v4475
  %v6932 = vpack.c.b16 %v4480, %v4476
  %v6933 = vpack.c.b16 %v4481, %v4477
  %v6934 = vpack.c.b16 %v4486, %v4482
  %v6935 = vpack.c.b16 %v4487, %v4483
  %v6936 = vpack.c.b16 %v4488, %v4484
  %v6937 = vpack.c.b16 %v4489, %v4485
  %v6938 = vpack.c.b16 %v4494, %v4490
  %v6939 = vpack.c.b16 %v4495, %v4491
  %v6940 = vpack.c.b16 %v4496, %v4492
  %v6941 = vpack.c.b16 %v4497, %v4493
  %v6942 = vpack.c.b16 %v4502, %v4498
  %v6943 = vpack.c.b16 %v4503, %v4499
  %v6944 = vpack.c.b16 %v4504, %v4500
  %v6945 = vpack.c.b16 %v4505, %v4501
  %v6946 = vpack.c.b16 %v4510, %v4506
  %v6947 = vpack.c.b16 %v4511, %v4507
  %v6948 = vpack.c.b16 %v4512, %v4508
  %v6949 = vpack.c.b16 %v4513, %v4509
  %v6950 = vpack.c.b16 %v4518, %v4514
  %v6951 = vpack.c.b16 %v4519, %v4515
  %v6952 = vpack.c.b16 %v4520, %v4516
  %v6953 = vpack.c.b16 %v4521, %v4517
  %v6954 = vpack.c.b16 %v4526, %v4522
  %v6955 = vpack.c.b16 %v4527, %v4523
  %v6956 = vpack.c.b16 %v4528, %v4524
  %v6957 = vpack.c.b16 %v4529, %v4525
  %v6958 = vpack.c.b16 %v4534, %v4530
  %v6959 = vpack.c.b16 %v4535, %v4531
  %v6960 = vpack.c.b16 %v4536, %v4532
  %v6961 = vpack.c.b16 %v4537, %v4533
  %v6962 = vpack.c.b16 %v4542, %v4538
  %v6963 = vpack.c.b16 %v4543, %v4539
  %v6964 = vpack.c.b16 %v4544, %v4540
  %v6965 = vpack.c.b16 %v4545, %v4541
  %v6966 = vpack.c.b16 %v4550, %v4546
  %v6967 = vpack.c.b16 %v4551, %v4547
  %v6968 = vpack.c.b16 %v4552, %v4548
  %v6969 = vpack.c.b16 %v4553, %v4549
  %v6970 = vpack.c.b16 %v4558, %v4554
  %v6971 = vpack.c.b16 %v4559, %v4555
  %v6972 = vpack.c.b16 %v4560, %v4556
  %v6973 = vpack.c.b16 %v4561, %v4557
  %v6974 = vpack.c.b16 %v4566, %v4562
  %v6975 = vpack.c.b16 %v4567, %v4563
  %v6976 = vpack.c.b16 %v4568, %v4564
  %v6977 = vpack.c.b16 %v4569, %v4565
  %v6978 = vpack.c.b16 %v4574, %v4570
  %v6979 = vpack.c.b16 %v4575, %v4571
  %v6980 = vpack.c.b16 %v4576, %v4572
  %v6981 = vpack.c.b16 %v4577, %v4573
  %v6982 = vpack.c.b16 %v4582, %v4578
  %v6983 = vpack.c.b16 %v4583, %v4579
  %v6984 = vpack.c.b16 %v4584, %v4580
  %v6985 = vpack.c.b16 %v4585, %v4581
  %v6986 = vpack.c.b16 %v4590, %v4586
  %v6987 = vpack.c.b16 %v4591, %v4587
  %v6988 = vpack.c.b16 %v4592, %v4588
  %v6989 = vpack.c.b16 %v4593, %v4589
  %v6990 = vpack.c.b16 %v4598, %v4594
  %v6991 = vpack.c.b16 %v4599, %v4595
  %v6992 = vpack.c.b16 %v4600, %v4596
  %v6993 = vpack.c.b16 %v4601, %v4597
  %v6994 = vpack.c.b16 %v4606, %v4602
  %v6995 = vpack.c.b16 %v4607, %v4603
  %v6996 = vpack.c.b16 %v4608, %v4604
  %v6997 = vpack.c.b16 %v4609, %v4605
  %v6998 = vpack.c.b16 %v4614, %v4610
  %v6999 = vpack.c.b16 %v4615, %v4611
  %v7000 = vpack.c.b16 %v4616, %v4612
  %v7001 = vpack.c.b16 %v4617, %v4613
  %v7002 = vpack.c.b16 %v4622, %v4618
  %v7003 = vpack.c.b16 %v4623, %v4619
  %v7004 = vpack.c.b16 %v4624, %v4620
  %v7005 = vpack.c.b16 %v4625, %v4621
  %v7006 = vpack.c.b16 %v4630, %v4626
  %v7007 = vpack.c.b16 %v4631, %v4627
  %v7008 = vpack.c.b16 %v4632, %v4628
  %v7009 = vpack.c.b16 %v4633, %v4629
  %v7010 = vpack.c.b16 %v4638, %v4634
  %v7011 = vpack.c.b16 %v4639, %v4635
  %v7012 = vpack.c.b16 %v4640, %v4636
  %v7013 = vpack.c.b16 %v4641, %v4637
  %v7014 = vpack.c.b16 %v4646, %v4642
  %v7015 = vpack.c.b16 %v4647, %v4643
  %v7016 = vpack.c.b16 %v4648, %v4644
  %v7017 = vpack.c.b16 %v4649, %v4645
  %v7018 = vpack.c.b16 %v4654, %v4650
  %v7019 = vpack.c.b16 %v4655, %v4651
  %v7020 = vpack.c.b16 %v4656, %v4652
  %v7021 = vpack.c.b16 %v4657, %v4653
  %v7022 = vpack.c.b16 %v4662, %v4658
  %v7023 = vpack.c.b16 %v4663, %v4659
  %v7024 = vpack.c.b16 %v4664, %v4660
  %v7025 = vpack.c.b16 %v4665, %v4661
  %v7026 = vpack.c.b16 %v4670, %v4666
  %v7027 = vpack.c.b16 %v4671, %v4667
  %v7028 = vpack.c.b16 %v4672, %v4668
  %v7029 = vpack.c.b16 %v4673, %v4669
  %v7030 = vpack.c.b16 %v4678, %v4674
  %v7031 = vpack.c.b16 %v4679, %v4675
  %v7032 = vpack.c.b16 %v4680, %v4676
  %v7033 = vpack.c.b16 %v4681, %v4677
  %v7034 = vpack.c.b16 %v4686, %v4682
  %v7035 = vpack.c.b16 %v4687, %v4683
  %v7036 = vpack.c.b16 %v4688, %v4684
  %v7037 = vpack.c.b16 %v4689, %v4685
  %v7038 = vpack.c.b16 %v4694, %v4690
  %v7039 = vpack.c.b16 %v4695, %v4691
  %v7040 = vpack.c.b16 %v4696, %v4692
  %v7041 = vpack.c.b16 %v4697, %v4693
  %v7042 = vpack.c.b16 %v4702, %v4698
  %v7043 = vpack.c.b16 %v4703, %v4699
  %v7044 = vpack.c.b16 %v4704, %v4700
  %v7045 = vpack.c.b16 %v4705, %v4701
  %v7046 = vpack.c.b16 %v4710, %v4706
  %v7047 = vpack.c.b16 %v4711, %v4707
  %v7048 = vpack.c.b16 %v4712, %v4708
  %v7049 = vpack.c.b16 %v4713, %v4709
  %v7050 = vpack.c.b16 %v4718, %v4714
  %v7051 = vpack.c.b16 %v4719, %v4715
  %v7052 = vpack.c.b16 %v4720, %v4716
  %v7053 = vpack.c.b16 %v4721, %v4717
  %v7054 = vpack.c.b16 %v4726, %v4722
  %v7055 = vpack.c.b16 %v4727, %v4723
  %v7056 = vpack.c.b16 %v4728, %v4724
  %v7057 = vpack.c.b16 %v4729, %v4725
  %v7058 = vpack.c.b16 %v4734, %v4730
  %v7059 = vpack.c.b16 %v4735, %v4731
  %v7060 = vpack.c.b16 %v4736, %v4732
  %v7061 = vpack.c.b16 %v4737, %v4733
  %v7062 = vpack.c.b16 %v4742, %v4738
  %v7063 = vpack.c.b16 %v4743, %v4739
  %v7064 = vpack.c.b16 %v4744, %v4740
  %v7065 = vpack.c.b16 %v4745, %v4741
  %v7066 = vpack.c.b16 %v4750, %v4746
  %v7067 = vpack.c.b16 %v4751, %v4747
  %v7068 = vpack.c.b16 %v4752, %v4748
  %v7069 = vpack.c.b16 %v4753, %v4749
  %v7070 = vpack.c.b16 %v4758, %v4754
  %v7071 = vpack.c.b16 %v4759, %v4755
  %v7072 = vpack.c.b16 %v4760, %v4756
  %v7073 = vpack.c.b16 %v4761, %v4757
  %v7074 = vpack.c.b16 %v4766, %v4762
  %v7075 = vpack.c.b16 %v4767, %v4763
  %v7076 = vpack.c.b16 %v4768, %v4764
  %v7077 = vpack.c.b16 %v4769, %v4765
  %v7078 = vpack.c.b16 %v4774, %v4770
  %v7079 = vpack.c.b16 %v4775, %v4771
  %v7080 = vpack.c.b16 %v4776, %v4772
  %v7081 = vpack.c.b16 %v4777, %v4773
  %v7082 = vpack.c.b16 %v4782, %v4778
  %v7083 = vpack.c.b16 %v4783, %v4779
  %v7084 = vpack.c.b16 %v4784, %v4780
  %v7085 = vpack.c.b16 %v4785, %v4781
  %v7086 = vpack.c.b16 %v4790, %v4786
  %v7087 = vpack.c.b16 %v4791, %v4787
  %v7088 = vpack.c.b16 %v4792, %v4788
  %v7089 = vpack.c.b16 %v4793, %v4789
  %v7090 = vpack.c.b16 %v4798, %v4794
  %v7091 = vpack.c.b16 %v4799, %v4795
  %v7092 = vpack.c.b16 %v4800, %v4796
  %v7093 = vpack.c.b16 %v4801, %v4797
  %v7094 = vpack.c.b16 %v4806, %v4802
  %v7095 = vpack.c.b16 %v4807, %v4803
  %v7096 = vpack.c.b16 %v4808, %v4804
  %v7097 = vpack.c.b16 %v4809, %v4805
  %v7098 = vpack.c.b16 %v4814, %v4810
  %v7099 = vpack.c.b16 %v4815, %v4811
  %v7100 = vpack.c.b16 %v4816, %v4812
  %v7101 = vpack.c.b16 %v4817, %v4813
  %v7102 = vpack.c.b16 %v4822, %v4818
  %v7103 = vpack.c.b16 %v4823, %v4819
  %v7104 = vpack.c.b16 %v4824, %v4820
  %v7105 = vpack.c.b16 %v4825, %v4821
  %v7106 = vpack.c.b16 %v4830, %v4826
  %v7107 = vpack.c.b16 %v4831, %v4827
  %v7108 = vpack.c.b16 %v4832, %v4828
  %v7109 = vpack.c.b16 %v4833, %v4829
  %v7110 = vpack.c.b16 %v4838, %v4834
  %v7111 = vpack.c.b16 %v4839, %v4835
  %v7112 = vpack.c.b16 %v4840, %v4836
  %v7113 = vpack.c.b16 %v4841, %v4837
  %v7114 = vpack.c.b16 %v4846, %v4842
  %v7115 = vpack.c.b16 %v4847, %v4843
  %v7116 = vpack.c.b16 %v4848, %v4844
  %v7117 = vpack.c.b16 %v4849, %v4845
  %v7118 = vpack.c.b16 %v4854, %v4850
  %v7119 = vpack.c.b16 %v4855, %v4851
  %v7120 = vpack.c.b16 %v4856, %v4852
  %v7121 = vpack.c.b16 %v4857, %v4853
  %v7122 = vpack.c.b16 %v4862, %v4858
  %v7123 = vpack.c.b16 %v4863, %v4859
  %v7124 = vpack.c.b16 %v4864, %v4860
  %v7125 = vpack.c.b16 %v4865, %v4861
  %v7126 = vpack.c.b16 %v4870, %v4866
  %v7127 = vpack.c.b16 %v4871, %v4867
  %v7128 = vpack.c.b16 %v4872, %v4868
  %v7129 = vpack.c.b16 %v4873, %v4869
  %v7130 = vpack.c.b16 %v4878, %v4874
  %v7131 = vpack.c.b16 %v4879, %v4875
  %v7132 = vpack.c.b16 %v4880, %v4876
  %v7133 = vpack.c.b16 %v4881, %v4877
  %v7134 = vpack.c.b16 %v4886, %v4882
  %v7135 = vpack.c.b16 %v4887, %v4883
  %v7136 = vpack.c.b16 %v4888, %v4884
  %v7137 = vpack.c.b16 %v4889, %v4885
  %v7138 = vpack.c.b16 %v4894, %v4890
  %v7139 = vpack.c.b16 %v4895, %v4891
  %v7140 = vpack.c.b16 %v4896, %v4892
  %v7141 = vpack.c.b16 %v4897, %v4893
  %v7142 = vpack.c.b16 %v4902, %v4898
  %v7143 = vpack.c.b16 %v4903, %v4899
  %v7144 = vpack.c.b16 %v4904, %v4900
  %v7145 = vpack.c.b16 %v4905, %v4901
  %v7146 = vpack.c.b16 %v4910, %v4906
  %v7147 = vpack.c.b16 %v4911, %v4907
  %v7148 = vpack.c.b16 %v4912, %v4908
  %v7149 = vpack.c.b16 %v4913, %v4909
  %v7150 = vpack.c.b16 %v4918, %v4914
  %v7151 = vpack.c.b16 %v4919, %v4915
  %v7152 = vpack.c.b16 %v4920, %v4916
  %v7153 = vpack.c.b16 %v4921, %v4917
  %v7154 = vpack.c.b16 %v4926, %v4922
  %v7155 = vpack.c.b16 %v4927, %v4923
  %v7156 = vpack.c.b16 %v4928, %v4924
  %v7157 = vpack.c.b16 %v4929, %v4925
  %v7158 = vpack.c.b16 %v4934, %v4930
  %v7159 = vpack.c.b16 %v4935, %v4931
  %v7160 = vpack.c.b16 %v4936, %v4932
  %v7161 = vpack.c.b16 %v4937, %v4933
  %v7162 = vpack.c.b16 %v4942, %v4938
  %v7163 = vpack.c.b16 %v4943, %v4939
  %v7164 = vpack.c.b16 %v4944, %v4940
  %v7165 = vpack.c.b16 %v4945, %v4941
  %v7166 = vpack.c.b16 %v4950, %v4946
  %v7167 = vpack.c.b16 %v4951, %v4947
  %v7168 = vpack.c.b16 %v4952, %v4948
  %v7169 = vpack.c.b16 %v4953, %v4949
  %v7170 = vpack.c.b16 %v4958, %v4954
  %v7171 = vpack.c.b16 %v4959, %v4955
  %v7172 = vpack.c.b16 %v4960, %v4956
  %v7173 = vpack.c.b16 %v4961, %v4957
  %v7174 = vpack.c.b16 %v4966, %v4962
  %v7175 = vpack.c.b16 %v4967, %v4963
  %v7176 = vpack.c.b16 %v4968, %v4964
  %v7177 = vpack.c.b16 %v4969, %v4965
  %v7178 = vpack.c.b16 %v4974, %v4970
  %v7179 = vpack.c.b16 %v4975, %v4971
  %v7180 = vpack.c.b16 %v4976, %v4972
  %v7181 = vpack.c.b16 %v4977, %v4973
  %v7182 = vpack.c.b16 %v4982, %v4978
  %v7183 = vpack.c.b16 %v4983, %v4979
  %v7184 = vpack.c.b16 %v4984, %v4980
  %v7185 = vpack.c.b16 %v4985, %v4981
  %v7186 = vpack.c.b16 %v4990, %v4986
  %v7187 = vpack.c.b16 %v4991, %v4987
  %v7188 = vpack.c.b16 %v4992, %v4988
  %v7189 = vpack.c.b16 %v4993, %v4989
  %v7190 = vpack.c.b16 %v4998, %v4994
  %v7191 = vpack.c.b16 %v4999, %v4995
  %v7192 = vpack.c.b16 %v5000, %v4996
  %v7193 = vpack.c.b16 %v5001, %v4997
  %v7194 = vpack.c.b16 %v5006, %v5002
  %v7195 = vpack.c.b16 %v5007, %v5003
  %v7196 = vpack.c.b16 %v5008, %v5004
  %v7197 = vpack.c.b16 %v5009, %v5005
  %v7198 = vpack.c.b16 %v5014, %v5010
  %v7199 = vpack.c.b16 %v5015, %v5011
  %v7200 = vpack.c.b16 %v5016, %v5012
  %v7201 = vpack.c.b16 %v5017, %v5013
  %v7202 = vpack.c.b16 %v5022, %v5018
  %v7203 = vpack.c.b16 %v5023, %v5019
  %v7204 = vpack.c.b16 %v5024, %v5020
  %v7205 = vpack.c.b16 %v5025, %v5021
  %v7206 = vpack.c.b16 %v5030, %v5026
  %v7207 = vpack.c.b16 %v5031, %v5027
  %v7208 = vpack.c.b16 %v5032, %v5028
  %v7209 = vpack.c.b16 %v5033, %v5029
  %v7210 = vpack.c.b16 %v5038, %v5034
  %v7211 = vpack.c.b16 %v5039, %v5035
  %v7212 = vpack.c.b16 %v5040, %v5036
  %v7213 = vpack.c.b16 %v5041, %v5037
  %v7214 = vpack.c.b16 %v5046, %v5042
  %v7215 = vpack.c.b16 %v5047, %v5043
  %v7216 = vpack.c.b16 %v5048, %v5044
  %v7217 = vpack.c.b16 %v5049, %v5045
  %v7218 = vpack.c.b16 %v5054, %v5050
  %v7219 = vpack.c.b16 %v5055, %v5051
  %v7220 = vpack.c.b16 %v5056, %v5052
  %v7221 = vpack.c.b16 %v5057, %v5053
  %v7222 = vpack.c.b16 %v5062, %v5058
  %v7223 = vpack.c.b16 %v5063, %v5059
  %v7224 = vpack.c.b16 %v5064, %v5060
  %v7225 = vpack.c.b16 %v5065, %v5061
  %v7226 = vpack.c.b16 %v5070, %v5066
  %v7227 = vpack.c.b16 %v5071, %v5067
  %v7228 = vpack.c.b16 %v5072, %v5068
  %v7229 = vpack.c.b16 %v5073, %v5069
  %v7230 = vpack.c.b16 %v5078, %v5074
  %v7231 = vpack.c.b16 %v5079, %v5075
  %v7232 = vpack.c.b16 %v5080, %v5076
  %v7233 = vpack.c.b16 %v5081, %v5077
  %v7234 = vpack.c.b16 %v5086, %v5082
  %v7235 = vpack.c.b16 %v5087, %v5083
  %v7236 = vpack.c.b16 %v5088, %v5084
  %v7237 = vpack.c.b16 %v5089, %v5085
  %v7238 = vpack.c.b16 %v5094, %v5090
  %v7239 = vpack.c.b16 %v5095, %v5091
  %v7240 = vpack.c.b16 %v5096, %v5092
  %v7241 = vpack.c.b16 %v5097, %v5093
  %v7242 = vpack.c.b16 %v5102, %v5098
  %v7243 = vpack.c.b16 %v5103, %v5099
  %v7244 = vpack.c.b16 %v5104, %v5100
  %v7245 = vpack.c.b16 %v5105, %v5101
  %v7246 = vpack.c.b16 %v5110, %v5106
  %v7247 = vpack.c.b16 %v5111, %v5107
  %v7248 = vpack.c.b16 %v5112, %v5108
  %v7249 = vpack.c.b16 %v5113, %v5109
  %v7250 = vpack.c.b16 %v5118, %v5114
  %v7251 = vpack.c.b16 %v5119, %v5115
  %v7252 = vpack.c.b16 %v5120, %v5116
  %v7253 = vpack.c.b16 %v5121, %v5117
  %v7254 = vpack.c.b16 %v5126, %v5122
  %v7255 = vpack.c.b16 %v5127, %v5123
  %v7256 = vpack.c.b16 %v5128, %v5124
  %v7257 = vpack.c.b16 %v5129, %v5125
  %v7258 = vpack.c.b16 %v5134, %v5130
  %v7259 = vpack.c.b16 %v5135, %v5131
  %v7260 = vpack.c.b16 %v5136, %v5132
  %v7261 = vpack.c.b16 %v5137, %v5133
  %v7262 = vpack.c.b16 %v5142, %v5138
  %v7263 = vpack.c.b16 %v5143, %v5139
  %v7264 = vpack.c.b16 %v5144, %v5140
  %v7265 = vpack.c.b16 %v5145, %v5141
  %v7266 = vpack.c.b16 %v5150, %v5146
  %v7267 = vpack.c.b16 %v5151, %v5147
  %v7268 = vpack.c.b16 %v5152, %v5148
  %v7269 = vpack.c.b16 %v5153, %v5149
  %v7270 = vpack.c.b16 %v5158, %v5154
  %v7271 = vpack.c.b16 %v5159, %v5155
  %v7272 = vpack.c.b16 %v5160, %v5156
  %v7273 = vpack.c.b16 %v5161, %v5157
  %v7274 = vpack.c.b16 %v5166, %v5162
  %v7275 = vpack.c.b16 %v5167, %v5163
  %v7276 = vpack.c.b16 %v5168, %v5164
  %v7277 = vpack.c.b16 %v5169, %v5165
  %v7278 = vpack.c.b16 %v5174, %v5170
  %v7279 = vpack.c.b16 %v5175, %v5171
  %v7280 = vpack.c.b16 %v5176, %v5172
  %v7281 = vpack.c.b16 %v5177, %v5173
  %v7282 = vpack.c.b16 %v5182, %v5178
  %v7283 = vpack.c.b16 %v5183, %v5179
  %v7284 = vpack.c.b16 %v5184, %v5180
  %v7285 = vpack.c.b16 %v5185, %v5181
  %v7286 = vpack.c.b16 %v5190, %v5186
  %v7287 = vpack.c.b16 %v5191, %v5187
  %v7288 = vpack.c.b16 %v5192, %v5188
  %v7289 = vpack.c.b16 %v5193, %v5189
  %v7290 = vpack.c.b16 %v5198, %v5194
  %v7291 = vpack.c.b16 %v5199, %v5195
  %v7292 = vpack.c.b16 %v5200, %v5196
  %v7293 = vpack.c.b16 %v5201, %v5197
  %v7294 = vpack.c.b16 %v5206, %v5202
  %v7295 = vpack.c.b16 %v5207, %v5203
  %v7296 = vpack.c.b16 %v5208, %v5204
  %v7297 = vpack.c.b16 %v5209, %v5205
  %v7298 = vpack.c.b16 %v5214, %v5210
  %v7299 = vpack.c.b16 %v5215, %v5211
  %v7300 = vpack.c.b16 %v5216, %v5212
  %v7301 = vpack.c.b16 %v5217, %v5213
  %v7302 = vpack.c.b16 %v5222, %v5218
  %v7303 = vpack.c.b16 %v5223, %v5219
  %v7304 = vpack.c.b16 %v5224, %v5220
  %v7305 = vpack.c.b16 %v5225, %v5221
  %v7306 = vpack.c.b16 %v5230, %v5226
  %v7307 = vpack.c.b16 %v5231, %v5227
  %v7308 = vpack.c.b16 %v5232, %v5228
  %v7309 = vpack.c.b16 %v5233, %v5229
  %v7310 = vpack.c.b16 %v5238, %v5234
  %v7311 = vpack.c.b16 %v5239, %v5235
  %v7312 = vpack.c.b16 %v5240, %v5236
  %v7313 = vpack.c.b16 %v5241, %v5237
  %v7314 = vpack.c.b16 %v5246, %v5242
  %v7315 = vpack.c.b16 %v5247, %v5243
  %v7316 = vpack.c.b16 %v5248, %v5244
  %v7317 = vpack.c.b16 %v5249, %v5245
  %v7318 = vpack.c.b16 %v5254, %v5250
  %v7319 = vpack.c.b16 %v5255, %v5251
  %v7320 = vpack.c.b16 %v5256, %v5252
  %v7321 = vpack.c.b16 %v5257, %v5253
  %v7322 = vpack.c.b16 %v5262, %v5258
  %v7323 = vpack.c.b16 %v5263, %v5259
  %v7324 = vpack.c.b16 %v5264, %v5260
  %v7325 = vpack.c.b16 %v5265, %v5261
  %v7326 = vpack.c.b16 %v5270, %v5266
  %v7327 = vpack.c.b16 %v5271, %v5267
  %v7328 = vpack.c.b16 %v5272, %v5268
  %v7329 = vpack.c.b16 %v5273, %v5269
  %v7330 = vpack.c.b16 %v5278, %v5274
  %v7331 = vpack.c.b16 %v5279, %v5275
  %v7332 = vpack.c.b16 %v5280, %v5276
  %v7333 = vpack.c.b16 %v5281, %v5277
  %v7334 = vpack.c.b16 %v5286, %v5282
  %v7335 = vpack.c.b16 %v5287, %v5283
  %v7336 = vpack.c.b16 %v5288, %v5284
  %v7337 = vpack.c.b16 %v5289, %v5285
  %v7338 = vpack.c.b16 %v5294, %v5290
  %v7339 = vpack.c.b16 %v5295, %v5291
  %v7340 = vpack.c.b16 %v5296, %v5292
  %v7341 = vpack.c.b16 %v5297, %v5293
  %v7342 = vpack.c.b16 %v5302, %v5298
  %v7343 = vpack.c.b16 %v5303, %v5299
  %v7344 = vpack.c.b16 %v5304, %v5300
  %v7345 = vpack.c.b16 %v5305, %v5301
  %v7346 = vpack.c.b16 %v5310, %v5306
  %v7347 = vpack.c.b16 %v5311, %v5307
  %v7348 = vpack.c.b16 %v5312, %v5308
  %v7349 = vpack.c.b16 %v5313, %v5309
  %v7350 = vpack.c.b16 %v5318, %v5314
  %v7351 = vpack.c.b16 %v5319, %v5315
  %v7352 = vpack.c.b16 %v5320, %v5316
  %v7353 = vpack.c.b16 %v5321, %v5317
  %v7354 = vpack.c.b16 %v5326, %v5322
  %v7355 = vpack.c.b16 %v5327, %v5323
  %v7356 = vpack.c.b16 %v5328, %v5324
  %v7357 = vpack.c.b16 %v5329, %v5325
  %v7358 = vpack.c.b16 %v5334, %v5330
  %v7359 = vpack.c.b16 %v5335, %v5331
  %v7360 = vpack.c.b16 %v5336, %v5332
  %v7361 = vpack.c.b16 %v5337, %v5333
  %v7362 = vpack.c.b16 %v5342, %v5338
  %v7363 = vpack.c.b16 %v5343, %v5339
  %v7364 = vpack.c.b16 %v5344, %v5340
  %v7365 = vpack.c.b16 %v5345, %v5341
  %v7366 = vpack.c.b16 %v5350, %v5346
  %v7367 = vpack.c.b16 %v5351, %v5347
  %v7368 = vpack.c.b16 %v5352, %v5348
  %v7369 = vpack.c.b16 %v5353, %v5349
  %v7370 = vpack.c.b16 %v5358, %v5354
  %v7371 = vpack.c.b16 %v5359, %v5355
  %v7372 = vpack.c.b16 %v5360, %v5356
  %v7373 = vpack.c.b16 %v5361, %v5357
  %v7374 = vpack.c.b16 %v5366, %v5362
  %v7375 = vpack.c.b16 %v5367, %v5363
  %v7376 = vpack.c.b16 %v5368, %v5364
  %v7377 = vpack.c.b16 %v5369, %v5365
  %v7378 = vpack.c.b16 %v5374, %v5370
  %v7379 = vpack.c.b16 %v5375, %v5371
  %v7380 = vpack.c.b16 %v5376, %v5372
  %v7381 = vpack.c.b16 %v5377, %v5373
  %v7382 = vpack.c.b16 %v5382, %v5378
  %v7383 = vpack.c.b16 %v5383, %v5379
  %v7384 = vpack.c.b16 %v5384, %v5380
  %v7385 = vpack.c.b16 %v5385, %v5381
  %v7386 = vpack.c.b16 %v5390, %v5386
  %v7387 = vpack.c.b16 %v5391, %v5387
  %v7388 = vpack.c.b16 %v5392, %v5388
  %v7389 = vpack.c.b16 %v5393, %v5389
  %v7390 = vpack.c.b16 %v5398, %v5394
  %v7391 = vpack.c.b16 %v5399, %v5395
  %v7392 = vpack.c.b16 %v5400, %v5396
  %v7393 = vpack.c.b16 %v5401, %v5397
  %v7394 = vpack.c.b16 %v5406, %v5402
  %v7395 = vpack.c.b16 %v5407, %v5403
  %v7396 = vpack.c.b16 %v5408, %v5404
  %v7397 = vpack.c.b16 %v5409, %v5405
  %v7398 = vpack.c.b16 %v5414, %v5410
  %v7399 = vpack.c.b16 %v5415, %v5411
  %v7400 = vpack.c.b16 %v5416, %v5412
  %v7401 = vpack.c.b16 %v5417, %v5413
  %v7402 = vpack.c.b16 %v5422, %v5418
  %v7403 = vpack.c.b16 %v5423, %v5419
  %v7404 = vpack.c.b16 %v5424, %v5420
  %v7405 = vpack.c.b16 %v5425, %v5421
  %v7406 = vpack.c.b16 %v5430, %v5426
  %v7407 = vpack.c.b16 %v5431, %v5427
  %v7408 = vpack.c.b16 %v5432, %v5428
  %v7409 = vpack.c.b16 %v5433, %v5429
  %v7410 = vpack.c.b16 %v5438, %v5434
  %v7411 = vpack.c.b16 %v5439, %v5435
  %v7412 = vpack.c.b16 %v5440, %v5436
  %v7413 = vpack.c.b16 %v5441, %v5437
  %v7414 = vpack.c.b16 %v5446, %v5442
  %v7415 = vpack.c.b16 %v5447, %v5443
  %v7416 = vpack.c.b16 %v5448, %v5444
  %v7417 = vpack.c.b16 %v5449, %v5445
  %v7418 = vpack.c.b16 %v5454, %v5450
  %v7419 = vpack.c.b16 %v5455, %v5451
  %v7420 = vpack.c.b16 %v5456, %v5452
  %v7421 = vpack.c.b16 %v5457, %v5453
  %v7422 = vpack.c.b16 %v5462, %v5458
  %v7423 = vpack.c.b16 %v5463, %v5459
  %v7424 = vpack.c.b16 %v5464, %v5460
  %v7425 = vpack.c.b16 %v5465, %v5461
  %v7426 = vpack.c.b16 %v5470, %v5466
  %v7427 = vpack.c.b16 %v5471, %v5467
  %v7428 = vpack.c.b16 %v5472, %v5468
  %v7429 = vpack.c.b16 %v5473, %v5469
  %v7430 = vpack.c.b16 %v5478, %v5474
  %v7431 = vpack.c.b16 %v5479, %v5475
  %v7432 = vpack.c.b16 %v5480, %v5476
  %v7433 = vpack.c.b16 %v5481, %v5477
  %v7434 = vpack.c.b16 %v5486, %v5482
  %v7435 = vpack.c.b16 %v5487, %v5483
  %v7436 = vpack.c.b16 %v5488, %v5484
  %v7437 = vpack.c.b16 %v5489, %v5485
  %v7438 = vpack.c.b16 %v5494, %v5490
  %v7439 = vpack.c.b16 %v5495, %v5491
  %v7440 = vpack.c.b16 %v5496, %v5492
  %v7441 = vpack.c.b16 %v5497, %v5493
  %v7442 = vpack.c.b16 %v5502, %v5498
  %v7443 = vpack.c.b16 %v5503, %v5499
  %v7444 = vpack.c.b16 %v5504, %v5500
  %v7445 = vpack.c.b16 %v5505, %v5501
  %v7446 = vpack.c.b16 %v5510, %v5506
  %v7447 = vpack.c.b16 %v5511, %v5507
  %v7448 = vpack.c.b16 %v5512, %v5508
  %v7449 = vpack.c.b16 %v5513, %v5509
  %v7450 = vpack.c.b16 %v5518, %v5514
  %v7451 = vpack.c.b16 %v5519, %v5515
  %v7452 = vpack.c.b16 %v5520, %v5516
  %v7453 = vpack.c.b16 %v5521, %v5517
  %v7454 = vpack.c.b16 %v5526, %v5522
  %v7455 = vpack.c.b16 %v5527, %v5523
  %v7456 = vpack.c.b16 %v5528, %v5524
  %v7457 = vpack.c.b16 %v5529, %v5525
  %v7458 = vpack.c.b16 %v5534, %v5530
  %v7459 = vpack.c.b16 %v5535, %v5531
  %v7460 = vpack.c.b16 %v5536, %v5532
  %v7461 = vpack.c.b16 %v5537, %v5533
  %v7462 = vpack.c.b16 %v5542, %v5538
  %v7463 = vpack.c.b16 %v5543, %v5539
  %v7464 = vpack.c.b16 %v5544, %v5540
  %v7465 = vpack.c.b16 %v5545, %v5541
  %v7466 = vpack.c.b16 %v5550, %v5546
  %v7467 = vpack.c.b16 %v5551, %v5547
  %v7468 = vpack.c.b16 %v5552, %v5548
  %v7469 = vpack.c.b16 %v5553, %v5549
  %v7470 = vpack.c.b16 %v5558, %v5554
  %v7471 = vpack.c.b16 %v5559, %v5555
  %v7472 = vpack.c.b16 %v5560, %v5556
  %v7473 = vpack.c.b16 %v5561, %v5557
  %v7474 = vpack.c.b16 %v5566, %v5562
  %v7475 = vpack.c.b16 %v5567, %v5563
  %v7476 = vpack.c.b16 %v5568, %v5564
  %v7477 = vpack.c.b16 %v5569, %v5565
  %v7478 = vpack.c.b16 %v5574, %v5570
  %v7479 = vpack.c.b16 %v5575, %v5571
  %v7480 = vpack.c.b16 %v5576, %v5572
  %v7481 = vpack.c.b16 %v5577, %v5573
  %v7482 = vpack.c.b16 %v5582, %v5578
  %v7483 = vpack.c.b16 %v5583, %v5579
  %v7484 = vpack.c.b16 %v5584, %v5580
  %v7485 = vpack.c.b16 %v5585, %v5581
  %v7486 = vpack.c.b16 %v5590, %v5586
  %v7487 = vpack.c.b16 %v5591, %v5587
  %v7488 = vpack.c.b16 %v5592, %v5588
  %v7489 = vpack.c.b16 %v5593, %v5589
  %v7490 = vpack.c.b16 %v5598, %v5594
  %v7491 = vpack.c.b16 %v5599, %v5595
  %v7492 = vpack.c.b16 %v5600, %v5596
  %v7493 = vpack.c.b16 %v5601, %v5597
  %v7494 = vpack.c.b16 %v5606, %v5602
  %v7495 = vpack.c.b16 %v5607, %v5603
  %v7496 = vpack.c.b16 %v5608, %v5604
  %v7497 = vpack.c.b16 %v5609, %v5605
  %v7498 = vpack.c.b16 %v5614, %v5610
  %v7499 = vpack.c.b16 %v5615, %v5611
  %v7500 = vpack.c.b16 %v5616, %v5612
  %v7501 = vpack.c.b16 %v5617, %v5613
  %v7502 = vpack.c.b16 %v5622, %v5618
  %v7503 = vpack.c.b16 %v5623, %v5619
  %v7504 = vpack.c.b16 %v5624, %v5620
  %v7505 = vpack.c.b16 %v5625, %v5621
  %v7506 = vpack.c.b16 %v5630, %v5626
  %v7507 = vpack.c.b16 %v5631, %v5627
  %v7508 = vpack.c.b16 %v5632, %v5628
  %v7509 = vpack.c.b16 %v5633, %v5629
  %v7510 = vpack.c.b16 %v5638, %v5634
  %v7511 = vpack.c.b16 %v5639, %v5635
  %v7512 = vpack.c.b16 %v5640, %v5636
  %v7513 = vpack.c.b16 %v5641, %v5637
  %v7514 = vpack.c.b16 %v5646, %v5642
  %v7515 = vpack.c.b16 %v5647, %v5643
  %v7516 = vpack.c.b16 %v5648, %v5644
  %v7517 = vpack.c.b16 %v5649, %v5645
  %v7518 = vpack.c.b16 %v5654, %v5650
  %v7519 = vpack.c.b16 %v5655, %v5651
  %v7520 = vpack.c.b16 %v5656, %v5652
  %v7521 = vpack.c.b16 %v5657, %v5653
  %v7522 = vpack.c.b16 %v5662, %v5658
  %v7523 = vpack.c.b16 %v5663, %v5659
  %v7524 = vpack.c.b16 %v5664, %v5660
  %v7525 = vpack.c.b16 %v5665, %v5661
  %v7526 = vpack.c.b16 %v5670, %v5666
  %v7527 = vpack.c.b16 %v5671, %v5667
  %v7528 = vpack.c.b16 %v5672, %v5668
  %v7529 = vpack.c.b16 %v5673, %v5669
  %v7530 = vpack.c.b16 %v5678, %v5674
  %v7531 = vpack.c.b16 %v5679, %v5675
  %v7532 = vpack.c.b16 %v5680, %v5676
  %v7533 = vpack.c.b16 %v5681, %v5677
  %v7534 = vpack.c.b16 %v5686, %v5682
  %v7535 = vpack.c.b16 %v5687, %v5683
  %v7536 = vpack.c.b16 %v5688, %v5684
  %v7537 = vpack.c.b16 %v5689, %v5685
  %v7538 = vpack.c.b16 %v5694, %v5690
  %v7539 = vpack.c.b16 %v5695, %v5691
  %v7540 = vpack.c.b16 %v5696, %v5692
  %v7541 = vpack.c.b16 %v5697, %v5693
  %v7542 = vpack.c.b16 %v5702, %v5698
  %v7543 = vpack.c.b16 %v5703, %v5699
  %v7544 = vpack.c.b16 %v5704, %v5700
  %v7545 = vpack.c.b16 %v5705, %v5701
  %v7546 = vpack.c.b16 %v5710, %v5706
  %v7547 = vpack.c.b16 %v5711, %v5707
  %v7548 = vpack.c.b16 %v5712, %v5708
  %v7549 = vpack.c.b16 %v5713, %v5709
  %v7550 = vpack.c.b16 %v5718, %v5714
  %v7551 = vpack.c.b16 %v5719, %v5715
  %v7552 = vpack.c.b16 %v5720, %v5716
  %v7553 = vpack.c.b16 %v5721, %v5717
  %v7554 = vpack.c.b16 %v5726, %v5722
  %v7555 = vpack.c.b16 %v5727, %v5723
  %v7556 = vpack.c.b16 %v5728, %v5724
  %v7557 = vpack.c.b16 %v5729, %v5725
  %v7558 = vpack.c.b16 %v5734, %v5730
  %v7559 = vpack.c.b16 %v5735, %v5731
  %v7560 = vpack.c.b16 %v5736, %v5732
  %v7561 = vpack.c.b16 %v5737, %v5733
  %v7562 = vpack.c.b16 %v5742, %v5738
  %v7563 = vpack.c.b16 %v5743, %v5739
  %v7564 = vpack.c.b16 %v5744, %v5740
  %v7565 = vpack.c.b16 %v5745, %v5741
  %v7566 = vpack.c.b16 %v5750, %v5746
  %v7567 = vpack.c.b16 %v5751, %v5747
  %v7568 = vpack.c.b16 %v5752, %v5748
  %v7569 = vpack.c.b16 %v5753, %v5749
  %v7570 = vpack.c.b16 %v5758, %v5754
  %v7571 = vpack.c.b16 %v5759, %v5755
  %v7572 = vpack.c.b16 %v5760, %v5756
  %v7573 = vpack.c.b16 %v5761, %v5757
  %v7574 = vpack.c.b16 %v5766, %v5762
  %v7575 = vpack.c.b16 %v5767, %v5763
  %v7576 = vpack.c.b16 %v5768, %v5764
  %v7577 = vpack.c.b16 %v5769, %v5765
  %v7578 = vpack.c.b16 %v5774, %v5770
  %v7579 = vpack.c.b16 %v5775, %v5771
  %v7580 = vpack.c.b16 %v5776, %v5772
  %v7581 = vpack.c.b16 %v5777, %v5773
  %v7582 = vpack.c.b16 %v5782, %v5778
  %v7583 = vpack.c.b16 %v5783, %v5779
  %v7584 = vpack.c.b16 %v5784, %v5780
  %v7585 = vpack.c.b16 %v5785, %v5781
  %v7586 = vpack.c.b16 %v5790, %v5786
  %v7587 = vpack.c.b16 %v5791, %v5787
  %v7588 = vpack.c.b16 %v5792, %v5788
  %v7589 = vpack.c.b16 %v5793, %v5789
  %v7590 = vpack.c.b16 %v5798, %v5794
  %v7591 = vpack.c.b16 %v5799, %v5795
  %v7592 = vpack.c.b16 %v5800, %v5796
  %v7593 = vpack.c.b16 %v5801, %v5797
  %v7594 = vpack.c.b16 %v5806, %v5802
  %v7595 = vpack.c.b16 %v5807, %v5803
  %v7596 = vpack.c.b16 %v5808, %v5804
  %v7597 = vpack.c.b16 %v5809, %v5805
  %v7598 = vpack.c.b16 %v5814, %v5810
  %v7599 = vpack.c.b16 %v5815, %v5811
  %v7600 = vpack.c.b16 %v5816, %v5812
  %v7601 = vpack.c.b16 %v5817, %v5813
  %v7602 = vpack.c.b16 %v5822, %v5818
  %v7603 = vpack.c.b16 %v5823, %v5819
  %v7604 = vpack.c.b16 %v5824, %v5820
  %v7605 = vpack.c.b16 %v5825, %v5821
  %v7606 = vpack.c.b16 %v5830, %v5826
  %v7607 = vpack.c.b16 %v5831, %v5827
  %v7608 = vpack.c.b16 %v5832, %v5828
  %v7609 = vpack.c.b16 %v5833, %v5829
  %v7610 = vpack.c.b16 %v5838, %v5834
  %v7611 = vpack.c.b16 %v5839, %v5835
  %v7612 = vpack.c.b16 %v5840, %v5836
  %v7613 = vpack.c.b16 %v5841, %v5837
  %v7614 = vpack.c.b16 %v5846, %v5842
  %v7615 = vpack.c.b16 %v5847, %v5843
  %v7616 = vpack.c.b16 %v5848, %v5844
  %v7617 = vpack.c.b16 %v5849, %v5845
  %v7618 = vpack.c.b16 %v5854, %v5850
  %v7619 = vpack.c.b16 %v5855, %v5851
  %v7620 = vpack.c.b16 %v5856, %v5852
  %v7621 = vpack.c.b16 %v5857, %v5853
  %v7622 = vpack.c.b16 %v5862, %v5858
  %v7623 = vpack.c.b16 %v5863, %v5859
  %v7624 = vpack.c.b16 %v5864, %v5860
  %v7625 = vpack.c.b16 %v5865, %v5861
  %v7626 = vpack.c.b16 %v5870, %v5866
  %v7627 = vpack.c.b16 %v5871, %v5867
  %v7628 = vpack.c.b16 %v5872, %v5868
  %v7629 = vpack.c.b16 %v5873, %v5869
  %v7630 = vpack.c.b16 %v5878, %v5874
  %v7631 = vpack.c.b16 %v5879, %v5875
  %v7632 = vpack.c.b16 %v5880, %v5876
  %v7633 = vpack.c.b16 %v5881, %v5877
  %v7634 = vpack.c.b16 %v5886, %v5882
  %v7635 = vpack.c.b16 %v5887, %v5883
  %v7636 = vpack.c.b16 %v5888, %v5884
  %v7637 = vpack.c.b16 %v5889, %v5885
  %v7638 = vpack.c.b16 %v5894, %v5890
  %v7639 = vpack.c.b16 %v5895, %v5891
  %v7640 = vpack.c.b16 %v5896, %v5892
  %v7641 = vpack.c.b16 %v5897, %v5893
  %v7642 = vpack.c.b16 %v5902, %v5898
  %v7643 = vpack.c.b16 %v5903, %v5899
  %v7644 = vpack.c.b16 %v5904, %v5900
  %v7645 = vpack.c.b16 %v5905, %v5901
  %v7646 = vpack.c.b16 %v5910, %v5906
  %v7647 = vpack.c.b16 %v5911, %v5907
  %v7648 = vpack.c.b16 %v5912, %v5908
  %v7649 = vpack.c.b16 %v5913, %v5909
  %v7650 = vpack.c.b16 %v5918, %v5914
  %v7651 = vpack.c.b16 %v5919, %v5915
  %v7652 = vpack.c.b16 %v5920, %v5916
  %v7653 = vpack.c.b16 %v5921, %v5917
  %v7654 = vpack.c.b16 %v5926, %v5922
  %v7655 = vpack.c.b16 %v5927, %v5923
  %v7656 = vpack.c.b16 %v5928, %v5924
  %v7657 = vpack.c.b16 %v5929, %v5925
  %v7658 = vpack.c.b16 %v5934, %v5930
  %v7659 = vpack.c.b16 %v5935, %v5931
  %v7660 = vpack.c.b16 %v5936, %v5932
  %v7661 = vpack.c.b16 %v5937, %v5933
  %v7662 = vpack.c.b16 %v5942, %v5938
  %v7663 = vpack.c.b16 %v5943, %v5939
  %v7664 = vpack.c.b16 %v5944, %v5940
  %v7665 = vpack.c.b16 %v5945, %v5941
  %v7666 = vpack.c.b16 %v5950, %v5946
  %v7667 = vpack.c.b16 %v5951, %v5947
  %v7668 = vpack.c.b16 %v5952, %v5948
  %v7669 = vpack.c.b16 %v5953, %v5949
  %v7670 = vpack.c.b16 %v5958, %v5954
  %v7671 = vpack.c.b16 %v5959, %v5955
  %v7672 = vpack.c.b16 %v5960, %v5956
  %v7673 = vpack.c.b16 %v5961, %v5957
  %v7674 = vpack.c.b16 %v5966, %v5962
  %v7675 = vpack.c.b16 %v5967, %v5963
  %v7676 = vpack.c.b16 %v5968, %v5964
  %v7677 = vpack.c.b16 %v5969, %v5965
  %v7678 = vpack.c.b16 %v5974, %v5970
  %v7679 = vpack.c.b16 %v5975, %v5971
  %v7680 = vpack.c.b16 %v5976, %v5972
  %v7681 = vpack.c.b16 %v5977, %v5973
  %v7682 = vpack.c.b16 %v5982, %v5978
  %v7683 = vpack.c.b16 %v5983, %v5979
  %v7684 = vpack.c.b16 %v5984, %v5980
  %v7685 = vpack.c.b16 %v5985, %v5981
  %v7686 = vpack.c.b16 %v5990, %v5986
  %v7687 = vpack.c.b16 %v5991, %v5987
  %v7688 = vpack.c.b16 %v5992, %v5988
  %v7689 = vpack.c.b16 %v5993, %v5989
  %v7690 = vpack.c.b16 %v5998, %v5994
  %v7691 = vpack.c.b16 %v5999, %v5995
  %v7692 = vpack.c.b16 %v6000, %v5996
  %v7693 = vpack.c.b16 %v6001, %v5997
  %v7694 = vpack.c.b16 %v6006, %v6002
  %v7695 = vpack.c.b16 %v6007, %v6003
  %v7696 = vpack.c.b16 %v6008, %v6004
  %v7697 = vpack.c.b16 %v6009, %v6005
  %v7698 = vpack.c.b16 %v6014, %v6010
  %v7699 = vpack.c.b16 %v6015, %v6011
  %v7700 = vpack.c.b16 %v6016, %v6012
  %v7701 = vpack.c.b16 %v6017, %v6013
  %v7702 = vpack.c.b16 %v6022, %v6018
  %v7703 = vpack.c.b16 %v6023, %v6019
  %v7704 = vpack.c.b16 %v6024, %v6020
  %v7705 = vpack.c.b16 %v6025, %v6021
  %v7706 = vpack.c.b16 %v6030, %v6026
  %v7707 = vpack.c.b16 %v6031, %v6027
  %v7708 = vpack.c.b16 %v6032, %v6028
  %v7709 = vpack.c.b16 %v6033, %v6029
  %v7710 = vpack.c.b16 %v6038, %v6034
  %v7711 = vpack.c.b16 %v6039, %v6035
  %v7712 = vpack.c.b16 %v6040, %v6036
  %v7713 = vpack.c.b16 %v6041, %v6037
  %v7714 = vpack.c.b16 %v6046, %v6042
  %v7715 = vpack.c.b16 %v6047, %v6043
  %v7716 = vpack.c.b16 %v6048, %v6044
  %v7717 = vpack.c.b16 %v6049, %v6045
  %v7718 = vpack.c.b16 %v6054, %v6050
  %v7719 = vpack.c.b16 %v6055, %v6051
  %v7720 = vpack.c.b16 %v6056, %v6052
  %v7721 = vpack.c.b16 %v6057, %v6053
  %v7722 = vpack.c.b16 %v6062, %v6058
  %v7723 = vpack.c.b16 %v6063, %v6059
  %v7724 = vpack.c.b16 %v6064, %v6060
  %v7725 = vpack.c.b16 %v6065, %v6061
  %v7726 = vpack.c.b16 %v6070, %v6066
  %v7727 = vpack.c.b16 %v6071, %v6067
  %v7728 = vpack.c.b16 %v6072, %v6068
  %v7729 = vpack.c.b16 %v6073, %v6069
  %v7730 = vpack.c.b16 %v6078, %v6074
  %v7731 = vpack.c.b16 %v6079, %v6075
  %v7732 = vpack.c.b16 %v6080, %v6076
  %v7733 = vpack.c.b16 %v6081, %v6077
  %v7734 = vpack.c.b16 %v6086, %v6082
  %v7735 = vpack.c.b16 %v6087, %v6083
  %v7736 = vpack.c.b16 %v6088, %v6084
  %v7737 = vpack.c.b16 %v6089, %v6085
  %v7738 = vpack.c.b16 %v6094, %v6090
  %v7739 = vpack.c.b16 %v6095, %v6091
  %v7740 = vpack.c.b16 %v6096, %v6092
  %v7741 = vpack.c.b16 %v6097, %v6093
  %v7742 = vpack.c.b16 %v6102, %v6098
  %v7743 = vpack.c.b16 %v6103, %v6099
  %v7744 = vpack.c.b16 %v6104, %v6100
  %v7745 = vpack.c.b16 %v6105, %v6101
  %v7746 = vpack.c.b16 %v6110, %v6106
  %v7747 = vpack.c.b16 %v6111, %v6107
  %v7748 = vpack.c.b16 %v6112, %v6108
  %v7749 = vpack.c.b16 %v6113, %v6109
  %v7750 = vpack.c.b16 %v6118, %v6114
  %v7751 = vpack.c.b16 %v6119, %v6115
  %v7752 = vpack.c.b16 %v6120, %v6116
  %v7753 = vpack.c.b16 %v6121, %v6117
  %v7754 = vpack.c.b16 %v6126, %v6122
  %v7755 = vpack.c.b16 %v6127, %v6123
  %v7756 = vpack.c.b16 %v6128, %v6124
  %v7757 = vpack.c.b16 %v6129, %v6125
  %v7758 = vpack.c.b16 %v6134, %v6130
  %v7759 = vpack.c.b16 %v6135, %v6131
  %v7760 = vpack.c.b16 %v6136, %v6132
  %v7761 = vpack.c.b16 %v6137, %v6133
  %v7762 = vpack.c.b16 %v6142, %v6138
  %v7763 = vpack.c.b16 %v6143, %v6139
  %v7764 = vpack.c.b16 %v6144, %v6140
  %v7765 = vpack.c.b16 %v6145, %v6141
  %v7766 = vpack.c.b16 %v6150, %v6146
  %v7767 = vpack.c.b16 %v6151, %v6147
  %v7768 = vpack.c.b16 %v6152, %v6148
  %v7769 = vpack.c.b16 %v6153, %v6149
  %v7770 = vpack.c.b16 %v6158, %v6154
  %v7771 = vpack.c.b16 %v6159, %v6155
  %v7772 = vpack.c.b16 %v6160, %v6156
  %v7773 = vpack.c.b16 %v6161, %v6157
  %v7774 = vpack.c.b16 %v6166, %v6162
  %v7775 = vpack.c.b16 %v6167, %v6163
  %v7776 = vpack.c.b16 %v6168, %v6164
  %v7777 = vpack.c.b16 %v6169, %v6165
  %v7778 = vpack.c.b16 %v6174, %v6170
  %v7779 = vpack.c.b16 %v6175, %v6171
  %v7780 = vpack.c.b16 %v6176, %v6172
  %v7781 = vpack.c.b16 %v6177, %v6173
  %v7782 = vpack.c.b16 %v6182, %v6178
  %v7783 = vpack.c.b16 %v6183, %v6179
  %v7784 = vpack.c.b16 %v6184, %v6180
  %v7785 = vpack.c.b16 %v6185, %v6181
  %v7786 = vpack.c.b16 %v6190, %v6186
  %v7787 = vpack.c.b16 %v6191, %v6187
  %v7788 = vpack.c.b16 %v6192, %v6188
  %v7789 = vpack.c.b16 %v6193, %v6189
  %v7790 = vpack.c.b16 %v6198, %v6194
  %v7791 = vpack.c.b16 %v6199, %v6195
  %v7792 = vpack.c.b16 %v6200, %v6196
  %v7793 = vpack.c.b16 %v6201, %v6197
  %v7794 = vpack.c.b16 %v6206, %v6202
  %v7795 = vpack.c.b16 %v6207, %v6203
  %v7796 = vpack.c.b16 %v6208, %v6204
  %v7797 = vpack.c.b16 %v6209, %v6205
  %v7798 = vpack.c.b16 %v6214, %v6210
  %v7799 = vpack.c.b16 %v6215, %v6211
  %v7800 = vpack.c.b16 %v6216, %v6212
  %v7801 = vpack.c.b16 %v6217, %v6213
  %v7802 = vpack.c.b16 %v6222, %v6218
  %v7803 = vpack.c.b16 %v6223, %v6219
  %v7804 = vpack.c.b16 %v6224, %v6220
  %v7805 = vpack.c.b16 %v6225, %v6221
  %v7806 = vpack.c.b16 %v6230, %v6226
  %v7807 = vpack.c.b16 %v6231, %v6227
  %v7808 = vpack.c.b16 %v6232, %v6228
  %v7809 = vpack.c.b16 %v6233, %v6229
  %v7810 = vpack.c.b16 %v6238, %v6234
  %v7811 = vpack.c.b16 %v6239, %v6235
  %v7812 = vpack.c.b16 %v6240, %v6236
  %v7813 = vpack.c.b16 %v6241, %v6237
  %v7814 = vpack.c.b16 %v6246, %v6242
  %v7815 = vpack.c.b16 %v6247, %v6243
  %v7816 = vpack.c.b16 %v6248, %v6244
  %v7817 = vpack.c.b16 %v6249, %v6245
  %v7818 = vpack.c.b16 %v6254, %v6250
  %v7819 = vpack.c.b16 %v6255, %v6251
  %v7820 = vpack.c.b16 %v6256, %v6252
  %v7821 = vpack.c.b16 %v6257, %v6253
  %v7822 = vpack.c.b16 %v6262, %v6258
  %v7823 = vpack.c.b16 %v6263, %v6259
  %v7824 = vpack.c.b16 %v6264, %v6260
  %v7825 = vpack.c.b16 %v6265, %v6261
  %v7826 = vpack.c.b16 %v6270, %v6266
  %v7827 = vpack.c.b16 %v6271, %v6267
  %v7828 = vpack.c.b16 %v6272, %v6268
  %v7829 = vpack.c.b16 %v6273, %v6269
  %v7830 = vpack.c.b16 %v6278, %v6274
  %v7831 = vpack.c.b16 %v6279, %v6275
  %v7832 = vpack.c.b16 %v6280, %v6276
  %v7833 = vpack.c.b16 %v6281, %v6277
  %v7834 = vpack.c.b16 %v6286, %v6282
  %v7835 = vpack.c.b16 %v6287, %v6283
  %v7836 = vpack.c.b16 %v6288, %v6284
  %v7837 = vpack.c.b16 %v6289, %v6285
  %v7838 = vpack.c.b16 %v6294, %v6290
  %v7839 = vpack.c.b16 %v6295, %v6291
  %v7840 = vpack.c.b16 %v6296, %v6292
  %v7841 = vpack.c.b16 %v6297, %v6293
  %v7842 = vpack.c.b16 %v6302, %v6298
  %v7843 = vpack.c.b16 %v6303, %v6299
  %v7844 = vpack.c.b16 %v6304, %v6300
  %v7845 = vpack.c.b16 %v6305, %v6301
  %v7846 = vpack.c.b16 %v6310, %v6306
  %v7847 = vpack.c.b16 %v6311, %v6307
  %v7848 = vpack.c.b16 %v6312, %v6308
  %v7849 = vpack.c.b16 %v6313, %v6309
  %9386 = vmatpush.bf16.msra.mxu0 %v6342
  %9387 = vmatpush.bf16.msra.mxu0 %v6338
  %9388 = vmatpush.bf16.msra.mxu0 %v6334
  %9389 = vmatpush.bf16.msra.mxu0 %v6330
  %9390 = vmatpush.bf16.msra.mxu0 %v6326
  %9391 = vmatpush.bf16.msra.mxu0 %v6322
  %9392 = vmatpush.bf16.msra.mxu0 %v6318
  %9393 = vmatpush.bf16.msra.mxu0 %v6314
  %9394 = vmatmul.bf16.gmra.mxu0 %v1590
  %v9395 = vpop.f32.mrf.mxu0
  %v9396 = vadd.f32 0.0, %v9395
  %v9397 = vpop.f32.mrf.mxu0
  %9398 = vdwg.mxu0
  %9399 = vmatpush.bf16.msra.mxu0 %v6374
  %9400 = vmatpush.bf16.msra.mxu0 %v6370
  %9401 = vmatpush.bf16.msra.mxu0 %v6366
  %9402 = vmatpush.bf16.msra.mxu0 %v6362
  %9403 = vmatpush.bf16.msra.mxu0 %v6358
  %9404 = vmatpush.bf16.msra.mxu0 %v6354
  %9405 = vmatpush.bf16.msra.mxu0 %v6350
  %9406 = vmatpush.bf16.msra.mxu0 %v6346
  %9407 = vmatmul.bf16.gmra.mxu0 %v1591
  %v9408 = vpop.f32.mrf.mxu0
  %v9409 = vadd.f32 %v9396, %v9408
  %v9410 = vpop.f32.mrf.mxu0
  %9411 = vdwg.mxu0
  %9412 = vmatpush.bf16.msra.mxu0 %v6406
  %9413 = vmatpush.bf16.msra.mxu0 %v6402
  %9414 = vmatpush.bf16.msra.mxu0 %v6398
  %9415 = vmatpush.bf16.msra.mxu0 %v6394
  %9416 = vmatpush.bf16.msra.mxu0 %v6390
  %9417 = vmatpush.bf16.msra.mxu0 %v6386
  %9418 = vmatpush.bf16.msra.mxu0 %v6382
  %9419 = vmatpush.bf16.msra.mxu0 %v6378
  %9420 = vmatmul.bf16.gmra.mxu0 %v1592
  %v9421 = vpop.f32.mrf.mxu0
  %v9422 = vadd.f32 %v9409, %v9421
  %v9423 = vpop.f32.mrf.mxu0
  %9424 = vdwg.mxu0
  %9425 = vmatpush.bf16.msra.mxu0 %v6438
  %9426 = vmatpush.bf16.msra.mxu0 %v6434
  %9427 = vmatpush.bf16.msra.mxu0 %v6430
  %9428 = vmatpush.bf16.msra.mxu0 %v6426
  %9429 = vmatpush.bf16.msra.mxu0 %v6422
  %9430 = vmatpush.bf16.msra.mxu0 %v6418
  %9431 = vmatpush.bf16.msra.mxu0 %v6414
  %9432 = vmatpush.bf16.msra.mxu0 %v6410
  %9433 = vmatmul.bf16.gmra.mxu0 %v1593
  %v9434 = vpop.f32.mrf.mxu0
  %v9435 = vadd.f32 %v9422, %v9434
  %v9436 = vpop.f32.mrf.mxu0
  %9437 = vdwg.mxu0
  %9438 = vmatpush.bf16.msra.mxu0 %v6470
  %9439 = vmatpush.bf16.msra.mxu0 %v6466
  %9440 = vmatpush.bf16.msra.mxu0 %v6462
  %9441 = vmatpush.bf16.msra.mxu0 %v6458
  %9442 = vmatpush.bf16.msra.mxu0 %v6454
  %9443 = vmatpush.bf16.msra.mxu0 %v6450
  %9444 = vmatpush.bf16.msra.mxu0 %v6446
  %9445 = vmatpush.bf16.msra.mxu0 %v6442
  %9446 = vmatmul.bf16.gmra.mxu0 %v1594
  %v9447 = vpop.f32.mrf.mxu0
  %v9448 = vadd.f32 %v9435, %v9447
  %v9449 = vpop.f32.mrf.mxu0
  %9450 = vdwg.mxu0
  %9451 = vmatpush.bf16.msra.mxu0 %v6502
  %9452 = vmatpush.bf16.msra.mxu0 %v6498
  %9453 = vmatpush.bf16.msra.mxu0 %v6494
  %9454 = vmatpush.bf16.msra.mxu0 %v6490
  %9455 = vmatpush.bf16.msra.mxu0 %v6486
  %9456 = vmatpush.bf16.msra.mxu0 %v6482
  %9457 = vmatpush.bf16.msra.mxu0 %v6478
  %9458 = vmatpush.bf16.msra.mxu0 %v6474
  %9459 = vmatmul.bf16.gmra.mxu0 %v1595
  %v9460 = vpop.f32.mrf.mxu0
  %v9461 = vadd.f32 %v9448, %v9460
  %v9462 = vpop.f32.mrf.mxu0
  %9463 = vdwg.mxu0
  %9464 = vmatpush.bf16.msra.mxu0 %v6534
  %9465 = vmatpush.bf16.msra.mxu0 %v6530
  %9466 = vmatpush.bf16.msra.mxu0 %v6526
  %9467 = vmatpush.bf16.msra.mxu0 %v6522
  %9468 = vmatpush.bf16.msra.mxu0 %v6518
  %9469 = vmatpush.bf16.msra.mxu0 %v6514
  %9470 = vmatpush.bf16.msra.mxu0 %v6510
  %9471 = vmatpush.bf16.msra.mxu0 %v6506
  %9472 = vmatmul.bf16.gmra.mxu0 %v1596
  %v9473 = vpop.f32.mrf.mxu0
  %v9474 = vadd.f32 %v9461, %v9473
  %v9475 = vpop.f32.mrf.mxu0
  %9476 = vdwg.mxu0
  %9477 = vmatpush.bf16.msra.mxu0 %v6566
  %9478 = vmatpush.bf16.msra.mxu0 %v6562
  %9479 = vmatpush.bf16.msra.mxu0 %v6558
  %9480 = vmatpush.bf16.msra.mxu0 %v6554
  %9481 = vmatpush.bf16.msra.mxu0 %v6550
  %9482 = vmatpush.bf16.msra.mxu0 %v6546
  %9483 = vmatpush.bf16.msra.mxu0 %v6542
  %9484 = vmatpush.bf16.msra.mxu0 %v6538
  %9485 = vmatmul.bf16.gmra.mxu0 %v1597
  %v9486 = vpop.f32.mrf.mxu0
  %v9487 = vadd.f32 %v9474, %v9486
  %v9488 = vpop.f32.mrf.mxu0
  %9489 = vdwg.mxu0
  %9490 = vmatpush.bf16.msra.mxu0 %v6598
  %9491 = vmatpush.bf16.msra.mxu0 %v6594
  %9492 = vmatpush.bf16.msra.mxu0 %v6590
  %9493 = vmatpush.bf16.msra.mxu0 %v6586
  %9494 = vmatpush.bf16.msra.mxu0 %v6582
  %9495 = vmatpush.bf16.msra.mxu0 %v6578
  %9496 = vmatpush.bf16.msra.mxu0 %v6574
  %9497 = vmatpush.bf16.msra.mxu0 %v6570
  %9498 = vmatmul.bf16.gmra.mxu0 %v1602
  %v9499 = vpop.f32.mrf.mxu0
  %v9500 = vadd.f32 %v9487, %v9499
  %v9501 = vpop.f32.mrf.mxu0
  %9502 = vdwg.mxu0
  %9503 = vmatpush.bf16.msra.mxu0 %v6630
  %9504 = vmatpush.bf16.msra.mxu0 %v6626
  %9505 = vmatpush.bf16.msra.mxu0 %v6622
  %9506 = vmatpush.bf16.msra.mxu0 %v6618
  %9507 = vmatpush.bf16.msra.mxu0 %v6614
  %9508 = vmatpush.bf16.msra.mxu0 %v6610
  %9509 = vmatpush.bf16.msra.mxu0 %v6606
  %9510 = vmatpush.bf16.msra.mxu0 %v6602
  %9511 = vmatmul.bf16.gmra.mxu0 %v1603
  %v9512 = vpop.f32.mrf.mxu0
  %v9513 = vadd.f32 %v9500, %v9512
  %v9514 = vpop.f32.mrf.mxu0
  %9515 = vdwg.mxu0
  %9516 = vmatpush.bf16.msra.mxu0 %v6662
  %9517 = vmatpush.bf16.msra.mxu0 %v6658
  %9518 = vmatpush.bf16.msra.mxu0 %v6654
  %9519 = vmatpush.bf16.msra.mxu0 %v6650
  %9520 = vmatpush.bf16.msra.mxu0 %v6646
  %9521 = vmatpush.bf16.msra.mxu0 %v6642
  %9522 = vmatpush.bf16.msra.mxu0 %v6638
  %9523 = vmatpush.bf16.msra.mxu0 %v6634
  %9524 = vmatmul.bf16.gmra.mxu0 %v1604
  %v9525 = vpop.f32.mrf.mxu0
  %v9526 = vadd.f32 %v9513, %v9525
  %v9527 = vpop.f32.mrf.mxu0
  %9528 = vdwg.mxu0
  %9529 = vmatpush.bf16.msra.mxu0 %v6694
  %9530 = vmatpush.bf16.msra.mxu0 %v6690
  %9531 = vmatpush.bf16.msra.mxu0 %v6686
  %9532 = vmatpush.bf16.msra.mxu0 %v6682
  %9533 = vmatpush.bf16.msra.mxu0 %v6678
  %9534 = vmatpush.bf16.msra.mxu0 %v6674
  %9535 = vmatpush.bf16.msra.mxu0 %v6670
  %9536 = vmatpush.bf16.msra.mxu0 %v6666
  %9537 = vmatmul.bf16.gmra.mxu0 %v1605
  %v9538 = vpop.f32.mrf.mxu0
  %v9539 = vadd.f32 %v9526, %v9538
  %v9540 = vpop.f32.mrf.mxu0
  %9541 = vdwg.mxu0
  %9542 = vmatpush.bf16.msra.mxu0 %v6726
  %9543 = vmatpush.bf16.msra.mxu0 %v6722
  %9544 = vmatpush.bf16.msra.mxu0 %v6718
  %9545 = vmatpush.bf16.msra.mxu0 %v6714
  %9546 = vmatpush.bf16.msra.mxu0 %v6710
  %9547 = vmatpush.bf16.msra.mxu0 %v6706
  %9548 = vmatpush.bf16.msra.mxu0 %v6702
  %9549 = vmatpush.bf16.msra.mxu0 %v6698
  %9550 = vmatmul.bf16.gmra.mxu0 %v1606
  %v9551 = vpop.f32.mrf.mxu0
  %v9552 = vadd.f32 %v9539, %v9551
  %v9553 = vpop.f32.mrf.mxu0
  %9554 = vdwg.mxu0
  %9555 = vmatpush.bf16.msra.mxu0 %v6758
  %9556 = vmatpush.bf16.msra.mxu0 %v6754
  %9557 = vmatpush.bf16.msra.mxu0 %v6750
  %9558 = vmatpush.bf16.msra.mxu0 %v6746
  %9559 = vmatpush.bf16.msra.mxu0 %v6742
  %9560 = vmatpush.bf16.msra.mxu0 %v6738
  %9561 = vmatpush.bf16.msra.mxu0 %v6734
  %9562 = vmatpush.bf16.msra.mxu0 %v6730
  %9563 = vmatmul.bf16.gmra.mxu0 %v1607
  %v9564 = vpop.f32.mrf.mxu0
  %v9565 = vadd.f32 %v9552, %v9564
  %v9566 = vpop.f32.mrf.mxu0
  %9567 = vdwg.mxu0
  %9568 = vmatpush.bf16.msra.mxu0 %v6790
  %9569 = vmatpush.bf16.msra.mxu0 %v6786
  %9570 = vmatpush.bf16.msra.mxu0 %v6782
  %9571 = vmatpush.bf16.msra.mxu0 %v6778
  %9572 = vmatpush.bf16.msra.mxu0 %v6774
  %9573 = vmatpush.bf16.msra.mxu0 %v6770
  %9574 = vmatpush.bf16.msra.mxu0 %v6766
  %9575 = vmatpush.bf16.msra.mxu0 %v6762
  %9576 = vmatmul.bf16.gmra.mxu0 %v1608
  %v9577 = vpop.f32.mrf.mxu0
  %v9578 = vadd.f32 %v9565, %v9577
  %v9579 = vpop.f32.mrf.mxu0
  %9580 = vdwg.mxu0
  %9581 = vmatpush.bf16.msra.mxu0 %v6822
  %9582 = vmatpush.bf16.msra.mxu0 %v6818
  %9583 = vmatpush.bf16.msra.mxu0 %v6814
  %9584 = vmatpush.bf16.msra.mxu0 %v6810
  %9585 = vmatpush.bf16.msra.mxu0 %v6806
  %9586 = vmatpush.bf16.msra.mxu0 %v6802
  %9587 = vmatpush.bf16.msra.mxu0 %v6798
  %9588 = vmatpush.bf16.msra.mxu0 %v6794
  %9589 = vmatmul.bf16.gmra.mxu0 %v1609
  %v9590 = vpop.f32.mrf.mxu0
  %v9591 = vadd.f32 %v9578, %v9590
  %v9592 = vpop.f32.mrf.mxu0
  %9593 = vdwg.mxu0
  %9594 = vmatpush.bf16.msra.mxu0 %v6854
  %9595 = vmatpush.bf16.msra.mxu0 %v6850
  %9596 = vmatpush.bf16.msra.mxu0 %v6846
  %9597 = vmatpush.bf16.msra.mxu0 %v6842
  %9598 = vmatpush.bf16.msra.mxu0 %v6838
  %9599 = vmatpush.bf16.msra.mxu0 %v6834
  %9600 = vmatpush.bf16.msra.mxu0 %v6830
  %9601 = vmatpush.bf16.msra.mxu0 %v6826
  %9602 = vmatmul.bf16.gmra.mxu0 %v1614
  %v9603 = vpop.f32.mrf.mxu0
  %v9604 = vadd.f32 %v9591, %v9603
  %v9605 = vpop.f32.mrf.mxu0
  %9606 = vdwg.mxu0
  %9607 = vmatpush.bf16.msra.mxu0 %v6886
  %9608 = vmatpush.bf16.msra.mxu0 %v6882
  %9609 = vmatpush.bf16.msra.mxu0 %v6878
  %9610 = vmatpush.bf16.msra.mxu0 %v6874
  %9611 = vmatpush.bf16.msra.mxu0 %v6870
  %9612 = vmatpush.bf16.msra.mxu0 %v6866
  %9613 = vmatpush.bf16.msra.mxu0 %v6862
  %9614 = vmatpush.bf16.msra.mxu0 %v6858
  %9615 = vmatmul.bf16.gmra.mxu0 %v1615
  %v9616 = vpop.f32.mrf.mxu0
  %v9617 = vadd.f32 %v9604, %v9616
  %v9618 = vpop.f32.mrf.mxu0
  %9619 = vdwg.mxu0
  %9620 = vmatpush.bf16.msra.mxu0 %v6918
  %9621 = vmatpush.bf16.msra.mxu0 %v6914
  %9622 = vmatpush.bf16.msra.mxu0 %v6910
  %9623 = vmatpush.bf16.msra.mxu0 %v6906
  %9624 = vmatpush.bf16.msra.mxu0 %v6902
  %9625 = vmatpush.bf16.msra.mxu0 %v6898
  %9626 = vmatpush.bf16.msra.mxu0 %v6894
  %9627 = vmatpush.bf16.msra.mxu0 %v6890
  %9628 = vmatmul.bf16.gmra.mxu0 %v1616
  %v9629 = vpop.f32.mrf.mxu0
  %v9630 = vadd.f32 %v9617, %v9629
  %v9631 = vpop.f32.mrf.mxu0
  %9632 = vdwg.mxu0
  %9633 = vmatpush.bf16.msra.mxu0 %v6950
  %9634 = vmatpush.bf16.msra.mxu0 %v6946
  %9635 = vmatpush.bf16.msra.mxu0 %v6942
  %9636 = vmatpush.bf16.msra.mxu0 %v6938
  %9637 = vmatpush.bf16.msra.mxu0 %v6934
  %9638 = vmatpush.bf16.msra.mxu0 %v6930
  %9639 = vmatpush.bf16.msra.mxu0 %v6926
  %9640 = vmatpush.bf16.msra.mxu0 %v6922
  %9641 = vmatmul.bf16.gmra.mxu0 %v1617
  %v9642 = vpop.f32.mrf.mxu0
  %v9643 = vadd.f32 %v9630, %v9642
  %v9644 = vpop.f32.mrf.mxu0
  %9645 = vdwg.mxu0
  %9646 = vmatpush.bf16.msra.mxu0 %v6982
  %9647 = vmatpush.bf16.msra.mxu0 %v6978
  %9648 = vmatpush.bf16.msra.mxu0 %v6974
  %9649 = vmatpush.bf16.msra.mxu0 %v6970
  %9650 = vmatpush.bf16.msra.mxu0 %v6966
  %9651 = vmatpush.bf16.msra.mxu0 %v6962
  %9652 = vmatpush.bf16.msra.mxu0 %v6958
  %9653 = vmatpush.bf16.msra.mxu0 %v6954
  %9654 = vmatmul.bf16.gmra.mxu0 %v1618
  %v9655 = vpop.f32.mrf.mxu0
  %v9656 = vadd.f32 %v9643, %v9655
  %v9657 = vpop.f32.mrf.mxu0
  %9658 = vdwg.mxu0
  %9659 = vmatpush.bf16.msra.mxu0 %v7014
  %9660 = vmatpush.bf16.msra.mxu0 %v7010
  %9661 = vmatpush.bf16.msra.mxu0 %v7006
  %9662 = vmatpush.bf16.msra.mxu0 %v7002
  %9663 = vmatpush.bf16.msra.mxu0 %v6998
  %9664 = vmatpush.bf16.msra.mxu0 %v6994
  %9665 = vmatpush.bf16.msra.mxu0 %v6990
  %9666 = vmatpush.bf16.msra.mxu0 %v6986
  %9667 = vmatmul.bf16.gmra.mxu0 %v1619
  %v9668 = vpop.f32.mrf.mxu0
  %v9669 = vadd.f32 %v9656, %v9668
  %v9670 = vpop.f32.mrf.mxu0
  %9671 = vdwg.mxu0
  %9672 = vmatpush.bf16.msra.mxu0 %v7046
  %9673 = vmatpush.bf16.msra.mxu0 %v7042
  %9674 = vmatpush.bf16.msra.mxu0 %v7038
  %9675 = vmatpush.bf16.msra.mxu0 %v7034
  %9676 = vmatpush.bf16.msra.mxu0 %v7030
  %9677 = vmatpush.bf16.msra.mxu0 %v7026
  %9678 = vmatpush.bf16.msra.mxu0 %v7022
  %9679 = vmatpush.bf16.msra.mxu0 %v7018
  %9680 = vmatmul.bf16.gmra.mxu0 %v1620
  %v9681 = vpop.f32.mrf.mxu0
  %v9682 = vadd.f32 %v9669, %v9681
  %v9683 = vpop.f32.mrf.mxu0
  %9684 = vdwg.mxu0
  %9685 = vmatpush.bf16.msra.mxu0 %v7078
  %9686 = vmatpush.bf16.msra.mxu0 %v7074
  %9687 = vmatpush.bf16.msra.mxu0 %v7070
  %9688 = vmatpush.bf16.msra.mxu0 %v7066
  %9689 = vmatpush.bf16.msra.mxu0 %v7062
  %9690 = vmatpush.bf16.msra.mxu0 %v7058
  %9691 = vmatpush.bf16.msra.mxu0 %v7054
  %9692 = vmatpush.bf16.msra.mxu0 %v7050
  %9693 = vmatmul.bf16.gmra.mxu0 %v1621
  %v9694 = vpop.f32.mrf.mxu0
  %v9695 = vadd.f32 %v9682, %v9694
  %v9696 = vpop.f32.mrf.mxu0
  %9697 = vdwg.mxu0
  %9698 = vmatpush.bf16.msra.mxu0 %v7110
  %9699 = vmatpush.bf16.msra.mxu0 %v7106
  %9700 = vmatpush.bf16.msra.mxu0 %v7102
  %9701 = vmatpush.bf16.msra.mxu0 %v7098
  %9702 = vmatpush.bf16.msra.mxu0 %v7094
  %9703 = vmatpush.bf16.msra.mxu0 %v7090
  %9704 = vmatpush.bf16.msra.mxu0 %v7086
  %9705 = vmatpush.bf16.msra.mxu0 %v7082
  %9706 = vmatmul.bf16.gmra.mxu0 %v1626
  %v9707 = vpop.f32.mrf.mxu0
  %v9708 = vadd.f32 %v9695, %v9707
  %v9709 = vpop.f32.mrf.mxu0
  %9710 = vdwg.mxu0
  %9711 = vmatpush.bf16.msra.mxu0 %v7142
  %9712 = vmatpush.bf16.msra.mxu0 %v7138
  %9713 = vmatpush.bf16.msra.mxu0 %v7134
  %9714 = vmatpush.bf16.msra.mxu0 %v7130
  %9715 = vmatpush.bf16.msra.mxu0 %v7126
  %9716 = vmatpush.bf16.msra.mxu0 %v7122
  %9717 = vmatpush.bf16.msra.mxu0 %v7118
  %9718 = vmatpush.bf16.msra.mxu0 %v7114
  %9719 = vmatmul.bf16.gmra.mxu0 %v1627
  %v9720 = vpop.f32.mrf.mxu0
  %v9721 = vadd.f32 %v9708, %v9720
  %v9722 = vpop.f32.mrf.mxu0
  %9723 = vdwg.mxu0
  %9724 = vmatpush.bf16.msra.mxu0 %v7174
  %9725 = vmatpush.bf16.msra.mxu0 %v7170
  %9726 = vmatpush.bf16.msra.mxu0 %v7166
  %9727 = vmatpush.bf16.msra.mxu0 %v7162
  %9728 = vmatpush.bf16.msra.mxu0 %v7158
  %9729 = vmatpush.bf16.msra.mxu0 %v7154
  %9730 = vmatpush.bf16.msra.mxu0 %v7150
  %9731 = vmatpush.bf16.msra.mxu0 %v7146
  %9732 = vmatmul.bf16.gmra.mxu0 %v1628
  %v9733 = vpop.f32.mrf.mxu0
  %v9734 = vadd.f32 %v9721, %v9733
  %v9735 = vpop.f32.mrf.mxu0
  %9736 = vdwg.mxu0
  %9737 = vmatpush.bf16.msra.mxu0 %v7206
  %9738 = vmatpush.bf16.msra.mxu0 %v7202
  %9739 = vmatpush.bf16.msra.mxu0 %v7198
  %9740 = vmatpush.bf16.msra.mxu0 %v7194
  %9741 = vmatpush.bf16.msra.mxu0 %v7190
  %9742 = vmatpush.bf16.msra.mxu0 %v7186
  %9743 = vmatpush.bf16.msra.mxu0 %v7182
  %9744 = vmatpush.bf16.msra.mxu0 %v7178
  %9745 = vmatmul.bf16.gmra.mxu0 %v1629
  %v9746 = vpop.f32.mrf.mxu0
  %v9747 = vadd.f32 %v9734, %v9746
  %v9748 = vpop.f32.mrf.mxu0
  %9749 = vdwg.mxu0
  %9750 = vmatpush.bf16.msra.mxu0 %v7238
  %9751 = vmatpush.bf16.msra.mxu0 %v7234
  %9752 = vmatpush.bf16.msra.mxu0 %v7230
  %9753 = vmatpush.bf16.msra.mxu0 %v7226
  %9754 = vmatpush.bf16.msra.mxu0 %v7222
  %9755 = vmatpush.bf16.msra.mxu0 %v7218
  %9756 = vmatpush.bf16.msra.mxu0 %v7214
  %9757 = vmatpush.bf16.msra.mxu0 %v7210
  %9758 = vmatmul.bf16.gmra.mxu0 %v1630
  %v9759 = vpop.f32.mrf.mxu0
  %v9760 = vadd.f32 %v9747, %v9759
  %v9761 = vpop.f32.mrf.mxu0
  %9762 = vdwg.mxu0
  %9763 = vmatpush.bf16.msra.mxu0 %v7270
  %9764 = vmatpush.bf16.msra.mxu0 %v7266
  %9765 = vmatpush.bf16.msra.mxu0 %v7262
  %9766 = vmatpush.bf16.msra.mxu0 %v7258
  %9767 = vmatpush.bf16.msra.mxu0 %v7254
  %9768 = vmatpush.bf16.msra.mxu0 %v7250
  %9769 = vmatpush.bf16.msra.mxu0 %v7246
  %9770 = vmatpush.bf16.msra.mxu0 %v7242
  %9771 = vmatmul.bf16.gmra.mxu0 %v1631
  %v9772 = vpop.f32.mrf.mxu0
  %v9773 = vadd.f32 %v9760, %v9772
  %v9774 = vpop.f32.mrf.mxu0
  %9775 = vdwg.mxu0
  %9776 = vmatpush.bf16.msra.mxu0 %v7302
  %9777 = vmatpush.bf16.msra.mxu0 %v7298
  %9778 = vmatpush.bf16.msra.mxu0 %v7294
  %9779 = vmatpush.bf16.msra.mxu0 %v7290
  %9780 = vmatpush.bf16.msra.mxu0 %v7286
  %9781 = vmatpush.bf16.msra.mxu0 %v7282
  %9782 = vmatpush.bf16.msra.mxu0 %v7278
  %9783 = vmatpush.bf16.msra.mxu0 %v7274
  %9784 = vmatmul.bf16.gmra.mxu0 %v1632
  %v9785 = vpop.f32.mrf.mxu0
  %v9786 = vadd.f32 %v9773, %v9785
  %v9787 = vpop.f32.mrf.mxu0
  %9788 = vdwg.mxu0
  %9789 = vmatpush.bf16.msra.mxu0 %v7334
  %9790 = vmatpush.bf16.msra.mxu0 %v7330
  %9791 = vmatpush.bf16.msra.mxu0 %v7326
  %9792 = vmatpush.bf16.msra.mxu0 %v7322
  %9793 = vmatpush.bf16.msra.mxu0 %v7318
  %9794 = vmatpush.bf16.msra.mxu0 %v7314
  %9795 = vmatpush.bf16.msra.mxu0 %v7310
  %9796 = vmatpush.bf16.msra.mxu0 %v7306
  %9797 = vmatmul.bf16.gmra.mxu0 %v1633
  %v9798 = vpop.f32.mrf.mxu0
  %v9799 = vadd.f32 %v9786, %v9798
  %v9800 = vpop.f32.mrf.mxu0
  %9801 = vdwg.mxu0
  %9802 = vmatpush.bf16.msra.mxu0 %v7366
  %9803 = vmatpush.bf16.msra.mxu0 %v7362
  %9804 = vmatpush.bf16.msra.mxu0 %v7358
  %9805 = vmatpush.bf16.msra.mxu0 %v7354
  %9806 = vmatpush.bf16.msra.mxu0 %v7350
  %9807 = vmatpush.bf16.msra.mxu0 %v7346
  %9808 = vmatpush.bf16.msra.mxu0 %v7342
  %9809 = vmatpush.bf16.msra.mxu0 %v7338
  %9810 = vmatmul.bf16.gmra.mxu0 %v1638
  %v9811 = vpop.f32.mrf.mxu0
  %v9812 = vadd.f32 %v9799, %v9811
  %v9813 = vpop.f32.mrf.mxu0
  %9814 = vdwg.mxu0
  %9815 = vmatpush.bf16.msra.mxu0 %v7398
  %9816 = vmatpush.bf16.msra.mxu0 %v7394
  %9817 = vmatpush.bf16.msra.mxu0 %v7390
  %9818 = vmatpush.bf16.msra.mxu0 %v7386
  %9819 = vmatpush.bf16.msra.mxu0 %v7382
  %9820 = vmatpush.bf16.msra.mxu0 %v7378
  %9821 = vmatpush.bf16.msra.mxu0 %v7374
  %9822 = vmatpush.bf16.msra.mxu0 %v7370
  %9823 = vmatmul.bf16.gmra.mxu0 %v1639
  %v9824 = vpop.f32.mrf.mxu0
  %v9825 = vadd.f32 %v9812, %v9824
  %v9826 = vpop.f32.mrf.mxu0
  %9827 = vdwg.mxu0
  %9828 = vmatpush.bf16.msra.mxu0 %v7430
  %9829 = vmatpush.bf16.msra.mxu0 %v7426
  %9830 = vmatpush.bf16.msra.mxu0 %v7422
  %9831 = vmatpush.bf16.msra.mxu0 %v7418
  %9832 = vmatpush.bf16.msra.mxu0 %v7414
  %9833 = vmatpush.bf16.msra.mxu0 %v7410
  %9834 = vmatpush.bf16.msra.mxu0 %v7406
  %9835 = vmatpush.bf16.msra.mxu0 %v7402
  %9836 = vmatmul.bf16.gmra.mxu0 %v1640
  %v9837 = vpop.f32.mrf.mxu0
  %v9838 = vadd.f32 %v9825, %v9837
  %v9839 = vpop.f32.mrf.mxu0
  %9840 = vdwg.mxu0
  %9841 = vmatpush.bf16.msra.mxu0 %v7462
  %9842 = vmatpush.bf16.msra.mxu0 %v7458
  %9843 = vmatpush.bf16.msra.mxu0 %v7454
  %9844 = vmatpush.bf16.msra.mxu0 %v7450
  %9845 = vmatpush.bf16.msra.mxu0 %v7446
  %9846 = vmatpush.bf16.msra.mxu0 %v7442
  %9847 = vmatpush.bf16.msra.mxu0 %v7438
  %9848 = vmatpush.bf16.msra.mxu0 %v7434
  %9849 = vmatmul.bf16.gmra.mxu0 %v1641
  %v9850 = vpop.f32.mrf.mxu0
  %v9851 = vadd.f32 %v9838, %v9850
  %v9852 = vpop.f32.mrf.mxu0
  %9853 = vdwg.mxu0
  %9854 = vmatpush.bf16.msra.mxu0 %v7494
  %9855 = vmatpush.bf16.msra.mxu0 %v7490
  %9856 = vmatpush.bf16.msra.mxu0 %v7486
  %9857 = vmatpush.bf16.msra.mxu0 %v7482
  %9858 = vmatpush.bf16.msra.mxu0 %v7478
  %9859 = vmatpush.bf16.msra.mxu0 %v7474
  %9860 = vmatpush.bf16.msra.mxu0 %v7470
  %9861 = vmatpush.bf16.msra.mxu0 %v7466
  %9862 = vmatmul.bf16.gmra.mxu0 %v1642
  %v9863 = vpop.f32.mrf.mxu0
  %v9864 = vadd.f32 %v9851, %v9863
  %v9865 = vpop.f32.mrf.mxu0
  %9866 = vdwg.mxu0
  %9867 = vmatpush.bf16.msra.mxu0 %v7526
  %9868 = vmatpush.bf16.msra.mxu0 %v7522
  %9869 = vmatpush.bf16.msra.mxu0 %v7518
  %9870 = vmatpush.bf16.msra.mxu0 %v7514
  %9871 = vmatpush.bf16.msra.mxu0 %v7510
  %9872 = vmatpush.bf16.msra.mxu0 %v7506
  %9873 = vmatpush.bf16.msra.mxu0 %v7502
  %9874 = vmatpush.bf16.msra.mxu0 %v7498
  %9875 = vmatmul.bf16.gmra.mxu0 %v1643
  %v9876 = vpop.f32.mrf.mxu0
  %v9877 = vadd.f32 %v9864, %v9876
  %v9878 = vpop.f32.mrf.mxu0
  %9879 = vdwg.mxu0
  %9880 = vmatpush.bf16.msra.mxu0 %v7558
  %9881 = vmatpush.bf16.msra.mxu0 %v7554
  %9882 = vmatpush.bf16.msra.mxu0 %v7550
  %9883 = vmatpush.bf16.msra.mxu0 %v7546
  %9884 = vmatpush.bf16.msra.mxu0 %v7542
  %9885 = vmatpush.bf16.msra.mxu0 %v7538
  %9886 = vmatpush.bf16.msra.mxu0 %v7534
  %9887 = vmatpush.bf16.msra.mxu0 %v7530
  %9888 = vmatmul.bf16.gmra.mxu0 %v1644
  %v9889 = vpop.f32.mrf.mxu0
  %v9890 = vadd.f32 %v9877, %v9889
  %v9891 = vpop.f32.mrf.mxu0
  %9892 = vdwg.mxu0
  %9893 = vmatpush.bf16.msra.mxu0 %v7590
  %9894 = vmatpush.bf16.msra.mxu0 %v7586
  %9895 = vmatpush.bf16.msra.mxu0 %v7582
  %9896 = vmatpush.bf16.msra.mxu0 %v7578
  %9897 = vmatpush.bf16.msra.mxu0 %v7574
  %9898 = vmatpush.bf16.msra.mxu0 %v7570
  %9899 = vmatpush.bf16.msra.mxu0 %v7566
  %9900 = vmatpush.bf16.msra.mxu0 %v7562
  %9901 = vmatmul.bf16.gmra.mxu0 %v1645
  %v9902 = vpop.f32.mrf.mxu0
  %v9903 = vadd.f32 %v9890, %v9902
  %v9904 = vpop.f32.mrf.mxu0
  %9905 = vdwg.mxu0
  %9906 = vmatpush.bf16.msra.mxu0 %v7622
  %9907 = vmatpush.bf16.msra.mxu0 %v7618
  %9908 = vmatpush.bf16.msra.mxu0 %v7614
  %9909 = vmatpush.bf16.msra.mxu0 %v7610
  %9910 = vmatpush.bf16.msra.mxu0 %v7606
  %9911 = vmatpush.bf16.msra.mxu0 %v7602
  %9912 = vmatpush.bf16.msra.mxu0 %v7598
  %9913 = vmatpush.bf16.msra.mxu0 %v7594
  %9914 = vmatmul.bf16.gmra.mxu0 %v1650
  %v9915 = vpop.f32.mrf.mxu0
  %v9916 = vadd.f32 %v9903, %v9915
  %v9917 = vpop.f32.mrf.mxu0
  %9918 = vdwg.mxu0
  %9919 = vmatpush.bf16.msra.mxu0 %v7654
  %9920 = vmatpush.bf16.msra.mxu0 %v7650
  %9921 = vmatpush.bf16.msra.mxu0 %v7646
  %9922 = vmatpush.bf16.msra.mxu0 %v7642
  %9923 = vmatpush.bf16.msra.mxu0 %v7638
  %9924 = vmatpush.bf16.msra.mxu0 %v7634
  %9925 = vmatpush.bf16.msra.mxu0 %v7630
  %9926 = vmatpush.bf16.msra.mxu0 %v7626
  %9927 = vmatmul.bf16.gmra.mxu0 %v1651
  %v9928 = vpop.f32.mrf.mxu0
  %v9929 = vadd.f32 %v9916, %v9928
  %v9930 = vpop.f32.mrf.mxu0
  %9931 = vdwg.mxu0
  %9932 = vmatpush.bf16.msra.mxu0 %v7686
  %9933 = vmatpush.bf16.msra.mxu0 %v7682
  %9934 = vmatpush.bf16.msra.mxu0 %v7678
  %9935 = vmatpush.bf16.msra.mxu0 %v7674
  %9936 = vmatpush.bf16.msra.mxu0 %v7670
  %9937 = vmatpush.bf16.msra.mxu0 %v7666
  %9938 = vmatpush.bf16.msra.mxu0 %v7662
  %9939 = vmatpush.bf16.msra.mxu0 %v7658
  %9940 = vmatmul.bf16.gmra.mxu0 %v1652
  %v9941 = vpop.f32.mrf.mxu0
  %v9942 = vadd.f32 %v9929, %v9941
  %v9943 = vpop.f32.mrf.mxu0
  %9944 = vdwg.mxu0
  %9945 = vmatpush.bf16.msra.mxu0 %v7718
  %9946 = vmatpush.bf16.msra.mxu0 %v7714
  %9947 = vmatpush.bf16.msra.mxu0 %v7710
  %9948 = vmatpush.bf16.msra.mxu0 %v7706
  %9949 = vmatpush.bf16.msra.mxu0 %v7702
  %9950 = vmatpush.bf16.msra.mxu0 %v7698
  %9951 = vmatpush.bf16.msra.mxu0 %v7694
  %9952 = vmatpush.bf16.msra.mxu0 %v7690
  %9953 = vmatmul.bf16.gmra.mxu0 %v1653
  %v9954 = vpop.f32.mrf.mxu0
  %v9955 = vadd.f32 %v9942, %v9954
  %v9956 = vpop.f32.mrf.mxu0
  %9957 = vdwg.mxu0
  %9958 = vmatpush.bf16.msra.mxu0 %v7750
  %9959 = vmatpush.bf16.msra.mxu0 %v7746
  %9960 = vmatpush.bf16.msra.mxu0 %v7742
  %9961 = vmatpush.bf16.msra.mxu0 %v7738
  %9962 = vmatpush.bf16.msra.mxu0 %v7734
  %9963 = vmatpush.bf16.msra.mxu0 %v7730
  %9964 = vmatpush.bf16.msra.mxu0 %v7726
  %9965 = vmatpush.bf16.msra.mxu0 %v7722
  %9966 = vmatmul.bf16.gmra.mxu0 %v1654
  %v9967 = vpop.f32.mrf.mxu0
  %v9968 = vadd.f32 %v9955, %v9967
  %v9969 = vpop.f32.mrf.mxu0
  %9970 = vdwg.mxu0
  %9971 = vmatpush.bf16.msra.mxu0 %v7782
  %9972 = vmatpush.bf16.msra.mxu0 %v7778
  %9973 = vmatpush.bf16.msra.mxu0 %v7774
  %9974 = vmatpush.bf16.msra.mxu0 %v7770
  %9975 = vmatpush.bf16.msra.mxu0 %v7766
  %9976 = vmatpush.bf16.msra.mxu0 %v7762
  %9977 = vmatpush.bf16.msra.mxu0 %v7758
  %9978 = vmatpush.bf16.msra.mxu0 %v7754
  %9979 = vmatmul.bf16.gmra.mxu0 %v1655
  %v9980 = vpop.f32.mrf.mxu0
  %v9981 = vadd.f32 %v9968, %v9980
  %v9982 = vpop.f32.mrf.mxu0
  %9983 = vdwg.mxu0
  %9984 = vmatpush.bf16.msra.mxu0 %v7814
  %9985 = vmatpush.bf16.msra.mxu0 %v7810
  %9986 = vmatpush.bf16.msra.mxu0 %v7806
  %9987 = vmatpush.bf16.msra.mxu0 %v7802
  %9988 = vmatpush.bf16.msra.mxu0 %v7798
  %9989 = vmatpush.bf16.msra.mxu0 %v7794
  %9990 = vmatpush.bf16.msra.mxu0 %v7790
  %9991 = vmatpush.bf16.msra.mxu0 %v7786
  %9992 = vmatmul.bf16.gmra.mxu0 %v1656
  %v9993 = vpop.f32.mrf.mxu0
  %v9994 = vadd.f32 %v9981, %v9993
  %v9995 = vpop.f32.mrf.mxu0
  %9996 = vdwg.mxu0
  %9997 = vmatpush.bf16.msra.mxu0 %v7846
  %9998 = vmatpush.bf16.msra.mxu0 %v7842
  %9999 = vmatpush.bf16.msra.mxu0 %v7838
  %10000 = vmatpush.bf16.msra.mxu0 %v7834
  %10001 = vmatpush.bf16.msra.mxu0 %v7830
  %10002 = vmatpush.bf16.msra.mxu0 %v7826
  %10003 = vmatpush.bf16.msra.mxu0 %v7822
  %10004 = vmatpush.bf16.msra.mxu0 %v7818
  %10005 = vmatmul.bf16.gmra.mxu0 %v1657
  %v10006 = vpop.f32.mrf.mxu0
  %v10007 = vadd.f32 %v9994, %v10006
  %v10008 = vpop.f32.mrf.mxu0
  %10009 = vdwg.mxu0
  %10010 = vmatpush.bf16.msra.mxu0 %v6343
  %10011 = vmatpush.bf16.msra.mxu0 %v6339
  %10012 = vmatpush.bf16.msra.mxu0 %v6335
  %10013 = vmatpush.bf16.msra.mxu0 %v6331
  %10014 = vmatpush.bf16.msra.mxu0 %v6327
  %10015 = vmatpush.bf16.msra.mxu0 %v6323
  %10016 = vmatpush.bf16.msra.mxu0 %v6319
  %10017 = vmatpush.bf16.msra.mxu0 %v6315
  %10018 = vmatmul.bf16.gmra.mxu0 %v1590
  %v10019 = vpop.f32.mrf.mxu0
  %v10020 = vadd.f32 0.0, %v10019
  %v10021 = vpop.f32.mrf.mxu0
  %10022 = vdwg.mxu0
  %10023 = vmatpush.bf16.msra.mxu0 %v6375
  %10024 = vmatpush.bf16.msra.mxu0 %v6371
  %10025 = vmatpush.bf16.msra.mxu0 %v6367
  %10026 = vmatpush.bf16.msra.mxu0 %v6363
  %10027 = vmatpush.bf16.msra.mxu0 %v6359
  %10028 = vmatpush.bf16.msra.mxu0 %v6355
  %10029 = vmatpush.bf16.msra.mxu0 %v6351
  %10030 = vmatpush.bf16.msra.mxu0 %v6347
  %10031 = vmatmul.bf16.gmra.mxu0 %v1591
  %v10032 = vpop.f32.mrf.mxu0
  %v10033 = vadd.f32 %v10020, %v10032
  %v10034 = vpop.f32.mrf.mxu0
  %10035 = vdwg.mxu0
  %10036 = vmatpush.bf16.msra.mxu0 %v6407
  %10037 = vmatpush.bf16.msra.mxu0 %v6403
  %10038 = vmatpush.bf16.msra.mxu0 %v6399
  %10039 = vmatpush.bf16.msra.mxu0 %v6395
  %10040 = vmatpush.bf16.msra.mxu0 %v6391
  %10041 = vmatpush.bf16.msra.mxu0 %v6387
  %10042 = vmatpush.bf16.msra.mxu0 %v6383
  %10043 = vmatpush.bf16.msra.mxu0 %v6379
  %10044 = vmatmul.bf16.gmra.mxu0 %v1592
  %v10045 = vpop.f32.mrf.mxu0
  %v10046 = vadd.f32 %v10033, %v10045
  %v10047 = vpop.f32.mrf.mxu0
  %10048 = vdwg.mxu0
  %10049 = vmatpush.bf16.msra.mxu0 %v6439
  %10050 = vmatpush.bf16.msra.mxu0 %v6435
  %10051 = vmatpush.bf16.msra.mxu0 %v6431
  %10052 = vmatpush.bf16.msra.mxu0 %v6427
  %10053 = vmatpush.bf16.msra.mxu0 %v6423
  %10054 = vmatpush.bf16.msra.mxu0 %v6419
  %10055 = vmatpush.bf16.msra.mxu0 %v6415
  %10056 = vmatpush.bf16.msra.mxu0 %v6411
  %10057 = vmatmul.bf16.gmra.mxu0 %v1593
  %v10058 = vpop.f32.mrf.mxu0
  %v10059 = vadd.f32 %v10046, %v10058
  %v10060 = vpop.f32.mrf.mxu0
  %10061 = vdwg.mxu0
  %10062 = vmatpush.bf16.msra.mxu0 %v6471
  %10063 = vmatpush.bf16.msra.mxu0 %v6467
  %10064 = vmatpush.bf16.msra.mxu0 %v6463
  %10065 = vmatpush.bf16.msra.mxu0 %v6459
  %10066 = vmatpush.bf16.msra.mxu0 %v6455
  %10067 = vmatpush.bf16.msra.mxu0 %v6451
  %10068 = vmatpush.bf16.msra.mxu0 %v6447
  %10069 = vmatpush.bf16.msra.mxu0 %v6443
  %10070 = vmatmul.bf16.gmra.mxu0 %v1594
  %v10071 = vpop.f32.mrf.mxu0
  %v10072 = vadd.f32 %v10059, %v10071
  %v10073 = vpop.f32.mrf.mxu0
  %10074 = vdwg.mxu0
  %10075 = vmatpush.bf16.msra.mxu0 %v6503
  %10076 = vmatpush.bf16.msra.mxu0 %v6499
  %10077 = vmatpush.bf16.msra.mxu0 %v6495
  %10078 = vmatpush.bf16.msra.mxu0 %v6491
  %10079 = vmatpush.bf16.msra.mxu0 %v6487
  %10080 = vmatpush.bf16.msra.mxu0 %v6483
  %10081 = vmatpush.bf16.msra.mxu0 %v6479
  %10082 = vmatpush.bf16.msra.mxu0 %v6475
  %10083 = vmatmul.bf16.gmra.mxu0 %v1595
  %v10084 = vpop.f32.mrf.mxu0
  %v10085 = vadd.f32 %v10072, %v10084
  %v10086 = vpop.f32.mrf.mxu0
  %10087 = vdwg.mxu0
  %10088 = vmatpush.bf16.msra.mxu0 %v6535
  %10089 = vmatpush.bf16.msra.mxu0 %v6531
  %10090 = vmatpush.bf16.msra.mxu0 %v6527
  %10091 = vmatpush.bf16.msra.mxu0 %v6523
  %10092 = vmatpush.bf16.msra.mxu0 %v6519
  %10093 = vmatpush.bf16.msra.mxu0 %v6515
  %10094 = vmatpush.bf16.msra.mxu0 %v6511
  %10095 = vmatpush.bf16.msra.mxu0 %v6507
  %10096 = vmatmul.bf16.gmra.mxu0 %v1596
  %v10097 = vpop.f32.mrf.mxu0
  %v10098 = vadd.f32 %v10085, %v10097
  %v10099 = vpop.f32.mrf.mxu0
  %10100 = vdwg.mxu0
  %10101 = vmatpush.bf16.msra.mxu0 %v6567
  %10102 = vmatpush.bf16.msra.mxu0 %v6563
  %10103 = vmatpush.bf16.msra.mxu0 %v6559
  %10104 = vmatpush.bf16.msra.mxu0 %v6555
  %10105 = vmatpush.bf16.msra.mxu0 %v6551
  %10106 = vmatpush.bf16.msra.mxu0 %v6547
  %10107 = vmatpush.bf16.msra.mxu0 %v6543
  %10108 = vmatpush.bf16.msra.mxu0 %v6539
  %10109 = vmatmul.bf16.gmra.mxu0 %v1597
  %v10110 = vpop.f32.mrf.mxu0
  %v10111 = vadd.f32 %v10098, %v10110
  %v10112 = vpop.f32.mrf.mxu0
  %10113 = vdwg.mxu0
  %10114 = vmatpush.bf16.msra.mxu0 %v6599
  %10115 = vmatpush.bf16.msra.mxu0 %v6595
  %10116 = vmatpush.bf16.msra.mxu0 %v6591
  %10117 = vmatpush.bf16.msra.mxu0 %v6587
  %10118 = vmatpush.bf16.msra.mxu0 %v6583
  %10119 = vmatpush.bf16.msra.mxu0 %v6579
  %10120 = vmatpush.bf16.msra.mxu0 %v6575
  %10121 = vmatpush.bf16.msra.mxu0 %v6571
  %10122 = vmatmul.bf16.gmra.mxu0 %v1602
  %v10123 = vpop.f32.mrf.mxu0
  %v10124 = vadd.f32 %v10111, %v10123
  %v10125 = vpop.f32.mrf.mxu0
  %10126 = vdwg.mxu0
  %10127 = vmatpush.bf16.msra.mxu0 %v6631
  %10128 = vmatpush.bf16.msra.mxu0 %v6627
  %10129 = vmatpush.bf16.msra.mxu0 %v6623
  %10130 = vmatpush.bf16.msra.mxu0 %v6619
  %10131 = vmatpush.bf16.msra.mxu0 %v6615
  %10132 = vmatpush.bf16.msra.mxu0 %v6611
  %10133 = vmatpush.bf16.msra.mxu0 %v6607
  %10134 = vmatpush.bf16.msra.mxu0 %v6603
  %10135 = vmatmul.bf16.gmra.mxu0 %v1603
  %v10136 = vpop.f32.mrf.mxu0
  %v10137 = vadd.f32 %v10124, %v10136
  %v10138 = vpop.f32.mrf.mxu0
  %10139 = vdwg.mxu0
  %10140 = vmatpush.bf16.msra.mxu0 %v6663
  %10141 = vmatpush.bf16.msra.mxu0 %v6659
  %10142 = vmatpush.bf16.msra.mxu0 %v6655
  %10143 = vmatpush.bf16.msra.mxu0 %v6651
  %10144 = vmatpush.bf16.msra.mxu0 %v6647
  %10145 = vmatpush.bf16.msra.mxu0 %v6643
  %10146 = vmatpush.bf16.msra.mxu0 %v6639
  %10147 = vmatpush.bf16.msra.mxu0 %v6635
  %10148 = vmatmul.bf16.gmra.mxu0 %v1604
  %v10149 = vpop.f32.mrf.mxu0
  %v10150 = vadd.f32 %v10137, %v10149
  %v10151 = vpop.f32.mrf.mxu0
  %10152 = vdwg.mxu0
  %10153 = vmatpush.bf16.msra.mxu0 %v6695
  %10154 = vmatpush.bf16.msra.mxu0 %v6691
  %10155 = vmatpush.bf16.msra.mxu0 %v6687
  %10156 = vmatpush.bf16.msra.mxu0 %v6683
  %10157 = vmatpush.bf16.msra.mxu0 %v6679
  %10158 = vmatpush.bf16.msra.mxu0 %v6675
  %10159 = vmatpush.bf16.msra.mxu0 %v6671
  %10160 = vmatpush.bf16.msra.mxu0 %v6667
  %10161 = vmatmul.bf16.gmra.mxu0 %v1605
  %v10162 = vpop.f32.mrf.mxu0
  %v10163 = vadd.f32 %v10150, %v10162
  %v10164 = vpop.f32.mrf.mxu0
  %10165 = vdwg.mxu0
  %10166 = vmatpush.bf16.msra.mxu0 %v6727
  %10167 = vmatpush.bf16.msra.mxu0 %v6723
  %10168 = vmatpush.bf16.msra.mxu0 %v6719
  %10169 = vmatpush.bf16.msra.mxu0 %v6715
  %10170 = vmatpush.bf16.msra.mxu0 %v6711
  %10171 = vmatpush.bf16.msra.mxu0 %v6707
  %10172 = vmatpush.bf16.msra.mxu0 %v6703
  %10173 = vmatpush.bf16.msra.mxu0 %v6699
  %10174 = vmatmul.bf16.gmra.mxu0 %v1606
  %v10175 = vpop.f32.mrf.mxu0
  %v10176 = vadd.f32 %v10163, %v10175
  %v10177 = vpop.f32.mrf.mxu0
  %10178 = vdwg.mxu0
  %10179 = vmatpush.bf16.msra.mxu0 %v6759
  %10180 = vmatpush.bf16.msra.mxu0 %v6755
  %10181 = vmatpush.bf16.msra.mxu0 %v6751
  %10182 = vmatpush.bf16.msra.mxu0 %v6747
  %10183 = vmatpush.bf16.msra.mxu0 %v6743
  %10184 = vmatpush.bf16.msra.mxu0 %v6739
  %10185 = vmatpush.bf16.msra.mxu0 %v6735
  %10186 = vmatpush.bf16.msra.mxu0 %v6731
  %10187 = vmatmul.bf16.gmra.mxu0 %v1607
  %v10188 = vpop.f32.mrf.mxu0
  %v10189 = vadd.f32 %v10176, %v10188
  %v10190 = vpop.f32.mrf.mxu0
  %10191 = vdwg.mxu0
  %10192 = vmatpush.bf16.msra.mxu0 %v6791
  %10193 = vmatpush.bf16.msra.mxu0 %v6787
  %10194 = vmatpush.bf16.msra.mxu0 %v6783
  %10195 = vmatpush.bf16.msra.mxu0 %v6779
  %10196 = vmatpush.bf16.msra.mxu0 %v6775
  %10197 = vmatpush.bf16.msra.mxu0 %v6771
  %10198 = vmatpush.bf16.msra.mxu0 %v6767
  %10199 = vmatpush.bf16.msra.mxu0 %v6763
  %10200 = vmatmul.bf16.gmra.mxu0 %v1608
  %v10201 = vpop.f32.mrf.mxu0
  %v10202 = vadd.f32 %v10189, %v10201
  %v10203 = vpop.f32.mrf.mxu0
  %10204 = vdwg.mxu0
  %10205 = vmatpush.bf16.msra.mxu0 %v6823
  %10206 = vmatpush.bf16.msra.mxu0 %v6819
  %10207 = vmatpush.bf16.msra.mxu0 %v6815
  %10208 = vmatpush.bf16.msra.mxu0 %v6811
  %10209 = vmatpush.bf16.msra.mxu0 %v6807
  %10210 = vmatpush.bf16.msra.mxu0 %v6803
  %10211 = vmatpush.bf16.msra.mxu0 %v6799
  %10212 = vmatpush.bf16.msra.mxu0 %v6795
  %10213 = vmatmul.bf16.gmra.mxu0 %v1609
  %v10214 = vpop.f32.mrf.mxu0
  %v10215 = vadd.f32 %v10202, %v10214
  %v10216 = vpop.f32.mrf.mxu0
  %10217 = vdwg.mxu0
  %10218 = vmatpush.bf16.msra.mxu0 %v6855
  %10219 = vmatpush.bf16.msra.mxu0 %v6851
  %10220 = vmatpush.bf16.msra.mxu0 %v6847
  %10221 = vmatpush.bf16.msra.mxu0 %v6843
  %10222 = vmatpush.bf16.msra.mxu0 %v6839
  %10223 = vmatpush.bf16.msra.mxu0 %v6835
  %10224 = vmatpush.bf16.msra.mxu0 %v6831
  %10225 = vmatpush.bf16.msra.mxu0 %v6827
  %10226 = vmatmul.bf16.gmra.mxu0 %v1614
  %v10227 = vpop.f32.mrf.mxu0
  %v10228 = vadd.f32 %v10215, %v10227
  %v10229 = vpop.f32.mrf.mxu0
  %10230 = vdwg.mxu0
  %10231 = vmatpush.bf16.msra.mxu0 %v6887
  %10232 = vmatpush.bf16.msra.mxu0 %v6883
  %10233 = vmatpush.bf16.msra.mxu0 %v6879
  %10234 = vmatpush.bf16.msra.mxu0 %v6875
  %10235 = vmatpush.bf16.msra.mxu0 %v6871
  %10236 = vmatpush.bf16.msra.mxu0 %v6867
  %10237 = vmatpush.bf16.msra.mxu0 %v6863
  %10238 = vmatpush.bf16.msra.mxu0 %v6859
  %10239 = vmatmul.bf16.gmra.mxu0 %v1615
  %v10240 = vpop.f32.mrf.mxu0
  %v10241 = vadd.f32 %v10228, %v10240
  %v10242 = vpop.f32.mrf.mxu0
  %10243 = vdwg.mxu0
  %10244 = vmatpush.bf16.msra.mxu0 %v6919
  %10245 = vmatpush.bf16.msra.mxu0 %v6915
  %10246 = vmatpush.bf16.msra.mxu0 %v6911
  %10247 = vmatpush.bf16.msra.mxu0 %v6907
  %10248 = vmatpush.bf16.msra.mxu0 %v6903
  %10249 = vmatpush.bf16.msra.mxu0 %v6899
  %10250 = vmatpush.bf16.msra.mxu0 %v6895
  %10251 = vmatpush.bf16.msra.mxu0 %v6891
  %10252 = vmatmul.bf16.gmra.mxu0 %v1616
  %v10253 = vpop.f32.mrf.mxu0
  %v10254 = vadd.f32 %v10241, %v10253
  %v10255 = vpop.f32.mrf.mxu0
  %10256 = vdwg.mxu0
  %10257 = vmatpush.bf16.msra.mxu0 %v6951
  %10258 = vmatpush.bf16.msra.mxu0 %v6947
  %10259 = vmatpush.bf16.msra.mxu0 %v6943
  %10260 = vmatpush.bf16.msra.mxu0 %v6939
  %10261 = vmatpush.bf16.msra.mxu0 %v6935
  %10262 = vmatpush.bf16.msra.mxu0 %v6931
  %10263 = vmatpush.bf16.msra.mxu0 %v6927
  %10264 = vmatpush.bf16.msra.mxu0 %v6923
  %10265 = vmatmul.bf16.gmra.mxu0 %v1617
  %v10266 = vpop.f32.mrf.mxu0
  %v10267 = vadd.f32 %v10254, %v10266
  %v10268 = vpop.f32.mrf.mxu0
  %10269 = vdwg.mxu0
  %10270 = vmatpush.bf16.msra.mxu0 %v6983
  %10271 = vmatpush.bf16.msra.mxu0 %v6979
  %10272 = vmatpush.bf16.msra.mxu0 %v6975
  %10273 = vmatpush.bf16.msra.mxu0 %v6971
  %10274 = vmatpush.bf16.msra.mxu0 %v6967
  %10275 = vmatpush.bf16.msra.mxu0 %v6963
  %10276 = vmatpush.bf16.msra.mxu0 %v6959
  %10277 = vmatpush.bf16.msra.mxu0 %v6955
  %10278 = vmatmul.bf16.gmra.mxu0 %v1618
  %v10279 = vpop.f32.mrf.mxu0
  %v10280 = vadd.f32 %v10267, %v10279
  %v10281 = vpop.f32.mrf.mxu0
  %10282 = vdwg.mxu0
  %10283 = vmatpush.bf16.msra.mxu0 %v7015
  %10284 = vmatpush.bf16.msra.mxu0 %v7011
  %10285 = vmatpush.bf16.msra.mxu0 %v7007
  %10286 = vmatpush.bf16.msra.mxu0 %v7003
  %10287 = vmatpush.bf16.msra.mxu0 %v6999
  %10288 = vmatpush.bf16.msra.mxu0 %v6995
  %10289 = vmatpush.bf16.msra.mxu0 %v6991
  %10290 = vmatpush.bf16.msra.mxu0 %v6987
  %10291 = vmatmul.bf16.gmra.mxu0 %v1619
  %v10292 = vpop.f32.mrf.mxu0
  %v10293 = vadd.f32 %v10280, %v10292
  %v10294 = vpop.f32.mrf.mxu0
  %10295 = vdwg.mxu0
  %10296 = vmatpush.bf16.msra.mxu0 %v7047
  %10297 = vmatpush.bf16.msra.mxu0 %v7043
  %10298 = vmatpush.bf16.msra.mxu0 %v7039
  %10299 = vmatpush.bf16.msra.mxu0 %v7035
  %10300 = vmatpush.bf16.msra.mxu0 %v7031
  %10301 = vmatpush.bf16.msra.mxu0 %v7027
  %10302 = vmatpush.bf16.msra.mxu0 %v7023
  %10303 = vmatpush.bf16.msra.mxu0 %v7019
  %10304 = vmatmul.bf16.gmra.mxu0 %v1620
  %v10305 = vpop.f32.mrf.mxu0
  %v10306 = vadd.f32 %v10293, %v10305
  %v10307 = vpop.f32.mrf.mxu0
  %10308 = vdwg.mxu0
  %10309 = vmatpush.bf16.msra.mxu0 %v7079
  %10310 = vmatpush.bf16.msra.mxu0 %v7075
  %10311 = vmatpush.bf16.msra.mxu0 %v7071
  %10312 = vmatpush.bf16.msra.mxu0 %v7067
  %10313 = vmatpush.bf16.msra.mxu0 %v7063
  %10314 = vmatpush.bf16.msra.mxu0 %v7059
  %10315 = vmatpush.bf16.msra.mxu0 %v7055
  %10316 = vmatpush.bf16.msra.mxu0 %v7051
  %10317 = vmatmul.bf16.gmra.mxu0 %v1621
  %v10318 = vpop.f32.mrf.mxu0
  %v10319 = vadd.f32 %v10306, %v10318
  %v10320 = vpop.f32.mrf.mxu0
  %10321 = vdwg.mxu0
  %10322 = vmatpush.bf16.msra.mxu0 %v7111
  %10323 = vmatpush.bf16.msra.mxu0 %v7107
  %10324 = vmatpush.bf16.msra.mxu0 %v7103
  %10325 = vmatpush.bf16.msra.mxu0 %v7099
  %10326 = vmatpush.bf16.msra.mxu0 %v7095
  %10327 = vmatpush.bf16.msra.mxu0 %v7091
  %10328 = vmatpush.bf16.msra.mxu0 %v7087
  %10329 = vmatpush.bf16.msra.mxu0 %v7083
  %10330 = vmatmul.bf16.gmra.mxu0 %v1626
  %v10331 = vpop.f32.mrf.mxu0
  %v10332 = vadd.f32 %v10319, %v10331
  %v10333 = vpop.f32.mrf.mxu0
  %10334 = vdwg.mxu0
  %10335 = vmatpush.bf16.msra.mxu0 %v7143
  %10336 = vmatpush.bf16.msra.mxu0 %v7139
  %10337 = vmatpush.bf16.msra.mxu0 %v7135
  %10338 = vmatpush.bf16.msra.mxu0 %v7131
  %10339 = vmatpush.bf16.msra.mxu0 %v7127
  %10340 = vmatpush.bf16.msra.mxu0 %v7123
  %10341 = vmatpush.bf16.msra.mxu0 %v7119
  %10342 = vmatpush.bf16.msra.mxu0 %v7115
  %10343 = vmatmul.bf16.gmra.mxu0 %v1627
  %v10344 = vpop.f32.mrf.mxu0
  %v10345 = vadd.f32 %v10332, %v10344
  %v10346 = vpop.f32.mrf.mxu0
  %10347 = vdwg.mxu0
  %10348 = vmatpush.bf16.msra.mxu0 %v7175
  %10349 = vmatpush.bf16.msra.mxu0 %v7171
  %10350 = vmatpush.bf16.msra.mxu0 %v7167
  %10351 = vmatpush.bf16.msra.mxu0 %v7163
  %10352 = vmatpush.bf16.msra.mxu0 %v7159
  %10353 = vmatpush.bf16.msra.mxu0 %v7155
  %10354 = vmatpush.bf16.msra.mxu0 %v7151
  %10355 = vmatpush.bf16.msra.mxu0 %v7147
  %10356 = vmatmul.bf16.gmra.mxu0 %v1628
  %v10357 = vpop.f32.mrf.mxu0
  %v10358 = vadd.f32 %v10345, %v10357
  %v10359 = vpop.f32.mrf.mxu0
  %10360 = vdwg.mxu0
  %10361 = vmatpush.bf16.msra.mxu0 %v7207
  %10362 = vmatpush.bf16.msra.mxu0 %v7203
  %10363 = vmatpush.bf16.msra.mxu0 %v7199
  %10364 = vmatpush.bf16.msra.mxu0 %v7195
  %10365 = vmatpush.bf16.msra.mxu0 %v7191
  %10366 = vmatpush.bf16.msra.mxu0 %v7187
  %10367 = vmatpush.bf16.msra.mxu0 %v7183
  %10368 = vmatpush.bf16.msra.mxu0 %v7179
  %10369 = vmatmul.bf16.gmra.mxu0 %v1629
  %v10370 = vpop.f32.mrf.mxu0
  %v10371 = vadd.f32 %v10358, %v10370
  %v10372 = vpop.f32.mrf.mxu0
  %10373 = vdwg.mxu0
  %10374 = vmatpush.bf16.msra.mxu0 %v7239
  %10375 = vmatpush.bf16.msra.mxu0 %v7235
  %10376 = vmatpush.bf16.msra.mxu0 %v7231
  %10377 = vmatpush.bf16.msra.mxu0 %v7227
  %10378 = vmatpush.bf16.msra.mxu0 %v7223
  %10379 = vmatpush.bf16.msra.mxu0 %v7219
  %10380 = vmatpush.bf16.msra.mxu0 %v7215
  %10381 = vmatpush.bf16.msra.mxu0 %v7211
  %10382 = vmatmul.bf16.gmra.mxu0 %v1630
  %v10383 = vpop.f32.mrf.mxu0
  %v10384 = vadd.f32 %v10371, %v10383
  %v10385 = vpop.f32.mrf.mxu0
  %10386 = vdwg.mxu0
  %10387 = vmatpush.bf16.msra.mxu0 %v7271
  %10388 = vmatpush.bf16.msra.mxu0 %v7267
  %10389 = vmatpush.bf16.msra.mxu0 %v7263
  %10390 = vmatpush.bf16.msra.mxu0 %v7259
  %10391 = vmatpush.bf16.msra.mxu0 %v7255
  %10392 = vmatpush.bf16.msra.mxu0 %v7251
  %10393 = vmatpush.bf16.msra.mxu0 %v7247
  %10394 = vmatpush.bf16.msra.mxu0 %v7243
  %10395 = vmatmul.bf16.gmra.mxu0 %v1631
  %v10396 = vpop.f32.mrf.mxu0
  %v10397 = vadd.f32 %v10384, %v10396
  %v10398 = vpop.f32.mrf.mxu0
  %10399 = vdwg.mxu0
  %10400 = vmatpush.bf16.msra.mxu0 %v7303
  %10401 = vmatpush.bf16.msra.mxu0 %v7299
  %10402 = vmatpush.bf16.msra.mxu0 %v7295
  %10403 = vmatpush.bf16.msra.mxu0 %v7291
  %10404 = vmatpush.bf16.msra.mxu0 %v7287
  %10405 = vmatpush.bf16.msra.mxu0 %v7283
  %10406 = vmatpush.bf16.msra.mxu0 %v7279
  %10407 = vmatpush.bf16.msra.mxu0 %v7275
  %10408 = vmatmul.bf16.gmra.mxu0 %v1632
  %v10409 = vpop.f32.mrf.mxu0
  %v10410 = vadd.f32 %v10397, %v10409
  %v10411 = vpop.f32.mrf.mxu0
  %10412 = vdwg.mxu0
  %10413 = vmatpush.bf16.msra.mxu0 %v7335
  %10414 = vmatpush.bf16.msra.mxu0 %v7331
  %10415 = vmatpush.bf16.msra.mxu0 %v7327
  %10416 = vmatpush.bf16.msra.mxu0 %v7323
  %10417 = vmatpush.bf16.msra.mxu0 %v7319
  %10418 = vmatpush.bf16.msra.mxu0 %v7315
  %10419 = vmatpush.bf16.msra.mxu0 %v7311
  %10420 = vmatpush.bf16.msra.mxu0 %v7307
  %10421 = vmatmul.bf16.gmra.mxu0 %v1633
  %v10422 = vpop.f32.mrf.mxu0
  %v10423 = vadd.f32 %v10410, %v10422
  %v10424 = vpop.f32.mrf.mxu0
  %10425 = vdwg.mxu0
  %10426 = vmatpush.bf16.msra.mxu0 %v7367
  %10427 = vmatpush.bf16.msra.mxu0 %v7363
  %10428 = vmatpush.bf16.msra.mxu0 %v7359
  %10429 = vmatpush.bf16.msra.mxu0 %v7355
  %10430 = vmatpush.bf16.msra.mxu0 %v7351
  %10431 = vmatpush.bf16.msra.mxu0 %v7347
  %10432 = vmatpush.bf16.msra.mxu0 %v7343
  %10433 = vmatpush.bf16.msra.mxu0 %v7339
  %10434 = vmatmul.bf16.gmra.mxu0 %v1638
  %v10435 = vpop.f32.mrf.mxu0
  %v10436 = vadd.f32 %v10423, %v10435
  %v10437 = vpop.f32.mrf.mxu0
  %10438 = vdwg.mxu0
  %10439 = vmatpush.bf16.msra.mxu0 %v7399
  %10440 = vmatpush.bf16.msra.mxu0 %v7395
  %10441 = vmatpush.bf16.msra.mxu0 %v7391
  %10442 = vmatpush.bf16.msra.mxu0 %v7387
  %10443 = vmatpush.bf16.msra.mxu0 %v7383
  %10444 = vmatpush.bf16.msra.mxu0 %v7379
  %10445 = vmatpush.bf16.msra.mxu0 %v7375
  %10446 = vmatpush.bf16.msra.mxu0 %v7371
  %10447 = vmatmul.bf16.gmra.mxu0 %v1639
  %v10448 = vpop.f32.mrf.mxu0
  %v10449 = vadd.f32 %v10436, %v10448
  %v10450 = vpop.f32.mrf.mxu0
  %10451 = vdwg.mxu0
  %10452 = vmatpush.bf16.msra.mxu0 %v7431
  %10453 = vmatpush.bf16.msra.mxu0 %v7427
  %10454 = vmatpush.bf16.msra.mxu0 %v7423
  %10455 = vmatpush.bf16.msra.mxu0 %v7419
  %10456 = vmatpush.bf16.msra.mxu0 %v7415
  %10457 = vmatpush.bf16.msra.mxu0 %v7411
  %10458 = vmatpush.bf16.msra.mxu0 %v7407
  %10459 = vmatpush.bf16.msra.mxu0 %v7403
  %10460 = vmatmul.bf16.gmra.mxu0 %v1640
  %v10461 = vpop.f32.mrf.mxu0
  %v10462 = vadd.f32 %v10449, %v10461
  %v10463 = vpop.f32.mrf.mxu0
  %10464 = vdwg.mxu0
  %10465 = vmatpush.bf16.msra.mxu0 %v7463
  %10466 = vmatpush.bf16.msra.mxu0 %v7459
  %10467 = vmatpush.bf16.msra.mxu0 %v7455
  %10468 = vmatpush.bf16.msra.mxu0 %v7451
  %10469 = vmatpush.bf16.msra.mxu0 %v7447
  %10470 = vmatpush.bf16.msra.mxu0 %v7443
  %10471 = vmatpush.bf16.msra.mxu0 %v7439
  %10472 = vmatpush.bf16.msra.mxu0 %v7435
  %10473 = vmatmul.bf16.gmra.mxu0 %v1641
  %v10474 = vpop.f32.mrf.mxu0
  %v10475 = vadd.f32 %v10462, %v10474
  %v10476 = vpop.f32.mrf.mxu0
  %10477 = vdwg.mxu0
  %10478 = vmatpush.bf16.msra.mxu0 %v7495
  %10479 = vmatpush.bf16.msra.mxu0 %v7491
  %10480 = vmatpush.bf16.msra.mxu0 %v7487
  %10481 = vmatpush.bf16.msra.mxu0 %v7483
  %10482 = vmatpush.bf16.msra.mxu0 %v7479
  %10483 = vmatpush.bf16.msra.mxu0 %v7475
  %10484 = vmatpush.bf16.msra.mxu0 %v7471
  %10485 = vmatpush.bf16.msra.mxu0 %v7467
  %10486 = vmatmul.bf16.gmra.mxu0 %v1642
  %v10487 = vpop.f32.mrf.mxu0
  %v10488 = vadd.f32 %v10475, %v10487
  %v10489 = vpop.f32.mrf.mxu0
  %10490 = vdwg.mxu0
  %10491 = vmatpush.bf16.msra.mxu0 %v7527
  %10492 = vmatpush.bf16.msra.mxu0 %v7523
  %10493 = vmatpush.bf16.msra.mxu0 %v7519
  %10494 = vmatpush.bf16.msra.mxu0 %v7515
  %10495 = vmatpush.bf16.msra.mxu0 %v7511
  %10496 = vmatpush.bf16.msra.mxu0 %v7507
  %10497 = vmatpush.bf16.msra.mxu0 %v7503
  %10498 = vmatpush.bf16.msra.mxu0 %v7499
  %10499 = vmatmul.bf16.gmra.mxu0 %v1643
  %v10500 = vpop.f32.mrf.mxu0
  %v10501 = vadd.f32 %v10488, %v10500
  %v10502 = vpop.f32.mrf.mxu0
  %10503 = vdwg.mxu0
  %10504 = vmatpush.bf16.msra.mxu0 %v7559
  %10505 = vmatpush.bf16.msra.mxu0 %v7555
  %10506 = vmatpush.bf16.msra.mxu0 %v7551
  %10507 = vmatpush.bf16.msra.mxu0 %v7547
  %10508 = vmatpush.bf16.msra.mxu0 %v7543
  %10509 = vmatpush.bf16.msra.mxu0 %v7539
  %10510 = vmatpush.bf16.msra.mxu0 %v7535
  %10511 = vmatpush.bf16.msra.mxu0 %v7531
  %10512 = vmatmul.bf16.gmra.mxu0 %v1644
  %v10513 = vpop.f32.mrf.mxu0
  %v10514 = vadd.f32 %v10501, %v10513
  %v10515 = vpop.f32.mrf.mxu0
  %10516 = vdwg.mxu0
  %10517 = vmatpush.bf16.msra.mxu0 %v7591
  %10518 = vmatpush.bf16.msra.mxu0 %v7587
  %10519 = vmatpush.bf16.msra.mxu0 %v7583
  %10520 = vmatpush.bf16.msra.mxu0 %v7579
  %10521 = vmatpush.bf16.msra.mxu0 %v7575
  %10522 = vmatpush.bf16.msra.mxu0 %v7571
  %10523 = vmatpush.bf16.msra.mxu0 %v7567
  %10524 = vmatpush.bf16.msra.mxu0 %v7563
  %10525 = vmatmul.bf16.gmra.mxu0 %v1645
  %v10526 = vpop.f32.mrf.mxu0
  %v10527 = vadd.f32 %v10514, %v10526
  %v10528 = vpop.f32.mrf.mxu0
  %10529 = vdwg.mxu0
  %10530 = vmatpush.bf16.msra.mxu0 %v7623
  %10531 = vmatpush.bf16.msra.mxu0 %v7619
  %10532 = vmatpush.bf16.msra.mxu0 %v7615
  %10533 = vmatpush.bf16.msra.mxu0 %v7611
  %10534 = vmatpush.bf16.msra.mxu0 %v7607
  %10535 = vmatpush.bf16.msra.mxu0 %v7603
  %10536 = vmatpush.bf16.msra.mxu0 %v7599
  %10537 = vmatpush.bf16.msra.mxu0 %v7595
  %10538 = vmatmul.bf16.gmra.mxu0 %v1650
  %v10539 = vpop.f32.mrf.mxu0
  %v10540 = vadd.f32 %v10527, %v10539
  %v10541 = vpop.f32.mrf.mxu0
  %10542 = vdwg.mxu0
  %10543 = vmatpush.bf16.msra.mxu0 %v7655
  %10544 = vmatpush.bf16.msra.mxu0 %v7651
  %10545 = vmatpush.bf16.msra.mxu0 %v7647
  %10546 = vmatpush.bf16.msra.mxu0 %v7643
  %10547 = vmatpush.bf16.msra.mxu0 %v7639
  %10548 = vmatpush.bf16.msra.mxu0 %v7635
  %10549 = vmatpush.bf16.msra.mxu0 %v7631
  %10550 = vmatpush.bf16.msra.mxu0 %v7627
  %10551 = vmatmul.bf16.gmra.mxu0 %v1651
  %v10552 = vpop.f32.mrf.mxu0
  %v10553 = vadd.f32 %v10540, %v10552
  %v10554 = vpop.f32.mrf.mxu0
  %10555 = vdwg.mxu0
  %10556 = vmatpush.bf16.msra.mxu0 %v7687
  %10557 = vmatpush.bf16.msra.mxu0 %v7683
  %10558 = vmatpush.bf16.msra.mxu0 %v7679
  %10559 = vmatpush.bf16.msra.mxu0 %v7675
  %10560 = vmatpush.bf16.msra.mxu0 %v7671
  %10561 = vmatpush.bf16.msra.mxu0 %v7667
  %10562 = vmatpush.bf16.msra.mxu0 %v7663
  %10563 = vmatpush.bf16.msra.mxu0 %v7659
  %10564 = vmatmul.bf16.gmra.mxu0 %v1652
  %v10565 = vpop.f32.mrf.mxu0
  %v10566 = vadd.f32 %v10553, %v10565
  %v10567 = vpop.f32.mrf.mxu0
  %10568 = vdwg.mxu0
  %10569 = vmatpush.bf16.msra.mxu0 %v7719
  %10570 = vmatpush.bf16.msra.mxu0 %v7715
  %10571 = vmatpush.bf16.msra.mxu0 %v7711
  %10572 = vmatpush.bf16.msra.mxu0 %v7707
  %10573 = vmatpush.bf16.msra.mxu0 %v7703
  %10574 = vmatpush.bf16.msra.mxu0 %v7699
  %10575 = vmatpush.bf16.msra.mxu0 %v7695
  %10576 = vmatpush.bf16.msra.mxu0 %v7691
  %10577 = vmatmul.bf16.gmra.mxu0 %v1653
  %v10578 = vpop.f32.mrf.mxu0
  %v10579 = vadd.f32 %v10566, %v10578
  %v10580 = vpop.f32.mrf.mxu0
  %10581 = vdwg.mxu0
  %10582 = vmatpush.bf16.msra.mxu0 %v7751
  %10583 = vmatpush.bf16.msra.mxu0 %v7747
  %10584 = vmatpush.bf16.msra.mxu0 %v7743
  %10585 = vmatpush.bf16.msra.mxu0 %v7739
  %10586 = vmatpush.bf16.msra.mxu0 %v7735
  %10587 = vmatpush.bf16.msra.mxu0 %v7731
  %10588 = vmatpush.bf16.msra.mxu0 %v7727
  %10589 = vmatpush.bf16.msra.mxu0 %v7723
  %10590 = vmatmul.bf16.gmra.mxu0 %v1654
  %v10591 = vpop.f32.mrf.mxu0
  %v10592 = vadd.f32 %v10579, %v10591
  %v10593 = vpop.f32.mrf.mxu0
  %10594 = vdwg.mxu0
  %10595 = vmatpush.bf16.msra.mxu0 %v7783
  %10596 = vmatpush.bf16.msra.mxu0 %v7779
  %10597 = vmatpush.bf16.msra.mxu0 %v7775
  %10598 = vmatpush.bf16.msra.mxu0 %v7771
  %10599 = vmatpush.bf16.msra.mxu0 %v7767
  %10600 = vmatpush.bf16.msra.mxu0 %v7763
  %10601 = vmatpush.bf16.msra.mxu0 %v7759
  %10602 = vmatpush.bf16.msra.mxu0 %v7755
  %10603 = vmatmul.bf16.gmra.mxu0 %v1655
  %v10604 = vpop.f32.mrf.mxu0
  %v10605 = vadd.f32 %v10592, %v10604
  %v10606 = vpop.f32.mrf.mxu0
  %10607 = vdwg.mxu0
  %10608 = vmatpush.bf16.msra.mxu0 %v7815
  %10609 = vmatpush.bf16.msra.mxu0 %v7811
  %10610 = vmatpush.bf16.msra.mxu0 %v7807
  %10611 = vmatpush.bf16.msra.mxu0 %v7803
  %10612 = vmatpush.bf16.msra.mxu0 %v7799
  %10613 = vmatpush.bf16.msra.mxu0 %v7795
  %10614 = vmatpush.bf16.msra.mxu0 %v7791
  %10615 = vmatpush.bf16.msra.mxu0 %v7787
  %10616 = vmatmul.bf16.gmra.mxu0 %v1656
  %v10617 = vpop.f32.mrf.mxu0
  %v10618 = vadd.f32 %v10605, %v10617
  %v10619 = vpop.f32.mrf.mxu0
  %10620 = vdwg.mxu0
  %10621 = vmatpush.bf16.msra.mxu0 %v7847
  %10622 = vmatpush.bf16.msra.mxu0 %v7843
  %10623 = vmatpush.bf16.msra.mxu0 %v7839
  %10624 = vmatpush.bf16.msra.mxu0 %v7835
  %10625 = vmatpush.bf16.msra.mxu0 %v7831
  %10626 = vmatpush.bf16.msra.mxu0 %v7827
  %10627 = vmatpush.bf16.msra.mxu0 %v7823
  %10628 = vmatpush.bf16.msra.mxu0 %v7819
  %10629 = vmatmul.bf16.gmra.mxu0 %v1657
  %v10630 = vpop.f32.mrf.mxu0
  %v10631 = vadd.f32 %v10618, %v10630
  %v10632 = vpop.f32.mrf.mxu0
  %10633 = vdwg.mxu0
  %10634 = vmatpush.bf16.msra.mxu0 %v6344
  %10635 = vmatpush.bf16.msra.mxu0 %v6340
  %10636 = vmatpush.bf16.msra.mxu0 %v6336
  %10637 = vmatpush.bf16.msra.mxu0 %v6332
  %10638 = vmatpush.bf16.msra.mxu0 %v6328
  %10639 = vmatpush.bf16.msra.mxu0 %v6324
  %10640 = vmatpush.bf16.msra.mxu0 %v6320
  %10641 = vmatpush.bf16.msra.mxu0 %v6316
  %10642 = vmatmul.bf16.gmra.mxu0 %v1590
  %v10643 = vpop.f32.mrf.mxu0
  %v10644 = vadd.f32 0.0, %v10643
  %v10645 = vpop.f32.mrf.mxu0
  %10646 = vdwg.mxu0
  %10647 = vmatpush.bf16.msra.mxu0 %v6376
  %10648 = vmatpush.bf16.msra.mxu0 %v6372
  %10649 = vmatpush.bf16.msra.mxu0 %v6368
  %10650 = vmatpush.bf16.msra.mxu0 %v6364
  %10651 = vmatpush.bf16.msra.mxu0 %v6360
  %10652 = vmatpush.bf16.msra.mxu0 %v6356
  %10653 = vmatpush.bf16.msra.mxu0 %v6352
  %10654 = vmatpush.bf16.msra.mxu0 %v6348
  %10655 = vmatmul.bf16.gmra.mxu0 %v1591
  %v10656 = vpop.f32.mrf.mxu0
  %v10657 = vadd.f32 %v10644, %v10656
  %v10658 = vpop.f32.mrf.mxu0
  %10659 = vdwg.mxu0
  %10660 = vmatpush.bf16.msra.mxu0 %v6408
  %10661 = vmatpush.bf16.msra.mxu0 %v6404
  %10662 = vmatpush.bf16.msra.mxu0 %v6400
  %10663 = vmatpush.bf16.msra.mxu0 %v6396
  %10664 = vmatpush.bf16.msra.mxu0 %v6392
  %10665 = vmatpush.bf16.msra.mxu0 %v6388
  %10666 = vmatpush.bf16.msra.mxu0 %v6384
  %10667 = vmatpush.bf16.msra.mxu0 %v6380
  %10668 = vmatmul.bf16.gmra.mxu0 %v1592
  %v10669 = vpop.f32.mrf.mxu0
  %v10670 = vadd.f32 %v10657, %v10669
  %v10671 = vpop.f32.mrf.mxu0
  %10672 = vdwg.mxu0
  %10673 = vmatpush.bf16.msra.mxu0 %v6440
  %10674 = vmatpush.bf16.msra.mxu0 %v6436
  %10675 = vmatpush.bf16.msra.mxu0 %v6432
  %10676 = vmatpush.bf16.msra.mxu0 %v6428
  %10677 = vmatpush.bf16.msra.mxu0 %v6424
  %10678 = vmatpush.bf16.msra.mxu0 %v6420
  %10679 = vmatpush.bf16.msra.mxu0 %v6416
  %10680 = vmatpush.bf16.msra.mxu0 %v6412
  %10681 = vmatmul.bf16.gmra.mxu0 %v1593
  %v10682 = vpop.f32.mrf.mxu0
  %v10683 = vadd.f32 %v10670, %v10682
  %v10684 = vpop.f32.mrf.mxu0
  %10685 = vdwg.mxu0
  %10686 = vmatpush.bf16.msra.mxu0 %v6472
  %10687 = vmatpush.bf16.msra.mxu0 %v6468
  %10688 = vmatpush.bf16.msra.mxu0 %v6464
  %10689 = vmatpush.bf16.msra.mxu0 %v6460
  %10690 = vmatpush.bf16.msra.mxu0 %v6456
  %10691 = vmatpush.bf16.msra.mxu0 %v6452
  %10692 = vmatpush.bf16.msra.mxu0 %v6448
  %10693 = vmatpush.bf16.msra.mxu0 %v6444
  %10694 = vmatmul.bf16.gmra.mxu0 %v1594
  %v10695 = vpop.f32.mrf.mxu0
  %v10696 = vadd.f32 %v10683, %v10695
  %v10697 = vpop.f32.mrf.mxu0
  %10698 = vdwg.mxu0
  %10699 = vmatpush.bf16.msra.mxu0 %v6504
  %10700 = vmatpush.bf16.msra.mxu0 %v6500
  %10701 = vmatpush.bf16.msra.mxu0 %v6496
  %10702 = vmatpush.bf16.msra.mxu0 %v6492
  %10703 = vmatpush.bf16.msra.mxu0 %v6488
  %10704 = vmatpush.bf16.msra.mxu0 %v6484
  %10705 = vmatpush.bf16.msra.mxu0 %v6480
  %10706 = vmatpush.bf16.msra.mxu0 %v6476
  %10707 = vmatmul.bf16.gmra.mxu0 %v1595
  %v10708 = vpop.f32.mrf.mxu0
  %v10709 = vadd.f32 %v10696, %v10708
  %v10710 = vpop.f32.mrf.mxu0
  %10711 = vdwg.mxu0
  %10712 = vmatpush.bf16.msra.mxu0 %v6536
  %10713 = vmatpush.bf16.msra.mxu0 %v6532
  %10714 = vmatpush.bf16.msra.mxu0 %v6528
  %10715 = vmatpush.bf16.msra.mxu0 %v6524
  %10716 = vmatpush.bf16.msra.mxu0 %v6520
  %10717 = vmatpush.bf16.msra.mxu0 %v6516
  %10718 = vmatpush.bf16.msra.mxu0 %v6512
  %10719 = vmatpush.bf16.msra.mxu0 %v6508
  %10720 = vmatmul.bf16.gmra.mxu0 %v1596
  %v10721 = vpop.f32.mrf.mxu0
  %v10722 = vadd.f32 %v10709, %v10721
  %v10723 = vpop.f32.mrf.mxu0
  %10724 = vdwg.mxu0
  %10725 = vmatpush.bf16.msra.mxu0 %v6568
  %10726 = vmatpush.bf16.msra.mxu0 %v6564
  %10727 = vmatpush.bf16.msra.mxu0 %v6560
  %10728 = vmatpush.bf16.msra.mxu0 %v6556
  %10729 = vmatpush.bf16.msra.mxu0 %v6552
  %10730 = vmatpush.bf16.msra.mxu0 %v6548
  %10731 = vmatpush.bf16.msra.mxu0 %v6544
  %10732 = vmatpush.bf16.msra.mxu0 %v6540
  %10733 = vmatmul.bf16.gmra.mxu0 %v1597
  %v10734 = vpop.f32.mrf.mxu0
  %v10735 = vadd.f32 %v10722, %v10734
  %v10736 = vpop.f32.mrf.mxu0
  %10737 = vdwg.mxu0
  %10738 = vmatpush.bf16.msra.mxu0 %v6600
  %10739 = vmatpush.bf16.msra.mxu0 %v6596
  %10740 = vmatpush.bf16.msra.mxu0 %v6592
  %10741 = vmatpush.bf16.msra.mxu0 %v6588
  %10742 = vmatpush.bf16.msra.mxu0 %v6584
  %10743 = vmatpush.bf16.msra.mxu0 %v6580
  %10744 = vmatpush.bf16.msra.mxu0 %v6576
  %10745 = vmatpush.bf16.msra.mxu0 %v6572
  %10746 = vmatmul.bf16.gmra.mxu0 %v1602
  %v10747 = vpop.f32.mrf.mxu0
  %v10748 = vadd.f32 %v10735, %v10747
  %v10749 = vpop.f32.mrf.mxu0
  %10750 = vdwg.mxu0
  %10751 = vmatpush.bf16.msra.mxu0 %v6632
  %10752 = vmatpush.bf16.msra.mxu0 %v6628
  %10753 = vmatpush.bf16.msra.mxu0 %v6624
  %10754 = vmatpush.bf16.msra.mxu0 %v6620
  %10755 = vmatpush.bf16.msra.mxu0 %v6616
  %10756 = vmatpush.bf16.msra.mxu0 %v6612
  %10757 = vmatpush.bf16.msra.mxu0 %v6608
  %10758 = vmatpush.bf16.msra.mxu0 %v6604
  %10759 = vmatmul.bf16.gmra.mxu0 %v1603
  %v10760 = vpop.f32.mrf.mxu0
  %v10761 = vadd.f32 %v10748, %v10760
  %v10762 = vpop.f32.mrf.mxu0
  %10763 = vdwg.mxu0
  %10764 = vmatpush.bf16.msra.mxu0 %v6664
  %10765 = vmatpush.bf16.msra.mxu0 %v6660
  %10766 = vmatpush.bf16.msra.mxu0 %v6656
  %10767 = vmatpush.bf16.msra.mxu0 %v6652
  %10768 = vmatpush.bf16.msra.mxu0 %v6648
  %10769 = vmatpush.bf16.msra.mxu0 %v6644
  %10770 = vmatpush.bf16.msra.mxu0 %v6640
  %10771 = vmatpush.bf16.msra.mxu0 %v6636
  %10772 = vmatmul.bf16.gmra.mxu0 %v1604
  %v10773 = vpop.f32.mrf.mxu0
  %v10774 = vadd.f32 %v10761, %v10773
  %v10775 = vpop.f32.mrf.mxu0
  %10776 = vdwg.mxu0
  %10777 = vmatpush.bf16.msra.mxu0 %v6696
  %10778 = vmatpush.bf16.msra.mxu0 %v6692
  %10779 = vmatpush.bf16.msra.mxu0 %v6688
  %10780 = vmatpush.bf16.msra.mxu0 %v6684
  %10781 = vmatpush.bf16.msra.mxu0 %v6680
  %10782 = vmatpush.bf16.msra.mxu0 %v6676
  %10783 = vmatpush.bf16.msra.mxu0 %v6672
  %10784 = vmatpush.bf16.msra.mxu0 %v6668
  %10785 = vmatmul.bf16.gmra.mxu0 %v1605
  %v10786 = vpop.f32.mrf.mxu0
  %v10787 = vadd.f32 %v10774, %v10786
  %v10788 = vpop.f32.mrf.mxu0
  %10789 = vdwg.mxu0
  %10790 = vmatpush.bf16.msra.mxu0 %v6728
  %10791 = vmatpush.bf16.msra.mxu0 %v6724
  %10792 = vmatpush.bf16.msra.mxu0 %v6720
  %10793 = vmatpush.bf16.msra.mxu0 %v6716
  %10794 = vmatpush.bf16.msra.mxu0 %v6712
  %10795 = vmatpush.bf16.msra.mxu0 %v6708
  %10796 = vmatpush.bf16.msra.mxu0 %v6704
  %10797 = vmatpush.bf16.msra.mxu0 %v6700
  %10798 = vmatmul.bf16.gmra.mxu0 %v1606
  %v10799 = vpop.f32.mrf.mxu0
  %v10800 = vadd.f32 %v10787, %v10799
  %v10801 = vpop.f32.mrf.mxu0
  %10802 = vdwg.mxu0
  %10803 = vmatpush.bf16.msra.mxu0 %v6760
  %10804 = vmatpush.bf16.msra.mxu0 %v6756
  %10805 = vmatpush.bf16.msra.mxu0 %v6752
  %10806 = vmatpush.bf16.msra.mxu0 %v6748
  %10807 = vmatpush.bf16.msra.mxu0 %v6744
  %10808 = vmatpush.bf16.msra.mxu0 %v6740
  %10809 = vmatpush.bf16.msra.mxu0 %v6736
  %10810 = vmatpush.bf16.msra.mxu0 %v6732
  %10811 = vmatmul.bf16.gmra.mxu0 %v1607
  %v10812 = vpop.f32.mrf.mxu0
  %v10813 = vadd.f32 %v10800, %v10812
  %v10814 = vpop.f32.mrf.mxu0
  %10815 = vdwg.mxu0
  %10816 = vmatpush.bf16.msra.mxu0 %v6792
  %10817 = vmatpush.bf16.msra.mxu0 %v6788
  %10818 = vmatpush.bf16.msra.mxu0 %v6784
  %10819 = vmatpush.bf16.msra.mxu0 %v6780
  %10820 = vmatpush.bf16.msra.mxu0 %v6776
  %10821 = vmatpush.bf16.msra.mxu0 %v6772
  %10822 = vmatpush.bf16.msra.mxu0 %v6768
  %10823 = vmatpush.bf16.msra.mxu0 %v6764
  %10824 = vmatmul.bf16.gmra.mxu0 %v1608
  %v10825 = vpop.f32.mrf.mxu0
  %v10826 = vadd.f32 %v10813, %v10825
  %v10827 = vpop.f32.mrf.mxu0
  %10828 = vdwg.mxu0
  %10829 = vmatpush.bf16.msra.mxu0 %v6824
  %10830 = vmatpush.bf16.msra.mxu0 %v6820
  %10831 = vmatpush.bf16.msra.mxu0 %v6816
  %10832 = vmatpush.bf16.msra.mxu0 %v6812
  %10833 = vmatpush.bf16.msra.mxu0 %v6808
  %10834 = vmatpush.bf16.msra.mxu0 %v6804
  %10835 = vmatpush.bf16.msra.mxu0 %v6800
  %10836 = vmatpush.bf16.msra.mxu0 %v6796
  %10837 = vmatmul.bf16.gmra.mxu0 %v1609
  %v10838 = vpop.f32.mrf.mxu0
  %v10839 = vadd.f32 %v10826, %v10838
  %v10840 = vpop.f32.mrf.mxu0
  %10841 = vdwg.mxu0
  %10842 = vmatpush.bf16.msra.mxu0 %v6856
  %10843 = vmatpush.bf16.msra.mxu0 %v6852
  %10844 = vmatpush.bf16.msra.mxu0 %v6848
  %10845 = vmatpush.bf16.msra.mxu0 %v6844
  %10846 = vmatpush.bf16.msra.mxu0 %v6840
  %10847 = vmatpush.bf16.msra.mxu0 %v6836
  %10848 = vmatpush.bf16.msra.mxu0 %v6832
  %10849 = vmatpush.bf16.msra.mxu0 %v6828
  %10850 = vmatmul.bf16.gmra.mxu0 %v1614
  %v10851 = vpop.f32.mrf.mxu0
  %v10852 = vadd.f32 %v10839, %v10851
  %v10853 = vpop.f32.mrf.mxu0
  %10854 = vdwg.mxu0
  %10855 = vmatpush.bf16.msra.mxu0 %v6888
  %10856 = vmatpush.bf16.msra.mxu0 %v6884
  %10857 = vmatpush.bf16.msra.mxu0 %v6880
  %10858 = vmatpush.bf16.msra.mxu0 %v6876
  %10859 = vmatpush.bf16.msra.mxu0 %v6872
  %10860 = vmatpush.bf16.msra.mxu0 %v6868
  %10861 = vmatpush.bf16.msra.mxu0 %v6864
  %10862 = vmatpush.bf16.msra.mxu0 %v6860
  %10863 = vmatmul.bf16.gmra.mxu0 %v1615
  %v10864 = vpop.f32.mrf.mxu0
  %v10865 = vadd.f32 %v10852, %v10864
  %v10866 = vpop.f32.mrf.mxu0
  %10867 = vdwg.mxu0
  %10868 = vmatpush.bf16.msra.mxu0 %v6920
  %10869 = vmatpush.bf16.msra.mxu0 %v6916
  %10870 = vmatpush.bf16.msra.mxu0 %v6912
  %10871 = vmatpush.bf16.msra.mxu0 %v6908
  %10872 = vmatpush.bf16.msra.mxu0 %v6904
  %10873 = vmatpush.bf16.msra.mxu0 %v6900
  %10874 = vmatpush.bf16.msra.mxu0 %v6896
  %10875 = vmatpush.bf16.msra.mxu0 %v6892
  %10876 = vmatmul.bf16.gmra.mxu0 %v1616
  %v10877 = vpop.f32.mrf.mxu0
  %v10878 = vadd.f32 %v10865, %v10877
  %v10879 = vpop.f32.mrf.mxu0
  %10880 = vdwg.mxu0
  %10881 = vmatpush.bf16.msra.mxu0 %v6952
  %10882 = vmatpush.bf16.msra.mxu0 %v6948
  %10883 = vmatpush.bf16.msra.mxu0 %v6944
  %10884 = vmatpush.bf16.msra.mxu0 %v6940
  %10885 = vmatpush.bf16.msra.mxu0 %v6936
  %10886 = vmatpush.bf16.msra.mxu0 %v6932
  %10887 = vmatpush.bf16.msra.mxu0 %v6928
  %10888 = vmatpush.bf16.msra.mxu0 %v6924
  %10889 = vmatmul.bf16.gmra.mxu0 %v1617
  %v10890 = vpop.f32.mrf.mxu0
  %v10891 = vadd.f32 %v10878, %v10890
  %v10892 = vpop.f32.mrf.mxu0
  %10893 = vdwg.mxu0
  %10894 = vmatpush.bf16.msra.mxu0 %v6984
  %10895 = vmatpush.bf16.msra.mxu0 %v6980
  %10896 = vmatpush.bf16.msra.mxu0 %v6976
  %10897 = vmatpush.bf16.msra.mxu0 %v6972
  %10898 = vmatpush.bf16.msra.mxu0 %v6968
  %10899 = vmatpush.bf16.msra.mxu0 %v6964
  %10900 = vmatpush.bf16.msra.mxu0 %v6960
  %10901 = vmatpush.bf16.msra.mxu0 %v6956
  %10902 = vmatmul.bf16.gmra.mxu0 %v1618
  %v10903 = vpop.f32.mrf.mxu0
  %v10904 = vadd.f32 %v10891, %v10903
  %v10905 = vpop.f32.mrf.mxu0
  %10906 = vdwg.mxu0
  %10907 = vmatpush.bf16.msra.mxu0 %v7016
  %10908 = vmatpush.bf16.msra.mxu0 %v7012
  %10909 = vmatpush.bf16.msra.mxu0 %v7008
  %10910 = vmatpush.bf16.msra.mxu0 %v7004
  %10911 = vmatpush.bf16.msra.mxu0 %v7000
  %10912 = vmatpush.bf16.msra.mxu0 %v6996
  %10913 = vmatpush.bf16.msra.mxu0 %v6992
  %10914 = vmatpush.bf16.msra.mxu0 %v6988
  %10915 = vmatmul.bf16.gmra.mxu0 %v1619
  %v10916 = vpop.f32.mrf.mxu0
  %v10917 = vadd.f32 %v10904, %v10916
  %v10918 = vpop.f32.mrf.mxu0
  %10919 = vdwg.mxu0
  %10920 = vmatpush.bf16.msra.mxu0 %v7048
  %10921 = vmatpush.bf16.msra.mxu0 %v7044
  %10922 = vmatpush.bf16.msra.mxu0 %v7040
  %10923 = vmatpush.bf16.msra.mxu0 %v7036
  %10924 = vmatpush.bf16.msra.mxu0 %v7032
  %10925 = vmatpush.bf16.msra.mxu0 %v7028
  %10926 = vmatpush.bf16.msra.mxu0 %v7024
  %10927 = vmatpush.bf16.msra.mxu0 %v7020
  %10928 = vmatmul.bf16.gmra.mxu0 %v1620
  %v10929 = vpop.f32.mrf.mxu0
  %v10930 = vadd.f32 %v10917, %v10929
  %v10931 = vpop.f32.mrf.mxu0
  %10932 = vdwg.mxu0
  %10933 = vmatpush.bf16.msra.mxu0 %v7080
  %10934 = vmatpush.bf16.msra.mxu0 %v7076
  %10935 = vmatpush.bf16.msra.mxu0 %v7072
  %10936 = vmatpush.bf16.msra.mxu0 %v7068
  %10937 = vmatpush.bf16.msra.mxu0 %v7064
  %10938 = vmatpush.bf16.msra.mxu0 %v7060
  %10939 = vmatpush.bf16.msra.mxu0 %v7056
  %10940 = vmatpush.bf16.msra.mxu0 %v7052
  %10941 = vmatmul.bf16.gmra.mxu0 %v1621
  %v10942 = vpop.f32.mrf.mxu0
  %v10943 = vadd.f32 %v10930, %v10942
  %v10944 = vpop.f32.mrf.mxu0
  %10945 = vdwg.mxu0
  %10946 = vmatpush.bf16.msra.mxu0 %v7112
  %10947 = vmatpush.bf16.msra.mxu0 %v7108
  %10948 = vmatpush.bf16.msra.mxu0 %v7104
  %10949 = vmatpush.bf16.msra.mxu0 %v7100
  %10950 = vmatpush.bf16.msra.mxu0 %v7096
  %10951 = vmatpush.bf16.msra.mxu0 %v7092
  %10952 = vmatpush.bf16.msra.mxu0 %v7088
  %10953 = vmatpush.bf16.msra.mxu0 %v7084
  %10954 = vmatmul.bf16.gmra.mxu0 %v1626
  %v10955 = vpop.f32.mrf.mxu0
  %v10956 = vadd.f32 %v10943, %v10955
  %v10957 = vpop.f32.mrf.mxu0
  %10958 = vdwg.mxu0
  %10959 = vmatpush.bf16.msra.mxu0 %v7144
  %10960 = vmatpush.bf16.msra.mxu0 %v7140
  %10961 = vmatpush.bf16.msra.mxu0 %v7136
  %10962 = vmatpush.bf16.msra.mxu0 %v7132
  %10963 = vmatpush.bf16.msra.mxu0 %v7128
  %10964 = vmatpush.bf16.msra.mxu0 %v7124
  %10965 = vmatpush.bf16.msra.mxu0 %v7120
  %10966 = vmatpush.bf16.msra.mxu0 %v7116
  %10967 = vmatmul.bf16.gmra.mxu0 %v1627
  %v10968 = vpop.f32.mrf.mxu0
  %v10969 = vadd.f32 %v10956, %v10968
  %v10970 = vpop.f32.mrf.mxu0
  %10971 = vdwg.mxu0
  %10972 = vmatpush.bf16.msra.mxu0 %v7176
  %10973 = vmatpush.bf16.msra.mxu0 %v7172
  %10974 = vmatpush.bf16.msra.mxu0 %v7168
  %10975 = vmatpush.bf16.msra.mxu0 %v7164
  %10976 = vmatpush.bf16.msra.mxu0 %v7160
  %10977 = vmatpush.bf16.msra.mxu0 %v7156
  %10978 = vmatpush.bf16.msra.mxu0 %v7152
  %10979 = vmatpush.bf16.msra.mxu0 %v7148
  %10980 = vmatmul.bf16.gmra.mxu0 %v1628
  %v10981 = vpop.f32.mrf.mxu0
  %v10982 = vadd.f32 %v10969, %v10981
  %v10983 = vpop.f32.mrf.mxu0
  %10984 = vdwg.mxu0
  %10985 = vmatpush.bf16.msra.mxu0 %v7208
  %10986 = vmatpush.bf16.msra.mxu0 %v7204
  %10987 = vmatpush.bf16.msra.mxu0 %v7200
  %10988 = vmatpush.bf16.msra.mxu0 %v7196
  %10989 = vmatpush.bf16.msra.mxu0 %v7192
  %10990 = vmatpush.bf16.msra.mxu0 %v7188
  %10991 = vmatpush.bf16.msra.mxu0 %v7184
  %10992 = vmatpush.bf16.msra.mxu0 %v7180
  %10993 = vmatmul.bf16.gmra.mxu0 %v1629
  %v10994 = vpop.f32.mrf.mxu0
  %v10995 = vadd.f32 %v10982, %v10994
  %v10996 = vpop.f32.mrf.mxu0
  %10997 = vdwg.mxu0
  %10998 = vmatpush.bf16.msra.mxu0 %v7240
  %10999 = vmatpush.bf16.msra.mxu0 %v7236
  %11000 = vmatpush.bf16.msra.mxu0 %v7232
  %11001 = vmatpush.bf16.msra.mxu0 %v7228
  %11002 = vmatpush.bf16.msra.mxu0 %v7224
  %11003 = vmatpush.bf16.msra.mxu0 %v7220
  %11004 = vmatpush.bf16.msra.mxu0 %v7216
  %11005 = vmatpush.bf16.msra.mxu0 %v7212
  %11006 = vmatmul.bf16.gmra.mxu0 %v1630
  %v11007 = vpop.f32.mrf.mxu0
  %v11008 = vadd.f32 %v10995, %v11007
  %v11009 = vpop.f32.mrf.mxu0
  %11010 = vdwg.mxu0
  %11011 = vmatpush.bf16.msra.mxu0 %v7272
  %11012 = vmatpush.bf16.msra.mxu0 %v7268
  %11013 = vmatpush.bf16.msra.mxu0 %v7264
  %11014 = vmatpush.bf16.msra.mxu0 %v7260
  %11015 = vmatpush.bf16.msra.mxu0 %v7256
  %11016 = vmatpush.bf16.msra.mxu0 %v7252
  %11017 = vmatpush.bf16.msra.mxu0 %v7248
  %11018 = vmatpush.bf16.msra.mxu0 %v7244
  %11019 = vmatmul.bf16.gmra.mxu0 %v1631
  %v11020 = vpop.f32.mrf.mxu0
  %v11021 = vadd.f32 %v11008, %v11020
  %v11022 = vpop.f32.mrf.mxu0
  %11023 = vdwg.mxu0
  %11024 = vmatpush.bf16.msra.mxu0 %v7304
  %11025 = vmatpush.bf16.msra.mxu0 %v7300
  %11026 = vmatpush.bf16.msra.mxu0 %v7296
  %11027 = vmatpush.bf16.msra.mxu0 %v7292
  %11028 = vmatpush.bf16.msra.mxu0 %v7288
  %11029 = vmatpush.bf16.msra.mxu0 %v7284
  %11030 = vmatpush.bf16.msra.mxu0 %v7280
  %11031 = vmatpush.bf16.msra.mxu0 %v7276
  %11032 = vmatmul.bf16.gmra.mxu0 %v1632
  %v11033 = vpop.f32.mrf.mxu0
  %v11034 = vadd.f32 %v11021, %v11033
  %v11035 = vpop.f32.mrf.mxu0
  %11036 = vdwg.mxu0
  %11037 = vmatpush.bf16.msra.mxu0 %v7336
  %11038 = vmatpush.bf16.msra.mxu0 %v7332
  %11039 = vmatpush.bf16.msra.mxu0 %v7328
  %11040 = vmatpush.bf16.msra.mxu0 %v7324
  %11041 = vmatpush.bf16.msra.mxu0 %v7320
  %11042 = vmatpush.bf16.msra.mxu0 %v7316
  %11043 = vmatpush.bf16.msra.mxu0 %v7312
  %11044 = vmatpush.bf16.msra.mxu0 %v7308
  %11045 = vmatmul.bf16.gmra.mxu0 %v1633
  %v11046 = vpop.f32.mrf.mxu0
  %v11047 = vadd.f32 %v11034, %v11046
  %v11048 = vpop.f32.mrf.mxu0
  %11049 = vdwg.mxu0
  %11050 = vmatpush.bf16.msra.mxu0 %v7368
  %11051 = vmatpush.bf16.msra.mxu0 %v7364
  %11052 = vmatpush.bf16.msra.mxu0 %v7360
  %11053 = vmatpush.bf16.msra.mxu0 %v7356
  %11054 = vmatpush.bf16.msra.mxu0 %v7352
  %11055 = vmatpush.bf16.msra.mxu0 %v7348
  %11056 = vmatpush.bf16.msra.mxu0 %v7344
  %11057 = vmatpush.bf16.msra.mxu0 %v7340
  %11058 = vmatmul.bf16.gmra.mxu0 %v1638
  %v11059 = vpop.f32.mrf.mxu0
  %v11060 = vadd.f32 %v11047, %v11059
  %v11061 = vpop.f32.mrf.mxu0
  %11062 = vdwg.mxu0
  %11063 = vmatpush.bf16.msra.mxu0 %v7400
  %11064 = vmatpush.bf16.msra.mxu0 %v7396
  %11065 = vmatpush.bf16.msra.mxu0 %v7392
  %11066 = vmatpush.bf16.msra.mxu0 %v7388
  %11067 = vmatpush.bf16.msra.mxu0 %v7384
  %11068 = vmatpush.bf16.msra.mxu0 %v7380
  %11069 = vmatpush.bf16.msra.mxu0 %v7376
  %11070 = vmatpush.bf16.msra.mxu0 %v7372
  %11071 = vmatmul.bf16.gmra.mxu0 %v1639
  %v11072 = vpop.f32.mrf.mxu0
  %v11073 = vadd.f32 %v11060, %v11072
  %v11074 = vpop.f32.mrf.mxu0
  %11075 = vdwg.mxu0
  %11076 = vmatpush.bf16.msra.mxu0 %v7432
  %11077 = vmatpush.bf16.msra.mxu0 %v7428
  %11078 = vmatpush.bf16.msra.mxu0 %v7424
  %11079 = vmatpush.bf16.msra.mxu0 %v7420
  %11080 = vmatpush.bf16.msra.mxu0 %v7416
  %11081 = vmatpush.bf16.msra.mxu0 %v7412
  %11082 = vmatpush.bf16.msra.mxu0 %v7408
  %11083 = vmatpush.bf16.msra.mxu0 %v7404
  %11084 = vmatmul.bf16.gmra.mxu0 %v1640
  %v11085 = vpop.f32.mrf.mxu0
  %v11086 = vadd.f32 %v11073, %v11085
  %v11087 = vpop.f32.mrf.mxu0
  %11088 = vdwg.mxu0
  %11089 = vmatpush.bf16.msra.mxu0 %v7464
  %11090 = vmatpush.bf16.msra.mxu0 %v7460
  %11091 = vmatpush.bf16.msra.mxu0 %v7456
  %11092 = vmatpush.bf16.msra.mxu0 %v7452
  %11093 = vmatpush.bf16.msra.mxu0 %v7448
  %11094 = vmatpush.bf16.msra.mxu0 %v7444
  %11095 = vmatpush.bf16.msra.mxu0 %v7440
  %11096 = vmatpush.bf16.msra.mxu0 %v7436
  %11097 = vmatmul.bf16.gmra.mxu0 %v1641
  %v11098 = vpop.f32.mrf.mxu0
  %v11099 = vadd.f32 %v11086, %v11098
  %v11100 = vpop.f32.mrf.mxu0
  %11101 = vdwg.mxu0
  %11102 = vmatpush.bf16.msra.mxu0 %v7496
  %11103 = vmatpush.bf16.msra.mxu0 %v7492
  %11104 = vmatpush.bf16.msra.mxu0 %v7488
  %11105 = vmatpush.bf16.msra.mxu0 %v7484
  %11106 = vmatpush.bf16.msra.mxu0 %v7480
  %11107 = vmatpush.bf16.msra.mxu0 %v7476
  %11108 = vmatpush.bf16.msra.mxu0 %v7472
  %11109 = vmatpush.bf16.msra.mxu0 %v7468
  %11110 = vmatmul.bf16.gmra.mxu0 %v1642
  %v11111 = vpop.f32.mrf.mxu0
  %v11112 = vadd.f32 %v11099, %v11111
  %v11113 = vpop.f32.mrf.mxu0
  %11114 = vdwg.mxu0
  %11115 = vmatpush.bf16.msra.mxu0 %v7528
  %11116 = vmatpush.bf16.msra.mxu0 %v7524
  %11117 = vmatpush.bf16.msra.mxu0 %v7520
  %11118 = vmatpush.bf16.msra.mxu0 %v7516
  %11119 = vmatpush.bf16.msra.mxu0 %v7512
  %11120 = vmatpush.bf16.msra.mxu0 %v7508
  %11121 = vmatpush.bf16.msra.mxu0 %v7504
  %11122 = vmatpush.bf16.msra.mxu0 %v7500
  %11123 = vmatmul.bf16.gmra.mxu0 %v1643
  %v11124 = vpop.f32.mrf.mxu0
  %v11125 = vadd.f32 %v11112, %v11124
  %v11126 = vpop.f32.mrf.mxu0
  %11127 = vdwg.mxu0
  %11128 = vmatpush.bf16.msra.mxu0 %v7560
  %11129 = vmatpush.bf16.msra.mxu0 %v7556
  %11130 = vmatpush.bf16.msra.mxu0 %v7552
  %11131 = vmatpush.bf16.msra.mxu0 %v7548
  %11132 = vmatpush.bf16.msra.mxu0 %v7544
  %11133 = vmatpush.bf16.msra.mxu0 %v7540
  %11134 = vmatpush.bf16.msra.mxu0 %v7536
  %11135 = vmatpush.bf16.msra.mxu0 %v7532
  %11136 = vmatmul.bf16.gmra.mxu0 %v1644
  %v11137 = vpop.f32.mrf.mxu0
  %v11138 = vadd.f32 %v11125, %v11137
  %v11139 = vpop.f32.mrf.mxu0
  %11140 = vdwg.mxu0
  %11141 = vmatpush.bf16.msra.mxu0 %v7592
  %11142 = vmatpush.bf16.msra.mxu0 %v7588
  %11143 = vmatpush.bf16.msra.mxu0 %v7584
  %11144 = vmatpush.bf16.msra.mxu0 %v7580
  %11145 = vmatpush.bf16.msra.mxu0 %v7576
  %11146 = vmatpush.bf16.msra.mxu0 %v7572
  %11147 = vmatpush.bf16.msra.mxu0 %v7568
  %11148 = vmatpush.bf16.msra.mxu0 %v7564
  %11149 = vmatmul.bf16.gmra.mxu0 %v1645
  %v11150 = vpop.f32.mrf.mxu0
  %v11151 = vadd.f32 %v11138, %v11150
  %v11152 = vpop.f32.mrf.mxu0
  %11153 = vdwg.mxu0
  %11154 = vmatpush.bf16.msra.mxu0 %v7624
  %11155 = vmatpush.bf16.msra.mxu0 %v7620
  %11156 = vmatpush.bf16.msra.mxu0 %v7616
  %11157 = vmatpush.bf16.msra.mxu0 %v7612
  %11158 = vmatpush.bf16.msra.mxu0 %v7608
  %11159 = vmatpush.bf16.msra.mxu0 %v7604
  %11160 = vmatpush.bf16.msra.mxu0 %v7600
  %11161 = vmatpush.bf16.msra.mxu0 %v7596
  %11162 = vmatmul.bf16.gmra.mxu0 %v1650
  %v11163 = vpop.f32.mrf.mxu0
  %v11164 = vadd.f32 %v11151, %v11163
  %v11165 = vpop.f32.mrf.mxu0
  %11166 = vdwg.mxu0
  %11167 = vmatpush.bf16.msra.mxu0 %v7656
  %11168 = vmatpush.bf16.msra.mxu0 %v7652
  %11169 = vmatpush.bf16.msra.mxu0 %v7648
  %11170 = vmatpush.bf16.msra.mxu0 %v7644
  %11171 = vmatpush.bf16.msra.mxu0 %v7640
  %11172 = vmatpush.bf16.msra.mxu0 %v7636
  %11173 = vmatpush.bf16.msra.mxu0 %v7632
  %11174 = vmatpush.bf16.msra.mxu0 %v7628
  %11175 = vmatmul.bf16.gmra.mxu0 %v1651
  %v11176 = vpop.f32.mrf.mxu0
  %v11177 = vadd.f32 %v11164, %v11176
  %v11178 = vpop.f32.mrf.mxu0
  %11179 = vdwg.mxu0
  %11180 = vmatpush.bf16.msra.mxu0 %v7688
  %11181 = vmatpush.bf16.msra.mxu0 %v7684
  %11182 = vmatpush.bf16.msra.mxu0 %v7680
  %11183 = vmatpush.bf16.msra.mxu0 %v7676
  %11184 = vmatpush.bf16.msra.mxu0 %v7672
  %11185 = vmatpush.bf16.msra.mxu0 %v7668
  %11186 = vmatpush.bf16.msra.mxu0 %v7664
  %11187 = vmatpush.bf16.msra.mxu0 %v7660
  %11188 = vmatmul.bf16.gmra.mxu0 %v1652
  %v11189 = vpop.f32.mrf.mxu0
  %v11190 = vadd.f32 %v11177, %v11189
  %v11191 = vpop.f32.mrf.mxu0
  %11192 = vdwg.mxu0
  %11193 = vmatpush.bf16.msra.mxu0 %v7720
  %11194 = vmatpush.bf16.msra.mxu0 %v7716
  %11195 = vmatpush.bf16.msra.mxu0 %v7712
  %11196 = vmatpush.bf16.msra.mxu0 %v7708
  %11197 = vmatpush.bf16.msra.mxu0 %v7704
  %11198 = vmatpush.bf16.msra.mxu0 %v7700
  %11199 = vmatpush.bf16.msra.mxu0 %v7696
  %11200 = vmatpush.bf16.msra.mxu0 %v7692
  %11201 = vmatmul.bf16.gmra.mxu0 %v1653
  %v11202 = vpop.f32.mrf.mxu0
  %v11203 = vadd.f32 %v11190, %v11202
  %v11204 = vpop.f32.mrf.mxu0
  %11205 = vdwg.mxu0
  %11206 = vmatpush.bf16.msra.mxu0 %v7752
  %11207 = vmatpush.bf16.msra.mxu0 %v7748
  %11208 = vmatpush.bf16.msra.mxu0 %v7744
  %11209 = vmatpush.bf16.msra.mxu0 %v7740
  %11210 = vmatpush.bf16.msra.mxu0 %v7736
  %11211 = vmatpush.bf16.msra.mxu0 %v7732
  %11212 = vmatpush.bf16.msra.mxu0 %v7728
  %11213 = vmatpush.bf16.msra.mxu0 %v7724
  %11214 = vmatmul.bf16.gmra.mxu0 %v1654
  %v11215 = vpop.f32.mrf.mxu0
  %v11216 = vadd.f32 %v11203, %v11215
  %v11217 = vpop.f32.mrf.mxu0
  %11218 = vdwg.mxu0
  %11219 = vmatpush.bf16.msra.mxu0 %v7784
  %11220 = vmatpush.bf16.msra.mxu0 %v7780
  %11221 = vmatpush.bf16.msra.mxu0 %v7776
  %11222 = vmatpush.bf16.msra.mxu0 %v7772
  %11223 = vmatpush.bf16.msra.mxu0 %v7768
  %11224 = vmatpush.bf16.msra.mxu0 %v7764
  %11225 = vmatpush.bf16.msra.mxu0 %v7760
  %11226 = vmatpush.bf16.msra.mxu0 %v7756
  %11227 = vmatmul.bf16.gmra.mxu0 %v1655
  %v11228 = vpop.f32.mrf.mxu0
  %v11229 = vadd.f32 %v11216, %v11228
  %v11230 = vpop.f32.mrf.mxu0
  %11231 = vdwg.mxu0
  %11232 = vmatpush.bf16.msra.mxu0 %v7816
  %11233 = vmatpush.bf16.msra.mxu0 %v7812
  %11234 = vmatpush.bf16.msra.mxu0 %v7808
  %11235 = vmatpush.bf16.msra.mxu0 %v7804
  %11236 = vmatpush.bf16.msra.mxu0 %v7800
  %11237 = vmatpush.bf16.msra.mxu0 %v7796
  %11238 = vmatpush.bf16.msra.mxu0 %v7792
  %11239 = vmatpush.bf16.msra.mxu0 %v7788
  %11240 = vmatmul.bf16.gmra.mxu0 %v1656
  %v11241 = vpop.f32.mrf.mxu0
  %v11242 = vadd.f32 %v11229, %v11241
  %v11243 = vpop.f32.mrf.mxu0
  %11244 = vdwg.mxu0
  %11245 = vmatpush.bf16.msra.mxu0 %v7848
  %11246 = vmatpush.bf16.msra.mxu0 %v7844
  %11247 = vmatpush.bf16.msra.mxu0 %v7840
  %11248 = vmatpush.bf16.msra.mxu0 %v7836
  %11249 = vmatpush.bf16.msra.mxu0 %v7832
  %11250 = vmatpush.bf16.msra.mxu0 %v7828
  %11251 = vmatpush.bf16.msra.mxu0 %v7824
  %11252 = vmatpush.bf16.msra.mxu0 %v7820
  %11253 = vmatmul.bf16.gmra.mxu0 %v1657
  %v11254 = vpop.f32.mrf.mxu0
  %v11255 = vadd.f32 %v11242, %v11254
  %v11256 = vpop.f32.mrf.mxu0
  %11257 = vdwg.mxu0
  %11258 = vmatpush.bf16.msra.mxu0 %v6345
  %11259 = vmatpush.bf16.msra.mxu0 %v6341
  %11260 = vmatpush.bf16.msra.mxu0 %v6337
  %11261 = vmatpush.bf16.msra.mxu0 %v6333
  %11262 = vmatpush.bf16.msra.mxu0 %v6329
  %11263 = vmatpush.bf16.msra.mxu0 %v6325
  %11264 = vmatpush.bf16.msra.mxu0 %v6321
  %11265 = vmatpush.bf16.msra.mxu0 %v6317
  %11266 = vmatmul.bf16.gmra.mxu0 %v1590
  %v11267 = vpop.f32.mrf.mxu0
  %v11268 = vadd.f32 0.0, %v11267
  %v11269 = vpop.f32.mrf.mxu0
  %11270 = vdwg.mxu0
  %11271 = vmatpush.bf16.msra.mxu0 %v6377
  %11272 = vmatpush.bf16.msra.mxu0 %v6373
  %11273 = vmatpush.bf16.msra.mxu0 %v6369
  %11274 = vmatpush.bf16.msra.mxu0 %v6365
  %11275 = vmatpush.bf16.msra.mxu0 %v6361
  %11276 = vmatpush.bf16.msra.mxu0 %v6357
  %11277 = vmatpush.bf16.msra.mxu0 %v6353
  %11278 = vmatpush.bf16.msra.mxu0 %v6349
  %11279 = vmatmul.bf16.gmra.mxu0 %v1591
  %v11280 = vpop.f32.mrf.mxu0
  %v11281 = vadd.f32 %v11268, %v11280
  %v11282 = vpop.f32.mrf.mxu0
  %11283 = vdwg.mxu0
  %11284 = vmatpush.bf16.msra.mxu0 %v6409
  %11285 = vmatpush.bf16.msra.mxu0 %v6405
  %11286 = vmatpush.bf16.msra.mxu0 %v6401
  %11287 = vmatpush.bf16.msra.mxu0 %v6397
  %11288 = vmatpush.bf16.msra.mxu0 %v6393
  %11289 = vmatpush.bf16.msra.mxu0 %v6389
  %11290 = vmatpush.bf16.msra.mxu0 %v6385
  %11291 = vmatpush.bf16.msra.mxu0 %v6381
  %11292 = vmatmul.bf16.gmra.mxu0 %v1592
  %v11293 = vpop.f32.mrf.mxu0
  %v11294 = vadd.f32 %v11281, %v11293
  %v11295 = vpop.f32.mrf.mxu0
  %11296 = vdwg.mxu0
  %11297 = vmatpush.bf16.msra.mxu0 %v6441
  %11298 = vmatpush.bf16.msra.mxu0 %v6437
  %11299 = vmatpush.bf16.msra.mxu0 %v6433
  %11300 = vmatpush.bf16.msra.mxu0 %v6429
  %11301 = vmatpush.bf16.msra.mxu0 %v6425
  %11302 = vmatpush.bf16.msra.mxu0 %v6421
  %11303 = vmatpush.bf16.msra.mxu0 %v6417
  %11304 = vmatpush.bf16.msra.mxu0 %v6413
  %11305 = vmatmul.bf16.gmra.mxu0 %v1593
  %v11306 = vpop.f32.mrf.mxu0
  %v11307 = vadd.f32 %v11294, %v11306
  %v11308 = vpop.f32.mrf.mxu0
  %11309 = vdwg.mxu0
  %11310 = vmatpush.bf16.msra.mxu0 %v6473
  %11311 = vmatpush.bf16.msra.mxu0 %v6469
  %11312 = vmatpush.bf16.msra.mxu0 %v6465
  %11313 = vmatpush.bf16.msra.mxu0 %v6461
  %11314 = vmatpush.bf16.msra.mxu0 %v6457
  %11315 = vmatpush.bf16.msra.mxu0 %v6453
  %11316 = vmatpush.bf16.msra.mxu0 %v6449
  %11317 = vmatpush.bf16.msra.mxu0 %v6445
  %11318 = vmatmul.bf16.gmra.mxu0 %v1594
  %v11319 = vpop.f32.mrf.mxu0
  %v11320 = vadd.f32 %v11307, %v11319
  %v11321 = vpop.f32.mrf.mxu0
  %11322 = vdwg.mxu0
  %11323 = vmatpush.bf16.msra.mxu0 %v6505
  %11324 = vmatpush.bf16.msra.mxu0 %v6501
  %11325 = vmatpush.bf16.msra.mxu0 %v6497
  %11326 = vmatpush.bf16.msra.mxu0 %v6493
  %11327 = vmatpush.bf16.msra.mxu0 %v6489
  %11328 = vmatpush.bf16.msra.mxu0 %v6485
  %11329 = vmatpush.bf16.msra.mxu0 %v6481
  %11330 = vmatpush.bf16.msra.mxu0 %v6477
  %11331 = vmatmul.bf16.gmra.mxu0 %v1595
  %v11332 = vpop.f32.mrf.mxu0
  %v11333 = vadd.f32 %v11320, %v11332
  %v11334 = vpop.f32.mrf.mxu0
  %11335 = vdwg.mxu0
  %11336 = vmatpush.bf16.msra.mxu0 %v6537
  %11337 = vmatpush.bf16.msra.mxu0 %v6533
  %11338 = vmatpush.bf16.msra.mxu0 %v6529
  %11339 = vmatpush.bf16.msra.mxu0 %v6525
  %11340 = vmatpush.bf16.msra.mxu0 %v6521
  %11341 = vmatpush.bf16.msra.mxu0 %v6517
  %11342 = vmatpush.bf16.msra.mxu0 %v6513
  %11343 = vmatpush.bf16.msra.mxu0 %v6509
  %11344 = vmatmul.bf16.gmra.mxu0 %v1596
  %v11345 = vpop.f32.mrf.mxu0
  %v11346 = vadd.f32 %v11333, %v11345
  %v11347 = vpop.f32.mrf.mxu0
  %11348 = vdwg.mxu0
  %11349 = vmatpush.bf16.msra.mxu0 %v6569
  %11350 = vmatpush.bf16.msra.mxu0 %v6565
  %11351 = vmatpush.bf16.msra.mxu0 %v6561
  %11352 = vmatpush.bf16.msra.mxu0 %v6557
  %11353 = vmatpush.bf16.msra.mxu0 %v6553
  %11354 = vmatpush.bf16.msra.mxu0 %v6549
  %11355 = vmatpush.bf16.msra.mxu0 %v6545
  %11356 = vmatpush.bf16.msra.mxu0 %v6541
  %11357 = vmatmul.bf16.gmra.mxu0 %v1597
  %v11358 = vpop.f32.mrf.mxu0
  %v11359 = vadd.f32 %v11346, %v11358
  %v11360 = vpop.f32.mrf.mxu0
  %11361 = vdwg.mxu0
  %11362 = vmatpush.bf16.msra.mxu0 %v6601
  %11363 = vmatpush.bf16.msra.mxu0 %v6597
  %11364 = vmatpush.bf16.msra.mxu0 %v6593
  %11365 = vmatpush.bf16.msra.mxu0 %v6589
  %11366 = vmatpush.bf16.msra.mxu0 %v6585
  %11367 = vmatpush.bf16.msra.mxu0 %v6581
  %11368 = vmatpush.bf16.msra.mxu0 %v6577
  %11369 = vmatpush.bf16.msra.mxu0 %v6573
  %11370 = vmatmul.bf16.gmra.mxu0 %v1602
  %v11371 = vpop.f32.mrf.mxu0
  %v11372 = vadd.f32 %v11359, %v11371
  %v11373 = vpop.f32.mrf.mxu0
  %11374 = vdwg.mxu0
  %11375 = vmatpush.bf16.msra.mxu0 %v6633
  %11376 = vmatpush.bf16.msra.mxu0 %v6629
  %11377 = vmatpush.bf16.msra.mxu0 %v6625
  %11378 = vmatpush.bf16.msra.mxu0 %v6621
  %11379 = vmatpush.bf16.msra.mxu0 %v6617
  %11380 = vmatpush.bf16.msra.mxu0 %v6613
  %11381 = vmatpush.bf16.msra.mxu0 %v6609
  %11382 = vmatpush.bf16.msra.mxu0 %v6605
  %11383 = vmatmul.bf16.gmra.mxu0 %v1603
  %v11384 = vpop.f32.mrf.mxu0
  %v11385 = vadd.f32 %v11372, %v11384
  %v11386 = vpop.f32.mrf.mxu0
  %11387 = vdwg.mxu0
  %11388 = vmatpush.bf16.msra.mxu0 %v6665
  %11389 = vmatpush.bf16.msra.mxu0 %v6661
  %11390 = vmatpush.bf16.msra.mxu0 %v6657
  %11391 = vmatpush.bf16.msra.mxu0 %v6653
  %11392 = vmatpush.bf16.msra.mxu0 %v6649
  %11393 = vmatpush.bf16.msra.mxu0 %v6645
  %11394 = vmatpush.bf16.msra.mxu0 %v6641
  %11395 = vmatpush.bf16.msra.mxu0 %v6637
  %11396 = vmatmul.bf16.gmra.mxu0 %v1604
  %v11397 = vpop.f32.mrf.mxu0
  %v11398 = vadd.f32 %v11385, %v11397
  %v11399 = vpop.f32.mrf.mxu0
  %11400 = vdwg.mxu0
  %11401 = vmatpush.bf16.msra.mxu0 %v6697
  %11402 = vmatpush.bf16.msra.mxu0 %v6693
  %11403 = vmatpush.bf16.msra.mxu0 %v6689
  %11404 = vmatpush.bf16.msra.mxu0 %v6685
  %11405 = vmatpush.bf16.msra.mxu0 %v6681
  %11406 = vmatpush.bf16.msra.mxu0 %v6677
  %11407 = vmatpush.bf16.msra.mxu0 %v6673
  %11408 = vmatpush.bf16.msra.mxu0 %v6669
  %11409 = vmatmul.bf16.gmra.mxu0 %v1605
  %v11410 = vpop.f32.mrf.mxu0
  %v11411 = vadd.f32 %v11398, %v11410
  %v11412 = vpop.f32.mrf.mxu0
  %11413 = vdwg.mxu0
  %11414 = vmatpush.bf16.msra.mxu0 %v6729
  %11415 = vmatpush.bf16.msra.mxu0 %v6725
  %11416 = vmatpush.bf16.msra.mxu0 %v6721
  %11417 = vmatpush.bf16.msra.mxu0 %v6717
  %11418 = vmatpush.bf16.msra.mxu0 %v6713
  %11419 = vmatpush.bf16.msra.mxu0 %v6709
  %11420 = vmatpush.bf16.msra.mxu0 %v6705
  %11421 = vmatpush.bf16.msra.mxu0 %v6701
  %11422 = vmatmul.bf16.gmra.mxu0 %v1606
  %v11423 = vpop.f32.mrf.mxu0
  %v11424 = vadd.f32 %v11411, %v11423
  %v11425 = vpop.f32.mrf.mxu0
  %11426 = vdwg.mxu0
  %11427 = vmatpush.bf16.msra.mxu0 %v6761
  %11428 = vmatpush.bf16.msra.mxu0 %v6757
  %11429 = vmatpush.bf16.msra.mxu0 %v6753
  %11430 = vmatpush.bf16.msra.mxu0 %v6749
  %11431 = vmatpush.bf16.msra.mxu0 %v6745
  %11432 = vmatpush.bf16.msra.mxu0 %v6741
  %11433 = vmatpush.bf16.msra.mxu0 %v6737
  %11434 = vmatpush.bf16.msra.mxu0 %v6733
  %11435 = vmatmul.bf16.gmra.mxu0 %v1607
  %v11436 = vpop.f32.mrf.mxu0
  %v11437 = vadd.f32 %v11424, %v11436
  %v11438 = vpop.f32.mrf.mxu0
  %11439 = vdwg.mxu0
  %11440 = vmatpush.bf16.msra.mxu0 %v6793
  %11441 = vmatpush.bf16.msra.mxu0 %v6789
  %11442 = vmatpush.bf16.msra.mxu0 %v6785
  %11443 = vmatpush.bf16.msra.mxu0 %v6781
  %11444 = vmatpush.bf16.msra.mxu0 %v6777
  %11445 = vmatpush.bf16.msra.mxu0 %v6773
  %11446 = vmatpush.bf16.msra.mxu0 %v6769
  %11447 = vmatpush.bf16.msra.mxu0 %v6765
  %11448 = vmatmul.bf16.gmra.mxu0 %v1608
  %v11449 = vpop.f32.mrf.mxu0
  %v11450 = vadd.f32 %v11437, %v11449
  %v11451 = vpop.f32.mrf.mxu0
  %11452 = vdwg.mxu0
  %11453 = vmatpush.bf16.msra.mxu0 %v6825
  %11454 = vmatpush.bf16.msra.mxu0 %v6821
  %11455 = vmatpush.bf16.msra.mxu0 %v6817
  %11456 = vmatpush.bf16.msra.mxu0 %v6813
  %11457 = vmatpush.bf16.msra.mxu0 %v6809
  %11458 = vmatpush.bf16.msra.mxu0 %v6805
  %11459 = vmatpush.bf16.msra.mxu0 %v6801
  %11460 = vmatpush.bf16.msra.mxu0 %v6797
  %11461 = vmatmul.bf16.gmra.mxu0 %v1609
  %v11462 = vpop.f32.mrf.mxu0
  %v11463 = vadd.f32 %v11450, %v11462
  %v11464 = vpop.f32.mrf.mxu0
  %11465 = vdwg.mxu0
  %11466 = vmatpush.bf16.msra.mxu0 %v6857
  %11467 = vmatpush.bf16.msra.mxu0 %v6853
  %11468 = vmatpush.bf16.msra.mxu0 %v6849
  %11469 = vmatpush.bf16.msra.mxu0 %v6845
  %11470 = vmatpush.bf16.msra.mxu0 %v6841
  %11471 = vmatpush.bf16.msra.mxu0 %v6837
  %11472 = vmatpush.bf16.msra.mxu0 %v6833
  %11473 = vmatpush.bf16.msra.mxu0 %v6829
  %11474 = vmatmul.bf16.gmra.mxu0 %v1614
  %v11475 = vpop.f32.mrf.mxu0
  %v11476 = vadd.f32 %v11463, %v11475
  %v11477 = vpop.f32.mrf.mxu0
  %11478 = vdwg.mxu0
  %11479 = vmatpush.bf16.msra.mxu0 %v6889
  %11480 = vmatpush.bf16.msra.mxu0 %v6885
  %11481 = vmatpush.bf16.msra.mxu0 %v6881
  %11482 = vmatpush.bf16.msra.mxu0 %v6877
  %11483 = vmatpush.bf16.msra.mxu0 %v6873
  %11484 = vmatpush.bf16.msra.mxu0 %v6869
  %11485 = vmatpush.bf16.msra.mxu0 %v6865
  %11486 = vmatpush.bf16.msra.mxu0 %v6861
  %11487 = vmatmul.bf16.gmra.mxu0 %v1615
  %v11488 = vpop.f32.mrf.mxu0
  %v11489 = vadd.f32 %v11476, %v11488
  %v11490 = vpop.f32.mrf.mxu0
  %11491 = vdwg.mxu0
  %11492 = vmatpush.bf16.msra.mxu0 %v6921
  %11493 = vmatpush.bf16.msra.mxu0 %v6917
  %11494 = vmatpush.bf16.msra.mxu0 %v6913
  %11495 = vmatpush.bf16.msra.mxu0 %v6909
  %11496 = vmatpush.bf16.msra.mxu0 %v6905
  %11497 = vmatpush.bf16.msra.mxu0 %v6901
  %11498 = vmatpush.bf16.msra.mxu0 %v6897
  %11499 = vmatpush.bf16.msra.mxu0 %v6893
  %11500 = vmatmul.bf16.gmra.mxu0 %v1616
  %v11501 = vpop.f32.mrf.mxu0
  %v11502 = vadd.f32 %v11489, %v11501
  %v11503 = vpop.f32.mrf.mxu0
  %11504 = vdwg.mxu0
  %11505 = vmatpush.bf16.msra.mxu0 %v6953
  %11506 = vmatpush.bf16.msra.mxu0 %v6949
  %11507 = vmatpush.bf16.msra.mxu0 %v6945
  %11508 = vmatpush.bf16.msra.mxu0 %v6941
  %11509 = vmatpush.bf16.msra.mxu0 %v6937
  %11510 = vmatpush.bf16.msra.mxu0 %v6933
  %11511 = vmatpush.bf16.msra.mxu0 %v6929
  %11512 = vmatpush.bf16.msra.mxu0 %v6925
  %11513 = vmatmul.bf16.gmra.mxu0 %v1617
  %v11514 = vpop.f32.mrf.mxu0
  %v11515 = vadd.f32 %v11502, %v11514
  %v11516 = vpop.f32.mrf.mxu0
  %11517 = vdwg.mxu0
  %11518 = vmatpush.bf16.msra.mxu0 %v6985
  %11519 = vmatpush.bf16.msra.mxu0 %v6981
  %11520 = vmatpush.bf16.msra.mxu0 %v6977
  %11521 = vmatpush.bf16.msra.mxu0 %v6973
  %11522 = vmatpush.bf16.msra.mxu0 %v6969
  %11523 = vmatpush.bf16.msra.mxu0 %v6965
  %11524 = vmatpush.bf16.msra.mxu0 %v6961
  %11525 = vmatpush.bf16.msra.mxu0 %v6957
  %11526 = vmatmul.bf16.gmra.mxu0 %v1618
  %v11527 = vpop.f32.mrf.mxu0
  %v11528 = vadd.f32 %v11515, %v11527
  %v11529 = vpop.f32.mrf.mxu0
  %11530 = vdwg.mxu0
  %11531 = vmatpush.bf16.msra.mxu0 %v7017
  %11532 = vmatpush.bf16.msra.mxu0 %v7013
  %11533 = vmatpush.bf16.msra.mxu0 %v7009
  %11534 = vmatpush.bf16.msra.mxu0 %v7005
  %11535 = vmatpush.bf16.msra.mxu0 %v7001
  %11536 = vmatpush.bf16.msra.mxu0 %v6997
  %11537 = vmatpush.bf16.msra.mxu0 %v6993
  %11538 = vmatpush.bf16.msra.mxu0 %v6989
  %11539 = vmatmul.bf16.gmra.mxu0 %v1619
  %v11540 = vpop.f32.mrf.mxu0
  %v11541 = vadd.f32 %v11528, %v11540
  %v11542 = vpop.f32.mrf.mxu0
  %11543 = vdwg.mxu0
  %11544 = vmatpush.bf16.msra.mxu0 %v7049
  %11545 = vmatpush.bf16.msra.mxu0 %v7045
  %11546 = vmatpush.bf16.msra.mxu0 %v7041
  %11547 = vmatpush.bf16.msra.mxu0 %v7037
  %11548 = vmatpush.bf16.msra.mxu0 %v7033
  %11549 = vmatpush.bf16.msra.mxu0 %v7029
  %11550 = vmatpush.bf16.msra.mxu0 %v7025
  %11551 = vmatpush.bf16.msra.mxu0 %v7021
  %11552 = vmatmul.bf16.gmra.mxu0 %v1620
  %v11553 = vpop.f32.mrf.mxu0
  %v11554 = vadd.f32 %v11541, %v11553
  %v11555 = vpop.f32.mrf.mxu0
  %11556 = vdwg.mxu0
  %11557 = vmatpush.bf16.msra.mxu0 %v7081
  %11558 = vmatpush.bf16.msra.mxu0 %v7077
  %11559 = vmatpush.bf16.msra.mxu0 %v7073
  %11560 = vmatpush.bf16.msra.mxu0 %v7069
  %11561 = vmatpush.bf16.msra.mxu0 %v7065
  %11562 = vmatpush.bf16.msra.mxu0 %v7061
  %11563 = vmatpush.bf16.msra.mxu0 %v7057
  %11564 = vmatpush.bf16.msra.mxu0 %v7053
  %11565 = vmatmul.bf16.gmra.mxu0 %v1621
  %v11566 = vpop.f32.mrf.mxu0
  %v11567 = vadd.f32 %v11554, %v11566
  %v11568 = vpop.f32.mrf.mxu0
  %11569 = vdwg.mxu0
  %11570 = vmatpush.bf16.msra.mxu0 %v7113
  %11571 = vmatpush.bf16.msra.mxu0 %v7109
  %11572 = vmatpush.bf16.msra.mxu0 %v7105
  %11573 = vmatpush.bf16.msra.mxu0 %v7101
  %11574 = vmatpush.bf16.msra.mxu0 %v7097
  %11575 = vmatpush.bf16.msra.mxu0 %v7093
  %11576 = vmatpush.bf16.msra.mxu0 %v7089
  %11577 = vmatpush.bf16.msra.mxu0 %v7085
  %11578 = vmatmul.bf16.gmra.mxu0 %v1626
  %v11579 = vpop.f32.mrf.mxu0
  %v11580 = vadd.f32 %v11567, %v11579
  %v11581 = vpop.f32.mrf.mxu0
  %11582 = vdwg.mxu0
  %11583 = vmatpush.bf16.msra.mxu0 %v7145
  %11584 = vmatpush.bf16.msra.mxu0 %v7141
  %11585 = vmatpush.bf16.msra.mxu0 %v7137
  %11586 = vmatpush.bf16.msra.mxu0 %v7133
  %11587 = vmatpush.bf16.msra.mxu0 %v7129
  %11588 = vmatpush.bf16.msra.mxu0 %v7125
  %11589 = vmatpush.bf16.msra.mxu0 %v7121
  %11590 = vmatpush.bf16.msra.mxu0 %v7117
  %11591 = vmatmul.bf16.gmra.mxu0 %v1627
  %v11592 = vpop.f32.mrf.mxu0
  %v11593 = vadd.f32 %v11580, %v11592
  %v11594 = vpop.f32.mrf.mxu0
  %11595 = vdwg.mxu0
  %11596 = vmatpush.bf16.msra.mxu0 %v7177
  %11597 = vmatpush.bf16.msra.mxu0 %v7173
  %11598 = vmatpush.bf16.msra.mxu0 %v7169
  %11599 = vmatpush.bf16.msra.mxu0 %v7165
  %11600 = vmatpush.bf16.msra.mxu0 %v7161
  %11601 = vmatpush.bf16.msra.mxu0 %v7157
  %11602 = vmatpush.bf16.msra.mxu0 %v7153
  %11603 = vmatpush.bf16.msra.mxu0 %v7149
  %11604 = vmatmul.bf16.gmra.mxu0 %v1628
  %v11605 = vpop.f32.mrf.mxu0
  %v11606 = vadd.f32 %v11593, %v11605
  %v11607 = vpop.f32.mrf.mxu0
  %11608 = vdwg.mxu0
  %11609 = vmatpush.bf16.msra.mxu0 %v7209
  %11610 = vmatpush.bf16.msra.mxu0 %v7205
  %11611 = vmatpush.bf16.msra.mxu0 %v7201
  %11612 = vmatpush.bf16.msra.mxu0 %v7197
  %11613 = vmatpush.bf16.msra.mxu0 %v7193
  %11614 = vmatpush.bf16.msra.mxu0 %v7189
  %11615 = vmatpush.bf16.msra.mxu0 %v7185
  %11616 = vmatpush.bf16.msra.mxu0 %v7181
  %11617 = vmatmul.bf16.gmra.mxu0 %v1629
  %v11618 = vpop.f32.mrf.mxu0
  %v11619 = vadd.f32 %v11606, %v11618
  %v11620 = vpop.f32.mrf.mxu0
  %11621 = vdwg.mxu0
  %11622 = vmatpush.bf16.msra.mxu0 %v7241
  %11623 = vmatpush.bf16.msra.mxu0 %v7237
  %11624 = vmatpush.bf16.msra.mxu0 %v7233
  %11625 = vmatpush.bf16.msra.mxu0 %v7229
  %11626 = vmatpush.bf16.msra.mxu0 %v7225
  %11627 = vmatpush.bf16.msra.mxu0 %v7221
  %11628 = vmatpush.bf16.msra.mxu0 %v7217
  %11629 = vmatpush.bf16.msra.mxu0 %v7213
  %11630 = vmatmul.bf16.gmra.mxu0 %v1630
  %v11631 = vpop.f32.mrf.mxu0
  %v11632 = vadd.f32 %v11619, %v11631
  %v11633 = vpop.f32.mrf.mxu0
  %11634 = vdwg.mxu0
  %11635 = vmatpush.bf16.msra.mxu0 %v7273
  %11636 = vmatpush.bf16.msra.mxu0 %v7269
  %11637 = vmatpush.bf16.msra.mxu0 %v7265
  %11638 = vmatpush.bf16.msra.mxu0 %v7261
  %11639 = vmatpush.bf16.msra.mxu0 %v7257
  %11640 = vmatpush.bf16.msra.mxu0 %v7253
  %11641 = vmatpush.bf16.msra.mxu0 %v7249
  %11642 = vmatpush.bf16.msra.mxu0 %v7245
  %11643 = vmatmul.bf16.gmra.mxu0 %v1631
  %v11644 = vpop.f32.mrf.mxu0
  %v11645 = vadd.f32 %v11632, %v11644
  %v11646 = vpop.f32.mrf.mxu0
  %11647 = vdwg.mxu0
  %11648 = vmatpush.bf16.msra.mxu0 %v7305
  %11649 = vmatpush.bf16.msra.mxu0 %v7301
  %11650 = vmatpush.bf16.msra.mxu0 %v7297
  %11651 = vmatpush.bf16.msra.mxu0 %v7293
  %11652 = vmatpush.bf16.msra.mxu0 %v7289
  %11653 = vmatpush.bf16.msra.mxu0 %v7285
  %11654 = vmatpush.bf16.msra.mxu0 %v7281
  %11655 = vmatpush.bf16.msra.mxu0 %v7277
  %11656 = vmatmul.bf16.gmra.mxu0 %v1632
  %v11657 = vpop.f32.mrf.mxu0
  %v11658 = vadd.f32 %v11645, %v11657
  %v11659 = vpop.f32.mrf.mxu0
  %11660 = vdwg.mxu0
  %11661 = vmatpush.bf16.msra.mxu0 %v7337
  %11662 = vmatpush.bf16.msra.mxu0 %v7333
  %11663 = vmatpush.bf16.msra.mxu0 %v7329
  %11664 = vmatpush.bf16.msra.mxu0 %v7325
  %11665 = vmatpush.bf16.msra.mxu0 %v7321
  %11666 = vmatpush.bf16.msra.mxu0 %v7317
  %11667 = vmatpush.bf16.msra.mxu0 %v7313
  %11668 = vmatpush.bf16.msra.mxu0 %v7309
  %11669 = vmatmul.bf16.gmra.mxu0 %v1633
  %v11670 = vpop.f32.mrf.mxu0
  %v11671 = vadd.f32 %v11658, %v11670
  %v11672 = vpop.f32.mrf.mxu0
  %11673 = vdwg.mxu0
  %11674 = vmatpush.bf16.msra.mxu0 %v7369
  %11675 = vmatpush.bf16.msra.mxu0 %v7365
  %11676 = vmatpush.bf16.msra.mxu0 %v7361
  %11677 = vmatpush.bf16.msra.mxu0 %v7357
  %11678 = vmatpush.bf16.msra.mxu0 %v7353
  %11679 = vmatpush.bf16.msra.mxu0 %v7349
  %11680 = vmatpush.bf16.msra.mxu0 %v7345
  %11681 = vmatpush.bf16.msra.mxu0 %v7341
  %11682 = vmatmul.bf16.gmra.mxu0 %v1638
  %v11683 = vpop.f32.mrf.mxu0
  %v11684 = vadd.f32 %v11671, %v11683
  %v11685 = vpop.f32.mrf.mxu0
  %11686 = vdwg.mxu0
  %11687 = vmatpush.bf16.msra.mxu0 %v7401
  %11688 = vmatpush.bf16.msra.mxu0 %v7397
  %11689 = vmatpush.bf16.msra.mxu0 %v7393
  %11690 = vmatpush.bf16.msra.mxu0 %v7389
  %11691 = vmatpush.bf16.msra.mxu0 %v7385
  %11692 = vmatpush.bf16.msra.mxu0 %v7381
  %11693 = vmatpush.bf16.msra.mxu0 %v7377
  %11694 = vmatpush.bf16.msra.mxu0 %v7373
  %11695 = vmatmul.bf16.gmra.mxu0 %v1639
  %v11696 = vpop.f32.mrf.mxu0
  %v11697 = vadd.f32 %v11684, %v11696
  %v11698 = vpop.f32.mrf.mxu0
  %11699 = vdwg.mxu0
  %11700 = vmatpush.bf16.msra.mxu0 %v7433
  %11701 = vmatpush.bf16.msra.mxu0 %v7429
  %11702 = vmatpush.bf16.msra.mxu0 %v7425
  %11703 = vmatpush.bf16.msra.mxu0 %v7421
  %11704 = vmatpush.bf16.msra.mxu0 %v7417
  %11705 = vmatpush.bf16.msra.mxu0 %v7413
  %11706 = vmatpush.bf16.msra.mxu0 %v7409
  %11707 = vmatpush.bf16.msra.mxu0 %v7405
  %11708 = vmatmul.bf16.gmra.mxu0 %v1640
  %v11709 = vpop.f32.mrf.mxu0
  %v11710 = vadd.f32 %v11697, %v11709
  %v11711 = vpop.f32.mrf.mxu0
  %11712 = vdwg.mxu0
  %11713 = vmatpush.bf16.msra.mxu0 %v7465
  %11714 = vmatpush.bf16.msra.mxu0 %v7461
  %11715 = vmatpush.bf16.msra.mxu0 %v7457
  %11716 = vmatpush.bf16.msra.mxu0 %v7453
  %11717 = vmatpush.bf16.msra.mxu0 %v7449
  %11718 = vmatpush.bf16.msra.mxu0 %v7445
  %11719 = vmatpush.bf16.msra.mxu0 %v7441
  %11720 = vmatpush.bf16.msra.mxu0 %v7437
  %11721 = vmatmul.bf16.gmra.mxu0 %v1641
  %v11722 = vpop.f32.mrf.mxu0
  %v11723 = vadd.f32 %v11710, %v11722
  %v11724 = vpop.f32.mrf.mxu0
  %11725 = vdwg.mxu0
  %11726 = vmatpush.bf16.msra.mxu0 %v7497
  %11727 = vmatpush.bf16.msra.mxu0 %v7493
  %11728 = vmatpush.bf16.msra.mxu0 %v7489
  %11729 = vmatpush.bf16.msra.mxu0 %v7485
  %11730 = vmatpush.bf16.msra.mxu0 %v7481
  %11731 = vmatpush.bf16.msra.mxu0 %v7477
  %11732 = vmatpush.bf16.msra.mxu0 %v7473
  %11733 = vmatpush.bf16.msra.mxu0 %v7469
  %11734 = vmatmul.bf16.gmra.mxu0 %v1642
  %v11735 = vpop.f32.mrf.mxu0
  %v11736 = vadd.f32 %v11723, %v11735
  %v11737 = vpop.f32.mrf.mxu0
  %11738 = vdwg.mxu0
  %11739 = vmatpush.bf16.msra.mxu0 %v7529
  %11740 = vmatpush.bf16.msra.mxu0 %v7525
  %11741 = vmatpush.bf16.msra.mxu0 %v7521
  %11742 = vmatpush.bf16.msra.mxu0 %v7517
  %11743 = vmatpush.bf16.msra.mxu0 %v7513
  %11744 = vmatpush.bf16.msra.mxu0 %v7509
  %11745 = vmatpush.bf16.msra.mxu0 %v7505
  %11746 = vmatpush.bf16.msra.mxu0 %v7501
  %11747 = vmatmul.bf16.gmra.mxu0 %v1643
  %v11748 = vpop.f32.mrf.mxu0
  %v11749 = vadd.f32 %v11736, %v11748
  %v11750 = vpop.f32.mrf.mxu0
  %11751 = vdwg.mxu0
  %11752 = vmatpush.bf16.msra.mxu0 %v7561
  %11753 = vmatpush.bf16.msra.mxu0 %v7557
  %11754 = vmatpush.bf16.msra.mxu0 %v7553
  %11755 = vmatpush.bf16.msra.mxu0 %v7549
  %11756 = vmatpush.bf16.msra.mxu0 %v7545
  %11757 = vmatpush.bf16.msra.mxu0 %v7541
  %11758 = vmatpush.bf16.msra.mxu0 %v7537
  %11759 = vmatpush.bf16.msra.mxu0 %v7533
  %11760 = vmatmul.bf16.gmra.mxu0 %v1644
  %v11761 = vpop.f32.mrf.mxu0
  %v11762 = vadd.f32 %v11749, %v11761
  %v11763 = vpop.f32.mrf.mxu0
  %11764 = vdwg.mxu0
  %11765 = vmatpush.bf16.msra.mxu0 %v7593
  %11766 = vmatpush.bf16.msra.mxu0 %v7589
  %11767 = vmatpush.bf16.msra.mxu0 %v7585
  %11768 = vmatpush.bf16.msra.mxu0 %v7581
  %11769 = vmatpush.bf16.msra.mxu0 %v7577
  %11770 = vmatpush.bf16.msra.mxu0 %v7573
  %11771 = vmatpush.bf16.msra.mxu0 %v7569
  %11772 = vmatpush.bf16.msra.mxu0 %v7565
  %11773 = vmatmul.bf16.gmra.mxu0 %v1645
  %v11774 = vpop.f32.mrf.mxu0
  %v11775 = vadd.f32 %v11762, %v11774
  %v11776 = vpop.f32.mrf.mxu0
  %11777 = vdwg.mxu0
  %11778 = vmatpush.bf16.msra.mxu0 %v7625
  %11779 = vmatpush.bf16.msra.mxu0 %v7621
  %11780 = vmatpush.bf16.msra.mxu0 %v7617
  %11781 = vmatpush.bf16.msra.mxu0 %v7613
  %11782 = vmatpush.bf16.msra.mxu0 %v7609
  %11783 = vmatpush.bf16.msra.mxu0 %v7605
  %11784 = vmatpush.bf16.msra.mxu0 %v7601
  %11785 = vmatpush.bf16.msra.mxu0 %v7597
  %11786 = vmatmul.bf16.gmra.mxu0 %v1650
  %v11787 = vpop.f32.mrf.mxu0
  %v11788 = vadd.f32 %v11775, %v11787
  %v11789 = vpop.f32.mrf.mxu0
  %11790 = vdwg.mxu0
  %11791 = vmatpush.bf16.msra.mxu0 %v7657
  %11792 = vmatpush.bf16.msra.mxu0 %v7653
  %11793 = vmatpush.bf16.msra.mxu0 %v7649
  %11794 = vmatpush.bf16.msra.mxu0 %v7645
  %11795 = vmatpush.bf16.msra.mxu0 %v7641
  %11796 = vmatpush.bf16.msra.mxu0 %v7637
  %11797 = vmatpush.bf16.msra.mxu0 %v7633
  %11798 = vmatpush.bf16.msra.mxu0 %v7629
  %11799 = vmatmul.bf16.gmra.mxu0 %v1651
  %v11800 = vpop.f32.mrf.mxu0
  %v11801 = vadd.f32 %v11788, %v11800
  %v11802 = vpop.f32.mrf.mxu0
  %11803 = vdwg.mxu0
  %11804 = vmatpush.bf16.msra.mxu0 %v7689
  %11805 = vmatpush.bf16.msra.mxu0 %v7685
  %11806 = vmatpush.bf16.msra.mxu0 %v7681
  %11807 = vmatpush.bf16.msra.mxu0 %v7677
  %11808 = vmatpush.bf16.msra.mxu0 %v7673
  %11809 = vmatpush.bf16.msra.mxu0 %v7669
  %11810 = vmatpush.bf16.msra.mxu0 %v7665
  %11811 = vmatpush.bf16.msra.mxu0 %v7661
  %11812 = vmatmul.bf16.gmra.mxu0 %v1652
  %v11813 = vpop.f32.mrf.mxu0
  %v11814 = vadd.f32 %v11801, %v11813
  %v11815 = vpop.f32.mrf.mxu0
  %11816 = vdwg.mxu0
  %11817 = vmatpush.bf16.msra.mxu0 %v7721
  %11818 = vmatpush.bf16.msra.mxu0 %v7717
  %11819 = vmatpush.bf16.msra.mxu0 %v7713
  %11820 = vmatpush.bf16.msra.mxu0 %v7709
  %11821 = vmatpush.bf16.msra.mxu0 %v7705
  %11822 = vmatpush.bf16.msra.mxu0 %v7701
  %11823 = vmatpush.bf16.msra.mxu0 %v7697
  %11824 = vmatpush.bf16.msra.mxu0 %v7693
  %11825 = vmatmul.bf16.gmra.mxu0 %v1653
  %v11826 = vpop.f32.mrf.mxu0
  %v11827 = vadd.f32 %v11814, %v11826
  %v11828 = vpop.f32.mrf.mxu0
  %11829 = vdwg.mxu0
  %11830 = vmatpush.bf16.msra.mxu0 %v7753
  %11831 = vmatpush.bf16.msra.mxu0 %v7749
  %11832 = vmatpush.bf16.msra.mxu0 %v7745
  %11833 = vmatpush.bf16.msra.mxu0 %v7741
  %11834 = vmatpush.bf16.msra.mxu0 %v7737
  %11835 = vmatpush.bf16.msra.mxu0 %v7733
  %11836 = vmatpush.bf16.msra.mxu0 %v7729
  %11837 = vmatpush.bf16.msra.mxu0 %v7725
  %11838 = vmatmul.bf16.gmra.mxu0 %v1654
  %v11839 = vpop.f32.mrf.mxu0
  %v11840 = vadd.f32 %v11827, %v11839
  %v11841 = vpop.f32.mrf.mxu0
  %11842 = vdwg.mxu0
  %11843 = vmatpush.bf16.msra.mxu0 %v7785
  %11844 = vmatpush.bf16.msra.mxu0 %v7781
  %11845 = vmatpush.bf16.msra.mxu0 %v7777
  %11846 = vmatpush.bf16.msra.mxu0 %v7773
  %11847 = vmatpush.bf16.msra.mxu0 %v7769
  %11848 = vmatpush.bf16.msra.mxu0 %v7765
  %11849 = vmatpush.bf16.msra.mxu0 %v7761
  %11850 = vmatpush.bf16.msra.mxu0 %v7757
  %11851 = vmatmul.bf16.gmra.mxu0 %v1655
  %v11852 = vpop.f32.mrf.mxu0
  %v11853 = vadd.f32 %v11840, %v11852
  %v11854 = vpop.f32.mrf.mxu0
  %11855 = vdwg.mxu0
  %11856 = vmatpush.bf16.msra.mxu0 %v7817
  %11857 = vmatpush.bf16.msra.mxu0 %v7813
  %11858 = vmatpush.bf16.msra.mxu0 %v7809
  %11859 = vmatpush.bf16.msra.mxu0 %v7805
  %11860 = vmatpush.bf16.msra.mxu0 %v7801
  %11861 = vmatpush.bf16.msra.mxu0 %v7797
  %11862 = vmatpush.bf16.msra.mxu0 %v7793
  %11863 = vmatpush.bf16.msra.mxu0 %v7789
  %11864 = vmatmul.bf16.gmra.mxu0 %v1656
  %v11865 = vpop.f32.mrf.mxu0
  %v11866 = vadd.f32 %v11853, %v11865
  %v11867 = vpop.f32.mrf.mxu0
  %11868 = vdwg.mxu0
  %11869 = vmatpush.bf16.msra.mxu0 %v7849
  %11870 = vmatpush.bf16.msra.mxu0 %v7845
  %11871 = vmatpush.bf16.msra.mxu0 %v7841
  %11872 = vmatpush.bf16.msra.mxu0 %v7837
  %11873 = vmatpush.bf16.msra.mxu0 %v7833
  %11874 = vmatpush.bf16.msra.mxu0 %v7829
  %11875 = vmatpush.bf16.msra.mxu0 %v7825
  %11876 = vmatpush.bf16.msra.mxu0 %v7821
  %11877 = vmatmul.bf16.gmra.mxu0 %v1657
  %v11878 = vpop.f32.mrf.mxu0
  %v11879 = vadd.f32 %v11866, %v11878
  %v11880 = vpop.f32.mrf.mxu0
  %11881 = vdwg.mxu0
  %v11886 = vrot.slane %v10631, 4
  %v11887 = vrot.slane %v11879, 4
  %vm11888 = vcmask 1043456
  %v11889 = vsel %vm11888, %v10007, %v11886
  %v11890 = vsel %vm11888, %v11255, %v11887
  %v11893 = vadd.f32 %v35, %v11889
  %v11894 = vadd.f32 %v36, %v11890
  %11895 = vst [vmem:[#allocation2] sm:$0xff] %v11893
  %vm11896 = vcmask 949252
  %vm11897 = vmor %vm11896, %vm11888
  %11898 = vst.msk [vmem:[#allocation2 + $0x8] sm:$0xff] %vm11897, %v11894
  // Predicated region
  $region34: #{net_forward.7} parent=0 // pred_check
    %p11899 = pneg %p26
  $region35: #{net_forward.7} parent=0 // pred_check_branch
    %11901 = sbr.rel (%p11899) target = $region37
  $region36: #{net_forward.7} parent=0 // pred_region
    %v11902 = vld [vmem:[#allocation2] sm:$0xff]
    %v11903 = vld [vmem:[#allocation2 + $0x8] sm:$0xff]
    %v11904 = vld [vmem:[%s2] sm:$0xf]
    %v11906 = vperm.slane %v11904, 0
    %v11907 = vperm.slane %v11904, 1
    %v11908 = vperm.slane %v11904, 2
    %v11909 = vperm.slane %v11904, 3
    %v11910 = vrot.slane %v11907, 4
    %v11911 = vrot.slane %v11909, 4
    %v11912 = vsel %vm11888, %v11906, %v11910
    %v11913 = vsel %vm11888, %v11908, %v11911
    %v11916 = vadd.f32 %v11902, %v11912
    %v11917 = vadd.f32 %v11903, %v11913
    %v11918 = vmax.f32 %v11916, 0.0
    %v11919 = vmax.f32 %v11917, 0.0
    %11922 = vst [vmem:[#allocation1] ss:$2 sm:$0xff] %v11918
    %s11923 = scalar_lea.vmem [#allocation1], 16
    %11924 = vst [vmem:[%s11923] ss:$2 sm:$0xff] %v11919
    %v11925 = vld.sshfl [vmem:[#allocation1] sm:$0xff pattern:$0x75316420]
    %v11926 = vld.sshfl [vmem:[#allocation1 + $0x8] sm:$0xff pattern:$0x75316420]
    %v11927 = vld.sshfl [vmem:[#allocation1 + $0x10] sm:$0xff pattern:$0x75316420]
    %v11928 = vld.sshfl [vmem:[#allocation1 + $0x18] sm:$0xff pattern:$0x75316420]
    %v11933 = vpack.c.bf16 %v11925, %v11925
    %v11934 = vpack.c.bf16 %v11926, %v11926
    %v11935 = vpack.c.bf16 %v11927, %v11927
    %v11936 = vpack.c.bf16 %v11928, %v11928
    %v11937 = vld [vmem:[%s3] sm:$0xff]
    %v11938 = vld [vmem:[%s3 + $0x8] sm:$0xff]
    %v11939 = vld [vmem:[%s3 + $0x10] sm:$0xff]
    %v11940 = vld [vmem:[%s3 + $0x18] sm:$0xff]
    %v11941 = vld [vmem:[%s3 + $0x20] sm:$0xff]
    %v11942 = vld [vmem:[%s3 + $0x28] sm:$0xff]
    %v11943 = vld [vmem:[%s3 + $0x30] sm:$0xff]
    %v11944 = vld [vmem:[%s3 + $0x38] sm:$0xff]
    %v11945 = vld [vmem:[%s3 + $0x40] sm:$0xff]
    %v11946 = vld [vmem:[%s3 + $0x48] sm:$0xff]
    %v11947 = vld [vmem:[%s3 + $0x50] sm:$0xff]
    %v11948 = vld [vmem:[%s3 + $0x58] sm:$0xff]
    %v11949 = vld [vmem:[%s3 + $0x60] sm:$0xff]
    %v11950 = vld [vmem:[%s3 + $0x68] sm:$0xff]
    %v11951 = vld [vmem:[%s3 + $0x70] sm:$0xff]
    %v11952 = vld [vmem:[%s3 + $0x78] sm:$0xff]
    %v11953 = vld [vmem:[%s3 + $0x80] sm:$0xff]
    %v11954 = vld [vmem:[%s3 + $0x88] sm:$0xff]
    %v11955 = vld [vmem:[%s3 + $0x90] sm:$0xff]
    %v11956 = vld [vmem:[%s3 + $0x98] sm:$0xff]
    %v11957 = vld [vmem:[%s3 + $0xa0] sm:$0xff]
    %v11958 = vld [vmem:[%s3 + $0xa8] sm:$0xff]
    %v11959 = vld [vmem:[%s3 + $0xb0] sm:$0xff]
    %v11960 = vld [vmem:[%s3 + $0xb8] sm:$0xff]
    %v11961 = vld [vmem:[%s3 + $0xc0] sm:$0xff]
    %v11962 = vld [vmem:[%s3 + $0xc8] sm:$0xff]
    %v11963 = vld [vmem:[%s3 + $0xd0] sm:$0xff]
    %v11964 = vld [vmem:[%s3 + $0xd8] sm:$0xff]
    %v11965 = vld [vmem:[%s3 + $0xe0] sm:$0xff]
    %v11966 = vld [vmem:[%s3 + $0xe8] sm:$0xff]
    %v11967 = vld [vmem:[%s3 + $0xf0] sm:$0xff]
    %v11968 = vld [vmem:[%s3 + $0xf8] sm:$0xff]
    %v11969 = vld [vmem:[%s3 + $0x100] sm:$0xff]
    %v11970 = vld [vmem:[%s3 + $0x108] sm:$0xff]
    %v11971 = vld [vmem:[%s3 + $0x110] sm:$0xff]
    %v11972 = vld [vmem:[%s3 + $0x118] sm:$0xff]
    %v11973 = vld [vmem:[%s3 + $0x120] sm:$0xff]
    %v11974 = vld [vmem:[%s3 + $0x128] sm:$0xff]
    %v11975 = vld [vmem:[%s3 + $0x130] sm:$0xff]
    %v11976 = vld [vmem:[%s3 + $0x138] sm:$0xff]
    %v11977 = vld [vmem:[%s3 + $0x140] sm:$0xff]
    %v11978 = vld [vmem:[%s3 + $0x148] sm:$0xff]
    %v11979 = vld [vmem:[%s3 + $0x150] sm:$0xff]
    %v11980 = vld [vmem:[%s3 + $0x158] sm:$0xff]
    %v11981 = vld [vmem:[%s3 + $0x160] sm:$0xff]
    %v11982 = vld [vmem:[%s3 + $0x168] sm:$0xff]
    %v11983 = vld [vmem:[%s3 + $0x170] sm:$0xff]
    %v11984 = vld [vmem:[%s3 + $0x178] sm:$0xff]
    %v11985 = vld [vmem:[%s3 + $0x180] sm:$0xff]
    %v11986 = vld [vmem:[%s3 + $0x188] sm:$0xff]
    %v11987 = vld [vmem:[%s3 + $0x190] sm:$0xff]
    %v11988 = vld [vmem:[%s3 + $0x198] sm:$0xff]
    %v11989 = vld [vmem:[%s3 + $0x1a0] sm:$0xff]
    %v11990 = vld [vmem:[%s3 + $0x1a8] sm:$0xff]
    %v11991 = vld [vmem:[%s3 + $0x1b0] sm:$0xff]
    %v11992 = vld [vmem:[%s3 + $0x1b8] sm:$0xff]
    %v11993 = vld [vmem:[%s3 + $0x1c0] sm:$0xff]
    %v11994 = vld [vmem:[%s3 + $0x1c8] sm:$0xff]
    %v11995 = vld [vmem:[%s3 + $0x1d0] sm:$0xff]
    %v11996 = vld [vmem:[%s3 + $0x1d8] sm:$0xff]
    %v11997 = vld [vmem:[%s3 + $0x1e0] sm:$0xff]
    %v11998 = vld [vmem:[%s3 + $0x1e8] sm:$0xff]
    %v11999 = vld [vmem:[%s3 + $0x1f0] sm:$0xff]
    %v12000 = vld [vmem:[%s3 + $0x1f8] sm:$0xff]
    %v12001 = vld [vmem:[%s3 + $0x200] sm:$0xff]
    %v12002 = vld [vmem:[%s3 + $0x208] sm:$0xff]
    %v12003 = vld [vmem:[%s3 + $0x210] sm:$0xff]
    %v12004 = vld [vmem:[%s3 + $0x218] sm:$0xff]
    %v12005 = vld [vmem:[%s3 + $0x220] sm:$0xff]
    %v12006 = vld [vmem:[%s3 + $0x228] sm:$0xff]
    %v12007 = vld [vmem:[%s3 + $0x230] sm:$0xff]
    %v12008 = vld [vmem:[%s3 + $0x238] sm:$0xff]
    %v12009 = vld [vmem:[%s3 + $0x240] sm:$0xff]
    %v12010 = vld [vmem:[%s3 + $0x248] sm:$0xff]
    %v12011 = vld [vmem:[%s3 + $0x250] sm:$0xff]
    %v12012 = vld [vmem:[%s3 + $0x258] sm:$0xff]
    %v12013 = vld [vmem:[%s3 + $0x260] sm:$0xff]
    %v12014 = vld [vmem:[%s3 + $0x268] sm:$0xff]
    %v12015 = vld [vmem:[%s3 + $0x270] sm:$0xff]
    %v12016 = vld [vmem:[%s3 + $0x278] sm:$0xff]
    %v12017 = vld [vmem:[%s3 + $0x280] sm:$0xff]
    %v12018 = vld [vmem:[%s3 + $0x288] sm:$0xff]
    %v12019 = vld [vmem:[%s3 + $0x290] sm:$0xff]
    %v12020 = vld [vmem:[%s3 + $0x298] sm:$0xff]
    %v12021 = vld [vmem:[%s3 + $0x2a0] sm:$0xff]
    %v12022 = vld [vmem:[%s3 + $0x2a8] sm:$0xff]
    %v12023 = vld [vmem:[%s3 + $0x2b0] sm:$0xff]
    %v12024 = vld [vmem:[%s3 + $0x2b8] sm:$0xff]
    %v12025 = vld [vmem:[%s3 + $0x2c0] sm:$0xff]
    %v12026 = vld [vmem:[%s3 + $0x2c8] sm:$0xff]
    %v12027 = vld [vmem:[%s3 + $0x2d0] sm:$0xff]
    %v12028 = vld [vmem:[%s3 + $0x2d8] sm:$0xff]
    %v12029 = vld [vmem:[%s3 + $0x2e0] sm:$0xff]
    %v12030 = vld [vmem:[%s3 + $0x2e8] sm:$0xff]
    %v12031 = vld [vmem:[%s3 + $0x2f0] sm:$0xff]
    %v12032 = vld [vmem:[%s3 + $0x2f8] sm:$0xff]
    %v12033 = vld [vmem:[%s3 + $0x300] sm:$0xff]
    %v12034 = vld [vmem:[%s3 + $0x308] sm:$0xff]
    %v12035 = vld [vmem:[%s3 + $0x310] sm:$0xff]
    %v12036 = vld [vmem:[%s3 + $0x318] sm:$0xff]
    %v12037 = vld [vmem:[%s3 + $0x320] sm:$0xff]
    %v12038 = vld [vmem:[%s3 + $0x328] sm:$0xff]
    %v12039 = vld [vmem:[%s3 + $0x330] sm:$0xff]
    %v12040 = vld [vmem:[%s3 + $0x338] sm:$0xff]
    %v12041 = vld [vmem:[%s3 + $0x340] sm:$0xff]
    %v12042 = vld [vmem:[%s3 + $0x348] sm:$0xff]
    %v12043 = vld [vmem:[%s3 + $0x350] sm:$0xff]
    %v12044 = vld [vmem:[%s3 + $0x358] sm:$0xff]
    %v12045 = vld [vmem:[%s3 + $0x360] sm:$0xff]
    %v12046 = vld [vmem:[%s3 + $0x368] sm:$0xff]
    %v12047 = vld [vmem:[%s3 + $0x370] sm:$0xff]
    %v12048 = vld [vmem:[%s3 + $0x378] sm:$0xff]
    %v12049 = vld [vmem:[%s3 + $0x380] sm:$0xff]
    %v12050 = vld [vmem:[%s3 + $0x388] sm:$0xff]
    %v12051 = vld [vmem:[%s3 + $0x390] sm:$0xff]
    %v12052 = vld [vmem:[%s3 + $0x398] sm:$0xff]
    %v12053 = vld [vmem:[%s3 + $0x3a0] sm:$0xff]
    %v12054 = vld [vmem:[%s3 + $0x3a8] sm:$0xff]
    %v12055 = vld [vmem:[%s3 + $0x3b0] sm:$0xff]
    %v12056 = vld [vmem:[%s3 + $0x3b8] sm:$0xff]
    %v12057 = vld [vmem:[%s3 + $0x3c0] sm:$0xff]
    %v12058 = vld [vmem:[%s3 + $0x3c8] sm:$0xff]
    %v12059 = vld [vmem:[%s3 + $0x3d0] sm:$0xff]
    %v12060 = vld [vmem:[%s3 + $0x3d8] sm:$0xff]
    %v12061 = vld [vmem:[%s3 + $0x3e0] sm:$0x33]
    %v12062 = vld [vmem:[%s3 + $0x3e8] sm:$0x33]
    %v12063 = vld [vmem:[%s4] sm:$0xf]
    %v12065 = vperm.slane %v12063, 0
    %v12066 = vperm.slane %v12063, 1
    %v12067 = vperm.slane %v12063, 2
    %v12068 = vperm.slane %v12063, 3
    %v12199 = vunpack.c.l.b16 %v11937
    %v12200 = vunpack.c.h.b16 %v11937
    %v12201 = vunpack.c.l.b16 %v11938
    %v12202 = vunpack.c.h.b16 %v11938
    %v12203 = vunpack.c.l.b16 %v11939
    %v12204 = vunpack.c.h.b16 %v11939
    %v12205 = vunpack.c.l.b16 %v11940
    %v12206 = vunpack.c.h.b16 %v11940
    %v12207 = vunpack.c.l.b16 %v11941
    %v12208 = vunpack.c.h.b16 %v11941
    %v12209 = vunpack.c.l.b16 %v11942
    %v12210 = vunpack.c.h.b16 %v11942
    %v12211 = vunpack.c.l.b16 %v11943
    %v12212 = vunpack.c.h.b16 %v11943
    %v12213 = vunpack.c.l.b16 %v11944
    %v12214 = vunpack.c.h.b16 %v11944
    %v12215 = vunpack.c.l.b16 %v11945
    %v12216 = vunpack.c.h.b16 %v11945
    %v12217 = vunpack.c.l.b16 %v11946
    %v12218 = vunpack.c.h.b16 %v11946
    %v12219 = vunpack.c.l.b16 %v11947
    %v12220 = vunpack.c.h.b16 %v11947
    %v12221 = vunpack.c.l.b16 %v11948
    %v12222 = vunpack.c.h.b16 %v11948
    %v12223 = vunpack.c.l.b16 %v11949
    %v12224 = vunpack.c.h.b16 %v11949
    %v12225 = vunpack.c.l.b16 %v11950
    %v12226 = vunpack.c.h.b16 %v11950
    %v12227 = vunpack.c.l.b16 %v11951
    %v12228 = vunpack.c.h.b16 %v11951
    %v12229 = vunpack.c.l.b16 %v11952
    %v12230 = vunpack.c.h.b16 %v11952
    %v12231 = vunpack.c.l.b16 %v11953
    %v12232 = vunpack.c.h.b16 %v11953
    %v12233 = vunpack.c.l.b16 %v11954
    %v12234 = vunpack.c.h.b16 %v11954
    %v12235 = vunpack.c.l.b16 %v11955
    %v12236 = vunpack.c.h.b16 %v11955
    %v12237 = vunpack.c.l.b16 %v11956
    %v12238 = vunpack.c.h.b16 %v11956
    %v12239 = vunpack.c.l.b16 %v11957
    %v12240 = vunpack.c.h.b16 %v11957
    %v12241 = vunpack.c.l.b16 %v11958
    %v12242 = vunpack.c.h.b16 %v11958
    %v12243 = vunpack.c.l.b16 %v11959
    %v12244 = vunpack.c.h.b16 %v11959
    %v12245 = vunpack.c.l.b16 %v11960
    %v12246 = vunpack.c.h.b16 %v11960
    %v12247 = vunpack.c.l.b16 %v11961
    %v12248 = vunpack.c.h.b16 %v11961
    %v12249 = vunpack.c.l.b16 %v11962
    %v12250 = vunpack.c.h.b16 %v11962
    %v12251 = vunpack.c.l.b16 %v11963
    %v12252 = vunpack.c.h.b16 %v11963
    %v12253 = vunpack.c.l.b16 %v11964
    %v12254 = vunpack.c.h.b16 %v11964
    %v12255 = vunpack.c.l.b16 %v11965
    %v12256 = vunpack.c.h.b16 %v11965
    %v12257 = vunpack.c.l.b16 %v11966
    %v12258 = vunpack.c.h.b16 %v11966
    %v12259 = vunpack.c.l.b16 %v11967
    %v12260 = vunpack.c.h.b16 %v11967
    %v12261 = vunpack.c.l.b16 %v11968
    %v12262 = vunpack.c.h.b16 %v11968
    %v12263 = vunpack.c.l.b16 %v11969
    %v12264 = vunpack.c.h.b16 %v11969
    %v12265 = vunpack.c.l.b16 %v11970
    %v12266 = vunpack.c.h.b16 %v11970
    %v12267 = vunpack.c.l.b16 %v11971
    %v12268 = vunpack.c.h.b16 %v11971
    %v12269 = vunpack.c.l.b16 %v11972
    %v12270 = vunpack.c.h.b16 %v11972
    %v12271 = vunpack.c.l.b16 %v11973
    %v12272 = vunpack.c.h.b16 %v11973
    %v12273 = vunpack.c.l.b16 %v11974
    %v12274 = vunpack.c.h.b16 %v11974
    %v12275 = vunpack.c.l.b16 %v11975
    %v12276 = vunpack.c.h.b16 %v11975
    %v12277 = vunpack.c.l.b16 %v11976
    %v12278 = vunpack.c.h.b16 %v11976
    %v12279 = vunpack.c.l.b16 %v11977
    %v12280 = vunpack.c.h.b16 %v11977
    %v12281 = vunpack.c.l.b16 %v11978
    %v12282 = vunpack.c.h.b16 %v11978
    %v12283 = vunpack.c.l.b16 %v11979
    %v12284 = vunpack.c.h.b16 %v11979
    %v12285 = vunpack.c.l.b16 %v11980
    %v12286 = vunpack.c.h.b16 %v11980
    %v12287 = vunpack.c.l.b16 %v11981
    %v12288 = vunpack.c.h.b16 %v11981
    %v12289 = vunpack.c.l.b16 %v11982
    %v12290 = vunpack.c.h.b16 %v11982
    %v12291 = vunpack.c.l.b16 %v11983
    %v12292 = vunpack.c.h.b16 %v11983
    %v12293 = vunpack.c.l.b16 %v11984
    %v12294 = vunpack.c.h.b16 %v11984
    %v12295 = vunpack.c.l.b16 %v11985
    %v12296 = vunpack.c.h.b16 %v11985
    %v12297 = vunpack.c.l.b16 %v11986
    %v12298 = vunpack.c.h.b16 %v11986
    %v12299 = vunpack.c.l.b16 %v11987
    %v12300 = vunpack.c.h.b16 %v11987
    %v12301 = vunpack.c.l.b16 %v11988
    %v12302 = vunpack.c.h.b16 %v11988
    %v12303 = vunpack.c.l.b16 %v11989
    %v12304 = vunpack.c.h.b16 %v11989
    %v12305 = vunpack.c.l.b16 %v11990
    %v12306 = vunpack.c.h.b16 %v11990
    %v12307 = vunpack.c.l.b16 %v11991
    %v12308 = vunpack.c.h.b16 %v11991
    %v12309 = vunpack.c.l.b16 %v11992
    %v12310 = vunpack.c.h.b16 %v11992
    %v12311 = vunpack.c.l.b16 %v11993
    %v12312 = vunpack.c.h.b16 %v11993
    %v12313 = vunpack.c.l.b16 %v11994
    %v12314 = vunpack.c.h.b16 %v11994
    %v12315 = vunpack.c.l.b16 %v11995
    %v12316 = vunpack.c.h.b16 %v11995
    %v12317 = vunpack.c.l.b16 %v11996
    %v12318 = vunpack.c.h.b16 %v11996
    %v12319 = vunpack.c.l.b16 %v11997
    %v12320 = vunpack.c.h.b16 %v11997
    %v12321 = vunpack.c.l.b16 %v11998
    %v12322 = vunpack.c.h.b16 %v11998
    %v12323 = vunpack.c.l.b16 %v11999
    %v12324 = vunpack.c.h.b16 %v11999
    %v12325 = vunpack.c.l.b16 %v12000
    %v12326 = vunpack.c.h.b16 %v12000
    %v12327 = vunpack.c.l.b16 %v12001
    %v12328 = vunpack.c.h.b16 %v12001
    %v12329 = vunpack.c.l.b16 %v12002
    %v12330 = vunpack.c.h.b16 %v12002
    %v12331 = vunpack.c.l.b16 %v12003
    %v12332 = vunpack.c.h.b16 %v12003
    %v12333 = vunpack.c.l.b16 %v12004
    %v12334 = vunpack.c.h.b16 %v12004
    %v12335 = vunpack.c.l.b16 %v12005
    %v12336 = vunpack.c.h.b16 %v12005
    %v12337 = vunpack.c.l.b16 %v12006
    %v12338 = vunpack.c.h.b16 %v12006
    %v12339 = vunpack.c.l.b16 %v12007
    %v12340 = vunpack.c.h.b16 %v12007
    %v12341 = vunpack.c.l.b16 %v12008
    %v12342 = vunpack.c.h.b16 %v12008
    %v12343 = vunpack.c.l.b16 %v12009
    %v12344 = vunpack.c.h.b16 %v12009
    %v12345 = vunpack.c.l.b16 %v12010
    %v12346 = vunpack.c.h.b16 %v12010
    %v12347 = vunpack.c.l.b16 %v12011
    %v12348 = vunpack.c.h.b16 %v12011
    %v12349 = vunpack.c.l.b16 %v12012
    %v12350 = vunpack.c.h.b16 %v12012
    %v12351 = vunpack.c.l.b16 %v12013
    %v12352 = vunpack.c.h.b16 %v12013
    %v12353 = vunpack.c.l.b16 %v12014
    %v12354 = vunpack.c.h.b16 %v12014
    %v12355 = vunpack.c.l.b16 %v12015
    %v12356 = vunpack.c.h.b16 %v12015
    %v12357 = vunpack.c.l.b16 %v12016
    %v12358 = vunpack.c.h.b16 %v12016
    %v12359 = vunpack.c.l.b16 %v12017
    %v12360 = vunpack.c.h.b16 %v12017
    %v12361 = vunpack.c.l.b16 %v12018
    %v12362 = vunpack.c.h.b16 %v12018
    %v12363 = vunpack.c.l.b16 %v12019
    %v12364 = vunpack.c.h.b16 %v12019
    %v12365 = vunpack.c.l.b16 %v12020
    %v12366 = vunpack.c.h.b16 %v12020
    %v12367 = vunpack.c.l.b16 %v12021
    %v12368 = vunpack.c.h.b16 %v12021
    %v12369 = vunpack.c.l.b16 %v12022
    %v12370 = vunpack.c.h.b16 %v12022
    %v12371 = vunpack.c.l.b16 %v12023
    %v12372 = vunpack.c.h.b16 %v12023
    %v12373 = vunpack.c.l.b16 %v12024
    %v12374 = vunpack.c.h.b16 %v12024
    %v12375 = vunpack.c.l.b16 %v12025
    %v12376 = vunpack.c.h.b16 %v12025
    %v12377 = vunpack.c.l.b16 %v12026
    %v12378 = vunpack.c.h.b16 %v12026
    %v12379 = vunpack.c.l.b16 %v12027
    %v12380 = vunpack.c.h.b16 %v12027
    %v12381 = vunpack.c.l.b16 %v12028
    %v12382 = vunpack.c.h.b16 %v12028
    %v12383 = vunpack.c.l.b16 %v12029
    %v12384 = vunpack.c.h.b16 %v12029
    %v12385 = vunpack.c.l.b16 %v12030
    %v12386 = vunpack.c.h.b16 %v12030
    %v12387 = vunpack.c.l.b16 %v12031
    %v12388 = vunpack.c.h.b16 %v12031
    %v12389 = vunpack.c.l.b16 %v12032
    %v12390 = vunpack.c.h.b16 %v12032
    %v12391 = vunpack.c.l.b16 %v12033
    %v12392 = vunpack.c.h.b16 %v12033
    %v12393 = vunpack.c.l.b16 %v12034
    %v12394 = vunpack.c.h.b16 %v12034
    %v12395 = vunpack.c.l.b16 %v12035
    %v12396 = vunpack.c.h.b16 %v12035
    %v12397 = vunpack.c.l.b16 %v12036
    %v12398 = vunpack.c.h.b16 %v12036
    %v12399 = vunpack.c.l.b16 %v12037
    %v12400 = vunpack.c.h.b16 %v12037
    %v12401 = vunpack.c.l.b16 %v12038
    %v12402 = vunpack.c.h.b16 %v12038
    %v12403 = vunpack.c.l.b16 %v12039
    %v12404 = vunpack.c.h.b16 %v12039
    %v12405 = vunpack.c.l.b16 %v12040
    %v12406 = vunpack.c.h.b16 %v12040
    %v12407 = vunpack.c.l.b16 %v12041
    %v12408 = vunpack.c.h.b16 %v12041
    %v12409 = vunpack.c.l.b16 %v12042
    %v12410 = vunpack.c.h.b16 %v12042
    %v12411 = vunpack.c.l.b16 %v12043
    %v12412 = vunpack.c.h.b16 %v12043
    %v12413 = vunpack.c.l.b16 %v12044
    %v12414 = vunpack.c.h.b16 %v12044
    %v12415 = vunpack.c.l.b16 %v12045
    %v12416 = vunpack.c.h.b16 %v12045
    %v12417 = vunpack.c.l.b16 %v12046
    %v12418 = vunpack.c.h.b16 %v12046
    %v12419 = vunpack.c.l.b16 %v12047
    %v12420 = vunpack.c.h.b16 %v12047
    %v12421 = vunpack.c.l.b16 %v12048
    %v12422 = vunpack.c.h.b16 %v12048
    %v12423 = vunpack.c.l.b16 %v12049
    %v12424 = vunpack.c.h.b16 %v12049
    %v12425 = vunpack.c.l.b16 %v12050
    %v12426 = vunpack.c.h.b16 %v12050
    %v12427 = vunpack.c.l.b16 %v12051
    %v12428 = vunpack.c.h.b16 %v12051
    %v12429 = vunpack.c.l.b16 %v12052
    %v12430 = vunpack.c.h.b16 %v12052
    %v12431 = vunpack.c.l.b16 %v12053
    %v12432 = vunpack.c.h.b16 %v12053
    %v12433 = vunpack.c.l.b16 %v12054
    %v12434 = vunpack.c.h.b16 %v12054
    %v12435 = vunpack.c.l.b16 %v12055
    %v12436 = vunpack.c.h.b16 %v12055
    %v12437 = vunpack.c.l.b16 %v12056
    %v12438 = vunpack.c.h.b16 %v12056
    %v12439 = vunpack.c.l.b16 %v12057
    %v12440 = vunpack.c.h.b16 %v12057
    %v12441 = vunpack.c.l.b16 %v12058
    %v12442 = vunpack.c.h.b16 %v12058
    %v12443 = vunpack.c.l.b16 %v12059
    %v12444 = vunpack.c.h.b16 %v12059
    %v12445 = vunpack.c.l.b16 %v12060
    %v12446 = vunpack.c.h.b16 %v12060
    %v12447 = vunpack.c.l.b16 %v12061
    %v12448 = vunpack.c.h.b16 %v12061
    %v12449 = vunpack.c.l.b16 %v12062
    %v12450 = vunpack.c.h.b16 %v12062
    %v12451 = vpack.c.b16 %v12203, %v12199
    %v12452 = vpack.c.b16 %v12204, %v12200
    %v12453 = vpack.c.b16 %v12205, %v12201
    %v12454 = vpack.c.b16 %v12206, %v12202
    %v12455 = vpack.c.b16 %v12211, %v12207
    %v12456 = vpack.c.b16 %v12212, %v12208
    %v12457 = vpack.c.b16 %v12213, %v12209
    %v12458 = vpack.c.b16 %v12214, %v12210
    %v12459 = vpack.c.b16 %v12219, %v12215
    %v12460 = vpack.c.b16 %v12220, %v12216
    %v12461 = vpack.c.b16 %v12221, %v12217
    %v12462 = vpack.c.b16 %v12222, %v12218
    %v12463 = vpack.c.b16 %v12227, %v12223
    %v12464 = vpack.c.b16 %v12228, %v12224
    %v12465 = vpack.c.b16 %v12229, %v12225
    %v12466 = vpack.c.b16 %v12230, %v12226
    %v12467 = vpack.c.b16 %v12235, %v12231
    %v12468 = vpack.c.b16 %v12236, %v12232
    %v12469 = vpack.c.b16 %v12237, %v12233
    %v12470 = vpack.c.b16 %v12238, %v12234
    %v12471 = vpack.c.b16 %v12243, %v12239
    %v12472 = vpack.c.b16 %v12244, %v12240
    %v12473 = vpack.c.b16 %v12245, %v12241
    %v12474 = vpack.c.b16 %v12246, %v12242
    %v12475 = vpack.c.b16 %v12251, %v12247
    %v12476 = vpack.c.b16 %v12252, %v12248
    %v12477 = vpack.c.b16 %v12253, %v12249
    %v12478 = vpack.c.b16 %v12254, %v12250
    %v12479 = vpack.c.b16 %v12259, %v12255
    %v12480 = vpack.c.b16 %v12260, %v12256
    %v12481 = vpack.c.b16 %v12261, %v12257
    %v12482 = vpack.c.b16 %v12262, %v12258
    %v12483 = vpack.c.b16 %v12267, %v12263
    %v12484 = vpack.c.b16 %v12268, %v12264
    %v12485 = vpack.c.b16 %v12269, %v12265
    %v12486 = vpack.c.b16 %v12270, %v12266
    %v12487 = vpack.c.b16 %v12275, %v12271
    %v12488 = vpack.c.b16 %v12276, %v12272
    %v12489 = vpack.c.b16 %v12277, %v12273
    %v12490 = vpack.c.b16 %v12278, %v12274
    %v12491 = vpack.c.b16 %v12283, %v12279
    %v12492 = vpack.c.b16 %v12284, %v12280
    %v12493 = vpack.c.b16 %v12285, %v12281
    %v12494 = vpack.c.b16 %v12286, %v12282
    %v12495 = vpack.c.b16 %v12291, %v12287
    %v12496 = vpack.c.b16 %v12292, %v12288
    %v12497 = vpack.c.b16 %v12293, %v12289
    %v12498 = vpack.c.b16 %v12294, %v12290
    %v12499 = vpack.c.b16 %v12299, %v12295
    %v12500 = vpack.c.b16 %v12300, %v12296
    %v12501 = vpack.c.b16 %v12301, %v12297
    %v12502 = vpack.c.b16 %v12302, %v12298
    %v12503 = vpack.c.b16 %v12307, %v12303
    %v12504 = vpack.c.b16 %v12308, %v12304
    %v12505 = vpack.c.b16 %v12309, %v12305
    %v12506 = vpack.c.b16 %v12310, %v12306
    %v12507 = vpack.c.b16 %v12315, %v12311
    %v12508 = vpack.c.b16 %v12316, %v12312
    %v12509 = vpack.c.b16 %v12317, %v12313
    %v12510 = vpack.c.b16 %v12318, %v12314
    %v12511 = vpack.c.b16 %v12323, %v12319
    %v12512 = vpack.c.b16 %v12324, %v12320
    %v12513 = vpack.c.b16 %v12325, %v12321
    %v12514 = vpack.c.b16 %v12326, %v12322
    %v12515 = vpack.c.b16 %v12331, %v12327
    %v12516 = vpack.c.b16 %v12332, %v12328
    %v12517 = vpack.c.b16 %v12333, %v12329
    %v12518 = vpack.c.b16 %v12334, %v12330
    %v12519 = vpack.c.b16 %v12339, %v12335
    %v12520 = vpack.c.b16 %v12340, %v12336
    %v12521 = vpack.c.b16 %v12341, %v12337
    %v12522 = vpack.c.b16 %v12342, %v12338
    %v12523 = vpack.c.b16 %v12347, %v12343
    %v12524 = vpack.c.b16 %v12348, %v12344
    %v12525 = vpack.c.b16 %v12349, %v12345
    %v12526 = vpack.c.b16 %v12350, %v12346
    %v12527 = vpack.c.b16 %v12355, %v12351
    %v12528 = vpack.c.b16 %v12356, %v12352
    %v12529 = vpack.c.b16 %v12357, %v12353
    %v12530 = vpack.c.b16 %v12358, %v12354
    %v12531 = vpack.c.b16 %v12363, %v12359
    %v12532 = vpack.c.b16 %v12364, %v12360
    %v12533 = vpack.c.b16 %v12365, %v12361
    %v12534 = vpack.c.b16 %v12366, %v12362
    %v12535 = vpack.c.b16 %v12371, %v12367
    %v12536 = vpack.c.b16 %v12372, %v12368
    %v12537 = vpack.c.b16 %v12373, %v12369
    %v12538 = vpack.c.b16 %v12374, %v12370
    %v12539 = vpack.c.b16 %v12379, %v12375
    %v12540 = vpack.c.b16 %v12380, %v12376
    %v12541 = vpack.c.b16 %v12381, %v12377
    %v12542 = vpack.c.b16 %v12382, %v12378
    %v12543 = vpack.c.b16 %v12387, %v12383
    %v12544 = vpack.c.b16 %v12388, %v12384
    %v12545 = vpack.c.b16 %v12389, %v12385
    %v12546 = vpack.c.b16 %v12390, %v12386
    %v12547 = vpack.c.b16 %v12395, %v12391
    %v12548 = vpack.c.b16 %v12396, %v12392
    %v12549 = vpack.c.b16 %v12397, %v12393
    %v12550 = vpack.c.b16 %v12398, %v12394
    %v12551 = vpack.c.b16 %v12403, %v12399
    %v12552 = vpack.c.b16 %v12404, %v12400
    %v12553 = vpack.c.b16 %v12405, %v12401
    %v12554 = vpack.c.b16 %v12406, %v12402
    %v12555 = vpack.c.b16 %v12411, %v12407
    %v12556 = vpack.c.b16 %v12412, %v12408
    %v12557 = vpack.c.b16 %v12413, %v12409
    %v12558 = vpack.c.b16 %v12414, %v12410
    %v12559 = vpack.c.b16 %v12419, %v12415
    %v12560 = vpack.c.b16 %v12420, %v12416
    %v12561 = vpack.c.b16 %v12421, %v12417
    %v12562 = vpack.c.b16 %v12422, %v12418
    %v12563 = vpack.c.b16 %v12427, %v12423
    %v12564 = vpack.c.b16 %v12428, %v12424
    %v12565 = vpack.c.b16 %v12429, %v12425
    %v12566 = vpack.c.b16 %v12430, %v12426
    %v12567 = vpack.c.b16 %v12435, %v12431
    %v12568 = vpack.c.b16 %v12436, %v12432
    %v12569 = vpack.c.b16 %v12437, %v12433
    %v12570 = vpack.c.b16 %v12438, %v12434
    %v12571 = vpack.c.b16 %v12443, %v12439
    %v12572 = vpack.c.b16 %v12444, %v12440
    %v12573 = vpack.c.b16 %v12445, %v12441
    %v12574 = vpack.c.b16 %v12446, %v12442
    %v12575 = vpack.c.b16 %v12447, %v12447
    %v12576 = vpack.c.b16 %v12448, %v12448
    %v12577 = vpack.c.b16 %v12449, %v12449
    %v12578 = vpack.c.b16 %v12450, %v12450
    %vm12703 = vcmask 949248
    %v12705 = vsel %vm12703, %v11936, 0
    %vm12707 = vcmask 1041408
    %v12709 = vsel %vm12707, %v12575, 0
    %v12712 = vsel %vm12707, %v12576, 0
    %v12715 = vsel %vm12707, %v12577, 0
    %v12718 = vsel %vm12707, %v12578, 0
    %12720 = vmatpush.bf16.msra.mxu0 %v12479
    %12721 = vmatpush.bf16.msra.mxu0 %v12475
    %12722 = vmatpush.bf16.msra.mxu0 %v12471
    %12723 = vmatpush.bf16.msra.mxu0 %v12467
    %12724 = vmatpush.bf16.msra.mxu0 %v12463
    %12725 = vmatpush.bf16.msra.mxu0 %v12459
    %12726 = vmatpush.bf16.msra.mxu0 %v12455
    %12727 = vmatpush.bf16.msra.mxu0 %v12451
    %12728 = vmatmul.bf16.gmra.mxu0 %v11933
    %v12729 = vpop.f32.mrf.mxu0
    %v12730 = vadd.f32 %v12065, %v12729
    %v12731 = vpop.f32.mrf.mxu0
    %12732 = vdwg.mxu0
    %12733 = vmatpush.bf16.msra.mxu0 %v12511
    %12734 = vmatpush.bf16.msra.mxu0 %v12507
    %12735 = vmatpush.bf16.msra.mxu0 %v12503
    %12736 = vmatpush.bf16.msra.mxu0 %v12499
    %12737 = vmatpush.bf16.msra.mxu0 %v12495
    %12738 = vmatpush.bf16.msra.mxu0 %v12491
    %12739 = vmatpush.bf16.msra.mxu0 %v12487
    %12740 = vmatpush.bf16.msra.mxu0 %v12483
    %12741 = vmatmul.bf16.gmra.mxu0 %v11934
    %v12742 = vpop.f32.mrf.mxu0
    %v12743 = vadd.f32 %v12730, %v12742
    %v12744 = vpop.f32.mrf.mxu0
    %12745 = vdwg.mxu0
    %12746 = vmatpush.bf16.msra.mxu0 %v12543
    %12747 = vmatpush.bf16.msra.mxu0 %v12539
    %12748 = vmatpush.bf16.msra.mxu0 %v12535
    %12749 = vmatpush.bf16.msra.mxu0 %v12531
    %12750 = vmatpush.bf16.msra.mxu0 %v12527
    %12751 = vmatpush.bf16.msra.mxu0 %v12523
    %12752 = vmatpush.bf16.msra.mxu0 %v12519
    %12753 = vmatpush.bf16.msra.mxu0 %v12515
    %12754 = vmatmul.bf16.gmra.mxu0 %v11935
    %v12755 = vpop.f32.mrf.mxu0
    %v12756 = vadd.f32 %v12743, %v12755
    %v12757 = vpop.f32.mrf.mxu0
    %12758 = vdwg.mxu0
    %12759 = vmatpush.bf16.msra.mxu0 %v12709
    %12760 = vmatpush.bf16.msra.mxu0 %v12571
    %12761 = vmatpush.bf16.msra.mxu0 %v12567
    %12762 = vmatpush.bf16.msra.mxu0 %v12563
    %12763 = vmatpush.bf16.msra.mxu0 %v12559
    %12764 = vmatpush.bf16.msra.mxu0 %v12555
    %12765 = vmatpush.bf16.msra.mxu0 %v12551
    %12766 = vmatpush.bf16.msra.mxu0 %v12547
    %12767 = vmatmul.bf16.gmra.mxu0 %v12705
    %v12768 = vpop.f32.mrf.mxu0
    %v12769 = vadd.f32 %v12756, %v12768
    %v12770 = vpop.f32.mrf.mxu0
    %12771 = vdwg.mxu0
    %12772 = vmatpush.bf16.msra.mxu0 %v12480
    %12773 = vmatpush.bf16.msra.mxu0 %v12476
    %12774 = vmatpush.bf16.msra.mxu0 %v12472
    %12775 = vmatpush.bf16.msra.mxu0 %v12468
    %12776 = vmatpush.bf16.msra.mxu0 %v12464
    %12777 = vmatpush.bf16.msra.mxu0 %v12460
    %12778 = vmatpush.bf16.msra.mxu0 %v12456
    %12779 = vmatpush.bf16.msra.mxu0 %v12452
    %12780 = vmatmul.bf16.gmra.mxu0 %v11933
    %v12781 = vpop.f32.mrf.mxu0
    %v12782 = vadd.f32 %v12066, %v12781
    %v12783 = vpop.f32.mrf.mxu0
    %12784 = vdwg.mxu0
    %12785 = vmatpush.bf16.msra.mxu0 %v12512
    %12786 = vmatpush.bf16.msra.mxu0 %v12508
    %12787 = vmatpush.bf16.msra.mxu0 %v12504
    %12788 = vmatpush.bf16.msra.mxu0 %v12500
    %12789 = vmatpush.bf16.msra.mxu0 %v12496
    %12790 = vmatpush.bf16.msra.mxu0 %v12492
    %12791 = vmatpush.bf16.msra.mxu0 %v12488
    %12792 = vmatpush.bf16.msra.mxu0 %v12484
    %12793 = vmatmul.bf16.gmra.mxu0 %v11934
    %v12794 = vpop.f32.mrf.mxu0
    %v12795 = vadd.f32 %v12782, %v12794
    %v12796 = vpop.f32.mrf.mxu0
    %12797 = vdwg.mxu0
    %12798 = vmatpush.bf16.msra.mxu0 %v12544
    %12799 = vmatpush.bf16.msra.mxu0 %v12540
    %12800 = vmatpush.bf16.msra.mxu0 %v12536
    %12801 = vmatpush.bf16.msra.mxu0 %v12532
    %12802 = vmatpush.bf16.msra.mxu0 %v12528
    %12803 = vmatpush.bf16.msra.mxu0 %v12524
    %12804 = vmatpush.bf16.msra.mxu0 %v12520
    %12805 = vmatpush.bf16.msra.mxu0 %v12516
    %12806 = vmatmul.bf16.gmra.mxu0 %v11935
    %v12807 = vpop.f32.mrf.mxu0
    %v12808 = vadd.f32 %v12795, %v12807
    %v12809 = vpop.f32.mrf.mxu0
    %12810 = vdwg.mxu0
    %12811 = vmatpush.bf16.msra.mxu0 %v12712
    %12812 = vmatpush.bf16.msra.mxu0 %v12572
    %12813 = vmatpush.bf16.msra.mxu0 %v12568
    %12814 = vmatpush.bf16.msra.mxu0 %v12564
    %12815 = vmatpush.bf16.msra.mxu0 %v12560
    %12816 = vmatpush.bf16.msra.mxu0 %v12556
    %12817 = vmatpush.bf16.msra.mxu0 %v12552
    %12818 = vmatpush.bf16.msra.mxu0 %v12548
    %12819 = vmatmul.bf16.gmra.mxu0 %v12705
    %v12820 = vpop.f32.mrf.mxu0
    %v12821 = vadd.f32 %v12808, %v12820
    %v12822 = vpop.f32.mrf.mxu0
    %12823 = vdwg.mxu0
    %12824 = vmatpush.bf16.msra.mxu0 %v12481
    %12825 = vmatpush.bf16.msra.mxu0 %v12477
    %12826 = vmatpush.bf16.msra.mxu0 %v12473
    %12827 = vmatpush.bf16.msra.mxu0 %v12469
    %12828 = vmatpush.bf16.msra.mxu0 %v12465
    %12829 = vmatpush.bf16.msra.mxu0 %v12461
    %12830 = vmatpush.bf16.msra.mxu0 %v12457
    %12831 = vmatpush.bf16.msra.mxu0 %v12453
    %12832 = vmatmul.bf16.gmra.mxu0 %v11933
    %v12833 = vpop.f32.mrf.mxu0
    %v12834 = vadd.f32 %v12067, %v12833
    %v12835 = vpop.f32.mrf.mxu0
    %12836 = vdwg.mxu0
    %12837 = vmatpush.bf16.msra.mxu0 %v12513
    %12838 = vmatpush.bf16.msra.mxu0 %v12509
    %12839 = vmatpush.bf16.msra.mxu0 %v12505
    %12840 = vmatpush.bf16.msra.mxu0 %v12501
    %12841 = vmatpush.bf16.msra.mxu0 %v12497
    %12842 = vmatpush.bf16.msra.mxu0 %v12493
    %12843 = vmatpush.bf16.msra.mxu0 %v12489
    %12844 = vmatpush.bf16.msra.mxu0 %v12485
    %12845 = vmatmul.bf16.gmra.mxu0 %v11934
    %v12846 = vpop.f32.mrf.mxu0
    %v12847 = vadd.f32 %v12834, %v12846
    %v12848 = vpop.f32.mrf.mxu0
    %12849 = vdwg.mxu0
    %12850 = vmatpush.bf16.msra.mxu0 %v12545
    %12851 = vmatpush.bf16.msra.mxu0 %v12541
    %12852 = vmatpush.bf16.msra.mxu0 %v12537
    %12853 = vmatpush.bf16.msra.mxu0 %v12533
    %12854 = vmatpush.bf16.msra.mxu0 %v12529
    %12855 = vmatpush.bf16.msra.mxu0 %v12525
    %12856 = vmatpush.bf16.msra.mxu0 %v12521
    %12857 = vmatpush.bf16.msra.mxu0 %v12517
    %12858 = vmatmul.bf16.gmra.mxu0 %v11935
    %v12859 = vpop.f32.mrf.mxu0
    %v12860 = vadd.f32 %v12847, %v12859
    %v12861 = vpop.f32.mrf.mxu0
    %12862 = vdwg.mxu0
    %12863 = vmatpush.bf16.msra.mxu0 %v12715
    %12864 = vmatpush.bf16.msra.mxu0 %v12573
    %12865 = vmatpush.bf16.msra.mxu0 %v12569
    %12866 = vmatpush.bf16.msra.mxu0 %v12565
    %12867 = vmatpush.bf16.msra.mxu0 %v12561
    %12868 = vmatpush.bf16.msra.mxu0 %v12557
    %12869 = vmatpush.bf16.msra.mxu0 %v12553
    %12870 = vmatpush.bf16.msra.mxu0 %v12549
    %12871 = vmatmul.bf16.gmra.mxu0 %v12705
    %v12872 = vpop.f32.mrf.mxu0
    %v12873 = vadd.f32 %v12860, %v12872
    %v12874 = vpop.f32.mrf.mxu0
    %12875 = vdwg.mxu0
    %12876 = vmatpush.bf16.msra.mxu0 %v12482
    %12877 = vmatpush.bf16.msra.mxu0 %v12478
    %12878 = vmatpush.bf16.msra.mxu0 %v12474
    %12879 = vmatpush.bf16.msra.mxu0 %v12470
    %12880 = vmatpush.bf16.msra.mxu0 %v12466
    %12881 = vmatpush.bf16.msra.mxu0 %v12462
    %12882 = vmatpush.bf16.msra.mxu0 %v12458
    %12883 = vmatpush.bf16.msra.mxu0 %v12454
    %12884 = vmatmul.bf16.gmra.mxu0 %v11933
    %v12885 = vpop.f32.mrf.mxu0
    %v12886 = vadd.f32 %v12068, %v12885
    %v12887 = vpop.f32.mrf.mxu0
    %12888 = vdwg.mxu0
    %12889 = vmatpush.bf16.msra.mxu0 %v12514
    %12890 = vmatpush.bf16.msra.mxu0 %v12510
    %12891 = vmatpush.bf16.msra.mxu0 %v12506
    %12892 = vmatpush.bf16.msra.mxu0 %v12502
    %12893 = vmatpush.bf16.msra.mxu0 %v12498
    %12894 = vmatpush.bf16.msra.mxu0 %v12494
    %12895 = vmatpush.bf16.msra.mxu0 %v12490
    %12896 = vmatpush.bf16.msra.mxu0 %v12486
    %12897 = vmatmul.bf16.gmra.mxu0 %v11934
    %v12898 = vpop.f32.mrf.mxu0
    %v12899 = vadd.f32 %v12886, %v12898
    %v12900 = vpop.f32.mrf.mxu0
    %12901 = vdwg.mxu0
    %12902 = vmatpush.bf16.msra.mxu0 %v12546
    %12903 = vmatpush.bf16.msra.mxu0 %v12542
    %12904 = vmatpush.bf16.msra.mxu0 %v12538
    %12905 = vmatpush.bf16.msra.mxu0 %v12534
    %12906 = vmatpush.bf16.msra.mxu0 %v12530
    %12907 = vmatpush.bf16.msra.mxu0 %v12526
    %12908 = vmatpush.bf16.msra.mxu0 %v12522
    %12909 = vmatpush.bf16.msra.mxu0 %v12518
    %12910 = vmatmul.bf16.gmra.mxu0 %v11935
    %v12911 = vpop.f32.mrf.mxu0
    %v12912 = vadd.f32 %v12899, %v12911
    %v12913 = vpop.f32.mrf.mxu0
    %12914 = vdwg.mxu0
    %12915 = vmatpush.bf16.msra.mxu0 %v12718
    %12916 = vmatpush.bf16.msra.mxu0 %v12574
    %12917 = vmatpush.bf16.msra.mxu0 %v12570
    %12918 = vmatpush.bf16.msra.mxu0 %v12566
    %12919 = vmatpush.bf16.msra.mxu0 %v12562
    %12920 = vmatpush.bf16.msra.mxu0 %v12558
    %12921 = vmatpush.bf16.msra.mxu0 %v12554
    %12922 = vmatpush.bf16.msra.mxu0 %v12550
    %12923 = vmatmul.bf16.gmra.mxu0 %v12705
    %v12924 = vpop.f32.mrf.mxu0
    %v12925 = vadd.f32 %v12912, %v12924
    %v12926 = vpop.f32.mrf.mxu0
    %12927 = vdwg.mxu0
    %v12928 = vmax.f32 %v12769, 0.0
    %v12929 = vmax.f32 %v12821, 0.0
    %v12930 = vmax.f32 %v12873, 0.0
    %v12931 = vmax.f32 %v12925, 0.0
    %v12932 = vpack.c.bf16 %v12928, %v12928
    %v12933 = vpack.c.bf16 %v12929, %v12929
    %v12934 = vpack.c.bf16 %v12930, %v12930
    %v12935 = vpack.c.bf16 %v12931, %v12931
    %v12936 = vld [vmem:[%s5] sm:$0xf]
    %v12937 = vld [vmem:[%s5 + $0x4] sm:$0xf]
    %v12938 = vld [vmem:[%s5 + $0x8] sm:$0xf]
    %v12939 = vld [vmem:[%s5 + $0xc] sm:$0xf]
    %v12940 = vld [vmem:[%s5 + $0x10] sm:$0xf]
    %v12941 = vld [vmem:[%s5 + $0x14] sm:$0xf]
    %v12942 = vld [vmem:[%s5 + $0x18] sm:$0xf]
    %v12943 = vld [vmem:[%s5 + $0x1c] sm:$0xf]
    %v12944 = vld [vmem:[%s5 + $0x20] sm:$0xf]
    %v12945 = vld [vmem:[%s5 + $0x24] sm:$0xf]
    %v12946 = vld [vmem:[%s5 + $0x28] sm:$0xf]
    %v12947 = vld [vmem:[%s5 + $0x2c] sm:$0xf]
    %v12948 = vld [vmem:[%s5 + $0x30] sm:$0xf]
    %v12949 = vld [vmem:[%s5 + $0x34] sm:$0xf]
    %v12950 = vld [vmem:[%s5 + $0x38] sm:$0xf]
    %v12951 = vld [vmem:[%s5 + $0x3c] sm:$0xf]
    %v12952 = vld [vmem:[%s5 + $0x40] sm:$0xf]
    %v12953 = vld [vmem:[%s5 + $0x44] sm:$0xf]
    %v12954 = vld [vmem:[%s5 + $0x48] sm:$0xf]
    %v12955 = vld [vmem:[%s5 + $0x4c] sm:$0xf]
    %v12956 = vld [vmem:[%s5 + $0x50] sm:$0xf]
    %v12957 = vld [vmem:[%s5 + $0x54] sm:$0xf]
    %v12958 = vld [vmem:[%s5 + $0x58] sm:$0xf]
    %v12959 = vld [vmem:[%s5 + $0x5c] sm:$0xf]
    %v12960 = vld [vmem:[%s5 + $0x60] sm:$0xf]
    %v12961 = vld [vmem:[%s5 + $0x64] sm:$0xf]
    %v12962 = vld [vmem:[%s5 + $0x68] sm:$0xf]
    %v12963 = vld [vmem:[%s5 + $0x6c] sm:$0xf]
    %v12964 = vld [vmem:[%s5 + $0x70] sm:$0xf]
    %v12965 = vld [vmem:[%s5 + $0x74] sm:$0xf]
    %v12966 = vld [vmem:[%s5 + $0x78] sm:$0xf]
    %v12967 = vld [vmem:[%s5 + $0x7c] sm:$0xf]
    %v12968 = vld [vmem:[%s5 + $0x80] sm:$0xf]
    %v12969 = vld [vmem:[%s5 + $0x84] sm:$0xf]
    %v12970 = vld [vmem:[%s5 + $0x88] sm:$0xf]
    %v12971 = vld [vmem:[%s5 + $0x8c] sm:$0xf]
    %v12972 = vld [vmem:[%s5 + $0x90] sm:$0xf]
    %v12973 = vld [vmem:[%s5 + $0x94] sm:$0xf]
    %v12974 = vld [vmem:[%s5 + $0x98] sm:$0xf]
    %v12975 = vld [vmem:[%s5 + $0x9c] sm:$0xf]
    %v12976 = vld [vmem:[%s5 + $0xa0] sm:$0xf]
    %v12977 = vld [vmem:[%s5 + $0xa4] sm:$0xf]
    %v12978 = vld [vmem:[%s5 + $0xa8] sm:$0xf]
    %v12979 = vld [vmem:[%s5 + $0xac] sm:$0xf]
    %v12980 = vld [vmem:[%s5 + $0xb0] sm:$0xf]
    %v12981 = vld [vmem:[%s5 + $0xb4] sm:$0xf]
    %v12982 = vld [vmem:[%s5 + $0xb8] sm:$0xf]
    %v12983 = vld [vmem:[%s5 + $0xbc] sm:$0xf]
    %v12984 = vld [vmem:[%s5 + $0xc0] sm:$0xf]
    %v12985 = vld [vmem:[%s5 + $0xc4] sm:$0xf]
    %v12986 = vld [vmem:[%s5 + $0xc8] sm:$0xf]
    %v12987 = vld [vmem:[%s5 + $0xcc] sm:$0xf]
    %v12988 = vld [vmem:[%s5 + $0xd0] sm:$0xf]
    %v12989 = vld [vmem:[%s5 + $0xd4] sm:$0xf]
    %v12990 = vld [vmem:[%s5 + $0xd8] sm:$0xf]
    %v12991 = vld [vmem:[%s5 + $0xdc] sm:$0xf]
    %v12992 = vld [vmem:[%s5 + $0xe0] sm:$0xf]
    %v12993 = vld [vmem:[%s5 + $0xe4] sm:$0xf]
    %v12994 = vld [vmem:[%s5 + $0xe8] sm:$0xf]
    %v12995 = vld [vmem:[%s5 + $0xec] sm:$0xf]
    %v12996 = vld [vmem:[%s5 + $0xf0] sm:$0xf]
    %v12997 = vld [vmem:[%s5 + $0xf4] sm:$0xf]
    %v12998 = vld [vmem:[%s5 + $0xf8] sm:$0x3]
    %v12999 = vld [vmem:[%s6] sm:$0x1]
    %v13001 = vperm.slane %v12999, 0
    %v13066 = vunpack.c.l.b16 %v12936
    %v13067 = vunpack.c.l.b16 %v12937
    %v13068 = vunpack.c.l.b16 %v12938
    %v13069 = vunpack.c.l.b16 %v12939
    %v13070 = vunpack.c.l.b16 %v12940
    %v13071 = vunpack.c.l.b16 %v12941
    %v13072 = vunpack.c.l.b16 %v12942
    %v13073 = vunpack.c.l.b16 %v12943
    %v13074 = vunpack.c.l.b16 %v12944
    %v13075 = vunpack.c.l.b16 %v12945
    %v13076 = vunpack.c.l.b16 %v12946
    %v13077 = vunpack.c.l.b16 %v12947
    %v13078 = vunpack.c.l.b16 %v12948
    %v13079 = vunpack.c.l.b16 %v12949
    %v13080 = vunpack.c.l.b16 %v12950
    %v13081 = vunpack.c.l.b16 %v12951
    %v13082 = vunpack.c.l.b16 %v12952
    %v13083 = vunpack.c.l.b16 %v12953
    %v13084 = vunpack.c.l.b16 %v12954
    %v13085 = vunpack.c.l.b16 %v12955
    %v13086 = vunpack.c.l.b16 %v12956
    %v13087 = vunpack.c.l.b16 %v12957
    %v13088 = vunpack.c.l.b16 %v12958
    %v13089 = vunpack.c.l.b16 %v12959
    %v13090 = vunpack.c.l.b16 %v12960
    %v13091 = vunpack.c.l.b16 %v12961
    %v13092 = vunpack.c.l.b16 %v12962
    %v13093 = vunpack.c.l.b16 %v12963
    %v13094 = vunpack.c.l.b16 %v12964
    %v13095 = vunpack.c.l.b16 %v12965
    %v13096 = vunpack.c.l.b16 %v12966
    %v13097 = vunpack.c.l.b16 %v12967
    %v13098 = vunpack.c.l.b16 %v12968
    %v13099 = vunpack.c.l.b16 %v12969
    %v13100 = vunpack.c.l.b16 %v12970
    %v13101 = vunpack.c.l.b16 %v12971
    %v13102 = vunpack.c.l.b16 %v12972
    %v13103 = vunpack.c.l.b16 %v12973
    %v13104 = vunpack.c.l.b16 %v12974
    %v13105 = vunpack.c.l.b16 %v12975
    %v13106 = vunpack.c.l.b16 %v12976
    %v13107 = vunpack.c.l.b16 %v12977
    %v13108 = vunpack.c.l.b16 %v12978
    %v13109 = vunpack.c.l.b16 %v12979
    %v13110 = vunpack.c.l.b16 %v12980
    %v13111 = vunpack.c.l.b16 %v12981
    %v13112 = vunpack.c.l.b16 %v12982
    %v13113 = vunpack.c.l.b16 %v12983
    %v13114 = vunpack.c.l.b16 %v12984
    %v13115 = vunpack.c.l.b16 %v12985
    %v13116 = vunpack.c.l.b16 %v12986
    %v13117 = vunpack.c.l.b16 %v12987
    %v13118 = vunpack.c.l.b16 %v12988
    %v13119 = vunpack.c.l.b16 %v12989
    %v13120 = vunpack.c.l.b16 %v12990
    %v13121 = vunpack.c.l.b16 %v12991
    %v13122 = vunpack.c.l.b16 %v12992
    %v13123 = vunpack.c.l.b16 %v12993
    %v13124 = vunpack.c.l.b16 %v12994
    %v13125 = vunpack.c.l.b16 %v12995
    %v13126 = vunpack.c.l.b16 %v12996
    %v13127 = vunpack.c.l.b16 %v12997
    %v13128 = vunpack.c.l.b16 %v12998
    %v13129 = vpack.c.b16 %v13067, %v13066
    %v13130 = vpack.c.b16 %v13069, %v13068
    %v13131 = vpack.c.b16 %v13071, %v13070
    %v13132 = vpack.c.b16 %v13073, %v13072
    %v13133 = vpack.c.b16 %v13075, %v13074
    %v13134 = vpack.c.b16 %v13077, %v13076
    %v13135 = vpack.c.b16 %v13079, %v13078
    %v13136 = vpack.c.b16 %v13081, %v13080
    %v13137 = vpack.c.b16 %v13083, %v13082
    %v13138 = vpack.c.b16 %v13085, %v13084
    %v13139 = vpack.c.b16 %v13087, %v13086
    %v13140 = vpack.c.b16 %v13089, %v13088
    %v13141 = vpack.c.b16 %v13091, %v13090
    %v13142 = vpack.c.b16 %v13093, %v13092
    %v13143 = vpack.c.b16 %v13095, %v13094
    %v13144 = vpack.c.b16 %v13097, %v13096
    %v13145 = vpack.c.b16 %v13099, %v13098
    %v13146 = vpack.c.b16 %v13101, %v13100
    %v13147 = vpack.c.b16 %v13103, %v13102
    %v13148 = vpack.c.b16 %v13105, %v13104
    %v13149 = vpack.c.b16 %v13107, %v13106
    %v13150 = vpack.c.b16 %v13109, %v13108
    %v13151 = vpack.c.b16 %v13111, %v13110
    %v13152 = vpack.c.b16 %v13113, %v13112
    %v13153 = vpack.c.b16 %v13115, %v13114
    %v13154 = vpack.c.b16 %v13117, %v13116
    %v13155 = vpack.c.b16 %v13119, %v13118
    %v13156 = vpack.c.b16 %v13121, %v13120
    %v13157 = vpack.c.b16 %v13123, %v13122
    %v13158 = vpack.c.b16 %v13125, %v13124
    %v13159 = vpack.c.b16 %v13127, %v13126
    %v13160 = vpack.c.b16 %v13128, %v13128
    %v13193 = vsel %vm12703, %v12935, 0
    %v13196 = vsel %vm12707, %v13160, 0
    %13198 = vmatpush.bf16.msra.mxu0 %v13136
    %13199 = vmatpush.bf16.msra.mxu0 %v13135
    %13200 = vmatpush.bf16.msra.mxu0 %v13134
    %13201 = vmatpush.bf16.msra.mxu0 %v13133
    %13202 = vmatpush.bf16.msra.mxu0 %v13132
    %13203 = vmatpush.bf16.msra.mxu0 %v13131
    %13204 = vmatpush.bf16.msra.mxu0 %v13130
    %13205 = vmatpush.bf16.msra.mxu0 %v13129
    %13206 = vmatmul.bf16.gmra.mxu0 %v12932
    %v13207 = vpop.f32.mrf.mxu0
    %v13208 = vadd.f32 %v13001, %v13207
    %v13209 = vpop.f32.mrf.mxu0
    %13210 = vdwg.mxu0
    %13211 = vmatpush.bf16.msra.mxu0 %v13144
    %13212 = vmatpush.bf16.msra.mxu0 %v13143
    %13213 = vmatpush.bf16.msra.mxu0 %v13142
    %13214 = vmatpush.bf16.msra.mxu0 %v13141
    %13215 = vmatpush.bf16.msra.mxu0 %v13140
    %13216 = vmatpush.bf16.msra.mxu0 %v13139
    %13217 = vmatpush.bf16.msra.mxu0 %v13138
    %13218 = vmatpush.bf16.msra.mxu0 %v13137
    %13219 = vmatmul.bf16.gmra.mxu0 %v12933
    %v13220 = vpop.f32.mrf.mxu0
    %v13221 = vadd.f32 %v13208, %v13220
    %v13222 = vpop.f32.mrf.mxu0
    %13223 = vdwg.mxu0
    %13224 = vmatpush.bf16.msra.mxu0 %v13152
    %13225 = vmatpush.bf16.msra.mxu0 %v13151
    %13226 = vmatpush.bf16.msra.mxu0 %v13150
    %13227 = vmatpush.bf16.msra.mxu0 %v13149
    %13228 = vmatpush.bf16.msra.mxu0 %v13148
    %13229 = vmatpush.bf16.msra.mxu0 %v13147
    %13230 = vmatpush.bf16.msra.mxu0 %v13146
    %13231 = vmatpush.bf16.msra.mxu0 %v13145
    %13232 = vmatmul.bf16.gmra.mxu0 %v12934
    %v13233 = vpop.f32.mrf.mxu0
    %v13234 = vadd.f32 %v13221, %v13233
    %v13235 = vpop.f32.mrf.mxu0
    %13236 = vdwg.mxu0
    %13237 = vmatpush.bf16.msra.mxu0 %v13196
    %13238 = vmatpush.bf16.msra.mxu0 %v13159
    %13239 = vmatpush.bf16.msra.mxu0 %v13158
    %13240 = vmatpush.bf16.msra.mxu0 %v13157
    %13241 = vmatpush.bf16.msra.mxu0 %v13156
    %13242 = vmatpush.bf16.msra.mxu0 %v13155
    %13243 = vmatpush.bf16.msra.mxu0 %v13154
    %13244 = vmatpush.bf16.msra.mxu0 %v13153
    %13245 = vmatmul.bf16.gmra.mxu0 %v13193
    %v13246 = vpop.f32.mrf.mxu0
    %v13247 = vadd.f32 %v13234, %v13246
    %v13248 = vpop.f32.mrf.mxu0
    %13249 = vdwg.mxu0
    %vm13250 = vcmask 35840
    %13251 = vst.msk [vmem:[%s7] sm:$0xf] %vm13250, %v13247
  $region37: #{net_forward.7} parent=0 // pred_fallthru
    _
  // Predicated region
  $region38: #{net_forward.7} parent=0 // pred_check
    _
  $region39: #{net_forward.7} parent=0 // pred_check_branch
    %13253 = sbr.rel (0) target = $region41
  $region40: #{net_forward.7} parent=0 // pred_region
    _
  $region41: #{net_forward.7} parent=0 // pred_fallthru
    _
  // Predicated region
  $region42: #{net_forward.7} parent=0 // pred_check
    _
  $region43: #{net_forward.7} parent=0 // pred_check_branch
    %13255 = sbr.rel (0) target = $region45
  $region44: #{net_forward.7} parent=0 // pred_region
    _
  $region45: #{net_forward.7} parent=0 // pred_fallthru
    _

</llo_original>
